<compile_context>
chip_gen: v6e
topology: v6e:2x2x1
jax: 0.10.0
libtpu: 0.0.40
codegen_flags: <defaults>
</compile_context>

<pallas_src>
import functools

import jax
import jax.numpy as jnp
from jax.experimental import pallas as pl
from jax.experimental.pallas import tpu as pltpu


# ----------------------------- fused kernel --------------------------------

def sasrec_fused_kernel(x_ref,
                        ln1_g_ref, ln1_b_ref,
                        wq_t_ref, bq_ref,
                        wkv_t_ref, bkv_ref,
                        wo_t_ref, bo_ref,
                        ln2_g_ref, ln2_b_ref,
                        w1_t_ref, b1_ref,
                        w2_t_ref, b2_ref,
                        lnf_g_ref, lnf_b_ref,
                        o_ref,
                        ctx_ref,
                        *, num_layers, num_heads, seq_len, hidden,
                        use_bf16_matmul):
    """All SASRec blocks + final layernorm for one batch tile.

    x_ref / o_ref: (bt*Tp, Hp) lane-dense slabs.  QKV weights are laid out so
    head h owns lanes [h*hs, (h+1)*hs) with hs a multiple of 128; padded lanes
    are zero and stay exactly zero through every op.
    ctx_ref: (bt*Tp, Ha) VMEM scratch holding the per-head attention outputs
    so the out-projection is a single full-K matmul.
    """
    M, Hp = x_ref.shape
    T = seq_len
    bt = M // T
    H = hidden
    nh = num_heads
    hd = H // nh
    Ha = wq_t_ref.shape[-1]          # nh * hs
    hs = Ha // nh                    # per-head lane slab (multiple of 128)
    scale = 1.0 / float(hd) ** 0.5
    inv_h = 1.0 / float(H)
    mxu_dtype = jnp.bfloat16 if use_bf16_matmul else jnp.float32

    # ---- loop-invariant constants, built once per kernel body ----
    feat_ok = jax.lax.broadcasted_iota(jnp.int32, (M, Hp), 1) < H
    row = jax.lax.broadcasted_iota(jnp.int32, (bt, T, T), 1)
    col = jax.lax.broadcasted_iota(jnp.int32, (bt, T, T), 2)
    causal_ok = col <= row                       # True => attend (past/self)

    def layer_norm(z, g, b):
        # torch.nn.LayerNorm over the real H features (padding masked out),
        # biased variance, eps=1e-8 inside the sqrt.
        mean = jnp.sum(z, axis=-1, keepdims=True) * inv_h
        cent = jnp.where(feat_ok, z - mean, 0.0)
        var = jnp.sum(cent * cent, axis=-1, keepdims=True) * inv_h
        return cent * jax.lax.rsqrt(var + 1e-8) * g + b

    def mm(a, w):
        # weights are already in MXU dtype (pre-cast in the wrapper);
        # accumulate f32 on the MXU.
        return jnp.dot(a.astype(mxu_dtype), w,
                       preferred_element_type=jnp.float32)

    def block(x, l):
        # --- attention layernorm (query path only, as in SASRec) ---
        q_in = layer_norm(x, ln1_g_ref[l], ln1_b_ref[l])

        # --- in-projection; K|V fused into one matmul; head-slab layout ---
        q = mm(q_in, wq_t_ref[l]) + bq_ref[l]             # (M, Ha)
        kv = mm(x, wkv_t_ref[l]) + bkv_ref[l]             # (M, 2Ha)

        q3 = ((q * scale).reshape(bt, T, Ha)).astype(mxu_dtype)
        k3 = kv[:, :Ha].reshape(bt, T, Ha).astype(mxu_dtype)
        v3 = kv[:, Ha:].reshape(bt, T, Ha).astype(mxu_dtype)

        for h_i in range(nh):                             # static, small nh
            sl = slice(h_i * hs, (h_i + 1) * hs)          # aligned 128-slab
            s = jnp.einsum('btd,bsd->bts', q3[:, :, sl], k3[:, :, sl],
                           preferred_element_type=jnp.float32)
            s = jnp.where(causal_ok, s, -1e30)            # finite mask: no NaN
            s = s - jnp.max(s, axis=-1, keepdims=True)
            p = jnp.exp(s)
            denom = jnp.sum(p, axis=-1, keepdims=True)
            inv = pl.reciprocal(denom, approx=True)       # EUP slot
            inv = inv * (2.0 - denom * inv)               # 1 Newton step
            p = (p * inv).astype(mxu_dtype)
            oh = jnp.einsum('bts,bsd->btd', p, v3[:, :, sl],
                            preferred_element_type=jnp.float32)
            ctx_ref[:, sl] = oh.reshape(M, hs).astype(ctx_ref.dtype)

        # single full-K out-projection over all heads
        mha = jnp.dot(ctx_ref[...], wo_t_ref[l],
                      preferred_element_type=jnp.float32) + bo_ref[l]

        # --- residual on the layernormed Q, then point-wise FFN ---
        seqs = q_in + mha
        h = layer_norm(seqs, ln2_g_ref[l], ln2_b_ref[l])
        ff = jnp.maximum(mm(h, w1_t_ref[l]) + b1_ref[l], 0.0)
        ff = mm(ff, w2_t_ref[l]) + b2_ref[l]
        return h + ff                                     # PointWiseFFN resid

    x = x_ref[...]                                        # (M, Hp)
    if num_layers <= 4:
        for l in range(num_layers):                       # static unroll
            x = block(x, l)
    else:                                                 # bound live ranges
        x = jax.lax.fori_loop(0, num_layers, lambda l, acc: block(acc, l), x)

    # --- fused final layernorm ---
    o_ref[...] = layer_norm(x, lnf_g_ref[0], lnf_b_ref[0]).astype(o_ref.dtype)


# ----------------------------- wrapper --------------------------------------

def _pad_vec(v, width):
    out = jnp.zeros((width,), jnp.float32)
    return out.at[:v.shape[0]].set(v)


def _pad_mat(m, rows, cols):
    out = jnp.zeros((rows, cols), jnp.float32)
    return out.at[:m.shape[0], :m.shape[1]].set(m)


def prepare_kernel_params(params, hidden, hidden_pad, num_heads,
                          use_bf16_matmul):
    """Pre-split / pre-transpose / head-slab-permute / pad / stack weights.

    Matmul weights are pre-cast to the MXU dtype (bf16 by default) so there
    are no in-kernel weight casts and half the weight DMA / VMEM residency.
    """
    H, Hp = hidden, hidden_pad
    nh = num_heads
    hd = H // nh
    hs = ((hd + 127) // 128) * 128      # per-head lane slab
    Ha = nh * hs
    wdt = jnp.bfloat16 if use_bf16_matmul else jnp.float32

    def head_cols(w_t):                 # (H,H) -> (Hp,Ha): head-slab columns
        out = jnp.zeros((Hp, Ha), jnp.float32)
        for h_i in range(nh):
            out = out.at[:H, h_i * hs:h_i * hs + hd].set(
                w_t[:, h_i * hd:(h_i + 1) * hd])
        return out

    def head_rows(w_t):                 # (H,H) -> (Ha,Hp): head-slab rows
        out = jnp.zeros((Ha, Hp), jnp.float32)
        for h_i in range(nh):
            out = out.at[h_i * hs:h_i * hs + hd, :H].set(
                w_t[h_i * hd:(h_i + 1) * hd, :])
        return out

    def head_vec(v):                    # (H,) -> (Ha,)
        out = jnp.zeros((Ha,), jnp.float32)
        for h_i in range(nh):
            out = out.at[h_i * hs:h_i * hs + hd].set(
                v[h_i * hd:(h_i + 1) * hd])
        return out

    ln1_g, ln1_b, wq_t, bq, wkv_t, bkv, wo_t, bo = ([] for _ in range(8))
    ln2_g, ln2_b, w1_t, b1, w2_t, b2 = ([] for _ in range(6))
    for p in params["blocks"]:
        wq, wk, wv = p["in_w"][:H], p["in_w"][H:2 * H], p["in_w"][2 * H:]
        bq_, bk_, bv_ = (p["in_b"][0, :H], p["in_b"][0, H:2 * H],
                         p["in_b"][0, 2 * H:])
        ln1_g.append(_pad_vec(p["ln1_g"][0], Hp))
        ln1_b.append(_pad_vec(p["ln1_b"][0], Hp))
        wq_t.append(head_cols(wq.T))
        bq.append(head_vec(bq_))
        wkv_t.append(jnp.concatenate([head_cols(wk.T), head_cols(wv.T)], 1))
        bkv.append(jnp.concatenate([head_vec(bk_), head_vec(bv_)]))
        wo_t.append(head_rows(p["out_w"].T))
        bo.append(_pad_vec(p["out_b"][0], Hp))
        ln2_g.append(_pad_vec(p["ln2_g"][0], Hp))
        ln2_b.append(_pad_vec(p["ln2_b"][0], Hp))
        w1_t.append(_pad_mat(p["c1_w"].T, Hp, Hp))
        b1.append(_pad_vec(p["c1_b"][0], Hp))
        w2_t.append(_pad_mat(p["c2_w"].T, Hp, Hp))
        b2.append(_pad_vec(p["c2_b"][0], Hp))

    def svec(xs):                       # (L, 1, width) f32 (biases / LN)
        return jnp.stack(xs)[:, None, :]

    def smat(xs):                       # stacked matmul weights, MXU dtype
        return jnp.stack(xs).astype(wdt)

    weights = [
        svec(ln1_g), svec(ln1_b),
        smat(wq_t), svec(bq),
        smat(wkv_t), svec(bkv),
        smat(wo_t), svec(bo),
        svec(ln2_g), svec(ln2_b),
        smat(w1_t), svec(b1),
        smat(w2_t), svec(b2),
        _pad_vec(params["last_ln_g"][0], Hp)[None, None, :],
        _pad_vec(params["last_ln_b"][0], Hp)[None, None, :],
    ]
    return weights, Ha


def _vmem_capacity_bytes():
    try:
        return int(pltpu.get_tpu_info().vmem_capacity_bytes)
    except Exception:
        return 64 * 1024 * 1024          # conservative: v7x per-TC VMEM


def _pick_batch_tile(B, Tp, Hp, Ha, weight_bytes, vmem_limit, multi_core):
    # generous f32 working-set estimate per sequence: Hp-wide activation slabs
    # + double-buffered x/o tiles, Ha-wide QKV/context slabs, (Tp,Tp) score /
    # prob / mask temporaries.  Weight stack counted at 2 buffers (worst case).
    per_seq = 4 * Tp * (11 * Hp + 9 * Ha + 6 * Tp)
    budget = vmem_limit - 2 * weight_bytes - (2 << 20)
    bt = max(1, min(B, budget // max(1, per_seq)))
    if multi_core and B >= 2:
        bt = min(bt, B // 2)             # >=2 grid steps: both v7x TCs get work
    while B % bt:
        bt -= 1
    if multi_core:                       # prefer an even step count on v7x
        while bt > 1 and (B // bt) % 2 != 0:
            bt -= 1
            while B % bt:
                bt -= 1
    return bt


def sasrec_forward(log_seqs, params, num_heads, *, use_bf16_matmul=True):
    """log_seqs: (B, T, H) float32 (already embedded).  Eval-mode forward."""
    B, T, H = log_seqs.shape
    assert H % num_heads == 0
    Hp = ((H + 127) // 128) * 128        # lane-dense feature padding
    Tp = ((T + 7) // 8) * 8              # sublane-aligned sequence padding
    L = len(params["blocks"])

    weights, Ha = prepare_kernel_params(params, H, Hp, num_heads,
                                        use_bf16_matmul)
    weight_bytes = sum(int(w.size) * w.dtype.itemsize for w in weights)

    # pad + fold activations into a lane-dense (B*Tp, Hp) slab; padded rows
    # are zero and (by causality) never influence real positions.
    x_pad = jnp.zeros((B, Tp, Hp), jnp.float32).at[:, :T, :H].set(log_seqs)
    x2d = x_pad.reshape(B * Tp, Hp)

    cap = _vmem_capacity_bytes()
    multi_core = cap <= 96 * 1024 * 1024            # v7x: 64 MiB/TC, 2 TCs
    vmem_limit = int(max(32 * 1024 * 1024,
                         min(cap - 16 * 1024 * 1024, 100 * 1024 * 1024)))
    bt = _pick_batch_tile(B, Tp, Hp, Ha, weight_bytes, vmem_limit, multi_core)
    steps = B // bt
    rows = bt * Tp

    ctx_dtype = jnp.bfloat16 if use_bf16_matmul else jnp.float32
    kernel = functools.partial(
        sasrec_fused_kernel, num_layers=L, num_heads=num_heads,
        seq_len=Tp, hidden=H, use_bf16_matmul=use_bf16_matmul)

    def call(single_buffer_weights):
        if single_buffer_weights:
            # constant index_map -> never re-DMA'd after step 0; one buffer.
            def w_spec(w):
                return pl.BlockSpec(w.shape, (lambda i, n=w.ndim: (0,) * n),
                                    pipeline_mode=pl.Buffered(1))
        else:
            def w_spec(w):
                return pl.BlockSpec(w.shape, (lambda i, n=w.ndim: (0,) * n))
        return pl.pallas_call(
            kernel,
            out_shape=jax.ShapeDtypeStruct((B * Tp, Hp), jnp.float32),
            grid=(steps,),
            in_specs=[pl.BlockSpec((rows, Hp), lambda i: (i, 0))]
                     + [w_spec(w) for w in weights],
            out_specs=pl.BlockSpec((rows, Hp), lambda i: (i, 0)),
            scratch_shapes=[pltpu.VMEM((rows, Ha), ctx_dtype)],
            compiler_params=pltpu.CompilerParams(
                dimension_semantics=("parallel",),
                vmem_limit_bytes=vmem_limit),
        )(x2d, *weights)

    try:
        out2d = jax.block_until_ready(call(True))
    except Exception:
        # pl.Buffered(1) single-buffered weights unsupported on this jax
        # version -> fall back to default double-buffering.
        out2d = jax.block_until_ready(call(False))

    return out2d.reshape(B, Tp, Hp)[:, :T, :H]


# ----------------------------- reference (pure JAX) -------------------------

def _layernorm_ref(x, gamma, beta, eps=1e-8):
    mean = jnp.mean(x, axis=-1, keepdims=True)
    var = jnp.mean((x - mean) ** 2, axis=-1, keepdims=True)
    return (x - mean) * jax.lax.rsqrt(var + eps) * gamma + beta


def sasrec_reference(log_seqs, params, num_heads):
    x = log_seqs
    B, T, H = x.shape
    hd = H // num_heads
    causal_ok = jnp.tril(jnp.ones((T, T), dtype=bool))
    for p in params["blocks"]:
        q_in = _layernorm_ref(x, p["ln1_g"][0], p["ln1_b"][0])
        wq, wk, wv = jnp.split(p["in_w"], 3, axis=0)
        bq, bk, bv = jnp.split(p["in_b"][0], 3)
        Q = q_in @ wq.T + bq
        K = x @ wk.T + bk
        V = x @ wv.T + bv
        Qh = Q.reshape(B, T, num_heads, hd).transpose(0, 2, 1, 3) / jnp.sqrt(hd)
        Kh = K.reshape(B, T, num_heads, hd).transpose(0, 2, 1, 3)
        Vh = V.reshape(B, T, num_heads, hd).transpose(0, 2, 1, 3)
        s = jnp.einsum("bhtd,bhsd->bhts", Qh, Kh)
        s = jnp.where(causal_ok[None, None], s, -jnp.inf)
        pr = jax.nn.softmax(s, axis=-1)
        a = jnp.einsum("bhts,bhsd->bhtd", pr, Vh)
        a = a.transpose(0, 2, 1, 3).reshape(B, T, H)
        mha = a @ p["out_w"].T + p["out_b"][0]
        seqs = q_in + mha
        h = _layernorm_ref(seqs, p["ln2_g"][0], p["ln2_b"][0])
        ff = jnp.maximum(h @ p["c1_w"].T + p["c1_b"][0], 0.0)
        ff = ff @ p["c2_w"].T + p["c2_b"][0]
        x = h + ff
    return _layernorm_ref(x, params["last_ln_g"][0], params["last_ln_b"][0])


# ----------------------------- param init ----------------------------------

def init_params(key, hidden, num_blocks):
    blocks = []
    for i in range(num_blocks):
        ks = jax.random.split(jax.random.fold_in(key, i), 6)
        blocks.append({
            "ln1_g": jnp.ones((1, hidden), jnp.float32),
            "ln1_b": jnp.zeros((1, hidden), jnp.float32),
            "in_w": 0.05 * jax.random.normal(ks[0], (3 * hidden, hidden),
                                             jnp.float32),
            "in_b": 0.05 * jax.random.normal(ks[1], (1, 3 * hidden),
                                             jnp.float32),
            "out_w": 0.05 * jax.random.normal(ks[2], (hidden, hidden),
                                              jnp.float32),
            "out_b": jnp.zeros((1, hidden), jnp.float32),
            "ln2_g": jnp.ones((1, hidden), jnp.float32),
            "ln2_b": jnp.zeros((1, hidden), jnp.float32),
            "c1_w": 0.05 * jax.random.normal(ks[3], (hidden, hidden),
                                             jnp.float32),
            "c1_b": 0.05 * jax.random.normal(ks[4], (1, hidden), jnp.float32),
            "c2_w": 0.05 * jax.random.normal(ks[5], (hidden, hidden),
                                             jnp.float32),
            "c2_b": jnp.zeros((1, hidden), jnp.float32),
        })
    return {
        "blocks": blocks,
        "last_ln_g": jnp.ones((1, hidden), jnp.float32),
        "last_ln_b": jnp.zeros((1, hidden), jnp.float32),
    }


# ----------------------------- main -----------------------------------------

if __name__ == "__main__":
    B, T, H = 2, 8, 32
    NUM_HEADS = 2
    NUM_BLOCKS = 2

    key = jax.random.PRNGKey(0)
    k_x, k_p = jax.random.split(key)
    log_seqs = jax.random.normal(k_x, (B, T, H), jnp.float32)
    params = init_params(k_p, H, NUM_BLOCKS)

    ref = jax.block_until_ready(sasrec_reference(log_seqs, params, NUM_HEADS))

    # exact-math check: f32 MXU path verifies layout / masking / LN numerics
    out_f32 = jax.block_until_ready(
        sasrec_forward(log_seqs, params, NUM_HEADS, use_bf16_matmul=False))
    assert out_f32.shape == (B, T, H)
    err_f32 = float(jnp.max(jnp.abs(out_f32 - ref)))
    assert err_f32 < 1e-3, f"f32 path max err {err_f32}"

    # default fast path: bf16 MXU inputs, f32 accumulation + elementwise math;
    # tolerance sized for bf16 input rounding at these magnitudes.
    out_bf16 = jax.block_until_ready(
        sasrec_forward(log_seqs, params, NUM_HEADS))
    assert out_bf16.shape == (B, T, H)
    err_bf16 = float(jnp.max(jnp.abs(out_bf16 - ref)))
    assert err_bf16 < 5e-2, f"bf16 path max err {err_bf16}"

    print("KERNEL_OK")
</pallas_src>

<mosaic_0001>
module attributes {stable_mosaic.version = 11 : i64} {
  func.func @sasrec_fused_kernel(%arg0: i32, %arg1: memref<8x128xf32, #tpu.memory_space<vmem>>, %arg2: memref<2x1x128xf32, #tpu.memory_space<vmem>>, %arg3: memref<2x1x128xf32, #tpu.memory_space<vmem>>, %arg4: memref<2x128x256xf32, #tpu.memory_space<vmem>>, %arg5: memref<2x1x256xf32, #tpu.memory_space<vmem>>, %arg6: memref<2x128x512xf32, #tpu.memory_space<vmem>>, %arg7: memref<2x1x512xf32, #tpu.memory_space<vmem>>, %arg8: memref<2x256x128xf32, #tpu.memory_space<vmem>>, %arg9: memref<2x1x128xf32, #tpu.memory_space<vmem>>, %arg10: memref<2x1x128xf32, #tpu.memory_space<vmem>>, %arg11: memref<2x1x128xf32, #tpu.memory_space<vmem>>, %arg12: memref<2x128x128xf32, #tpu.memory_space<vmem>>, %arg13: memref<2x1x128xf32, #tpu.memory_space<vmem>>, %arg14: memref<2x128x128xf32, #tpu.memory_space<vmem>>, %arg15: memref<2x1x128xf32, #tpu.memory_space<vmem>>, %arg16: memref<1x1x128xf32, #tpu.memory_space<vmem>>, %arg17: memref<1x1x128xf32, #tpu.memory_space<vmem>>, %arg18: memref<8x128xf32, #tpu.memory_space<vmem>>, %arg19: memref<8x256xf32, #tpu.memory_space<vmem>>) attributes {dimension_semantics = [#tpu.dimension_semantics<parallel>], iteration_bounds = array<i64: 2>, scalar_prefetch = 0 : i64, scratch_operands = 1 : i64, tpu.core_type = #tpu.core_type<tc>, window_params = [{transform_indices = @transform_0, window_bounds = array<i64: 8, 128>}, {pipeline_mode = #tpu.pipeline_mode<synchronous>, transform_indices = @transform_1, window_bounds = array<i64: 2, 1, 128>}, {pipeline_mode = #tpu.pipeline_mode<synchronous>, transform_indices = @transform_2, window_bounds = array<i64: 2, 1, 128>}, {pipeline_mode = #tpu.pipeline_mode<synchronous>, transform_indices = @transform_3, window_bounds = array<i64: 2, 128, 256>}, {pipeline_mode = #tpu.pipeline_mode<synchronous>, transform_indices = @transform_4, window_bounds = array<i64: 2, 1, 256>}, {pipeline_mode = #tpu.pipeline_mode<synchronous>, transform_indices = @transform_5, window_bounds = array<i64: 2, 128, 512>}, {pipeline_mode = #tpu.pipeline_mode<synchronous>, transform_indices = @transform_6, window_bounds = array<i64: 2, 1, 512>}, {pipeline_mode = #tpu.pipeline_mode<synchronous>, transform_indices = @transform_7, window_bounds = array<i64: 2, 256, 128>}, {pipeline_mode = #tpu.pipeline_mode<synchronous>, transform_indices = @transform_8, window_bounds = array<i64: 2, 1, 128>}, {pipeline_mode = #tpu.pipeline_mode<synchronous>, transform_indices = @transform_9, window_bounds = array<i64: 2, 1, 128>}, {pipeline_mode = #tpu.pipeline_mode<synchronous>, transform_indices = @transform_10, window_bounds = array<i64: 2, 1, 128>}, {pipeline_mode = #tpu.pipeline_mode<synchronous>, transform_indices = @transform_11, window_bounds = array<i64: 2, 128, 128>}, {pipeline_mode = #tpu.pipeline_mode<synchronous>, transform_indices = @transform_12, window_bounds = array<i64: 2, 1, 128>}, {pipeline_mode = #tpu.pipeline_mode<synchronous>, transform_indices = @transform_13, window_bounds = array<i64: 2, 128, 128>}, {pipeline_mode = #tpu.pipeline_mode<synchronous>, transform_indices = @transform_14, window_bounds = array<i64: 2, 1, 128>}, {pipeline_mode = #tpu.pipeline_mode<synchronous>, transform_indices = @transform_15, window_bounds = array<i64: 1, 1, 128>}, {pipeline_mode = #tpu.pipeline_mode<synchronous>, transform_indices = @transform_16, window_bounds = array<i64: 1, 1, 128>}, {transform_indices = @transform_17, window_bounds = array<i64: 8, 128>}]} {
    %0 = tpu.iota {dimensions = array<i32: 1>} : vector<8x128xi32>
    %c32_i32 = arith.constant 32 : i32
    %1 = vector.broadcast %c32_i32 : i32 to vector<8x128xi32>
    %2 = arith.cmpi slt, %0, %1 : vector<8x128xi32>
    %3 = tpu.iota {dimensions = array<i32: 1>} : vector<1x8x8xi32>
    %4 = tpu.iota {dimensions = array<i32: 2>} : vector<1x8x8xi32>
    %5 = arith.cmpi sle, %4, %3 : vector<1x8x8xi32>
    %c0 = arith.constant 0 : index
    %c0_0 = arith.constant 0 : index
    %6 = vector.load %arg1[%c0, %c0_0] : memref<8x128xf32, #tpu.memory_space<vmem>>, vector<8x128xf32>
    %c0_1 = arith.constant 0 : index
    %c0_2 = arith.constant 0 : index
    %c0_3 = arith.constant 0 : index
    %7 = vector.load %arg2[%c0_1, %c0_2, %c0_3] : memref<2x1x128xf32, #tpu.memory_space<vmem>>, vector<1x1x128xf32>
    %8 = vector.shape_cast %7 : vector<1x1x128xf32> to vector<1x128xf32>
    %c0_4 = arith.constant 0 : index
    %c0_5 = arith.constant 0 : index
    %c0_6 = arith.constant 0 : index
    %9 = vector.load %arg3[%c0_4, %c0_5, %c0_6] : memref<2x1x128xf32, #tpu.memory_space<vmem>>, vector<1x1x128xf32>
    %10 = vector.shape_cast %9 : vector<1x1x128xf32> to vector<1x128xf32>
    %cst = arith.constant dense<0.000000e+00> : vector<8xf32>
    %11 = vector.multi_reduction <add>, %6, %cst [1] : vector<8x128xf32> to vector<8xf32>
    %12 = vector.shape_cast %11 : vector<8xf32> to vector<8x1xf32>
    %cst_7 = arith.constant 3.125000e-02 : f32
    %13 = vector.broadcast %cst_7 : f32 to vector<8x1xf32>
    %14 = arith.mulf %12, %13 : vector<8x1xf32>
    %15 = vector.broadcast %14 : vector<8x1xf32> to vector<8x128xf32>
    %16 = arith.subf %6, %15 : vector<8x128xf32>
    %cst_8 = arith.constant 0.000000e+00 : f32
    %17 = vector.broadcast %cst_8 : f32 to vector<8x128xf32>
    %18 = arith.select %2, %16, %17 : vector<8x128xi1>, vector<8x128xf32>
    %19 = arith.mulf %18, %18 : vector<8x128xf32>
    %cst_9 = arith.constant dense<0.000000e+00> : vector<8xf32>
    %20 = vector.multi_reduction <add>, %19, %cst_9 [1] : vector<8x128xf32> to vector<8xf32>
    %21 = vector.shape_cast %20 : vector<8xf32> to vector<8x1xf32>
    %cst_10 = arith.constant 3.125000e-02 : f32
    %22 = vector.broadcast %cst_10 : f32 to vector<8x1xf32>
    %23 = arith.mulf %21, %22 : vector<8x1xf32>
    %cst_11 = arith.constant 9.99999993E-9 : f32
    %24 = vector.broadcast %cst_11 : f32 to vector<8x1xf32>
    %25 = arith.addf %23, %24 : vector<8x1xf32>
    %26 = math.rsqrt %25 : vector<8x1xf32>
    %27 = vector.broadcast %26 : vector<8x1xf32> to vector<8x128xf32>
    %28 = arith.mulf %18, %27 : vector<8x128xf32>
    %29 = vector.broadcast %8 : vector<1x128xf32> to vector<8x128xf32>
    %30 = arith.mulf %28, %29 : vector<8x128xf32>
    %31 = vector.broadcast %10 : vector<1x128xf32> to vector<8x128xf32>
    %32 = arith.addf %30, %31 : vector<8x128xf32>
    %c0_12 = arith.constant 0 : index
    %c0_13 = arith.constant 0 : index
    %c0_14 = arith.constant 0 : index
    %33 = vector.load %arg4[%c0_12, %c0_13, %c0_14] : memref<2x128x256xf32, #tpu.memory_space<vmem>>, vector<1x128x256xf32>
    %34 = vector.shape_cast %33 : vector<1x128x256xf32> to vector<128x256xf32>
    %cst_15 = arith.constant dense<0.000000e+00> : vector<8x256xf32>
    %35 = tpu.matmul %32, %34, %cst_15 {dimension_numbers = #tpu.dot_dimension_numbers<[1], [0], [0], [1], [0, 0, 1, 1], [], []>} : vector<8x128xf32>, vector<128x256xf32>, vector<8x256xf32> -> vector<8x256xf32>
    %c0_16 = arith.constant 0 : index
    %c0_17 = arith.constant 0 : index
    %c0_18 = arith.constant 0 : index
    %36 = vector.load %arg5[%c0_16, %c0_17, %c0_18] : memref<2x1x256xf32, #tpu.memory_space<vmem>>, vector<1x1x256xf32>
    %37 = vector.shape_cast %36 : vector<1x1x256xf32> to vector<1x256xf32>
    %38 = vector.broadcast %37 : vector<1x256xf32> to vector<8x256xf32>
    %39 = arith.addf %35, %38 : vector<8x256xf32>
    %c0_19 = arith.constant 0 : index
    %c0_20 = arith.constant 0 : index
    %c0_21 = arith.constant 0 : index
    %40 = vector.load %arg6[%c0_19, %c0_20, %c0_21] : memref<2x128x512xf32, #tpu.memory_space<vmem>>, vector<1x128x512xf32>
    %41 = vector.shape_cast %40 : vector<1x128x512xf32> to vector<128x512xf32>
    %cst_22 = arith.constant dense<0.000000e+00> : vector<8x512xf32>
    %42 = tpu.matmul %6, %41, %cst_22 {dimension_numbers = #tpu.dot_dimension_numbers<[1], [0], [0], [1], [0, 0, 1, 1], [], []>} : vector<8x128xf32>, vector<128x512xf32>, vector<8x512xf32> -> vector<8x512xf32>
    %c0_23 = arith.constant 0 : index
    %c0_24 = arith.constant 0 : index
    %c0_25 = arith.constant 0 : index
    %43 = vector.load %arg7[%c0_23, %c0_24, %c0_25] : memref<2x1x512xf32, #tpu.memory_space<vmem>>, vector<1x1x512xf32>
    %44 = vector.shape_cast %43 : vector<1x1x512xf32> to vector<1x512xf32>
    %45 = vector.broadcast %44 : vector<1x512xf32> to vector<8x512xf32>
    %46 = arith.addf %42, %45 : vector<8x512xf32>
    %cst_26 = arith.constant 2.500000e-01 : f32
    %47 = vector.broadcast %cst_26 : f32 to vector<8x256xf32>
    %48 = arith.mulf %39, %47 : vector<8x256xf32>
    %49 = vector.shape_cast %48 : vector<8x256xf32> to vector<1x8x256xf32>
    %50 = vector.extract_strided_slice %46 {offsets = [0, 0], sizes = [8, 256], strides = [1, 1]} : vector<8x512xf32> to vector<8x256xf32>
    %51 = vector.shape_cast %50 : vector<8x256xf32> to vector<1x8x256xf32>
    %52 = vector.extract_strided_slice %46 {offsets = [0, 256], sizes = [8, 256], strides = [1, 1]} : vector<8x512xf32> to vector<8x256xf32>
    %53 = vector.shape_cast %52 : vector<8x256xf32> to vector<1x8x256xf32>
    %54 = vector.extract_strided_slice %49 {offsets = [0, 0, 0], sizes = [1, 8, 128], strides = [1, 1, 1]} : vector<1x8x256xf32> to vector<1x8x128xf32>
    %55 = vector.extract_strided_slice %51 {offsets = [0, 0, 0], sizes = [1, 8, 128], strides = [1, 1, 1]} : vector<1x8x256xf32> to vector<1x8x128xf32>
    "tpu.trace_start"() <{level = 10 : i32, message = "btd,bsd->bts"}> : () -> ()
    %cst_27 = arith.constant dense<0.000000e+00> : vector<1x8x8xf32>
    %56 = tpu.matmul %54, %55, %cst_27 {dimension_numbers = #tpu.dot_dimension_numbers<[2], [2], [1], [1], [0, 0, 0, 1, 1, 1], [0], [0]>} : vector<1x8x128xf32>, vector<1x8x128xf32>, vector<1x8x8xf32> -> vector<1x8x8xf32>
    %cst_28 = arith.constant -1.000000e+30 : f32
    "tpu.trace_stop"() : () -> ()
    %57 = vector.broadcast %cst_28 : f32 to vector<1x8x8xf32>
    %58 = arith.select %5, %56, %57 : vector<1x8x8xi1>, vector<1x8x8xf32>
    %cst_29 = arith.constant dense<0xFF800000> : vector<1x8xf32>
    %59 = vector.multi_reduction <maximumf>, %58, %cst_29 [2] : vector<1x8x8xf32> to vector<1x8xf32>
    %60 = vector.shape_cast %59 : vector<1x8xf32> to vector<1x8x1xf32>
    %61 = vector.broadcast %60 : vector<1x8x1xf32> to vector<1x8x8xf32>
    %62 = arith.subf %58, %61 : vector<1x8x8xf32>
    %63 = math.exp %62 : vector<1x8x8xf32>
    %cst_30 = arith.constant dense<0.000000e+00> : vector<1x8xf32>
    %64 = vector.multi_reduction <add>, %63, %cst_30 [2] : vector<1x8x8xf32> to vector<1x8xf32>
    %65 = vector.shape_cast %64 : vector<1x8xf32> to vector<1x8x1xf32>
    %66 = tpu.reciprocal %65 {approx = true} : vector<1x8x1xf32> -> vector<1x8x1xf32>
    %67 = arith.mulf %65, %66 : vector<1x8x1xf32>
    %cst_31 = arith.constant 2.000000e+00 : f32
    %68 = vector.broadcast %cst_31 : f32 to vector<1x8x1xf32>
    %69 = arith.subf %68, %67 : vector<1x8x1xf32>
    %70 = arith.mulf %66, %69 : vector<1x8x1xf32>
    %71 = vector.broadcast %70 : vector<1x8x1xf32> to vector<1x8x8xf32>
    %72 = arith.mulf %63, %71 : vector<1x8x8xf32>
    %73 = vector.extract_strided_slice %53 {offsets = [0, 0, 0], sizes = [1, 8, 128], strides = [1, 1, 1]} : vector<1x8x256xf32> to vector<1x8x128xf32>
    "tpu.trace_start"() <{level = 10 : i32, message = "bts,bsd->btd"}> : () -> ()
    %cst_32 = arith.constant dense<0.000000e+00> : vector<1x8x128xf32>
    %74 = tpu.matmul %72, %73, %cst_32 {dimension_numbers = #tpu.dot_dimension_numbers<[2], [1], [1], [2], [0, 0, 0, 1, 1, 2], [0], [0]>} : vector<1x8x8xf32>, vector<1x8x128xf32>, vector<1x8x128xf32> -> vector<1x8x128xf32>
    "tpu.trace_stop"() : () -> ()
    %75 = vector.shape_cast %74 : vector<1x8x128xf32> to vector<8x128xf32>
    %c0_33 = arith.constant 0 : index
    %c0_34 = arith.constant 0 : index
    %76 = vector.load %arg19[%c0_33, %c0_34] : memref<8x256xf32, #tpu.memory_space<vmem>>, vector<8x128xf32>
    tpu.vector_store %arg19[%c0_33, %c0_34], %75 {strides = array<i32>} : memref<8x256xf32, #tpu.memory_space<vmem>>, vector<8x128xf32>,
    %77 = vector.extract_strided_slice %49 {offsets = [0, 0, 128], sizes = [1, 8, 128], strides = [1, 1, 1]} : vector<1x8x256xf32> to vector<1x8x128xf32>
    %78 = vector.extract_strided_slice %51 {offsets = [0, 0, 128], sizes = [1, 8, 128], strides = [1, 1, 1]} : vector<1x8x256xf32> to vector<1x8x128xf32>
    "tpu.trace_start"() <{level = 10 : i32, message = "btd,bsd->bts"}> : () -> ()
    %cst_35 = arith.constant dense<0.000000e+00> : vector<1x8x8xf32>
    %79 = tpu.matmul %77, %78, %cst_35 {dimension_numbers = #tpu.dot_dimension_numbers<[2], [2], [1], [1], [0, 0, 0, 1, 1, 1], [0], [0]>} : vector<1x8x128xf32>, vector<1x8x128xf32>, vector<1x8x8xf32> -> vector<1x8x8xf32>
    %cst_36 = arith.constant -1.000000e+30 : f32
    "tpu.trace_stop"() : () -> ()
    %80 = vector.broadcast %cst_36 : f32 to vector<1x8x8xf32>
    %81 = arith.select %5, %79, %80 : vector<1x8x8xi1>, vector<1x8x8xf32>
    %cst_37 = arith.constant dense<0xFF800000> : vector<1x8xf32>
    %82 = vector.multi_reduction <maximumf>, %81, %cst_37 [2] : vector<1x8x8xf32> to vector<1x8xf32>
    %83 = vector.shape_cast %82 : vector<1x8xf32> to vector<1x8x1xf32>
    %84 = vector.broadcast %83 : vector<1x8x1xf32> to vector<1x8x8xf32>
    %85 = arith.subf %81, %84 : vector<1x8x8xf32>
    %86 = math.exp %85 : vector<1x8x8xf32>
    %cst_38 = arith.constant dense<0.000000e+00> : vector<1x8xf32>
    %87 = vector.multi_reduction <add>, %86, %cst_38 [2] : vector<1x8x8xf32> to vector<1x8xf32>
    %88 = vector.shape_cast %87 : vector<1x8xf32> to vector<1x8x1xf32>
    %89 = tpu.reciprocal %88 {approx = true} : vector<1x8x1xf32> -> vector<1x8x1xf32>
    %90 = arith.mulf %88, %89 : vector<1x8x1xf32>
    %cst_39 = arith.constant 2.000000e+00 : f32
    %91 = vector.broadcast %cst_39 : f32 to vector<1x8x1xf32>
    %92 = arith.subf %91, %90 : vector<1x8x1xf32>
    %93 = arith.mulf %89, %92 : vector<1x8x1xf32>
    %94 = vector.broadcast %93 : vector<1x8x1xf32> to vector<1x8x8xf32>
    %95 = arith.mulf %86, %94 : vector<1x8x8xf32>
    %96 = vector.extract_strided_slice %53 {offsets = [0, 0, 128], sizes = [1, 8, 128], strides = [1, 1, 1]} : vector<1x8x256xf32> to vector<1x8x128xf32>
    "tpu.trace_start"() <{level = 10 : i32, message = "bts,bsd->btd"}> : () -> ()
    %cst_40 = arith.constant dense<0.000000e+00> : vector<1x8x128xf32>
    %97 = tpu.matmul %95, %96, %cst_40 {dimension_numbers = #tpu.dot_dimension_numbers<[2], [1], [1], [2], [0, 0, 0, 1, 1, 2], [0], [0]>} : vector<1x8x8xf32>, vector<1x8x128xf32>, vector<1x8x128xf32> -> vector<1x8x128xf32>
    "tpu.trace_stop"() : () -> ()
    %98 = vector.shape_cast %97 : vector<1x8x128xf32> to vector<8x128xf32>
    %c0_41 = arith.constant 0 : index
    %c128 = arith.constant 128 : index
    %99 = vector.load %arg19[%c0_41, %c128] : memref<8x256xf32, #tpu.memory_space<vmem>>, vector<8x128xf32>
    tpu.vector_store %arg19[%c0_41, %c128], %98 {strides = array<i32>} : memref<8x256xf32, #tpu.memory_space<vmem>>, vector<8x128xf32>,
    %c0_42 = arith.constant 0 : index
    %c0_43 = arith.constant 0 : index
    %100 = vector.load %arg19[%c0_42, %c0_43] : memref<8x256xf32, #tpu.memory_space<vmem>>, vector<8x256xf32>
    %c0_44 = arith.constant 0 : index
    %c0_45 = arith.constant 0 : index
    %c0_46 = arith.constant 0 : index
    %101 = vector.load %arg8[%c0_44, %c0_45, %c0_46] : memref<2x256x128xf32, #tpu.memory_space<vmem>>, vector<1x256x128xf32>
    %102 = vector.shape_cast %101 : vector<1x256x128xf32> to vector<256x128xf32>
    %cst_47 = arith.constant dense<0.000000e+00> : vector<8x128xf32>
    %103 = tpu.matmul %100, %102, %cst_47 {dimension_numbers = #tpu.dot_dimension_numbers<[1], [0], [0], [1], [0, 0, 1, 1], [], []>} : vector<8x256xf32>, vector<256x128xf32>, vector<8x128xf32> -> vector<8x128xf32>
    %c0_48 = arith.constant 0 : index
    %c0_49 = arith.constant 0 : index
    %c0_50 = arith.constant 0 : index
    %104 = vector.load %arg9[%c0_48, %c0_49, %c0_50] : memref<2x1x128xf32, #tpu.memory_space<vmem>>, vector<1x1x128xf32>
    %105 = vector.shape_cast %104 : vector<1x1x128xf32> to vector<1x128xf32>
    %106 = vector.broadcast %105 : vector<1x128xf32> to vector<8x128xf32>
    %107 = arith.addf %103, %106 : vector<8x128xf32>
    %108 = arith.addf %32, %107 : vector<8x128xf32>
    %c0_51 = arith.constant 0 : index
    %c0_52 = arith.constant 0 : index
    %c0_53 = arith.constant 0 : index
    %109 = vector.load %arg10[%c0_51, %c0_52, %c0_53] : memref<2x1x128xf32, #tpu.memory_space<vmem>>, vector<1x1x128xf32>
    %110 = vector.shape_cast %109 : vector<1x1x128xf32> to vector<1x128xf32>
    %c0_54 = arith.constant 0 : index
    %c0_55 = arith.constant 0 : index
    %c0_56 = arith.constant 0 : index
    %111 = vector.load %arg11[%c0_54, %c0_55, %c0_56] : memref<2x1x128xf32, #tpu.memory_space<vmem>>, vector<1x1x128xf32>
    %112 = vector.shape_cast %111 : vector<1x1x128xf32> to vector<1x128xf32>
    %cst_57 = arith.constant dense<0.000000e+00> : vector<8xf32>
    %113 = vector.multi_reduction <add>, %108, %cst_57 [1] : vector<8x128xf32> to vector<8xf32>
    %114 = vector.shape_cast %113 : vector<8xf32> to vector<8x1xf32>
    %cst_58 = arith.constant 3.125000e-02 : f32
    %115 = vector.broadcast %cst_58 : f32 to vector<8x1xf32>
    %116 = arith.mulf %114, %115 : vector<8x1xf32>
    %117 = vector.broadcast %116 : vector<8x1xf32> to vector<8x128xf32>
    %118 = arith.subf %108, %117 : vector<8x128xf32>
    %cst_59 = arith.constant 0.000000e+00 : f32
    %119 = vector.broadcast %cst_59 : f32 to vector<8x128xf32>
    %120 = arith.select %2, %118, %119 : vector<8x128xi1>, vector<8x128xf32>
    %121 = arith.mulf %120, %120 : vector<8x128xf32>
    %cst_60 = arith.constant dense<0.000000e+00> : vector<8xf32>
    %122 = vector.multi_reduction <add>, %121, %cst_60 [1] : vector<8x128xf32> to vector<8xf32>
    %123 = vector.shape_cast %122 : vector<8xf32> to vector<8x1xf32>
    %cst_61 = arith.constant 3.125000e-02 : f32
    %124 = vector.broadcast %cst_61 : f32 to vector<8x1xf32>
    %125 = arith.mulf %123, %124 : vector<8x1xf32>
    %cst_62 = arith.constant 9.99999993E-9 : f32
    %126 = vector.broadcast %cst_62 : f32 to vector<8x1xf32>
    %127 = arith.addf %125, %126 : vector<8x1xf32>
    %128 = math.rsqrt %127 : vector<8x1xf32>
    %129 = vector.broadcast %128 : vector<8x1xf32> to vector<8x128xf32>
    %130 = arith.mulf %120, %129 : vector<8x128xf32>
    %131 = vector.broadcast %110 : vector<1x128xf32> to vector<8x128xf32>
    %132 = arith.mulf %130, %131 : vector<8x128xf32>
    %133 = vector.broadcast %112 : vector<1x128xf32> to vector<8x128xf32>
    %134 = arith.addf %132, %133 : vector<8x128xf32>
    %c0_63 = arith.constant 0 : index
    %c0_64 = arith.constant 0 : index
    %c0_65 = arith.constant 0 : index
    %135 = vector.load %arg12[%c0_63, %c0_64, %c0_65] : memref<2x128x128xf32, #tpu.memory_space<vmem>>, vector<1x128x128xf32>
    %136 = vector.shape_cast %135 : vector<1x128x128xf32> to vector<128x128xf32>
    %cst_66 = arith.constant dense<0.000000e+00> : vector<8x128xf32>
    %137 = tpu.matmul %134, %136, %cst_66 {dimension_numbers = #tpu.dot_dimension_numbers<[1], [0], [0], [1], [0, 0, 1, 1], [], []>} : vector<8x128xf32>, vector<128x128xf32>, vector<8x128xf32> -> vector<8x128xf32>
    %c0_67 = arith.constant 0 : index
    %c0_68 = arith.constant 0 : index
    %c0_69 = arith.constant 0 : index
    %138 = vector.load %arg13[%c0_67, %c0_68, %c0_69] : memref<2x1x128xf32, #tpu.memory_space<vmem>>, vector<1x1x128xf32>
    %139 = vector.shape_cast %138 : vector<1x1x128xf32> to vector<1x128xf32>
    %140 = vector.broadcast %139 : vector<1x128xf32> to vector<8x128xf32>
    %141 = arith.addf %137, %140 : vector<8x128xf32>
    %cst_70 = arith.constant 0.000000e+00 : f32
    %142 = vector.broadcast %cst_70 : f32 to vector<8x128xf32>
    %143 = arith.maximumf %141, %142 : vector<8x128xf32>
    %c0_71 = arith.constant 0 : index
    %c0_72 = arith.constant 0 : index
    %c0_73 = arith.constant 0 : index
    %144 = vector.load %arg14[%c0_71, %c0_72, %c0_73] : memref<2x128x128xf32, #tpu.memory_space<vmem>>, vector<1x128x128xf32>
    %145 = vector.shape_cast %144 : vector<1x128x128xf32> to vector<128x128xf32>
    %cst_74 = arith.constant dense<0.000000e+00> : vector<8x128xf32>
    %146 = tpu.matmul %143, %145, %cst_74 {dimension_numbers = #tpu.dot_dimension_numbers<[1], [0], [0], [1], [0, 0, 1, 1], [], []>} : vector<8x128xf32>, vector<128x128xf32>, vector<8x128xf32> -> vector<8x128xf32>
    %c0_75 = arith.constant 0 : index
    %c0_76 = arith.constant 0 : index
    %c0_77 = arith.constant 0 : index
    %147 = vector.load %arg15[%c0_75, %c0_76, %c0_77] : memref<2x1x128xf32, #tpu.memory_space<vmem>>, vector<1x1x128xf32>
    %148 = vector.shape_cast %147 : vector<1x1x128xf32> to vector<1x128xf32>
    %149 = vector.broadcast %148 : vector<1x128xf32> to vector<8x128xf32>
    %150 = arith.addf %146, %149 : vector<8x128xf32>
    %151 = arith.addf %134, %150 : vector<8x128xf32>
    %c1 = arith.constant 1 : index
    %c0_78 = arith.constant 0 : index
    %c0_79 = arith.constant 0 : index
    %152 = vector.load %arg2[%c1, %c0_78, %c0_79] : memref<2x1x128xf32, #tpu.memory_space<vmem>>, vector<1x1x128xf32>
    %153 = vector.shape_cast %152 : vector<1x1x128xf32> to vector<1x128xf32>
    %c1_80 = arith.constant 1 : index
    %c0_81 = arith.constant 0 : index
    %c0_82 = arith.constant 0 : index
    %154 = vector.load %arg3[%c1_80, %c0_81, %c0_82] : memref<2x1x128xf32, #tpu.memory_space<vmem>>, vector<1x1x128xf32>
    %155 = vector.shape_cast %154 : vector<1x1x128xf32> to vector<1x128xf32>
    %cst_83 = arith.constant dense<0.000000e+00> : vector<8xf32>
    %156 = vector.multi_reduction <add>, %151, %cst_83 [1] : vector<8x128xf32> to vector<8xf32>
    %157 = vector.shape_cast %156 : vector<8xf32> to vector<8x1xf32>
    %cst_84 = arith.constant 3.125000e-02 : f32
    %158 = vector.broadcast %cst_84 : f32 to vector<8x1xf32>
    %159 = arith.mulf %157, %158 : vector<8x1xf32>
    %160 = vector.broadcast %159 : vector<8x1xf32> to vector<8x128xf32>
    %161 = arith.subf %151, %160 : vector<8x128xf32>
    %cst_85 = arith.constant 0.000000e+00 : f32
    %162 = vector.broadcast %cst_85 : f32 to vector<8x128xf32>
    %163 = arith.select %2, %161, %162 : vector<8x128xi1>, vector<8x128xf32>
    %164 = arith.mulf %163, %163 : vector<8x128xf32>
    %cst_86 = arith.constant dense<0.000000e+00> : vector<8xf32>
    %165 = vector.multi_reduction <add>, %164, %cst_86 [1] : vector<8x128xf32> to vector<8xf32>
    %166 = vector.shape_cast %165 : vector<8xf32> to vector<8x1xf32>
    %cst_87 = arith.constant 3.125000e-02 : f32
    %167 = vector.broadcast %cst_87 : f32 to vector<8x1xf32>
    %168 = arith.mulf %166, %167 : vector<8x1xf32>
    %cst_88 = arith.constant 9.99999993E-9 : f32
    %169 = vector.broadcast %cst_88 : f32 to vector<8x1xf32>
    %170 = arith.addf %168, %169 : vector<8x1xf32>
    %171 = math.rsqrt %170 : vector<8x1xf32>
    %172 = vector.broadcast %171 : vector<8x1xf32> to vector<8x128xf32>
    %173 = arith.mulf %163, %172 : vector<8x128xf32>
    %174 = vector.broadcast %153 : vector<1x128xf32> to vector<8x128xf32>
    %175 = arith.mulf %173, %174 : vector<8x128xf32>
    %176 = vector.broadcast %155 : vector<1x128xf32> to vector<8x128xf32>
    %177 = arith.addf %175, %176 : vector<8x128xf32>
    %c1_89 = arith.constant 1 : index
    %c0_90 = arith.constant 0 : index
    %c0_91 = arith.constant 0 : index
    %178 = vector.load %arg4[%c1_89, %c0_90, %c0_91] : memref<2x128x256xf32, #tpu.memory_space<vmem>>, vector<1x128x256xf32>
    %179 = vector.shape_cast %178 : vector<1x128x256xf32> to vector<128x256xf32>
    %cst_92 = arith.constant dense<0.000000e+00> : vector<8x256xf32>
    %180 = tpu.matmul %177, %179, %cst_92 {dimension_numbers = #tpu.dot_dimension_numbers<[1], [0], [0], [1], [0, 0, 1, 1], [], []>} : vector<8x128xf32>, vector<128x256xf32>, vector<8x256xf32> -> vector<8x256xf32>
    %c1_93 = arith.constant 1 : index
    %c0_94 = arith.constant 0 : index
    %c0_95 = arith.constant 0 : index
    %181 = vector.load %arg5[%c1_93, %c0_94, %c0_95] : memref<2x1x256xf32, #tpu.memory_space<vmem>>, vector<1x1x256xf32>
    %182 = vector.shape_cast %181 : vector<1x1x256xf32> to vector<1x256xf32>
    %183 = vector.broadcast %182 : vector<1x256xf32> to vector<8x256xf32>
    %184 = arith.addf %180, %183 : vector<8x256xf32>
    %c1_96 = arith.constant 1 : index
    %c0_97 = arith.constant 0 : index
    %c0_98 = arith.constant 0 : index
    %185 = vector.load %arg6[%c1_96, %c0_97, %c0_98] : memref<2x128x512xf32, #tpu.memory_space<vmem>>, vector<1x128x512xf32>
    %186 = vector.shape_cast %185 : vector<1x128x512xf32> to vector<128x512xf32>
    %cst_99 = arith.constant dense<0.000000e+00> : vector<8x512xf32>
    %187 = tpu.matmul %151, %186, %cst_99 {dimension_numbers = #tpu.dot_dimension_numbers<[1], [0], [0], [1], [0, 0, 1, 1], [], []>} : vector<8x128xf32>, vector<128x512xf32>, vector<8x512xf32> -> vector<8x512xf32>
    %c1_100 = arith.constant 1 : index
    %c0_101 = arith.constant 0 : index
    %c0_102 = arith.constant 0 : index
    %188 = vector.load %arg7[%c1_100, %c0_101, %c0_102] : memref<2x1x512xf32, #tpu.memory_space<vmem>>, vector<1x1x512xf32>
    %189 = vector.shape_cast %188 : vector<1x1x512xf32> to vector<1x512xf32>
    %190 = vector.broadcast %189 : vector<1x512xf32> to vector<8x512xf32>
    %191 = arith.addf %187, %190 : vector<8x512xf32>
    %cst_103 = arith.constant 2.500000e-01 : f32
    %192 = vector.broadcast %cst_103 : f32 to vector<8x256xf32>
    %193 = arith.mulf %184, %192 : vector<8x256xf32>
    %194 = vector.shape_cast %193 : vector<8x256xf32> to vector<1x8x256xf32>
    %195 = vector.extract_strided_slice %191 {offsets = [0, 0], sizes = [8, 256], strides = [1, 1]} : vector<8x512xf32> to vector<8x256xf32>
    %196 = vector.shape_cast %195 : vector<8x256xf32> to vector<1x8x256xf32>
    %197 = vector.extract_strided_slice %191 {offsets = [0, 256], sizes = [8, 256], strides = [1, 1]} : vector<8x512xf32> to vector<8x256xf32>
    %198 = vector.shape_cast %197 : vector<8x256xf32> to vector<1x8x256xf32>
    %199 = vector.extract_strided_slice %194 {offsets = [0, 0, 0], sizes = [1, 8, 128], strides = [1, 1, 1]} : vector<1x8x256xf32> to vector<1x8x128xf32>
    %200 = vector.extract_strided_slice %196 {offsets = [0, 0, 0], sizes = [1, 8, 128], strides = [1, 1, 1]} : vector<1x8x256xf32> to vector<1x8x128xf32>
    "tpu.trace_start"() <{level = 10 : i32, message = "btd,bsd->bts"}> : () -> ()
    %cst_104 = arith.constant dense<0.000000e+00> : vector<1x8x8xf32>
    %201 = tpu.matmul %199, %200, %cst_104 {dimension_numbers = #tpu.dot_dimension_numbers<[2], [2], [1], [1], [0, 0, 0, 1, 1, 1], [0], [0]>} : vector<1x8x128xf32>, vector<1x8x128xf32>, vector<1x8x8xf32> -> vector<1x8x8xf32>
    %cst_105 = arith.constant -1.000000e+30 : f32
    "tpu.trace_stop"() : () -> ()
    %202 = vector.broadcast %cst_105 : f32 to vector<1x8x8xf32>
    %203 = arith.select %5, %201, %202 : vector<1x8x8xi1>, vector<1x8x8xf32>
    %cst_106 = arith.constant dense<0xFF800000> : vector<1x8xf32>
    %204 = vector.multi_reduction <maximumf>, %203, %cst_106 [2] : vector<1x8x8xf32> to vector<1x8xf32>
    %205 = vector.shape_cast %204 : vector<1x8xf32> to vector<1x8x1xf32>
    %206 = vector.broadcast %205 : vector<1x8x1xf32> to vector<1x8x8xf32>
    %207 = arith.subf %203, %206 : vector<1x8x8xf32>
    %208 = math.exp %207 : vector<1x8x8xf32>
    %cst_107 = arith.constant dense<0.000000e+00> : vector<1x8xf32>
    %209 = vector.multi_reduction <add>, %208, %cst_107 [2] : vector<1x8x8xf32> to vector<1x8xf32>
    %210 = vector.shape_cast %209 : vector<1x8xf32> to vector<1x8x1xf32>
    %211 = tpu.reciprocal %210 {approx = true} : vector<1x8x1xf32> -> vector<1x8x1xf32>
    %212 = arith.mulf %210, %211 : vector<1x8x1xf32>
    %cst_108 = arith.constant 2.000000e+00 : f32
    %213 = vector.broadcast %cst_108 : f32 to vector<1x8x1xf32>
    %214 = arith.subf %213, %212 : vector<1x8x1xf32>
    %215 = arith.mulf %211, %214 : vector<1x8x1xf32>
    %216 = vector.broadcast %215 : vector<1x8x1xf32> to vector<1x8x8xf32>
    %217 = arith.mulf %208, %216 : vector<1x8x8xf32>
    %218 = vector.extract_strided_slice %198 {offsets = [0, 0, 0], sizes = [1, 8, 128], strides = [1, 1, 1]} : vector<1x8x256xf32> to vector<1x8x128xf32>
    "tpu.trace_start"() <{level = 10 : i32, message = "bts,bsd->btd"}> : () -> ()
    %cst_109 = arith.constant dense<0.000000e+00> : vector<1x8x128xf32>
    %219 = tpu.matmul %217, %218, %cst_109 {dimension_numbers = #tpu.dot_dimension_numbers<[2], [1], [1], [2], [0, 0, 0, 1, 1, 2], [0], [0]>} : vector<1x8x8xf32>, vector<1x8x128xf32>, vector<1x8x128xf32> -> vector<1x8x128xf32>
    "tpu.trace_stop"() : () -> ()
    %220 = vector.shape_cast %219 : vector<1x8x128xf32> to vector<8x128xf32>
    %c0_110 = arith.constant 0 : index
    %c0_111 = arith.constant 0 : index
    %221 = vector.load %arg19[%c0_110, %c0_111] : memref<8x256xf32, #tpu.memory_space<vmem>>, vector<8x128xf32>
    tpu.vector_store %arg19[%c0_110, %c0_111], %220 {strides = array<i32>} : memref<8x256xf32, #tpu.memory_space<vmem>>, vector<8x128xf32>,
    %222 = vector.extract_strided_slice %194 {offsets = [0, 0, 128], sizes = [1, 8, 128], strides = [1, 1, 1]} : vector<1x8x256xf32> to vector<1x8x128xf32>
    %223 = vector.extract_strided_slice %196 {offsets = [0, 0, 128], sizes = [1, 8, 128], strides = [1, 1, 1]} : vector<1x8x256xf32> to vector<1x8x128xf32>
    "tpu.trace_start"() <{level = 10 : i32, message = "btd,bsd->bts"}> : () -> ()
    %cst_112 = arith.constant dense<0.000000e+00> : vector<1x8x8xf32>
    %224 = tpu.matmul %222, %223, %cst_112 {dimension_numbers = #tpu.dot_dimension_numbers<[2], [2], [1], [1], [0, 0, 0, 1, 1, 1], [0], [0]>} : vector<1x8x128xf32>, vector<1x8x128xf32>, vector<1x8x8xf32> -> vector<1x8x8xf32>
    %cst_113 = arith.constant -1.000000e+30 : f32
    "tpu.trace_stop"() : () -> ()
    %225 = vector.broadcast %cst_113 : f32 to vector<1x8x8xf32>
    %226 = arith.select %5, %224, %225 : vector<1x8x8xi1>, vector<1x8x8xf32>
    %cst_114 = arith.constant dense<0xFF800000> : vector<1x8xf32>
    %227 = vector.multi_reduction <maximumf>, %226, %cst_114 [2] : vector<1x8x8xf32> to vector<1x8xf32>
    %228 = vector.shape_cast %227 : vector<1x8xf32> to vector<1x8x1xf32>
    %229 = vector.broadcast %228 : vector<1x8x1xf32> to vector<1x8x8xf32>
    %230 = arith.subf %226, %229 : vector<1x8x8xf32>
    %231 = math.exp %230 : vector<1x8x8xf32>
    %cst_115 = arith.constant dense<0.000000e+00> : vector<1x8xf32>
    %232 = vector.multi_reduction <add>, %231, %cst_115 [2] : vector<1x8x8xf32> to vector<1x8xf32>
    %233 = vector.shape_cast %232 : vector<1x8xf32> to vector<1x8x1xf32>
    %234 = tpu.reciprocal %233 {approx = true} : vector<1x8x1xf32> -> vector<1x8x1xf32>
    %235 = arith.mulf %233, %234 : vector<1x8x1xf32>
    %cst_116 = arith.constant 2.000000e+00 : f32
    %236 = vector.broadcast %cst_116 : f32 to vector<1x8x1xf32>
    %237 = arith.subf %236, %235 : vector<1x8x1xf32>
    %238 = arith.mulf %234, %237 : vector<1x8x1xf32>
    %239 = vector.broadcast %238 : vector<1x8x1xf32> to vector<1x8x8xf32>
    %240 = arith.mulf %231, %239 : vector<1x8x8xf32>
    %241 = vector.extract_strided_slice %198 {offsets = [0, 0, 128], sizes = [1, 8, 128], strides = [1, 1, 1]} : vector<1x8x256xf32> to vector<1x8x128xf32>
    "tpu.trace_start"() <{level = 10 : i32, message = "bts,bsd->btd"}> : () -> ()
    %cst_117 = arith.constant dense<0.000000e+00> : vector<1x8x128xf32>
    %242 = tpu.matmul %240, %241, %cst_117 {dimension_numbers = #tpu.dot_dimension_numbers<[2], [1], [1], [2], [0, 0, 0, 1, 1, 2], [0], [0]>} : vector<1x8x8xf32>, vector<1x8x128xf32>, vector<1x8x128xf32> -> vector<1x8x128xf32>
    "tpu.trace_stop"() : () -> ()
    %243 = vector.shape_cast %242 : vector<1x8x128xf32> to vector<8x128xf32>
    %c0_118 = arith.constant 0 : index
    %c128_119 = arith.constant 128 : index
    %244 = vector.load %arg19[%c0_118, %c128_119] : memref<8x256xf32, #tpu.memory_space<vmem>>, vector<8x128xf32>
    tpu.vector_store %arg19[%c0_118, %c128_119], %243 {strides = array<i32>} : memref<8x256xf32, #tpu.memory_space<vmem>>, vector<8x128xf32>,
    %c0_120 = arith.constant 0 : index
    %c0_121 = arith.constant 0 : index
    %245 = vector.load %arg19[%c0_120, %c0_121] : memref<8x256xf32, #tpu.memory_space<vmem>>, vector<8x256xf32>
    %c1_122 = arith.constant 1 : index
    %c0_123 = arith.constant 0 : index
    %c0_124 = arith.constant 0 : index
    %246 = vector.load %arg8[%c1_122, %c0_123, %c0_124] : memref<2x256x128xf32, #tpu.memory_space<vmem>>, vector<1x256x128xf32>
    %247 = vector.shape_cast %246 : vector<1x256x128xf32> to vector<256x128xf32>
    %cst_125 = arith.constant dense<0.000000e+00> : vector<8x128xf32>
    %248 = tpu.matmul %245, %247, %cst_125 {dimension_numbers = #tpu.dot_dimension_numbers<[1], [0], [0], [1], [0, 0, 1, 1], [], []>} : vector<8x256xf32>, vector<256x128xf32>, vector<8x128xf32> -> vector<8x128xf32>
    %c1_126 = arith.constant 1 : index
    %c0_127 = arith.constant 0 : index
    %c0_128 = arith.constant 0 : index
    %249 = vector.load %arg9[%c1_126, %c0_127, %c0_128] : memref<2x1x128xf32, #tpu.memory_space<vmem>>, vector<1x1x128xf32>
    %250 = vector.shape_cast %249 : vector<1x1x128xf32> to vector<1x128xf32>
    %251 = vector.broadcast %250 : vector<1x128xf32> to vector<8x128xf32>
    %252 = arith.addf %248, %251 : vector<8x128xf32>
    %253 = arith.addf %177, %252 : vector<8x128xf32>
    %c1_129 = arith.constant 1 : index
    %c0_130 = arith.constant 0 : index
    %c0_131 = arith.constant 0 : index
    %254 = vector.load %arg10[%c1_129, %c0_130, %c0_131] : memref<2x1x128xf32, #tpu.memory_space<vmem>>, vector<1x1x128xf32>
    %255 = vector.shape_cast %254 : vector<1x1x128xf32> to vector<1x128xf32>
    %c1_132 = arith.constant 1 : index
    %c0_133 = arith.constant 0 : index
    %c0_134 = arith.constant 0 : index
    %256 = vector.load %arg11[%c1_132, %c0_133, %c0_134] : memref<2x1x128xf32, #tpu.memory_space<vmem>>, vector<1x1x128xf32>
    %257 = vector.shape_cast %256 : vector<1x1x128xf32> to vector<1x128xf32>
    %cst_135 = arith.constant dense<0.000000e+00> : vector<8xf32>
    %258 = vector.multi_reduction <add>, %253, %cst_135 [1] : vector<8x128xf32> to vector<8xf32>
    %259 = vector.shape_cast %258 : vector<8xf32> to vector<8x1xf32>
    %cst_136 = arith.constant 3.125000e-02 : f32
    %260 = vector.broadcast %cst_136 : f32 to vector<8x1xf32>
    %261 = arith.mulf %259, %260 : vector<8x1xf32>
    %262 = vector.broadcast %261 : vector<8x1xf32> to vector<8x128xf32>
    %263 = arith.subf %253, %262 : vector<8x128xf32>
    %cst_137 = arith.constant 0.000000e+00 : f32
    %264 = vector.broadcast %cst_137 : f32 to vector<8x128xf32>
    %265 = arith.select %2, %263, %264 : vector<8x128xi1>, vector<8x128xf32>
    %266 = arith.mulf %265, %265 : vector<8x128xf32>
    %cst_138 = arith.constant dense<0.000000e+00> : vector<8xf32>
    %267 = vector.multi_reduction <add>, %266, %cst_138 [1] : vector<8x128xf32> to vector<8xf32>
    %268 = vector.shape_cast %267 : vector<8xf32> to vector<8x1xf32>
    %cst_139 = arith.constant 3.125000e-02 : f32
    %269 = vector.broadcast %cst_139 : f32 to vector<8x1xf32>
    %270 = arith.mulf %268, %269 : vector<8x1xf32>
    %cst_140 = arith.constant 9.99999993E-9 : f32
    %271 = vector.broadcast %cst_140 : f32 to vector<8x1xf32>
    %272 = arith.addf %270, %271 : vector<8x1xf32>
    %273 = math.rsqrt %272 : vector<8x1xf32>
    %274 = vector.broadcast %273 : vector<8x1xf32> to vector<8x128xf32>
    %275 = arith.mulf %265, %274 : vector<8x128xf32>
    %276 = vector.broadcast %255 : vector<1x128xf32> to vector<8x128xf32>
    %277 = arith.mulf %275, %276 : vector<8x128xf32>
    %278 = vector.broadcast %257 : vector<1x128xf32> to vector<8x128xf32>
    %279 = arith.addf %277, %278 : vector<8x128xf32>
    %c1_141 = arith.constant 1 : index
    %c0_142 = arith.constant 0 : index
    %c0_143 = arith.constant 0 : index
    %280 = vector.load %arg12[%c1_141, %c0_142, %c0_143] : memref<2x128x128xf32, #tpu.memory_space<vmem>>, vector<1x128x128xf32>
    %281 = vector.shape_cast %280 : vector<1x128x128xf32> to vector<128x128xf32>
    %cst_144 = arith.constant dense<0.000000e+00> : vector<8x128xf32>
    %282 = tpu.matmul %279, %281, %cst_144 {dimension_numbers = #tpu.dot_dimension_numbers<[1], [0], [0], [1], [0, 0, 1, 1], [], []>} : vector<8x128xf32>, vector<128x128xf32>, vector<8x128xf32> -> vector<8x128xf32>
    %c1_145 = arith.constant 1 : index
    %c0_146 = arith.constant 0 : index
    %c0_147 = arith.constant 0 : index
    %283 = vector.load %arg13[%c1_145, %c0_146, %c0_147] : memref<2x1x128xf32, #tpu.memory_space<vmem>>, vector<1x1x128xf32>
    %284 = vector.shape_cast %283 : vector<1x1x128xf32> to vector<1x128xf32>
    %285 = vector.broadcast %284 : vector<1x128xf32> to vector<8x128xf32>
    %286 = arith.addf %282, %285 : vector<8x128xf32>
    %cst_148 = arith.constant 0.000000e+00 : f32
    %287 = vector.broadcast %cst_148 : f32 to vector<8x128xf32>
    %288 = arith.maximumf %286, %287 : vector<8x128xf32>
    %c1_149 = arith.constant 1 : index
    %c0_150 = arith.constant 0 : index
    %c0_151 = arith.constant 0 : index
    %289 = vector.load %arg14[%c1_149, %c0_150, %c0_151] : memref<2x128x128xf32, #tpu.memory_space<vmem>>, vector<1x128x128xf32>
    %290 = vector.shape_cast %289 : vector<1x128x128xf32> to vector<128x128xf32>
    %cst_152 = arith.constant dense<0.000000e+00> : vector<8x128xf32>
    %291 = tpu.matmul %288, %290, %cst_152 {dimension_numbers = #tpu.dot_dimension_numbers<[1], [0], [0], [1], [0, 0, 1, 1], [], []>} : vector<8x128xf32>, vector<128x128xf32>, vector<8x128xf32> -> vector<8x128xf32>
    %c1_153 = arith.constant 1 : index
    %c0_154 = arith.constant 0 : index
    %c0_155 = arith.constant 0 : index
    %292 = vector.load %arg15[%c1_153, %c0_154, %c0_155] : memref<2x1x128xf32, #tpu.memory_space<vmem>>, vector<1x1x128xf32>
    %293 = vector.shape_cast %292 : vector<1x1x128xf32> to vector<1x128xf32>
    %294 = vector.broadcast %293 : vector<1x128xf32> to vector<8x128xf32>
    %295 = arith.addf %291, %294 : vector<8x128xf32>
    %296 = arith.addf %279, %295 : vector<8x128xf32>
    %c0_156 = arith.constant 0 : index
    %c0_157 = arith.constant 0 : index
    %c0_158 = arith.constant 0 : index
    %297 = vector.load %arg16[%c0_156, %c0_157, %c0_158] : memref<1x1x128xf32, #tpu.memory_space<vmem>>, vector<1x1x128xf32>
    %298 = vector.shape_cast %297 : vector<1x1x128xf32> to vector<1x128xf32>
    %c0_159 = arith.constant 0 : index
    %c0_160 = arith.constant 0 : index
    %c0_161 = arith.constant 0 : index
    %299 = vector.load %arg17[%c0_159, %c0_160, %c0_161] : memref<1x1x128xf32, #tpu.memory_space<vmem>>, vector<1x1x128xf32>
    %300 = vector.shape_cast %299 : vector<1x1x128xf32> to vector<1x128xf32>
    %cst_162 = arith.constant dense<0.000000e+00> : vector<8xf32>
    %301 = vector.multi_reduction <add>, %296, %cst_162 [1] : vector<8x128xf32> to vector<8xf32>
    %302 = vector.shape_cast %301 : vector<8xf32> to vector<8x1xf32>
    %cst_163 = arith.constant 3.125000e-02 : f32
    %303 = vector.broadcast %cst_163 : f32 to vector<8x1xf32>
    %304 = arith.mulf %302, %303 : vector<8x1xf32>
    %305 = vector.broadcast %304 : vector<8x1xf32> to vector<8x128xf32>
    %306 = arith.subf %296, %305 : vector<8x128xf32>
    %cst_164 = arith.constant 0.000000e+00 : f32
    %307 = vector.broadcast %cst_164 : f32 to vector<8x128xf32>
    %308 = arith.select %2, %306, %307 : vector<8x128xi1>, vector<8x128xf32>
    %309 = arith.mulf %308, %308 : vector<8x128xf32>
    %cst_165 = arith.constant dense<0.000000e+00> : vector<8xf32>
    %310 = vector.multi_reduction <add>, %309, %cst_165 [1] : vector<8x128xf32> to vector<8xf32>
    %311 = vector.shape_cast %310 : vector<8xf32> to vector<8x1xf32>
    %cst_166 = arith.constant 3.125000e-02 : f32
    %312 = vector.broadcast %cst_166 : f32 to vector<8x1xf32>
    %313 = arith.mulf %311, %312 : vector<8x1xf32>
    %cst_167 = arith.constant 9.99999993E-9 : f32
    %314 = vector.broadcast %cst_167 : f32 to vector<8x1xf32>
    %315 = arith.addf %313, %314 : vector<8x1xf32>
    %316 = math.rsqrt %315 : vector<8x1xf32>
    %317 = vector.broadcast %316 : vector<8x1xf32> to vector<8x128xf32>
    %318 = arith.mulf %308, %317 : vector<8x128xf32>
    %319 = vector.broadcast %298 : vector<1x128xf32> to vector<8x128xf32>
    %320 = arith.mulf %318, %319 : vector<8x128xf32>
    %321 = vector.broadcast %300 : vector<1x128xf32> to vector<8x128xf32>
    %322 = arith.addf %320, %321 : vector<8x128xf32>
    %c0_168 = arith.constant 0 : index
    %c0_169 = arith.constant 0 : index
    %323 = vector.load %arg18[%c0_168, %c0_169] : memref<8x128xf32, #tpu.memory_space<vmem>>, vector<8x128xf32>
    tpu.vector_store %arg18[%c0_168, %c0_169], %322 {strides = array<i32>} : memref<8x128xf32, #tpu.memory_space<vmem>>, vector<8x128xf32>,
    return
  }
  func.func @transform_0(%arg0: i32) -> (i32, i32) {
    %c0_i32 = arith.constant 0 : i32
    %c0_i32_0 = arith.constant 0 : i32
    return %arg0, %c0_i32 : i32, i32
  }
  func.func @transform_1(%arg0: i32) -> (i32, i32, i32) {
    %c0_i32 = arith.constant 0 : i32
    %c0_i32_0 = arith.constant 0 : i32
    %c0_i32_1 = arith.constant 0 : i32
    %c0_i32_2 = arith.constant 0 : i32
    return %c0_i32, %c0_i32_0, %c0_i32_1 : i32, i32, i32
  }
  func.func @transform_2(%arg0: i32) -> (i32, i32, i32) {
    %c0_i32 = arith.constant 0 : i32
    %c0_i32_0 = arith.constant 0 : i32
    %c0_i32_1 = arith.constant 0 : i32
    %c0_i32_2 = arith.constant 0 : i32
    return %c0_i32, %c0_i32_0, %c0_i32_1 : i32, i32, i32
  }
  func.func @transform_3(%arg0: i32) -> (i32, i32, i32) {
    %c0_i32 = arith.constant 0 : i32
    %c0_i32_0 = arith.constant 0 : i32
    %c0_i32_1 = arith.constant 0 : i32
    %c0_i32_2 = arith.constant 0 : i32
    return %c0_i32, %c0_i32_0, %c0_i32_1 : i32, i32, i32
  }
  func.func @transform_4(%arg0: i32) -> (i32, i32, i32) {
    %c0_i32 = arith.constant 0 : i32
    %c0_i32_0 = arith.constant 0 : i32
    %c0_i32_1 = arith.constant 0 : i32
    %c0_i32_2 = arith.constant 0 : i32
    return %c0_i32, %c0_i32_0, %c0_i32_1 : i32, i32, i32
  }
  func.func @transform_5(%arg0: i32) -> (i32, i32, i32) {
    %c0_i32 = arith.constant 0 : i32
    %c0_i32_0 = arith.constant 0 : i32
    %c0_i32_1 = arith.constant 0 : i32
    %c0_i32_2 = arith.constant 0 : i32
    return %c0_i32, %c0_i32_0, %c0_i32_1 : i32, i32, i32
  }
  func.func @transform_6(%arg0: i32) -> (i32, i32, i32) {
    %c0_i32 = arith.constant 0 : i32
    %c0_i32_0 = arith.constant 0 : i32
    %c0_i32_1 = arith.constant 0 : i32
    %c0_i32_2 = arith.constant 0 : i32
    return %c0_i32, %c0_i32_0, %c0_i32_1 : i32, i32, i32
  }
  func.func @transform_7(%arg0: i32) -> (i32, i32, i32) {
    %c0_i32 = arith.constant 0 : i32
    %c0_i32_0 = arith.constant 0 : i32
    %c0_i32_1 = arith.constant 0 : i32
    %c0_i32_2 = arith.constant 0 : i32
    return %c0_i32, %c0_i32_0, %c0_i32_1 : i32, i32, i32
  }
  func.func @transform_8(%arg0: i32) -> (i32, i32, i32) {
    %c0_i32 = arith.constant 0 : i32
    %c0_i32_0 = arith.constant 0 : i32
    %c0_i32_1 = arith.constant 0 : i32
    %c0_i32_2 = arith.constant 0 : i32
    return %c0_i32, %c0_i32_0, %c0_i32_1 : i32, i32, i32
  }
  func.func @transform_9(%arg0: i32) -> (i32, i32, i32) {
    %c0_i32 = arith.constant 0 : i32
    %c0_i32_0 = arith.constant 0 : i32
    %c0_i32_1 = arith.constant 0 : i32
    %c0_i32_2 = arith.constant 0 : i32
    return %c0_i32, %c0_i32_0, %c0_i32_1 : i32, i32, i32
  }
  func.func @transform_10(%arg0: i32) -> (i32, i32, i32) {
    %c0_i32 = arith.constant 0 : i32
    %c0_i32_0 = arith.constant 0 : i32
    %c0_i32_1 = arith.constant 0 : i32
    %c0_i32_2 = arith.constant 0 : i32
    return %c0_i32, %c0_i32_0, %c0_i32_1 : i32, i32, i32
  }
  func.func @transform_11(%arg0: i32) -> (i32, i32, i32) {
    %c0_i32 = arith.constant 0 : i32
    %c0_i32_0 = arith.constant 0 : i32
    %c0_i32_1 = arith.constant 0 : i32
    %c0_i32_2 = arith.constant 0 : i32
    return %c0_i32, %c0_i32_0, %c0_i32_1 : i32, i32, i32
  }
  func.func @transform_12(%arg0: i32) -> (i32, i32, i32) {
    %c0_i32 = arith.constant 0 : i32
    %c0_i32_0 = arith.constant 0 : i32
    %c0_i32_1 = arith.constant 0 : i32
    %c0_i32_2 = arith.constant 0 : i32
    return %c0_i32, %c0_i32_0, %c0_i32_1 : i32, i32, i32
  }
  func.func @transform_13(%arg0: i32) -> (i32, i32, i32) {
    %c0_i32 = arith.constant 0 : i32
    %c0_i32_0 = arith.constant 0 : i32
    %c0_i32_1 = arith.constant 0 : i32
    %c0_i32_2 = arith.constant 0 : i32
    return %c0_i32, %c0_i32_0, %c0_i32_1 : i32, i32, i32
  }
  func.func @transform_14(%arg0: i32) -> (i32, i32, i32) {
    %c0_i32 = arith.constant 0 : i32
    %c0_i32_0 = arith.constant 0 : i32
    %c0_i32_1 = arith.constant 0 : i32
    %c0_i32_2 = arith.constant 0 : i32
    return %c0_i32, %c0_i32_0, %c0_i32_1 : i32, i32, i32
  }
  func.func @transform_15(%arg0: i32) -> (i32, i32, i32) {
    %c0_i32 = arith.constant 0 : i32
    %c0_i32_0 = arith.constant 0 : i32
    %c0_i32_1 = arith.constant 0 : i32
    %c0_i32_2 = arith.constant 0 : i32
    return %c0_i32, %c0_i32_0, %c0_i32_1 : i32, i32, i32
  }
  func.func @transform_16(%arg0: i32) -> (i32, i32, i32) {
    %c0_i32 = arith.constant 0 : i32
    %c0_i32_0 = arith.constant 0 : i32
    %c0_i32_1 = arith.constant 0 : i32
    %c0_i32_2 = arith.constant 0 : i32
    return %c0_i32, %c0_i32_0, %c0_i32_1 : i32, i32, i32
  }
  func.func @transform_17(%arg0: i32) -> (i32, i32) {
    %c0_i32 = arith.constant 0 : i32
    %c0_i32_0 = arith.constant 0 : i32
    return %arg0, %c0_i32 : i32, i32
  }
}

module attributes {stable_mosaic.version = 11 : i64} {
  func.func @sasrec_fused_kernel(%arg0: i32, %arg1: memref<8x128xf32, #tpu.memory_space<vmem>>, %arg2: memref<2x1x128xf32, #tpu.memory_space<vmem>>, %arg3: memref<2x1x128xf32, #tpu.memory_space<vmem>>, %arg4: memref<2x128x256xf32, #tpu.memory_space<vmem>>, %arg5: memref<2x1x256xf32, #tpu.memory_space<vmem>>, %arg6: memref<2x128x512xf32, #tpu.memory_space<vmem>>, %arg7: memref<2x1x512xf32, #tpu.memory_space<vmem>>, %arg8: memref<2x256x128xf32, #tpu.memory_space<vmem>>, %arg9: memref<2x1x128xf32, #tpu.memory_space<vmem>>, %arg10: memref<2x1x128xf32, #tpu.memory_space<vmem>>, %arg11: memref<2x1x128xf32, #tpu.memory_space<vmem>>, %arg12: memref<2x128x128xf32, #tpu.memory_space<vmem>>, %arg13: memref<2x1x128xf32, #tpu.memory_space<vmem>>, %arg14: memref<2x128x128xf32, #tpu.memory_space<vmem>>, %arg15: memref<2x1x128xf32, #tpu.memory_space<vmem>>, %arg16: memref<1x1x128xf32, #tpu.memory_space<vmem>>, %arg17: memref<1x1x128xf32, #tpu.memory_space<vmem>>, %arg18: memref<8x128xf32, #tpu.memory_space<vmem>>, %arg19: memref<8x256xf32, #tpu.memory_space<vmem>>) attributes {dimension_semantics = [#tpu.dimension_semantics<parallel>], iteration_bounds = array<i64: 2>, scalar_prefetch = 0 : i64, scratch_operands = 1 : i64, tpu.core_type = #tpu.core_type<tc>, window_params = [{transform_indices = @transform_0, window_bounds = array<i64: 8, 128>}, {pipeline_mode = #tpu.pipeline_mode<synchronous>, transform_indices = @transform_1, window_bounds = array<i64: 2, 1, 128>}, {pipeline_mode = #tpu.pipeline_mode<synchronous>, transform_indices = @transform_2, window_bounds = array<i64: 2, 1, 128>}, {pipeline_mode = #tpu.pipeline_mode<synchronous>, transform_indices = @transform_3, window_bounds = array<i64: 2, 128, 256>}, {pipeline_mode = #tpu.pipeline_mode<synchronous>, transform_indices = @transform_4, window_bounds = array<i64: 2, 1, 256>}, {pipeline_mode = #tpu.pipeline_mode<synchronous>, transform_indices = @transform_5, window_bounds = array<i64: 2, 128, 512>}, {pipeline_mode = #tpu.pipeline_mode<synchronous>, transform_indices = @transform_6, window_bounds = array<i64: 2, 1, 512>}, {pipeline_mode = #tpu.pipeline_mode<synchronous>, transform_indices = @transform_7, window_bounds = array<i64: 2, 256, 128>}, {pipeline_mode = #tpu.pipeline_mode<synchronous>, transform_indices = @transform_8, window_bounds = array<i64: 2, 1, 128>}, {pipeline_mode = #tpu.pipeline_mode<synchronous>, transform_indices = @transform_9, window_bounds = array<i64: 2, 1, 128>}, {pipeline_mode = #tpu.pipeline_mode<synchronous>, transform_indices = @transform_10, window_bounds = array<i64: 2, 1, 128>}, {pipeline_mode = #tpu.pipeline_mode<synchronous>, transform_indices = @transform_11, window_bounds = array<i64: 2, 128, 128>}, {pipeline_mode = #tpu.pipeline_mode<synchronous>, transform_indices = @transform_12, window_bounds = array<i64: 2, 1, 128>}, {pipeline_mode = #tpu.pipeline_mode<synchronous>, transform_indices = @transform_13, window_bounds = array<i64: 2, 128, 128>}, {pipeline_mode = #tpu.pipeline_mode<synchronous>, transform_indices = @transform_14, window_bounds = array<i64: 2, 1, 128>}, {pipeline_mode = #tpu.pipeline_mode<synchronous>, transform_indices = @transform_15, window_bounds = array<i64: 1, 1, 128>}, {pipeline_mode = #tpu.pipeline_mode<synchronous>, transform_indices = @transform_16, window_bounds = array<i64: 1, 1, 128>}, {transform_indices = @transform_17, window_bounds = array<i64: 8, 128>}]} {
    %0 = tpu.iota {dimensions = array<i32: 1>} : vector<8x128xi32>
    %c32_i32 = arith.constant 32 : i32
    %1 = vector.broadcast %c32_i32 : i32 to vector<8x128xi32>
    %2 = arith.cmpi slt, %0, %1 : vector<8x128xi32>
    %3 = tpu.iota {dimensions = array<i32: 1>} : vector<1x8x8xi32>
    %4 = tpu.iota {dimensions = array<i32: 2>} : vector<1x8x8xi32>
    %5 = arith.cmpi sle, %4, %3 : vector<1x8x8xi32>
    %c0 = arith.constant 0 : index
    %c0_0 = arith.constant 0 : index
    %6 = vector.load %arg1[%c0, %c0_0] : memref<8x128xf32, #tpu.memory_space<vmem>>, vector<8x128xf32>
    %c0_1 = arith.constant 0 : index
    %c0_2 = arith.constant 0 : index
    %c0_3 = arith.constant 0 : index
    %7 = vector.load %arg2[%c0_1, %c0_2, %c0_3] : memref<2x1x128xf32, #tpu.memory_space<vmem>>, vector<1x1x128xf32>
    %8 = vector.shape_cast %7 : vector<1x1x128xf32> to vector<1x128xf32>
    %c0_4 = arith.constant 0 : index
    %c0_5 = arith.constant 0 : index
    %c0_6 = arith.constant 0 : index
    %9 = vector.load %arg3[%c0_4, %c0_5, %c0_6] : memref<2x1x128xf32, #tpu.memory_space<vmem>>, vector<1x1x128xf32>
    %10 = vector.shape_cast %9 : vector<1x1x128xf32> to vector<1x128xf32>
    %cst = arith.constant dense<0.000000e+00> : vector<8xf32>
    %11 = vector.multi_reduction <add>, %6, %cst [1] : vector<8x128xf32> to vector<8xf32>
    %12 = vector.shape_cast %11 : vector<8xf32> to vector<8x1xf32>
    %cst_7 = arith.constant 3.125000e-02 : f32
    %13 = vector.broadcast %cst_7 : f32 to vector<8x1xf32>
    %14 = arith.mulf %12, %13 : vector<8x1xf32>
    %15 = vector.broadcast %14 : vector<8x1xf32> to vector<8x128xf32>
    %16 = arith.subf %6, %15 : vector<8x128xf32>
    %cst_8 = arith.constant 0.000000e+00 : f32
    %17 = vector.broadcast %cst_8 : f32 to vector<8x128xf32>
    %18 = arith.select %2, %16, %17 : vector<8x128xi1>, vector<8x128xf32>
    %19 = arith.mulf %18, %18 : vector<8x128xf32>
    %cst_9 = arith.constant dense<0.000000e+00> : vector<8xf32>
    %20 = vector.multi_reduction <add>, %19, %cst_9 [1] : vector<8x128xf32> to vector<8xf32>
    %21 = vector.shape_cast %20 : vector<8xf32> to vector<8x1xf32>
    %cst_10 = arith.constant 3.125000e-02 : f32
    %22 = vector.broadcast %cst_10 : f32 to vector<8x1xf32>
    %23 = arith.mulf %21, %22 : vector<8x1xf32>
    %cst_11 = arith.constant 9.99999993E-9 : f32
    %24 = vector.broadcast %cst_11 : f32 to vector<8x1xf32>
    %25 = arith.addf %23, %24 : vector<8x1xf32>
    %26 = math.rsqrt %25 : vector<8x1xf32>
    %27 = vector.broadcast %26 : vector<8x1xf32> to vector<8x128xf32>
    %28 = arith.mulf %18, %27 : vector<8x128xf32>
    %29 = vector.broadcast %8 : vector<1x128xf32> to vector<8x128xf32>
    %30 = arith.mulf %28, %29 : vector<8x128xf32>
    %31 = vector.broadcast %10 : vector<1x128xf32> to vector<8x128xf32>
    %32 = arith.addf %30, %31 : vector<8x128xf32>
    %c0_12 = arith.constant 0 : index
    %c0_13 = arith.constant 0 : index
    %c0_14 = arith.constant 0 : index
    %33 = vector.load %arg4[%c0_12, %c0_13, %c0_14] : memref<2x128x256xf32, #tpu.memory_space<vmem>>, vector<1x128x256xf32>
    %34 = vector.shape_cast %33 : vector<1x128x256xf32> to vector<128x256xf32>
    %cst_15 = arith.constant dense<0.000000e+00> : vector<8x256xf32>
    %35 = tpu.matmul %32, %34, %cst_15 {dimension_numbers = #tpu.dot_dimension_numbers<[1], [0], [0], [1], [0, 0, 1, 1], [], []>} : vector<8x128xf32>, vector<128x256xf32>, vector<8x256xf32> -> vector<8x256xf32>
    %c0_16 = arith.constant 0 : index
    %c0_17 = arith.constant 0 : index
    %c0_18 = arith.constant 0 : index
    %36 = vector.load %arg5[%c0_16, %c0_17, %c0_18] : memref<2x1x256xf32, #tpu.memory_space<vmem>>, vector<1x1x256xf32>
    %37 = vector.shape_cast %36 : vector<1x1x256xf32> to vector<1x256xf32>
    %38 = vector.broadcast %37 : vector<1x256xf32> to vector<8x256xf32>
    %39 = arith.addf %35, %38 : vector<8x256xf32>
    %c0_19 = arith.constant 0 : index
    %c0_20 = arith.constant 0 : index
    %c0_21 = arith.constant 0 : index
    %40 = vector.load %arg6[%c0_19, %c0_20, %c0_21] : memref<2x128x512xf32, #tpu.memory_space<vmem>>, vector<1x128x512xf32>
    %41 = vector.shape_cast %40 : vector<1x128x512xf32> to vector<128x512xf32>
    %cst_22 = arith.constant dense<0.000000e+00> : vector<8x512xf32>
    %42 = tpu.matmul %6, %41, %cst_22 {dimension_numbers = #tpu.dot_dimension_numbers<[1], [0], [0], [1], [0, 0, 1, 1], [], []>} : vector<8x128xf32>, vector<128x512xf32>, vector<8x512xf32> -> vector<8x512xf32>
    %c0_23 = arith.constant 0 : index
    %c0_24 = arith.constant 0 : index
    %c0_25 = arith.constant 0 : index
    %43 = vector.load %arg7[%c0_23, %c0_24, %c0_25] : memref<2x1x512xf32, #tpu.memory_space<vmem>>, vector<1x1x512xf32>
    %44 = vector.shape_cast %43 : vector<1x1x512xf32> to vector<1x512xf32>
    %45 = vector.broadcast %44 : vector<1x512xf32> to vector<8x512xf32>
    %46 = arith.addf %42, %45 : vector<8x512xf32>
    %cst_26 = arith.constant 2.500000e-01 : f32
    %47 = vector.broadcast %cst_26 : f32 to vector<8x256xf32>
    %48 = arith.mulf %39, %47 : vector<8x256xf32>
    %49 = vector.shape_cast %48 : vector<8x256xf32> to vector<1x8x256xf32>
    %50 = vector.extract_strided_slice %46 {offsets = [0, 0], sizes = [8, 256], strides = [1, 1]} : vector<8x512xf32> to vector<8x256xf32>
    %51 = vector.shape_cast %50 : vector<8x256xf32> to vector<1x8x256xf32>
    %52 = vector.extract_strided_slice %46 {offsets = [0, 256], sizes = [8, 256], strides = [1, 1]} : vector<8x512xf32> to vector<8x256xf32>
    %53 = vector.shape_cast %52 : vector<8x256xf32> to vector<1x8x256xf32>
    %54 = vector.extract_strided_slice %49 {offsets = [0, 0, 0], sizes = [1, 8, 128], strides = [1, 1, 1]} : vector<1x8x256xf32> to vector<1x8x128xf32>
    %55 = vector.extract_strided_slice %51 {offsets = [0, 0, 0], sizes = [1, 8, 128], strides = [1, 1, 1]} : vector<1x8x256xf32> to vector<1x8x128xf32>
    "tpu.trace_start"() <{level = 10 : i32, message = "btd,bsd->bts"}> : () -> ()
    %cst_27 = arith.constant dense<0.000000e+00> : vector<1x8x8xf32>
    %56 = tpu.matmul %54, %55, %cst_27 {dimension_numbers = #tpu.dot_dimension_numbers<[2], [2], [1], [1], [0, 0, 0, 1, 1, 1], [0], [0]>} : vector<1x8x128xf32>, vector<1x8x128xf32>, vector<1x8x8xf32> -> vector<1x8x8xf32>
    %cst_28 = arith.constant -1.000000e+30 : f32
    "tpu.trace_stop"() : () -> ()
    %57 = vector.broadcast %cst_28 : f32 to vector<1x8x8xf32>
    %58 = arith.select %5, %56, %57 : vector<1x8x8xi1>, vector<1x8x8xf32>
    %cst_29 = arith.constant dense<0xFF800000> : vector<1x8xf32>
    %59 = vector.multi_reduction <maximumf>, %58, %cst_29 [2] : vector<1x8x8xf32> to vector<1x8xf32>
    %60 = vector.shape_cast %59 : vector<1x8xf32> to vector<1x8x1xf32>
    %61 = vector.broadcast %60 : vector<1x8x1xf32> to vector<1x8x8xf32>
    %62 = arith.subf %58, %61 : vector<1x8x8xf32>
    %63 = math.exp %62 : vector<1x8x8xf32>
    %cst_30 = arith.constant dense<0.000000e+00> : vector<1x8xf32>
    %64 = vector.multi_reduction <add>, %63, %cst_30 [2] : vector<1x8x8xf32> to vector<1x8xf32>
    %65 = vector.shape_cast %64 : vector<1x8xf32> to vector<1x8x1xf32>
    %66 = tpu.reciprocal %65 {approx = true} : vector<1x8x1xf32> -> vector<1x8x1xf32>
    %67 = arith.mulf %65, %66 : vector<1x8x1xf32>
    %cst_31 = arith.constant 2.000000e+00 : f32
    %68 = vector.broadcast %cst_31 : f32 to vector<1x8x1xf32>
    %69 = arith.subf %68, %67 : vector<1x8x1xf32>
    %70 = arith.mulf %66, %69 : vector<1x8x1xf32>
    %71 = vector.broadcast %70 : vector<1x8x1xf32> to vector<1x8x8xf32>
    %72 = arith.mulf %63, %71 : vector<1x8x8xf32>
    %73 = vector.extract_strided_slice %53 {offsets = [0, 0, 0], sizes = [1, 8, 128], strides = [1, 1, 1]} : vector<1x8x256xf32> to vector<1x8x128xf32>
    "tpu.trace_start"() <{level = 10 : i32, message = "bts,bsd->btd"}> : () -> ()
    %cst_32 = arith.constant dense<0.000000e+00> : vector<1x8x128xf32>
    %74 = tpu.matmul %72, %73, %cst_32 {dimension_numbers = #tpu.dot_dimension_numbers<[2], [1], [1], [2], [0, 0, 0, 1, 1, 2], [0], [0]>} : vector<1x8x8xf32>, vector<1x8x128xf32>, vector<1x8x128xf32> -> vector<1x8x128xf32>
    "tpu.trace_stop"() : () -> ()
    %75 = vector.shape_cast %74 : vector<1x8x128xf32> to vector<8x128xf32>
    %c0_33 = arith.constant 0 : index
    %c0_34 = arith.constant 0 : index
    %76 = vector.load %arg19[%c0_33, %c0_34] : memref<8x256xf32, #tpu.memory_space<vmem>>, vector<8x128xf32>
    tpu.vector_store %arg19[%c0_33, %c0_34], %75 {strides = array<i32>} : memref<8x256xf32, #tpu.memory_space<vmem>>, vector<8x128xf32>,
    %77 = vector.extract_strided_slice %49 {offsets = [0, 0, 128], sizes = [1, 8, 128], strides = [1, 1, 1]} : vector<1x8x256xf32> to vector<1x8x128xf32>
    %78 = vector.extract_strided_slice %51 {offsets = [0, 0, 128], sizes = [1, 8, 128], strides = [1, 1, 1]} : vector<1x8x256xf32> to vector<1x8x128xf32>
    "tpu.trace_start"() <{level = 10 : i32, message = "btd,bsd->bts"}> : () -> ()
    %cst_35 = arith.constant dense<0.000000e+00> : vector<1x8x8xf32>
    %79 = tpu.matmul %77, %78, %cst_35 {dimension_numbers = #tpu.dot_dimension_numbers<[2], [2], [1], [1], [0, 0, 0, 1, 1, 1], [0], [0]>} : vector<1x8x128xf32>, vector<1x8x128xf32>, vector<1x8x8xf32> -> vector<1x8x8xf32>
    %cst_36 = arith.constant -1.000000e+30 : f32
    "tpu.trace_stop"() : () -> ()
    %80 = vector.broadcast %cst_36 : f32 to vector<1x8x8xf32>
    %81 = arith.select %5, %79, %80 : vector<1x8x8xi1>, vector<1x8x8xf32>
    %cst_37 = arith.constant dense<0xFF800000> : vector<1x8xf32>
    %82 = vector.multi_reduction <maximumf>, %81, %cst_37 [2] : vector<1x8x8xf32> to vector<1x8xf32>
    %83 = vector.shape_cast %82 : vector<1x8xf32> to vector<1x8x1xf32>
    %84 = vector.broadcast %83 : vector<1x8x1xf32> to vector<1x8x8xf32>
    %85 = arith.subf %81, %84 : vector<1x8x8xf32>
    %86 = math.exp %85 : vector<1x8x8xf32>
    %cst_38 = arith.constant dense<0.000000e+00> : vector<1x8xf32>
    %87 = vector.multi_reduction <add>, %86, %cst_38 [2] : vector<1x8x8xf32> to vector<1x8xf32>
    %88 = vector.shape_cast %87 : vector<1x8xf32> to vector<1x8x1xf32>
    %89 = tpu.reciprocal %88 {approx = true} : vector<1x8x1xf32> -> vector<1x8x1xf32>
    %90 = arith.mulf %88, %89 : vector<1x8x1xf32>
    %cst_39 = arith.constant 2.000000e+00 : f32
    %91 = vector.broadcast %cst_39 : f32 to vector<1x8x1xf32>
    %92 = arith.subf %91, %90 : vector<1x8x1xf32>
    %93 = arith.mulf %89, %92 : vector<1x8x1xf32>
    %94 = vector.broadcast %93 : vector<1x8x1xf32> to vector<1x8x8xf32>
    %95 = arith.mulf %86, %94 : vector<1x8x8xf32>
    %96 = vector.extract_strided_slice %53 {offsets = [0, 0, 128], sizes = [1, 8, 128], strides = [1, 1, 1]} : vector<1x8x256xf32> to vector<1x8x128xf32>
    "tpu.trace_start"() <{level = 10 : i32, message = "bts,bsd->btd"}> : () -> ()
    %cst_40 = arith.constant dense<0.000000e+00> : vector<1x8x128xf32>
    %97 = tpu.matmul %95, %96, %cst_40 {dimension_numbers = #tpu.dot_dimension_numbers<[2], [1], [1], [2], [0, 0, 0, 1, 1, 2], [0], [0]>} : vector<1x8x8xf32>, vector<1x8x128xf32>, vector<1x8x128xf32> -> vector<1x8x128xf32>
    "tpu.trace_stop"() : () -> ()
    %98 = vector.shape_cast %97 : vector<1x8x128xf32> to vector<8x128xf32>
    %c0_41 = arith.constant 0 : index
    %c128 = arith.constant 128 : index
    %99 = vector.load %arg19[%c0_41, %c128] : memref<8x256xf32, #tpu.memory_space<vmem>>, vector<8x128xf32>
    tpu.vector_store %arg19[%c0_41, %c128], %98 {strides = array<i32>} : memref<8x256xf32, #tpu.memory_space<vmem>>, vector<8x128xf32>,
    %c0_42 = arith.constant 0 : index
    %c0_43 = arith.constant 0 : index
    %100 = vector.load %arg19[%c0_42, %c0_43] : memref<8x256xf32, #tpu.memory_space<vmem>>, vector<8x256xf32>
    %c0_44 = arith.constant 0 : index
    %c0_45 = arith.constant 0 : index
    %c0_46 = arith.constant 0 : index
    %101 = vector.load %arg8[%c0_44, %c0_45, %c0_46] : memref<2x256x128xf32, #tpu.memory_space<vmem>>, vector<1x256x128xf32>
    %102 = vector.shape_cast %101 : vector<1x256x128xf32> to vector<256x128xf32>
    %cst_47 = arith.constant dense<0.000000e+00> : vector<8x128xf32>
    %103 = tpu.matmul %100, %102, %cst_47 {dimension_numbers = #tpu.dot_dimension_numbers<[1], [0], [0], [1], [0, 0, 1, 1], [], []>} : vector<8x256xf32>, vector<256x128xf32>, vector<8x128xf32> -> vector<8x128xf32>
    %c0_48 = arith.constant 0 : index
    %c0_49 = arith.constant 0 : index
    %c0_50 = arith.constant 0 : index
    %104 = vector.load %arg9[%c0_48, %c0_49, %c0_50] : memref<2x1x128xf32, #tpu.memory_space<vmem>>, vector<1x1x128xf32>
    %105 = vector.shape_cast %104 : vector<1x1x128xf32> to vector<1x128xf32>
    %106 = vector.broadcast %105 : vector<1x128xf32> to vector<8x128xf32>
    %107 = arith.addf %103, %106 : vector<8x128xf32>
    %108 = arith.addf %32, %107 : vector<8x128xf32>
    %c0_51 = arith.constant 0 : index
    %c0_52 = arith.constant 0 : index
    %c0_53 = arith.constant 0 : index
    %109 = vector.load %arg10[%c0_51, %c0_52, %c0_53] : memref<2x1x128xf32, #tpu.memory_space<vmem>>, vector<1x1x128xf32>
    %110 = vector.shape_cast %109 : vector<1x1x128xf32> to vector<1x128xf32>
    %c0_54 = arith.constant 0 : index
    %c0_55 = arith.constant 0 : index
    %c0_56 = arith.constant 0 : index
    %111 = vector.load %arg11[%c0_54, %c0_55, %c0_56] : memref<2x1x128xf32, #tpu.memory_space<vmem>>, vector<1x1x128xf32>
    %112 = vector.shape_cast %111 : vector<1x1x128xf32> to vector<1x128xf32>
    %cst_57 = arith.constant dense<0.000000e+00> : vector<8xf32>
    %113 = vector.multi_reduction <add>, %108, %cst_57 [1] : vector<8x128xf32> to vector<8xf32>
    %114 = vector.shape_cast %113 : vector<8xf32> to vector<8x1xf32>
    %cst_58 = arith.constant 3.125000e-02 : f32
    %115 = vector.broadcast %cst_58 : f32 to vector<8x1xf32>
    %116 = arith.mulf %114, %115 : vector<8x1xf32>
    %117 = vector.broadcast %116 : vector<8x1xf32> to vector<8x128xf32>
    %118 = arith.subf %108, %117 : vector<8x128xf32>
    %cst_59 = arith.constant 0.000000e+00 : f32
    %119 = vector.broadcast %cst_59 : f32 to vector<8x128xf32>
    %120 = arith.select %2, %118, %119 : vector<8x128xi1>, vector<8x128xf32>
    %121 = arith.mulf %120, %120 : vector<8x128xf32>
    %cst_60 = arith.constant dense<0.000000e+00> : vector<8xf32>
    %122 = vector.multi_reduction <add>, %121, %cst_60 [1] : vector<8x128xf32> to vector<8xf32>
    %123 = vector.shape_cast %122 : vector<8xf32> to vector<8x1xf32>
    %cst_61 = arith.constant 3.125000e-02 : f32
    %124 = vector.broadcast %cst_61 : f32 to vector<8x1xf32>
    %125 = arith.mulf %123, %124 : vector<8x1xf32>
    %cst_62 = arith.constant 9.99999993E-9 : f32
    %126 = vector.broadcast %cst_62 : f32 to vector<8x1xf32>
    %127 = arith.addf %125, %126 : vector<8x1xf32>
    %128 = math.rsqrt %127 : vector<8x1xf32>
    %129 = vector.broadcast %128 : vector<8x1xf32> to vector<8x128xf32>
    %130 = arith.mulf %120, %129 : vector<8x128xf32>
    %131 = vector.broadcast %110 : vector<1x128xf32> to vector<8x128xf32>
    %132 = arith.mulf %130, %131 : vector<8x128xf32>
    %133 = vector.broadcast %112 : vector<1x128xf32> to vector<8x128xf32>
    %134 = arith.addf %132, %133 : vector<8x128xf32>
    %c0_63 = arith.constant 0 : index
    %c0_64 = arith.constant 0 : index
    %c0_65 = arith.constant 0 : index
    %135 = vector.load %arg12[%c0_63, %c0_64, %c0_65] : memref<2x128x128xf32, #tpu.memory_space<vmem>>, vector<1x128x128xf32>
    %136 = vector.shape_cast %135 : vector<1x128x128xf32> to vector<128x128xf32>
    %cst_66 = arith.constant dense<0.000000e+00> : vector<8x128xf32>
    %137 = tpu.matmul %134, %136, %cst_66 {dimension_numbers = #tpu.dot_dimension_numbers<[1], [0], [0], [1], [0, 0, 1, 1], [], []>} : vector<8x128xf32>, vector<128x128xf32>, vector<8x128xf32> -> vector<8x128xf32>
    %c0_67 = arith.constant 0 : index
    %c0_68 = arith.constant 0 : index
    %c0_69 = arith.constant 0 : index
    %138 = vector.load %arg13[%c0_67, %c0_68, %c0_69] : memref<2x1x128xf32, #tpu.memory_space<vmem>>, vector<1x1x128xf32>
    %139 = vector.shape_cast %138 : vector<1x1x128xf32> to vector<1x128xf32>
    %140 = vector.broadcast %139 : vector<1x128xf32> to vector<8x128xf32>
    %141 = arith.addf %137, %140 : vector<8x128xf32>
    %cst_70 = arith.constant 0.000000e+00 : f32
    %142 = vector.broadcast %cst_70 : f32 to vector<8x128xf32>
    %143 = arith.maximumf %141, %142 : vector<8x128xf32>
    %c0_71 = arith.constant 0 : index
    %c0_72 = arith.constant 0 : index
    %c0_73 = arith.constant 0 : index
    %144 = vector.load %arg14[%c0_71, %c0_72, %c0_73] : memref<2x128x128xf32, #tpu.memory_space<vmem>>, vector<1x128x128xf32>
    %145 = vector.shape_cast %144 : vector<1x128x128xf32> to vector<128x128xf32>
    %cst_74 = arith.constant dense<0.000000e+00> : vector<8x128xf32>
    %146 = tpu.matmul %143, %145, %cst_74 {dimension_numbers = #tpu.dot_dimension_numbers<[1], [0], [0], [1], [0, 0, 1, 1], [], []>} : vector<8x128xf32>, vector<128x128xf32>, vector<8x128xf32> -> vector<8x128xf32>
    %c0_75 = arith.constant 0 : index
    %c0_76 = arith.constant 0 : index
    %c0_77 = arith.constant 0 : index
    %147 = vector.load %arg15[%c0_75, %c0_76, %c0_77] : memref<2x1x128xf32, #tpu.memory_space<vmem>>, vector<1x1x128xf32>
    %148 = vector.shape_cast %147 : vector<1x1x128xf32> to vector<1x128xf32>
    %149 = vector.broadcast %148 : vector<1x128xf32> to vector<8x128xf32>
    %150 = arith.addf %146, %149 : vector<8x128xf32>
    %151 = arith.addf %134, %150 : vector<8x128xf32>
    %c1 = arith.constant 1 : index
    %c0_78 = arith.constant 0 : index
    %c0_79 = arith.constant 0 : index
    %152 = vector.load %arg2[%c1, %c0_78, %c0_79] : memref<2x1x128xf32, #tpu.memory_space<vmem>>, vector<1x1x128xf32>
    %153 = vector.shape_cast %152 : vector<1x1x128xf32> to vector<1x128xf32>
    %c1_80 = arith.constant 1 : index
    %c0_81 = arith.constant 0 : index
    %c0_82 = arith.constant 0 : index
    %154 = vector.load %arg3[%c1_80, %c0_81, %c0_82] : memref<2x1x128xf32, #tpu.memory_space<vmem>>, vector<1x1x128xf32>
    %155 = vector.shape_cast %154 : vector<1x1x128xf32> to vector<1x128xf32>
    %cst_83 = arith.constant dense<0.000000e+00> : vector<8xf32>
    %156 = vector.multi_reduction <add>, %151, %cst_83 [1] : vector<8x128xf32> to vector<8xf32>
    %157 = vector.shape_cast %156 : vector<8xf32> to vector<8x1xf32>
    %cst_84 = arith.constant 3.125000e-02 : f32
    %158 = vector.broadcast %cst_84 : f32 to vector<8x1xf32>
    %159 = arith.mulf %157, %158 : vector<8x1xf32>
    %160 = vector.broadcast %159 : vector<8x1xf32> to vector<8x128xf32>
    %161 = arith.subf %151, %160 : vector<8x128xf32>
    %cst_85 = arith.constant 0.000000e+00 : f32
    %162 = vector.broadcast %cst_85 : f32 to vector<8x128xf32>
    %163 = arith.select %2, %161, %162 : vector<8x128xi1>, vector<8x128xf32>
    %164 = arith.mulf %163, %163 : vector<8x128xf32>
    %cst_86 = arith.constant dense<0.000000e+00> : vector<8xf32>
    %165 = vector.multi_reduction <add>, %164, %cst_86 [1] : vector<8x128xf32> to vector<8xf32>
    %166 = vector.shape_cast %165 : vector<8xf32> to vector<8x1xf32>
    %cst_87 = arith.constant 3.125000e-02 : f32
    %167 = vector.broadcast %cst_87 : f32 to vector<8x1xf32>
    %168 = arith.mulf %166, %167 : vector<8x1xf32>
    %cst_88 = arith.constant 9.99999993E-9 : f32
    %169 = vector.broadcast %cst_88 : f32 to vector<8x1xf32>
    %170 = arith.addf %168, %169 : vector<8x1xf32>
    %171 = math.rsqrt %170 : vector<8x1xf32>
    %172 = vector.broadcast %171 : vector<8x1xf32> to vector<8x128xf32>
    %173 = arith.mulf %163, %172 : vector<8x128xf32>
    %174 = vector.broadcast %153 : vector<1x128xf32> to vector<8x128xf32>
    %175 = arith.mulf %173, %174 : vector<8x128xf32>
    %176 = vector.broadcast %155 : vector<1x128xf32> to vector<8x128xf32>
    %177 = arith.addf %175, %176 : vector<8x128xf32>
    %c1_89 = arith.constant 1 : index
    %c0_90 = arith.constant 0 : index
    %c0_91 = arith.constant 0 : index
    %178 = vector.load %arg4[%c1_89, %c0_90, %c0_91] : memref<2x128x256xf32, #tpu.memory_space<vmem>>, vector<1x128x256xf32>
    %179 = vector.shape_cast %178 : vector<1x128x256xf32> to vector<128x256xf32>
    %cst_92 = arith.constant dense<0.000000e+00> : vector<8x256xf32>
    %180 = tpu.matmul %177, %179, %cst_92 {dimension_numbers = #tpu.dot_dimension_numbers<[1], [0], [0], [1], [0, 0, 1, 1], [], []>} : vector<8x128xf32>, vector<128x256xf32>, vector<8x256xf32> -> vector<8x256xf32>
    %c1_93 = arith.constant 1 : index
    %c0_94 = arith.constant 0 : index
    %c0_95 = arith.constant 0 : index
    %181 = vector.load %arg5[%c1_93, %c0_94, %c0_95] : memref<2x1x256xf32, #tpu.memory_space<vmem>>, vector<1x1x256xf32>
    %182 = vector.shape_cast %181 : vector<1x1x256xf32> to vector<1x256xf32>
    %183 = vector.broadcast %182 : vector<1x256xf32> to vector<8x256xf32>
    %184 = arith.addf %180, %183 : vector<8x256xf32>
    %c1_96 = arith.constant 1 : index
    %c0_97 = arith.constant 0 : index
    %c0_98 = arith.constant 0 : index
    %185 = vector.load %arg6[%c1_96, %c0_97, %c0_98] : memref<2x128x512xf32, #tpu.memory_space<vmem>>, vector<1x128x512xf32>
    %186 = vector.shape_cast %185 : vector<1x128x512xf32> to vector<128x512xf32>
    %cst_99 = arith.constant dense<0.000000e+00> : vector<8x512xf32>
    %187 = tpu.matmul %151, %186, %cst_99 {dimension_numbers = #tpu.dot_dimension_numbers<[1], [0], [0], [1], [0, 0, 1, 1], [], []>} : vector<8x128xf32>, vector<128x512xf32>, vector<8x512xf32> -> vector<8x512xf32>
    %c1_100 = arith.constant 1 : index
    %c0_101 = arith.constant 0 : index
    %c0_102 = arith.constant 0 : index
    %188 = vector.load %arg7[%c1_100, %c0_101, %c0_102] : memref<2x1x512xf32, #tpu.memory_space<vmem>>, vector<1x1x512xf32>
    %189 = vector.shape_cast %188 : vector<1x1x512xf32> to vector<1x512xf32>
    %190 = vector.broadcast %189 : vector<1x512xf32> to vector<8x512xf32>
    %191 = arith.addf %187, %190 : vector<8x512xf32>
    %cst_103 = arith.constant 2.500000e-01 : f32
    %192 = vector.broadcast %cst_103 : f32 to vector<8x256xf32>
    %193 = arith.mulf %184, %192 : vector<8x256xf32>
    %194 = vector.shape_cast %193 : vector<8x256xf32> to vector<1x8x256xf32>
    %195 = vector.extract_strided_slice %191 {offsets = [0, 0], sizes = [8, 256], strides = [1, 1]} : vector<8x512xf32> to vector<8x256xf32>
    %196 = vector.shape_cast %195 : vector<8x256xf32> to vector<1x8x256xf32>
    %197 = vector.extract_strided_slice %191 {offsets = [0, 256], sizes = [8, 256], strides = [1, 1]} : vector<8x512xf32> to vector<8x256xf32>
    %198 = vector.shape_cast %197 : vector<8x256xf32> to vector<1x8x256xf32>
    %199 = vector.extract_strided_slice %194 {offsets = [0, 0, 0], sizes = [1, 8, 128], strides = [1, 1, 1]} : vector<1x8x256xf32> to vector<1x8x128xf32>
    %200 = vector.extract_strided_slice %196 {offsets = [0, 0, 0], sizes = [1, 8, 128], strides = [1, 1, 1]} : vector<1x8x256xf32> to vector<1x8x128xf32>
    "tpu.trace_start"() <{level = 10 : i32, message = "btd,bsd->bts"}> : () -> ()
    %cst_104 = arith.constant dense<0.000000e+00> : vector<1x8x8xf32>
    %201 = tpu.matmul %199, %200, %cst_104 {dimension_numbers = #tpu.dot_dimension_numbers<[2], [2], [1], [1], [0, 0, 0, 1, 1, 1], [0], [0]>} : vector<1x8x128xf32>, vector<1x8x128xf32>, vector<1x8x8xf32> -> vector<1x8x8xf32>
    %cst_105 = arith.constant -1.000000e+30 : f32
    "tpu.trace_stop"() : () -> ()
    %202 = vector.broadcast %cst_105 : f32 to vector<1x8x8xf32>
    %203 = arith.select %5, %201, %202 : vector<1x8x8xi1>, vector<1x8x8xf32>
    %cst_106 = arith.constant dense<0xFF800000> : vector<1x8xf32>
    %204 = vector.multi_reduction <maximumf>, %203, %cst_106 [2] : vector<1x8x8xf32> to vector<1x8xf32>
    %205 = vector.shape_cast %204 : vector<1x8xf32> to vector<1x8x1xf32>
    %206 = vector.broadcast %205 : vector<1x8x1xf32> to vector<1x8x8xf32>
    %207 = arith.subf %203, %206 : vector<1x8x8xf32>
    %208 = math.exp %207 : vector<1x8x8xf32>
    %cst_107 = arith.constant dense<0.000000e+00> : vector<1x8xf32>
    %209 = vector.multi_reduction <add>, %208, %cst_107 [2] : vector<1x8x8xf32> to vector<1x8xf32>
    %210 = vector.shape_cast %209 : vector<1x8xf32> to vector<1x8x1xf32>
    %211 = tpu.reciprocal %210 {approx = true} : vector<1x8x1xf32> -> vector<1x8x1xf32>
    %212 = arith.mulf %210, %211 : vector<1x8x1xf32>
    %cst_108 = arith.constant 2.000000e+00 : f32
    %213 = vector.broadcast %cst_108 : f32 to vector<1x8x1xf32>
    %214 = arith.subf %213, %212 : vector<1x8x1xf32>
    %215 = arith.mulf %211, %214 : vector<1x8x1xf32>
    %216 = vector.broadcast %215 : vector<1x8x1xf32> to vector<1x8x8xf32>
    %217 = arith.mulf %208, %216 : vector<1x8x8xf32>
    %218 = vector.extract_strided_slice %198 {offsets = [0, 0, 0], sizes = [1, 8, 128], strides = [1, 1, 1]} : vector<1x8x256xf32> to vector<1x8x128xf32>
    "tpu.trace_start"() <{level = 10 : i32, message = "bts,bsd->btd"}> : () -> ()
    %cst_109 = arith.constant dense<0.000000e+00> : vector<1x8x128xf32>
    %219 = tpu.matmul %217, %218, %cst_109 {dimension_numbers = #tpu.dot_dimension_numbers<[2], [1], [1], [2], [0, 0, 0, 1, 1, 2], [0], [0]>} : vector<1x8x8xf32>, vector<1x8x128xf32>, vector<1x8x128xf32> -> vector<1x8x128xf32>
    "tpu.trace_stop"() : () -> ()
    %220 = vector.shape_cast %219 : vector<1x8x128xf32> to vector<8x128xf32>
    %c0_110 = arith.constant 0 : index
    %c0_111 = arith.constant 0 : index
    %221 = vector.load %arg19[%c0_110, %c0_111] : memref<8x256xf32, #tpu.memory_space<vmem>>, vector<8x128xf32>
    tpu.vector_store %arg19[%c0_110, %c0_111], %220 {strides = array<i32>} : memref<8x256xf32, #tpu.memory_space<vmem>>, vector<8x128xf32>,
    %222 = vector.extract_strided_slice %194 {offsets = [0, 0, 128], sizes = [1, 8, 128], strides = [1, 1, 1]} : vector<1x8x256xf32> to vector<1x8x128xf32>
    %223 = vector.extract_strided_slice %196 {offsets = [0, 0, 128], sizes = [1, 8, 128], strides = [1, 1, 1]} : vector<1x8x256xf32> to vector<1x8x128xf32>
    "tpu.trace_start"() <{level = 10 : i32, message = "btd,bsd->bts"}> : () -> ()
    %cst_112 = arith.constant dense<0.000000e+00> : vector<1x8x8xf32>
    %224 = tpu.matmul %222, %223, %cst_112 {dimension_numbers = #tpu.dot_dimension_numbers<[2], [2], [1], [1], [0, 0, 0, 1, 1, 1], [0], [0]>} : vector<1x8x128xf32>, vector<1x8x128xf32>, vector<1x8x8xf32> -> vector<1x8x8xf32>
    %cst_113 = arith.constant -1.000000e+30 : f32
    "tpu.trace_stop"() : () -> ()
    %225 = vector.broadcast %cst_113 : f32 to vector<1x8x8xf32>
    %226 = arith.select %5, %224, %225 : vector<1x8x8xi1>, vector<1x8x8xf32>
    %cst_114 = arith.constant dense<0xFF800000> : vector<1x8xf32>
    %227 = vector.multi_reduction <maximumf>, %226, %cst_114 [2] : vector<1x8x8xf32> to vector<1x8xf32>
    %228 = vector.shape_cast %227 : vector<1x8xf32> to vector<1x8x1xf32>
    %229 = vector.broadcast %228 : vector<1x8x1xf32> to vector<1x8x8xf32>
    %230 = arith.subf %226, %229 : vector<1x8x8xf32>
    %231 = math.exp %230 : vector<1x8x8xf32>
    %cst_115 = arith.constant dense<0.000000e+00> : vector<1x8xf32>
    %232 = vector.multi_reduction <add>, %231, %cst_115 [2] : vector<1x8x8xf32> to vector<1x8xf32>
    %233 = vector.shape_cast %232 : vector<1x8xf32> to vector<1x8x1xf32>
    %234 = tpu.reciprocal %233 {approx = true} : vector<1x8x1xf32> -> vector<1x8x1xf32>
    %235 = arith.mulf %233, %234 : vector<1x8x1xf32>
    %cst_116 = arith.constant 2.000000e+00 : f32
    %236 = vector.broadcast %cst_116 : f32 to vector<1x8x1xf32>
    %237 = arith.subf %236, %235 : vector<1x8x1xf32>
    %238 = arith.mulf %234, %237 : vector<1x8x1xf32>
    %239 = vector.broadcast %238 : vector<1x8x1xf32> to vector<1x8x8xf32>
    %240 = arith.mulf %231, %239 : vector<1x8x8xf32>
    %241 = vector.extract_strided_slice %198 {offsets = [0, 0, 128], sizes = [1, 8, 128], strides = [1, 1, 1]} : vector<1x8x256xf32> to vector<1x8x128xf32>
    "tpu.trace_start"() <{level = 10 : i32, message = "bts,bsd->btd"}> : () -> ()
    %cst_117 = arith.constant dense<0.000000e+00> : vector<1x8x128xf32>
    %242 = tpu.matmul %240, %241, %cst_117 {dimension_numbers = #tpu.dot_dimension_numbers<[2], [1], [1], [2], [0, 0, 0, 1, 1, 2], [0], [0]>} : vector<1x8x8xf32>, vector<1x8x128xf32>, vector<1x8x128xf32> -> vector<1x8x128xf32>
    "tpu.trace_stop"() : () -> ()
    %243 = vector.shape_cast %242 : vector<1x8x128xf32> to vector<8x128xf32>
    %c0_118 = arith.constant 0 : index
    %c128_119 = arith.constant 128 : index
    %244 = vector.load %arg19[%c0_118, %c128_119] : memref<8x256xf32, #tpu.memory_space<vmem>>, vector<8x128xf32>
    tpu.vector_store %arg19[%c0_118, %c128_119], %243 {strides = array<i32>} : memref<8x256xf32, #tpu.memory_space<vmem>>, vector<8x128xf32>,
    %c0_120 = arith.constant 0 : index
    %c0_121 = arith.constant 0 : index
    %245 = vector.load %arg19[%c0_120, %c0_121] : memref<8x256xf32, #tpu.memory_space<vmem>>, vector<8x256xf32>
    %c1_122 = arith.constant 1 : index
    %c0_123 = arith.constant 0 : index
    %c0_124 = arith.constant 0 : index
    %246 = vector.load %arg8[%c1_122, %c0_123, %c0_124] : memref<2x256x128xf32, #tpu.memory_space<vmem>>, vector<1x256x128xf32>
    %247 = vector.shape_cast %246 : vector<1x256x128xf32> to vector<256x128xf32>
    %cst_125 = arith.constant dense<0.000000e+00> : vector<8x128xf32>
    %248 = tpu.matmul %245, %247, %cst_125 {dimension_numbers = #tpu.dot_dimension_numbers<[1], [0], [0], [1], [0, 0, 1, 1], [], []>} : vector<8x256xf32>, vector<256x128xf32>, vector<8x128xf32> -> vector<8x128xf32>
    %c1_126 = arith.constant 1 : index
    %c0_127 = arith.constant 0 : index
    %c0_128 = arith.constant 0 : index
    %249 = vector.load %arg9[%c1_126, %c0_127, %c0_128] : memref<2x1x128xf32, #tpu.memory_space<vmem>>, vector<1x1x128xf32>
    %250 = vector.shape_cast %249 : vector<1x1x128xf32> to vector<1x128xf32>
    %251 = vector.broadcast %250 : vector<1x128xf32> to vector<8x128xf32>
    %252 = arith.addf %248, %251 : vector<8x128xf32>
    %253 = arith.addf %177, %252 : vector<8x128xf32>
    %c1_129 = arith.constant 1 : index
    %c0_130 = arith.constant 0 : index
    %c0_131 = arith.constant 0 : index
    %254 = vector.load %arg10[%c1_129, %c0_130, %c0_131] : memref<2x1x128xf32, #tpu.memory_space<vmem>>, vector<1x1x128xf32>
    %255 = vector.shape_cast %254 : vector<1x1x128xf32> to vector<1x128xf32>
    %c1_132 = arith.constant 1 : index
    %c0_133 = arith.constant 0 : index
    %c0_134 = arith.constant 0 : index
    %256 = vector.load %arg11[%c1_132, %c0_133, %c0_134] : memref<2x1x128xf32, #tpu.memory_space<vmem>>, vector<1x1x128xf32>
    %257 = vector.shape_cast %256 : vector<1x1x128xf32> to vector<1x128xf32>
    %cst_135 = arith.constant dense<0.000000e+00> : vector<8xf32>
    %258 = vector.multi_reduction <add>, %253, %cst_135 [1] : vector<8x128xf32> to vector<8xf32>
    %259 = vector.shape_cast %258 : vector<8xf32> to vector<8x1xf32>
    %cst_136 = arith.constant 3.125000e-02 : f32
    %260 = vector.broadcast %cst_136 : f32 to vector<8x1xf32>
    %261 = arith.mulf %259, %260 : vector<8x1xf32>
    %262 = vector.broadcast %261 : vector<8x1xf32> to vector<8x128xf32>
    %263 = arith.subf %253, %262 : vector<8x128xf32>
    %cst_137 = arith.constant 0.000000e+00 : f32
    %264 = vector.broadcast %cst_137 : f32 to vector<8x128xf32>
    %265 = arith.select %2, %263, %264 : vector<8x128xi1>, vector<8x128xf32>
    %266 = arith.mulf %265, %265 : vector<8x128xf32>
    %cst_138 = arith.constant dense<0.000000e+00> : vector<8xf32>
    %267 = vector.multi_reduction <add>, %266, %cst_138 [1] : vector<8x128xf32> to vector<8xf32>
    %268 = vector.shape_cast %267 : vector<8xf32> to vector<8x1xf32>
    %cst_139 = arith.constant 3.125000e-02 : f32
    %269 = vector.broadcast %cst_139 : f32 to vector<8x1xf32>
    %270 = arith.mulf %268, %269 : vector<8x1xf32>
    %cst_140 = arith.constant 9.99999993E-9 : f32
    %271 = vector.broadcast %cst_140 : f32 to vector<8x1xf32>
    %272 = arith.addf %270, %271 : vector<8x1xf32>
    %273 = math.rsqrt %272 : vector<8x1xf32>
    %274 = vector.broadcast %273 : vector<8x1xf32> to vector<8x128xf32>
    %275 = arith.mulf %265, %274 : vector<8x128xf32>
    %276 = vector.broadcast %255 : vector<1x128xf32> to vector<8x128xf32>
    %277 = arith.mulf %275, %276 : vector<8x128xf32>
    %278 = vector.broadcast %257 : vector<1x128xf32> to vector<8x128xf32>
    %279 = arith.addf %277, %278 : vector<8x128xf32>
    %c1_141 = arith.constant 1 : index
    %c0_142 = arith.constant 0 : index
    %c0_143 = arith.constant 0 : index
    %280 = vector.load %arg12[%c1_141, %c0_142, %c0_143] : memref<2x128x128xf32, #tpu.memory_space<vmem>>, vector<1x128x128xf32>
    %281 = vector.shape_cast %280 : vector<1x128x128xf32> to vector<128x128xf32>
    %cst_144 = arith.constant dense<0.000000e+00> : vector<8x128xf32>
    %282 = tpu.matmul %279, %281, %cst_144 {dimension_numbers = #tpu.dot_dimension_numbers<[1], [0], [0], [1], [0, 0, 1, 1], [], []>} : vector<8x128xf32>, vector<128x128xf32>, vector<8x128xf32> -> vector<8x128xf32>
    %c1_145 = arith.constant 1 : index
    %c0_146 = arith.constant 0 : index
    %c0_147 = arith.constant 0 : index
    %283 = vector.load %arg13[%c1_145, %c0_146, %c0_147] : memref<2x1x128xf32, #tpu.memory_space<vmem>>, vector<1x1x128xf32>
    %284 = vector.shape_cast %283 : vector<1x1x128xf32> to vector<1x128xf32>
    %285 = vector.broadcast %284 : vector<1x128xf32> to vector<8x128xf32>
    %286 = arith.addf %282, %285 : vector<8x128xf32>
    %cst_148 = arith.constant 0.000000e+00 : f32
    %287 = vector.broadcast %cst_148 : f32 to vector<8x128xf32>
    %288 = arith.maximumf %286, %287 : vector<8x128xf32>
    %c1_149 = arith.constant 1 : index
    %c0_150 = arith.constant 0 : index
    %c0_151 = arith.constant 0 : index
    %289 = vector.load %arg14[%c1_149, %c0_150, %c0_151] : memref<2x128x128xf32, #tpu.memory_space<vmem>>, vector<1x128x128xf32>
    %290 = vector.shape_cast %289 : vector<1x128x128xf32> to vector<128x128xf32>
    %cst_152 = arith.constant dense<0.000000e+00> : vector<8x128xf32>
    %291 = tpu.matmul %288, %290, %cst_152 {dimension_numbers = #tpu.dot_dimension_numbers<[1], [0], [0], [1], [0, 0, 1, 1], [], []>} : vector<8x128xf32>, vector<128x128xf32>, vector<8x128xf32> -> vector<8x128xf32>
    %c1_153 = arith.constant 1 : index
    %c0_154 = arith.constant 0 : index
    %c0_155 = arith.constant 0 : index
    %292 = vector.load %arg15[%c1_153, %c0_154, %c0_155] : memref<2x1x128xf32, #tpu.memory_space<vmem>>, vector<1x1x128xf32>
    %293 = vector.shape_cast %292 : vector<1x1x128xf32> to vector<1x128xf32>
    %294 = vector.broadcast %293 : vector<1x128xf32> to vector<8x128xf32>
    %295 = arith.addf %291, %294 : vector<8x128xf32>
    %296 = arith.addf %279, %295 : vector<8x128xf32>
    %c0_156 = arith.constant 0 : index
    %c0_157 = arith.constant 0 : index
    %c0_158 = arith.constant 0 : index
    %297 = vector.load %arg16[%c0_156, %c0_157, %c0_158] : memref<1x1x128xf32, #tpu.memory_space<vmem>>, vector<1x1x128xf32>
    %298 = vector.shape_cast %297 : vector<1x1x128xf32> to vector<1x128xf32>
    %c0_159 = arith.constant 0 : index
    %c0_160 = arith.constant 0 : index
    %c0_161 = arith.constant 0 : index
    %299 = vector.load %arg17[%c0_159, %c0_160, %c0_161] : memref<1x1x128xf32, #tpu.memory_space<vmem>>, vector<1x1x128xf32>
    %300 = vector.shape_cast %299 : vector<1x1x128xf32> to vector<1x128xf32>
    %cst_162 = arith.constant dense<0.000000e+00> : vector<8xf32>
    %301 = vector.multi_reduction <add>, %296, %cst_162 [1] : vector<8x128xf32> to vector<8xf32>
    %302 = vector.shape_cast %301 : vector<8xf32> to vector<8x1xf32>
    %cst_163 = arith.constant 3.125000e-02 : f32
    %303 = vector.broadcast %cst_163 : f32 to vector<8x1xf32>
    %304 = arith.mulf %302, %303 : vector<8x1xf32>
    %305 = vector.broadcast %304 : vector<8x1xf32> to vector<8x128xf32>
    %306 = arith.subf %296, %305 : vector<8x128xf32>
    %cst_164 = arith.constant 0.000000e+00 : f32
    %307 = vector.broadcast %cst_164 : f32 to vector<8x128xf32>
    %308 = arith.select %2, %306, %307 : vector<8x128xi1>, vector<8x128xf32>
    %309 = arith.mulf %308, %308 : vector<8x128xf32>
    %cst_165 = arith.constant dense<0.000000e+00> : vector<8xf32>
    %310 = vector.multi_reduction <add>, %309, %cst_165 [1] : vector<8x128xf32> to vector<8xf32>
    %311 = vector.shape_cast %310 : vector<8xf32> to vector<8x1xf32>
    %cst_166 = arith.constant 3.125000e-02 : f32
    %312 = vector.broadcast %cst_166 : f32 to vector<8x1xf32>
    %313 = arith.mulf %311, %312 : vector<8x1xf32>
    %cst_167 = arith.constant 9.99999993E-9 : f32
    %314 = vector.broadcast %cst_167 : f32 to vector<8x1xf32>
    %315 = arith.addf %313, %314 : vector<8x1xf32>
    %316 = math.rsqrt %315 : vector<8x1xf32>
    %317 = vector.broadcast %316 : vector<8x1xf32> to vector<8x128xf32>
    %318 = arith.mulf %308, %317 : vector<8x128xf32>
    %319 = vector.broadcast %298 : vector<1x128xf32> to vector<8x128xf32>
    %320 = arith.mulf %318, %319 : vector<8x128xf32>
    %321 = vector.broadcast %300 : vector<1x128xf32> to vector<8x128xf32>
    %322 = arith.addf %320, %321 : vector<8x128xf32>
    %c0_168 = arith.constant 0 : index
    %c0_169 = arith.constant 0 : index
    %323 = vector.load %arg18[%c0_168, %c0_169] : memref<8x128xf32, #tpu.memory_space<vmem>>, vector<8x128xf32>
    tpu.vector_store %arg18[%c0_168, %c0_169], %322 {strides = array<i32>} : memref<8x128xf32, #tpu.memory_space<vmem>>, vector<8x128xf32>,
    return
  }
  func.func @transform_0(%arg0: i32) -> (i32, i32) {
    %c0_i32 = arith.constant 0 : i32
    %c0_i32_0 = arith.constant 0 : i32
    return %arg0, %c0_i32 : i32, i32
  }
  func.func @transform_1(%arg0: i32) -> (i32, i32, i32) {
    %c0_i32 = arith.constant 0 : i32
    %c0_i32_0 = arith.constant 0 : i32
    %c0_i32_1 = arith.constant 0 : i32
    %c0_i32_2 = arith.constant 0 : i32
    return %c0_i32, %c0_i32_0, %c0_i32_1 : i32, i32, i32
  }
  func.func @transform_2(%arg0: i32) -> (i32, i32, i32) {
    %c0_i32 = arith.constant 0 : i32
    %c0_i32_0 = arith.constant 0 : i32
    %c0_i32_1 = arith.constant 0 : i32
    %c0_i32_2 = arith.constant 0 : i32
    return %c0_i32, %c0_i32_0, %c0_i32_1 : i32, i32, i32
  }
  func.func @transform_3(%arg0: i32) -> (i32, i32, i32) {
    %c0_i32 = arith.constant 0 : i32
    %c0_i32_0 = arith.constant 0 : i32
    %c0_i32_1 = arith.constant 0 : i32
    %c0_i32_2 = arith.constant 0 : i32
    return %c0_i32, %c0_i32_0, %c0_i32_1 : i32, i32, i32
  }
  func.func @transform_4(%arg0: i32) -> (i32, i32, i32) {
    %c0_i32 = arith.constant 0 : i32
    %c0_i32_0 = arith.constant 0 : i32
    %c0_i32_1 = arith.constant 0 : i32
    %c0_i32_2 = arith.constant 0 : i32
    return %c0_i32, %c0_i32_0, %c0_i32_1 : i32, i32, i32
  }
  func.func @transform_5(%arg0: i32) -> (i32, i32, i32) {
    %c0_i32 = arith.constant 0 : i32
    %c0_i32_0 = arith.constant 0 : i32
    %c0_i32_1 = arith.constant 0 : i32
    %c0_i32_2 = arith.constant 0 : i32
    return %c0_i32, %c0_i32_0, %c0_i32_1 : i32, i32, i32
  }
  func.func @transform_6(%arg0: i32) -> (i32, i32, i32) {
    %c0_i32 = arith.constant 0 : i32
    %c0_i32_0 = arith.constant 0 : i32
    %c0_i32_1 = arith.constant 0 : i32
    %c0_i32_2 = arith.constant 0 : i32
    return %c0_i32, %c0_i32_0, %c0_i32_1 : i32, i32, i32
  }
  func.func @transform_7(%arg0: i32) -> (i32, i32, i32) {
    %c0_i32 = arith.constant 0 : i32
    %c0_i32_0 = arith.constant 0 : i32
    %c0_i32_1 = arith.constant 0 : i32
    %c0_i32_2 = arith.constant 0 : i32
    return %c0_i32, %c0_i32_0, %c0_i32_1 : i32, i32, i32
  }
  func.func @transform_8(%arg0: i32) -> (i32, i32, i32) {
    %c0_i32 = arith.constant 0 : i32
    %c0_i32_0 = arith.constant 0 : i32
    %c0_i32_1 = arith.constant 0 : i32
    %c0_i32_2 = arith.constant 0 : i32
    return %c0_i32, %c0_i32_0, %c0_i32_1 : i32, i32, i32
  }
  func.func @transform_9(%arg0: i32) -> (i32, i32, i32) {
    %c0_i32 = arith.constant 0 : i32
    %c0_i32_0 = arith.constant 0 : i32
    %c0_i32_1 = arith.constant 0 : i32
    %c0_i32_2 = arith.constant 0 : i32
    return %c0_i32, %c0_i32_0, %c0_i32_1 : i32, i32, i32
  }
  func.func @transform_10(%arg0: i32) -> (i32, i32, i32) {
    %c0_i32 = arith.constant 0 : i32
    %c0_i32_0 = arith.constant 0 : i32
    %c0_i32_1 = arith.constant 0 : i32
    %c0_i32_2 = arith.constant 0 : i32
    return %c0_i32, %c0_i32_0, %c0_i32_1 : i32, i32, i32
  }
  func.func @transform_11(%arg0: i32) -> (i32, i32, i32) {
    %c0_i32 = arith.constant 0 : i32
    %c0_i32_0 = arith.constant 0 : i32
    %c0_i32_1 = arith.constant 0 : i32
    %c0_i32_2 = arith.constant 0 : i32
    return %c0_i32, %c0_i32_0, %c0_i32_1 : i32, i32, i32
  }
  func.func @transform_12(%arg0: i32) -> (i32, i32, i32) {
    %c0_i32 = arith.constant 0 : i32
    %c0_i32_0 = arith.constant 0 : i32
    %c0_i32_1 = arith.constant 0 : i32
    %c0_i32_2 = arith.constant 0 : i32
    return %c0_i32, %c0_i32_0, %c0_i32_1 : i32, i32, i32
  }
  func.func @transform_13(%arg0: i32) -> (i32, i32, i32) {
    %c0_i32 = arith.constant 0 : i32
    %c0_i32_0 = arith.constant 0 : i32
    %c0_i32_1 = arith.constant 0 : i32
    %c0_i32_2 = arith.constant 0 : i32
    return %c0_i32, %c0_i32_0, %c0_i32_1 : i32, i32, i32
  }
  func.func @transform_14(%arg0: i32) -> (i32, i32, i32) {
    %c0_i32 = arith.constant 0 : i32
    %c0_i32_0 = arith.constant 0 : i32
    %c0_i32_1 = arith.constant 0 : i32
    %c0_i32_2 = arith.constant 0 : i32
    return %c0_i32, %c0_i32_0, %c0_i32_1 : i32, i32, i32
  }
  func.func @transform_15(%arg0: i32) -> (i32, i32, i32) {
    %c0_i32 = arith.constant 0 : i32
    %c0_i32_0 = arith.constant 0 : i32
    %c0_i32_1 = arith.constant 0 : i32
    %c0_i32_2 = arith.constant 0 : i32
    return %c0_i32, %c0_i32_0, %c0_i32_1 : i32, i32, i32
  }
  func.func @transform_16(%arg0: i32) -> (i32, i32, i32) {
    %c0_i32 = arith.constant 0 : i32
    %c0_i32_0 = arith.constant 0 : i32
    %c0_i32_1 = arith.constant 0 : i32
    %c0_i32_2 = arith.constant 0 : i32
    return %c0_i32, %c0_i32_0, %c0_i32_1 : i32, i32, i32
  }
  func.func @transform_17(%arg0: i32) -> (i32, i32) {
    %c0_i32 = arith.constant 0 : i32
    %c0_i32_0 = arith.constant 0 : i32
    return %arg0, %c0_i32 : i32, i32
  }
}

</mosaic_0001>

<llo_original>
// kernel: tpu_custom_call.1
$region0: #{tpu_custom_call.1}
  #allocation0 [shape = 'u32[]', space=smem, size = 0x4, offset = 0x4, fixed_abs, tag = 'smem constant byte address 0x4 - core index']
  #allocation1 [shape = 'u32[144,128]{1,0:T(1,128)}', space=vmem, size = 0x12000, scoped, tag = 'internal scratch']
  #allocation2 [shape = 'f32[8,256]{1,0:T(8,128)}', space=vmem, size = 0x2000, scoped, tag = 'scratch operand']
  %s0 = inlined_call_operand.hbm [shape: f32[16,128], index: 0, kind: input, shape index: {}]
  %s1 = inlined_call_operand.hbm [shape: f32[2,1,128], index: 1, kind: input, shape index: {}]
  %s2 = inlined_call_operand.vmem [shape: f32[2,1,128], index: 2, kind: input, shape index: {}]
  %s3 = inlined_call_operand.hbm [shape: f32[2,128,256], index: 3, kind: input, shape index: {}]
  %s4 = inlined_call_operand.hbm [shape: f32[2,1,256], index: 4, kind: input, shape index: {}]
  %s5 = inlined_call_operand.hbm [shape: f32[2,128,512], index: 5, kind: input, shape index: {}]
  %s6 = inlined_call_operand.vmem [shape: f32[2,1,512], index: 6, kind: input, shape index: {}]
  %s7 = inlined_call_operand.hbm [shape: f32[2,256,128], index: 7, kind: input, shape index: {}]
  %s8 = inlined_call_operand.vmem [shape: f32[2,1,128], index: 8, kind: input, shape index: {}]
  %s9 = inlined_call_operand.vmem [shape: f32[2,1,128], index: 9, kind: input, shape index: {}]
  %s10 = inlined_call_operand.vmem [shape: f32[2,1,128], index: 10, kind: input, shape index: {}]
  %s11 = inlined_call_operand.hbm [shape: f32[2,128,128], index: 11, kind: input, shape index: {}]
  %s12 = inlined_call_operand.vmem [shape: f32[2,1,128], index: 12, kind: input, shape index: {}]
  %s13 = inlined_call_operand.hbm [shape: f32[2,128,128], index: 13, kind: input, shape index: {}]
  %s14 = inlined_call_operand.vmem [shape: f32[2,1,128], index: 14, kind: input, shape index: {}]
  %s15 = inlined_call_operand.vmem [shape: f32[1,1,128], index: 15, kind: input, shape index: {}]
  %s16 = inlined_call_operand.vmem [shape: f32[1,1,128], index: 16, kind: input, shape index: {}]
  %s17 = inlined_call_operand.hbm [shape: f32[16,128], index: 17, kind: output, shape index: {}]
  %s18 = sld [smem:[#allocation0]]
  $region133: #{tpu_custom_call.1} parent=0
    _
  %s20 = ssub.s32 1, %s18
  %s21 = scalar_select 0, %s20, %s18
  $region1: #{tpu_custom_call.1} parent=0
    #allocation3 [shape = 'u8[8192]{0}', space=vmem, size = 0x2000, scoped, tag = 'input window, operand 0']
    #allocation4 [shape = 's32[2]{0}', space=sflag, size = 0x8, scoped, tag = 'scoped memory for tpu_custom_call.1']
    #allocation5 [shape = 's32[2]{0}', space=sflag, size = 0x8, scoped, tag = 'scoped memory for tpu_custom_call.1']
    #allocation6 [shape = 'u8[1024]{0}', space=vmem, size = 0x400, scoped, tag = 'input window, operand 1, single buffered']
    #allocation7 [shape = 's32[1]{0}', space=sflag, size = 0x4, scoped, tag = 'scoped memory for tpu_custom_call.1']
    #allocation8 [shape = 'u8[262144]{0}', space=vmem, size = 0x40000, scoped, tag = 'input window, operand 3, single buffered']
    #allocation9 [shape = 'u8[2048]{0}', space=vmem, size = 0x800, scoped, tag = 'input window, operand 4, single buffered']
    #allocation10 [shape = 's32[1]{0}', space=sflag, size = 0x4, scoped, tag = 'scoped memory for tpu_custom_call.1']
    #allocation11 [shape = 'u8[524288]{0}', space=vmem, size = 0x80000, scoped, tag = 'input window, operand 5, single buffered']
    #allocation12 [shape = 'u8[262144]{0}', space=vmem, size = 0x40000, scoped, tag = 'input window, operand 7, single buffered']
    #allocation13 [shape = 's32[1]{0}', space=sflag, size = 0x4, scoped, tag = 'scoped memory for tpu_custom_call.1']
    #allocation14 [shape = 'u8[131072]{0}', space=vmem, size = 0x20000, scoped, tag = 'input window, operand 11, single buffered']
    #allocation15 [shape = 'u8[131072]{0}', space=vmem, size = 0x20000, scoped, tag = 'input window, operand 13, single buffered']
    #allocation16 [shape = 's32[1]{0}', space=sflag, size = 0x4, scoped, tag = 'scoped memory for tpu_custom_call.1']
    #allocation17 [shape = 'u8[8192]{0}', space=vmem, size = 0x2000, scoped, tag = 'output window, operand 0']
    %22 = vsyncpa [#allocation4], 0
    %s23 = scalar_lea.sflag [#allocation4], 1
    %24 = vsyncpa %s23, 0
    %25 = vsyncpa [#allocation7], 0
    %26 = vsyncpa [#allocation10], 0
    %27 = vsyncpa [#allocation13], 0
    %28 = vsyncpa [#allocation16], 0
    %29 = vsyncpa [#allocation5], 0
    %s30 = scalar_lea.sflag [#allocation5], 1
    %31 = vsyncpa %s30, 0
    loop: start=0, step=1, limit=4
    $region2: #{tpu_custom_call.1} parent=1 // loop_pre_header
      _
    $region3: #{tpu_custom_call.1} parent=1 // loop_header
      %s33 = sphi 0, %s37
      %p34 = scmp.ge.s32.totalorder %s33, 4
      %s43 = sphi 0, %s45
      %s46 = sphi 0, %s43
      %s47 = sphi 0, %s46
      %s63 = sphi 0, %s47
      %s67 = sphi 0, %s67
      %s69 = sphi 0, %s67
      %s70 = sphi 0, %s69
      %s84 = sphi 0, %s70
      %s88 = sphi 0, %s88
      %s90 = sphi 0, %s88
      %s91 = sphi 0, %s90
      %s105 = sphi 0, %s91
      %s109 = sphi 0, %s109
      %s111 = sphi 0, %s109
      %s112 = sphi 0, %s111
      %s126 = sphi 0, %s112
      %s130 = sphi 0, %s130
      %s132 = sphi 0, %s130
      %s133 = sphi 0, %s132
      %s147 = sphi 0, %s133
      %s151 = sphi 0, %s151
      %s153 = sphi 0, %s151
      %s154 = sphi 0, %s153
      %s168 = sphi 0, %s154
      %s172 = sphi 0, %s172
      %s174 = sphi 0, %s172
      %s175 = sphi 0, %s174
      %s189 = sphi 0, %s175
      %s193 = sphi 0, %s193
      %s195 = sphi 0, %s193
      %s196 = sphi 0, %s195
      %s210 = sphi 0, %s196
      %s214 = sphi 0, %s214
      %s216 = sphi 0, %s214
      %s217 = sphi 0, %s216
      %s231 = sphi 0, %s217
      %s235 = sphi 0, %s235
      %s237 = sphi 0, %s235
      %s238 = sphi 0, %s237
      %s252 = sphi 0, %s238
      %s256 = sphi 0, %s256
      %s258 = sphi 0, %s256
      %s259 = sphi 0, %s258
      %s273 = sphi 0, %s259
      %s277 = sphi 0, %s277
      %s279 = sphi 0, %s277
      %s280 = sphi 0, %s279
      %s294 = sphi 0, %s280
      %s298 = sphi 0, %s298
      %s300 = sphi 0, %s298
      %s301 = sphi 0, %s300
      %s315 = sphi 0, %s301
      %s319 = sphi 0, %s319
      %s321 = sphi 0, %s319
      %s322 = sphi 0, %s321
      %s336 = sphi 0, %s322
      %s340 = sphi 0, %s340
      %s342 = sphi 0, %s340
      %s343 = sphi 0, %s342
      %s357 = sphi 0, %s343
      %s361 = sphi 0, %s361
      %s363 = sphi 0, %s361
      %s364 = sphi 0, %s363
      %s378 = sphi 0, %s364
      %s382 = sphi 0, %s382
      %s384 = sphi 0, %s382
      %s385 = sphi 0, %s384
      %s399 = sphi 0, %s385
      %s405 = sphi 0, %s407
      %s408 = sphi 0, %s405
      %s409 = sphi 0, %s408
      %s425 = sphi 0, %s409
    $region4: #{tpu_custom_call.1} parent=1 // loop_header_branch
      %36 = sbr.rel (%p34) target = $region8
    $region5: #{tpu_custom_call.1} parent=1 // loop_body
      %s38 = ssub.s32 %s33, 1
      %s39 = ssub.s32 %s33, 2
      %s40 = sadd.s32 %s33, 1
      %s41 = ssub.s32 %s33, %s40
      %p42 = scmp.eq.s32.totalorder %s41, 0
      %s44 = sadd.s32 %s43, 1
      %s45 = scalar_select %p42, %s43, %s44
      %p48 = pneg %p42
      %p49 = scmp.eq.s32.totalorder %s33, 1
      %p50 = por %p48, %p49
      %p51 = scmp.ne.s32.totalorder %s43, %s46
      %p52 = scmp.eq.s32.totalorder %s33, 0
      %p53 = por %p51, %p52
      %p54 = scmp.ne.s32.totalorder %s43, %s46
      %p55 = scmp.eq.s32.totalorder %s38, 1
      %p56 = por %p54, %p55
      %p57 = scmp.ne.s32.totalorder %s46, %s47
      %p58 = scmp.eq.s32.totalorder %s38, 0
      %p59 = por %p57, %p58
      %p60 = scmp.ne.s32.totalorder %s46, %s47
      %p61 = scmp.eq.s32.totalorder %s39, 1
      %p62 = por %p60, %p61
      %p64 = scmp.ne.s32.totalorder %s47, %s63
      %p65 = scmp.eq.s32.totalorder %s39, 0
      %p66 = por %p64, %p65
      %s68 = sadd.s32 %s67, 1
      %p71 = scmp.eq.s32.totalorder %s33, 1
      %p72 = scmp.ne.s32.totalorder %s67, %s69
      %p73 = scmp.eq.s32.totalorder %s33, 0
      %p74 = por %p72, %p73
      %p75 = scmp.ne.s32.totalorder %s67, %s69
      %p76 = scmp.eq.s32.totalorder %s38, 1
      %p77 = por %p75, %p76
      %p78 = scmp.ne.s32.totalorder %s69, %s70
      %p79 = scmp.eq.s32.totalorder %s38, 0
      %p80 = por %p78, %p79
      %p81 = scmp.ne.s32.totalorder %s69, %s70
      %p82 = scmp.eq.s32.totalorder %s39, 1
      %p83 = por %p81, %p82
      %p85 = scmp.ne.s32.totalorder %s70, %s84
      %p86 = scmp.eq.s32.totalorder %s39, 0
      %p87 = por %p85, %p86
      %s89 = sadd.s32 %s88, 1
      %p92 = scmp.eq.s32.totalorder %s33, 1
      %p93 = scmp.ne.s32.totalorder %s88, %s90
      %p94 = scmp.eq.s32.totalorder %s33, 0
      %p95 = por %p93, %p94
      %p96 = scmp.ne.s32.totalorder %s88, %s90
      %p97 = scmp.eq.s32.totalorder %s38, 1
      %p98 = por %p96, %p97
      %p99 = scmp.ne.s32.totalorder %s90, %s91
      %p100 = scmp.eq.s32.totalorder %s38, 0
      %p101 = por %p99, %p100
      %p102 = scmp.ne.s32.totalorder %s90, %s91
      %p103 = scmp.eq.s32.totalorder %s39, 1
      %p104 = por %p102, %p103
      %p106 = scmp.ne.s32.totalorder %s91, %s105
      %p107 = scmp.eq.s32.totalorder %s39, 0
      %p108 = por %p106, %p107
      %s110 = sadd.s32 %s109, 1
      %p113 = scmp.eq.s32.totalorder %s33, 1
      %p114 = scmp.ne.s32.totalorder %s109, %s111
      %p115 = scmp.eq.s32.totalorder %s33, 0
      %p116 = por %p114, %p115
      %p117 = scmp.ne.s32.totalorder %s109, %s111
      %p118 = scmp.eq.s32.totalorder %s38, 1
      %p119 = por %p117, %p118
      %p120 = scmp.ne.s32.totalorder %s111, %s112
      %p121 = scmp.eq.s32.totalorder %s38, 0
      %p122 = por %p120, %p121
      %p123 = scmp.ne.s32.totalorder %s111, %s112
      %p124 = scmp.eq.s32.totalorder %s39, 1
      %p125 = por %p123, %p124
      %p127 = scmp.ne.s32.totalorder %s112, %s126
      %p128 = scmp.eq.s32.totalorder %s39, 0
      %p129 = por %p127, %p128
      %s131 = sadd.s32 %s130, 1
      %p134 = scmp.eq.s32.totalorder %s33, 1
      %p135 = scmp.ne.s32.totalorder %s130, %s132
      %p136 = scmp.eq.s32.totalorder %s33, 0
      %p137 = por %p135, %p136
      %p138 = scmp.ne.s32.totalorder %s130, %s132
      %p139 = scmp.eq.s32.totalorder %s38, 1
      %p140 = por %p138, %p139
      %p141 = scmp.ne.s32.totalorder %s132, %s133
      %p142 = scmp.eq.s32.totalorder %s38, 0
      %p143 = por %p141, %p142
      %p144 = scmp.ne.s32.totalorder %s132, %s133
      %p145 = scmp.eq.s32.totalorder %s39, 1
      %p146 = por %p144, %p145
      %p148 = scmp.ne.s32.totalorder %s133, %s147
      %p149 = scmp.eq.s32.totalorder %s39, 0
      %p150 = por %p148, %p149
      %s152 = sadd.s32 %s151, 1
      %p155 = scmp.eq.s32.totalorder %s33, 1
      %p156 = scmp.ne.s32.totalorder %s151, %s153
      %p157 = scmp.eq.s32.totalorder %s33, 0
      %p158 = por %p156, %p157
      %p159 = scmp.ne.s32.totalorder %s151, %s153
      %p160 = scmp.eq.s32.totalorder %s38, 1
      %p161 = por %p159, %p160
      %p162 = scmp.ne.s32.totalorder %s153, %s154
      %p163 = scmp.eq.s32.totalorder %s38, 0
      %p164 = por %p162, %p163
      %p165 = scmp.ne.s32.totalorder %s153, %s154
      %p166 = scmp.eq.s32.totalorder %s39, 1
      %p167 = por %p165, %p166
      %p169 = scmp.ne.s32.totalorder %s154, %s168
      %p170 = scmp.eq.s32.totalorder %s39, 0
      %p171 = por %p169, %p170
      %s173 = sadd.s32 %s172, 1
      %p176 = scmp.eq.s32.totalorder %s33, 1
      %p177 = scmp.ne.s32.totalorder %s172, %s174
      %p178 = scmp.eq.s32.totalorder %s33, 0
      %p179 = por %p177, %p178
      %p180 = scmp.ne.s32.totalorder %s172, %s174
      %p181 = scmp.eq.s32.totalorder %s38, 1
      %p182 = por %p180, %p181
      %p183 = scmp.ne.s32.totalorder %s174, %s175
      %p184 = scmp.eq.s32.totalorder %s38, 0
      %p185 = por %p183, %p184
      %p186 = scmp.ne.s32.totalorder %s174, %s175
      %p187 = scmp.eq.s32.totalorder %s39, 1
      %p188 = por %p186, %p187
      %p190 = scmp.ne.s32.totalorder %s175, %s189
      %p191 = scmp.eq.s32.totalorder %s39, 0
      %p192 = por %p190, %p191
      %s194 = sadd.s32 %s193, 1
      %p197 = scmp.eq.s32.totalorder %s33, 1
      %p198 = scmp.ne.s32.totalorder %s193, %s195
      %p199 = scmp.eq.s32.totalorder %s33, 0
      %p200 = por %p198, %p199
      %p201 = scmp.ne.s32.totalorder %s193, %s195
      %p202 = scmp.eq.s32.totalorder %s38, 1
      %p203 = por %p201, %p202
      %p204 = scmp.ne.s32.totalorder %s195, %s196
      %p205 = scmp.eq.s32.totalorder %s38, 0
      %p206 = por %p204, %p205
      %p207 = scmp.ne.s32.totalorder %s195, %s196
      %p208 = scmp.eq.s32.totalorder %s39, 1
      %p209 = por %p207, %p208
      %p211 = scmp.ne.s32.totalorder %s196, %s210
      %p212 = scmp.eq.s32.totalorder %s39, 0
      %p213 = por %p211, %p212
      %s215 = sadd.s32 %s214, 1
      %p218 = scmp.eq.s32.totalorder %s33, 1
      %p219 = scmp.ne.s32.totalorder %s214, %s216
      %p220 = scmp.eq.s32.totalorder %s33, 0
      %p221 = por %p219, %p220
      %p222 = scmp.ne.s32.totalorder %s214, %s216
      %p223 = scmp.eq.s32.totalorder %s38, 1
      %p224 = por %p222, %p223
      %p225 = scmp.ne.s32.totalorder %s216, %s217
      %p226 = scmp.eq.s32.totalorder %s38, 0
      %p227 = por %p225, %p226
      %p228 = scmp.ne.s32.totalorder %s216, %s217
      %p229 = scmp.eq.s32.totalorder %s39, 1
      %p230 = por %p228, %p229
      %p232 = scmp.ne.s32.totalorder %s217, %s231
      %p233 = scmp.eq.s32.totalorder %s39, 0
      %p234 = por %p232, %p233
      %s236 = sadd.s32 %s235, 1
      %p239 = scmp.eq.s32.totalorder %s33, 1
      %p240 = scmp.ne.s32.totalorder %s235, %s237
      %p241 = scmp.eq.s32.totalorder %s33, 0
      %p242 = por %p240, %p241
      %p243 = scmp.ne.s32.totalorder %s235, %s237
      %p244 = scmp.eq.s32.totalorder %s38, 1
      %p245 = por %p243, %p244
      %p246 = scmp.ne.s32.totalorder %s237, %s238
      %p247 = scmp.eq.s32.totalorder %s38, 0
      %p248 = por %p246, %p247
      %p249 = scmp.ne.s32.totalorder %s237, %s238
      %p250 = scmp.eq.s32.totalorder %s39, 1
      %p251 = por %p249, %p250
      %p253 = scmp.ne.s32.totalorder %s238, %s252
      %p254 = scmp.eq.s32.totalorder %s39, 0
      %p255 = por %p253, %p254
      %s257 = sadd.s32 %s256, 1
      %p260 = scmp.eq.s32.totalorder %s33, 1
      %p261 = scmp.ne.s32.totalorder %s256, %s258
      %p262 = scmp.eq.s32.totalorder %s33, 0
      %p263 = por %p261, %p262
      %p264 = scmp.ne.s32.totalorder %s256, %s258
      %p265 = scmp.eq.s32.totalorder %s38, 1
      %p266 = por %p264, %p265
      %p267 = scmp.ne.s32.totalorder %s258, %s259
      %p268 = scmp.eq.s32.totalorder %s38, 0
      %p269 = por %p267, %p268
      %p270 = scmp.ne.s32.totalorder %s258, %s259
      %p271 = scmp.eq.s32.totalorder %s39, 1
      %p272 = por %p270, %p271
      %p274 = scmp.ne.s32.totalorder %s259, %s273
      %p275 = scmp.eq.s32.totalorder %s39, 0
      %p276 = por %p274, %p275
      %s278 = sadd.s32 %s277, 1
      %p281 = scmp.eq.s32.totalorder %s33, 1
      %p282 = scmp.ne.s32.totalorder %s277, %s279
      %p283 = scmp.eq.s32.totalorder %s33, 0
      %p284 = por %p282, %p283
      %p285 = scmp.ne.s32.totalorder %s277, %s279
      %p286 = scmp.eq.s32.totalorder %s38, 1
      %p287 = por %p285, %p286
      %p288 = scmp.ne.s32.totalorder %s279, %s280
      %p289 = scmp.eq.s32.totalorder %s38, 0
      %p290 = por %p288, %p289
      %p291 = scmp.ne.s32.totalorder %s279, %s280
      %p292 = scmp.eq.s32.totalorder %s39, 1
      %p293 = por %p291, %p292
      %p295 = scmp.ne.s32.totalorder %s280, %s294
      %p296 = scmp.eq.s32.totalorder %s39, 0
      %p297 = por %p295, %p296
      %s299 = sadd.s32 %s298, 1
      %p302 = scmp.eq.s32.totalorder %s33, 1
      %p303 = scmp.ne.s32.totalorder %s298, %s300
      %p304 = scmp.eq.s32.totalorder %s33, 0
      %p305 = por %p303, %p304
      %p306 = scmp.ne.s32.totalorder %s298, %s300
      %p307 = scmp.eq.s32.totalorder %s38, 1
      %p308 = por %p306, %p307
      %p309 = scmp.ne.s32.totalorder %s300, %s301
      %p310 = scmp.eq.s32.totalorder %s38, 0
      %p311 = por %p309, %p310
      %p312 = scmp.ne.s32.totalorder %s300, %s301
      %p313 = scmp.eq.s32.totalorder %s39, 1
      %p314 = por %p312, %p313
      %p316 = scmp.ne.s32.totalorder %s301, %s315
      %p317 = scmp.eq.s32.totalorder %s39, 0
      %p318 = por %p316, %p317
      %s320 = sadd.s32 %s319, 1
      %p323 = scmp.eq.s32.totalorder %s33, 1
      %p324 = scmp.ne.s32.totalorder %s319, %s321
      %p325 = scmp.eq.s32.totalorder %s33, 0
      %p326 = por %p324, %p325
      %p327 = scmp.ne.s32.totalorder %s319, %s321
      %p328 = scmp.eq.s32.totalorder %s38, 1
      %p329 = por %p327, %p328
      %p330 = scmp.ne.s32.totalorder %s321, %s322
      %p331 = scmp.eq.s32.totalorder %s38, 0
      %p332 = por %p330, %p331
      %p333 = scmp.ne.s32.totalorder %s321, %s322
      %p334 = scmp.eq.s32.totalorder %s39, 1
      %p335 = por %p333, %p334
      %p337 = scmp.ne.s32.totalorder %s322, %s336
      %p338 = scmp.eq.s32.totalorder %s39, 0
      %p339 = por %p337, %p338
      %s341 = sadd.s32 %s340, 1
      %p344 = scmp.eq.s32.totalorder %s33, 1
      %p345 = scmp.ne.s32.totalorder %s340, %s342
      %p346 = scmp.eq.s32.totalorder %s33, 0
      %p347 = por %p345, %p346
      %p348 = scmp.ne.s32.totalorder %s340, %s342
      %p349 = scmp.eq.s32.totalorder %s38, 1
      %p350 = por %p348, %p349
      %p351 = scmp.ne.s32.totalorder %s342, %s343
      %p352 = scmp.eq.s32.totalorder %s38, 0
      %p353 = por %p351, %p352
      %p354 = scmp.ne.s32.totalorder %s342, %s343
      %p355 = scmp.eq.s32.totalorder %s39, 1
      %p356 = por %p354, %p355
      %p358 = scmp.ne.s32.totalorder %s343, %s357
      %p359 = scmp.eq.s32.totalorder %s39, 0
      %p360 = por %p358, %p359
      %s362 = sadd.s32 %s361, 1
      %p365 = scmp.eq.s32.totalorder %s33, 1
      %p366 = scmp.ne.s32.totalorder %s361, %s363
      %p367 = scmp.eq.s32.totalorder %s33, 0
      %p368 = por %p366, %p367
      %p369 = scmp.ne.s32.totalorder %s361, %s363
      %p370 = scmp.eq.s32.totalorder %s38, 1
      %p371 = por %p369, %p370
      %p372 = scmp.ne.s32.totalorder %s363, %s364
      %p373 = scmp.eq.s32.totalorder %s38, 0
      %p374 = por %p372, %p373
      %p375 = scmp.ne.s32.totalorder %s363, %s364
      %p376 = scmp.eq.s32.totalorder %s39, 1
      %p377 = por %p375, %p376
      %p379 = scmp.ne.s32.totalorder %s364, %s378
      %p380 = scmp.eq.s32.totalorder %s39, 0
      %p381 = por %p379, %p380
      %s383 = sadd.s32 %s382, 1
      %p386 = scmp.eq.s32.totalorder %s33, 1
      %p387 = scmp.ne.s32.totalorder %s382, %s384
      %p388 = scmp.eq.s32.totalorder %s33, 0
      %p389 = por %p387, %p388
      %p390 = scmp.ne.s32.totalorder %s382, %s384
      %p391 = scmp.eq.s32.totalorder %s38, 1
      %p392 = por %p390, %p391
      %p393 = scmp.ne.s32.totalorder %s384, %s385
      %p394 = scmp.eq.s32.totalorder %s38, 0
      %p395 = por %p393, %p394
      %p396 = scmp.ne.s32.totalorder %s384, %s385
      %p397 = scmp.eq.s32.totalorder %s39, 1
      %p398 = por %p396, %p397
      %p400 = scmp.ne.s32.totalorder %s385, %s399
      %p401 = scmp.eq.s32.totalorder %s39, 0
      %p402 = por %p400, %p401
      %s403 = ssub.s32 %s33, %s40
      %p404 = scmp.eq.s32.totalorder %s403, 0
      %s406 = sadd.s32 %s405, 1
      %s407 = scalar_select %p404, %s405, %s406
      %p410 = pneg %p404
      %p411 = scmp.eq.s32.totalorder %s33, 1
      %p412 = por %p410, %p411
      %p413 = scmp.ne.s32.totalorder %s405, %s408
      %p414 = scmp.eq.s32.totalorder %s33, 0
      %p415 = por %p413, %p414
      %p416 = scmp.ne.s32.totalorder %s405, %s408
      %p417 = scmp.eq.s32.totalorder %s38, 1
      %p418 = por %p416, %p417
      %p419 = scmp.ne.s32.totalorder %s408, %s409
      %p420 = scmp.eq.s32.totalorder %s38, 0
      %p421 = por %p419, %p420
      %p422 = scmp.ne.s32.totalorder %s408, %s409
      %p423 = scmp.eq.s32.totalorder %s39, 1
      %p424 = por %p422, %p423
      %p426 = scmp.ne.s32.totalorder %s409, %s425
      %p427 = scmp.eq.s32.totalorder %s39, 0
      %p428 = por %p426, %p427
      %p429 = scmp.le.s32.totalorder 1, %s33
      %p430 = scmp.lt.s32.totalorder %s33, 3
      %p431 = pnand %p429, %p430
      %p432 = pneg %p431
      // Predicated region
      $region9: #{tpu_custom_call.1} parent=5 // pred_check
        _
      $region10: #{tpu_custom_call.1} parent=5 // pred_check_branch
        %434 = sbr.rel (%p431) target = $region12
      $region11: #{tpu_custom_call.1} parent=5 // pred_region
        %s435 = ssub.s32 %s33, 1
        // Predicated region
        $region13: #{tpu_custom_call.1} parent=11 // pred_check
          %p436 = pneg %p80
        $region14: #{tpu_custom_call.1} parent=11 // pred_check_branch
          %438 = sbr.rel (%p436) target = $region16
        $region15: #{tpu_custom_call.1} parent=11 // pred_region
          %s440 = ssub.s32 32, 32
          %441 = vsyncadd [#allocation7], %s440
          %s442 = sshll.u32 [#allocation6], 4
          %s443 = int_to_ptr.vmem [resolvable:$true] %s442
          %448 = dma.hbm_to_vmem [thread:$0]  %s1, 32, %s443, [#allocation7], 16, 16, 1
        $region16: #{tpu_custom_call.1} parent=11 // pred_fallthru
          _
        // Predicated region
        $region17: #{tpu_custom_call.1} parent=11 // pred_check
          %p449 = pneg %p101
        $region18: #{tpu_custom_call.1} parent=11 // pred_check_branch
          %451 = sbr.rel (%p449) target = $region20
        $region19: #{tpu_custom_call.1} parent=11 // pred_region
          _
        $region20: #{tpu_custom_call.1} parent=11 // pred_fallthru
          _
        // Predicated region
        $region21: #{tpu_custom_call.1} parent=11 // pred_check
          %p452 = pneg %p122
        $region22: #{tpu_custom_call.1} parent=11 // pred_check_branch
          %454 = sbr.rel (%p452) target = $region24
        $region23: #{tpu_custom_call.1} parent=11 // pred_region
          %s456 = ssub.s32 8192, 8192
          %457 = vsyncadd [#allocation7], %s456
          %s458 = sshll.u32 [#allocation8], 4
          %s459 = int_to_ptr.vmem [resolvable:$true] %s458
          %464 = dma.hbm_to_vmem [thread:$0]  %s3, 8192, %s459, [#allocation7], 256, 256, 16
        $region24: #{tpu_custom_call.1} parent=11 // pred_fallthru
          _
        // Predicated region
        $region25: #{tpu_custom_call.1} parent=11 // pred_check
          %p465 = pneg %p143
        $region26: #{tpu_custom_call.1} parent=11 // pred_check_branch
          %467 = sbr.rel (%p465) target = $region28
        $region27: #{tpu_custom_call.1} parent=11 // pred_region
          %s469 = ssub.s32 64, 64
          %470 = vsyncadd [#allocation10], %s469
          %s471 = sshll.u32 [#allocation9], 4
          %s472 = int_to_ptr.vmem [resolvable:$true] %s471
          %477 = dma.hbm_to_vmem [thread:$0]  %s4, 64, %s472, [#allocation10], 32, 32, 2
        $region28: #{tpu_custom_call.1} parent=11 // pred_fallthru
          _
        // Predicated region
        $region29: #{tpu_custom_call.1} parent=11 // pred_check
          %p478 = pneg %p164
        $region30: #{tpu_custom_call.1} parent=11 // pred_check_branch
          %480 = sbr.rel (%p478) target = $region32
        $region31: #{tpu_custom_call.1} parent=11 // pred_region
          %s482 = ssub.s32 16384, 16384
          %483 = vsyncadd [#allocation10], %s482
          %s484 = sshll.u32 [#allocation11], 4
          %s485 = int_to_ptr.vmem [resolvable:$true] %s484
          %490 = dma.hbm_to_vmem [thread:$0]  %s5, 16384, %s485, [#allocation10], 512, 512, 32
        $region32: #{tpu_custom_call.1} parent=11 // pred_fallthru
          _
        // Predicated region
        $region33: #{tpu_custom_call.1} parent=11 // pred_check
          %p491 = pneg %p185
        $region34: #{tpu_custom_call.1} parent=11 // pred_check_branch
          %493 = sbr.rel (%p491) target = $region36
        $region35: #{tpu_custom_call.1} parent=11 // pred_region
          _
        $region36: #{tpu_custom_call.1} parent=11 // pred_fallthru
          _
        // Predicated region
        $region37: #{tpu_custom_call.1} parent=11 // pred_check
          %p494 = pneg %p206
        $region38: #{tpu_custom_call.1} parent=11 // pred_check_branch
          %496 = sbr.rel (%p494) target = $region40
        $region39: #{tpu_custom_call.1} parent=11 // pred_region
          %s498 = ssub.s32 8192, 8192
          %499 = vsyncadd [#allocation13], %s498
          %s500 = sshll.u32 [#allocation12], 4
          %s501 = int_to_ptr.vmem [resolvable:$true] %s500
          %506 = dma.hbm_to_vmem [thread:$0]  %s7, 8192, %s501, [#allocation13], 128, 128, 8
        $region40: #{tpu_custom_call.1} parent=11 // pred_fallthru
          _
        // Predicated region
        $region41: #{tpu_custom_call.1} parent=11 // pred_check
          %p507 = pneg %p227
        $region42: #{tpu_custom_call.1} parent=11 // pred_check_branch
          %509 = sbr.rel (%p507) target = $region44
        $region43: #{tpu_custom_call.1} parent=11 // pred_region
          _
        $region44: #{tpu_custom_call.1} parent=11 // pred_fallthru
          _
        // Predicated region
        $region45: #{tpu_custom_call.1} parent=11 // pred_check
          %p510 = pneg %p248
        $region46: #{tpu_custom_call.1} parent=11 // pred_check_branch
          %512 = sbr.rel (%p510) target = $region48
        $region47: #{tpu_custom_call.1} parent=11 // pred_region
          _
        $region48: #{tpu_custom_call.1} parent=11 // pred_fallthru
          _
        // Predicated region
        $region49: #{tpu_custom_call.1} parent=11 // pred_check
          %p513 = pneg %p269
        $region50: #{tpu_custom_call.1} parent=11 // pred_check_branch
          %515 = sbr.rel (%p513) target = $region52
        $region51: #{tpu_custom_call.1} parent=11 // pred_region
          _
        $region52: #{tpu_custom_call.1} parent=11 // pred_fallthru
          _
        // Predicated region
        $region53: #{tpu_custom_call.1} parent=11 // pred_check
          %p516 = pneg %p290
        $region54: #{tpu_custom_call.1} parent=11 // pred_check_branch
          %518 = sbr.rel (%p516) target = $region56
        $region55: #{tpu_custom_call.1} parent=11 // pred_region
          %s520 = ssub.s32 4096, 4096
          %521 = vsyncadd [#allocation13], %s520
          %s522 = sshll.u32 [#allocation14], 4
          %s523 = int_to_ptr.vmem [resolvable:$true] %s522
          %528 = dma.hbm_to_vmem [thread:$0]  %s11, 4096, %s523, [#allocation13], 128, 128, 8
        $region56: #{tpu_custom_call.1} parent=11 // pred_fallthru
          _
        // Predicated region
        $region57: #{tpu_custom_call.1} parent=11 // pred_check
          %p529 = pneg %p311
        $region58: #{tpu_custom_call.1} parent=11 // pred_check_branch
          %531 = sbr.rel (%p529) target = $region60
        $region59: #{tpu_custom_call.1} parent=11 // pred_region
          _
        $region60: #{tpu_custom_call.1} parent=11 // pred_fallthru
          _
        // Predicated region
        $region61: #{tpu_custom_call.1} parent=11 // pred_check
          %p532 = pneg %p332
        $region62: #{tpu_custom_call.1} parent=11 // pred_check_branch
          %534 = sbr.rel (%p532) target = $region64
        $region63: #{tpu_custom_call.1} parent=11 // pred_region
          %s536 = ssub.s32 4096, 4096
          %537 = vsyncadd [#allocation16], %s536
          %s538 = sshll.u32 [#allocation15], 4
          %s539 = int_to_ptr.vmem [resolvable:$true] %s538
          %544 = dma.hbm_to_vmem [thread:$0]  %s13, 4096, %s539, [#allocation16], 128, 128, 8
        $region64: #{tpu_custom_call.1} parent=11 // pred_fallthru
          _
        // Predicated region
        $region65: #{tpu_custom_call.1} parent=11 // pred_check
          %p545 = pneg %p353
        $region66: #{tpu_custom_call.1} parent=11 // pred_check_branch
          %547 = sbr.rel (%p545) target = $region68
        $region67: #{tpu_custom_call.1} parent=11 // pred_region
          _
        $region68: #{tpu_custom_call.1} parent=11 // pred_fallthru
          _
        // Predicated region
        $region69: #{tpu_custom_call.1} parent=11 // pred_check
          %p548 = pneg %p374
        $region70: #{tpu_custom_call.1} parent=11 // pred_check_branch
          %550 = sbr.rel (%p548) target = $region72
        $region71: #{tpu_custom_call.1} parent=11 // pred_region
          _
        $region72: #{tpu_custom_call.1} parent=11 // pred_fallthru
          _
        // Predicated region
        $region73: #{tpu_custom_call.1} parent=11 // pred_check
          %p551 = pneg %p395
        $region74: #{tpu_custom_call.1} parent=11 // pred_check_branch
          %553 = sbr.rel (%p551) target = $region76
        $region75: #{tpu_custom_call.1} parent=11 // pred_region
          _
        $region76: #{tpu_custom_call.1} parent=11 // pred_fallthru
          _
      $region12: #{tpu_custom_call.1} parent=5 // pred_fallthru
        _
      %p554 = scmp.lt.s32.totalorder %s33, 2
      // Predicated region
      $region77: #{tpu_custom_call.1} parent=5 // pred_check
        %p555 = pneg %p554
      $region78: #{tpu_custom_call.1} parent=5 // pred_check_branch
        %557 = sbr.rel (%p555) target = $region80
      $region79: #{tpu_custom_call.1} parent=5 // pred_region
        // Predicated region
        $region81: #{tpu_custom_call.1} parent=79 // pred_check
          %p558 = pneg %p53
        $region82: #{tpu_custom_call.1} parent=79 // pred_check_branch
          %560 = sbr.rel (%p558) target = $region84
        $region83: #{tpu_custom_call.1} parent=79 // pred_region
          %s561 = sand.u32 %s43, 1
          %s562 = scalar_lea.sflag [#allocation4], %s561
          %s563 = sand.u32 %s43, 1
          %s564 = smul.addr %s563, 8
          %s565 = scalar_lea.vmem [#allocation3], %s564
          %s567 = ssub.s32 128, 128
          %568 = vsyncadd %s562, %s567
          %s569 = smul.addr %s33, 128
          %s570 = scalar_lea.hbm %s0, %s569
          %s572 = sshll.u32 %s565, 4
          %s573 = int_to_ptr.vmem [resolvable:$true] %s572
          %575 = dma.hbm_to_vmem [thread:$0]  %s570, 128, %s573, %s562
        $region84: #{tpu_custom_call.1} parent=79 // pred_fallthru
          _
      $region80: #{tpu_custom_call.1} parent=5 // pred_fallthru
        _
      %p576 = scmp.le.s32.totalorder 1, %s33
      %p577 = scmp.lt.s32.totalorder %s33, 3
      %p578 = pnand %p576, %p577
      %p579 = pneg %p578
      // Predicated region
      $region85: #{tpu_custom_call.1} parent=5 // pred_check
        _
      $region86: #{tpu_custom_call.1} parent=5 // pred_check_branch
        %581 = sbr.rel (%p578) target = $region88
      $region87: #{tpu_custom_call.1} parent=5 // pred_region
        %s582 = ssub.s32 %s33, 1
        %s583 = sand.u32 %s46, 1
        %s584 = scalar_lea.sflag [#allocation4], %s583
        %s585 = sand.u32 %s46, 1
        %s586 = smul.addr %s585, 8
        %s587 = scalar_lea.vmem [#allocation3], %s586
        // Predicated region
        $region89: #{tpu_custom_call.1} parent=87 // pred_check
          %p588 = pneg %p59
        $region90: #{tpu_custom_call.1} parent=87 // pred_check_branch
          %590 = sbr.rel (%p588) target = $region92
        $region91: #{tpu_custom_call.1} parent=87 // pred_region
          %591 = dma.done %s584, 128
        $region92: #{tpu_custom_call.1} parent=87 // pred_fallthru
          _
        // Predicated region
        $region93: #{tpu_custom_call.1} parent=87 // pred_check
          %p592 = pneg %p80
        $region94: #{tpu_custom_call.1} parent=87 // pred_check_branch
          %594 = sbr.rel (%p592) target = $region96
        $region95: #{tpu_custom_call.1} parent=87 // pred_region
          %595 = dma.done [#allocation7], 32
        $region96: #{tpu_custom_call.1} parent=87 // pred_fallthru
          _
        // Predicated region
        $region97: #{tpu_custom_call.1} parent=87 // pred_check
          %p596 = pneg %p122
        $region98: #{tpu_custom_call.1} parent=87 // pred_check_branch
          %598 = sbr.rel (%p596) target = $region100
        $region99: #{tpu_custom_call.1} parent=87 // pred_region
          %599 = dma.done [#allocation7], 8192
        $region100: #{tpu_custom_call.1} parent=87 // pred_fallthru
          _
        // Predicated region
        $region101: #{tpu_custom_call.1} parent=87 // pred_check
          %p600 = pneg %p143
        $region102: #{tpu_custom_call.1} parent=87 // pred_check_branch
          %602 = sbr.rel (%p600) target = $region104
        $region103: #{tpu_custom_call.1} parent=87 // pred_region
          %603 = dma.done [#allocation10], 64
        $region104: #{tpu_custom_call.1} parent=87 // pred_fallthru
          _
        // Predicated region
        $region105: #{tpu_custom_call.1} parent=87 // pred_check
          %p604 = pneg %p164
        $region106: #{tpu_custom_call.1} parent=87 // pred_check_branch
          %606 = sbr.rel (%p604) target = $region108
        $region107: #{tpu_custom_call.1} parent=87 // pred_region
          %607 = dma.done [#allocation10], 16384
        $region108: #{tpu_custom_call.1} parent=87 // pred_fallthru
          _
        // Predicated region
        $region109: #{tpu_custom_call.1} parent=87 // pred_check
          %p608 = pneg %p206
        $region110: #{tpu_custom_call.1} parent=87 // pred_check_branch
          %610 = sbr.rel (%p608) target = $region112
        $region111: #{tpu_custom_call.1} parent=87 // pred_region
          %611 = dma.done [#allocation13], 8192
        $region112: #{tpu_custom_call.1} parent=87 // pred_fallthru
          _
        // Predicated region
        $region113: #{tpu_custom_call.1} parent=87 // pred_check
          %p612 = pneg %p290
        $region114: #{tpu_custom_call.1} parent=87 // pred_check_branch
          %614 = sbr.rel (%p612) target = $region116
        $region115: #{tpu_custom_call.1} parent=87 // pred_region
          %615 = dma.done [#allocation13], 4096
        $region116: #{tpu_custom_call.1} parent=87 // pred_fallthru
          _
        // Predicated region
        $region117: #{tpu_custom_call.1} parent=87 // pred_check
          %p616 = pneg %p332
        $region118: #{tpu_custom_call.1} parent=87 // pred_check_branch
          %618 = sbr.rel (%p616) target = $region120
        $region119: #{tpu_custom_call.1} parent=87 // pred_region
          %619 = dma.done [#allocation16], 4096
        $region120: #{tpu_custom_call.1} parent=87 // pred_fallthru
          _
        %s620 = sand.u32 %s46, 1
        %s621 = scalar_lea.sflag [#allocation4], %s620
        %s622 = sand.u32 %s46, 1
        %s623 = smul.addr %s622, 8
        %s624 = scalar_lea.vmem [#allocation3], %s623
        %p625 = pneg %p59
        %p626 = pneg %p56
        %p627 = pneg %p80
        %p628 = pneg %p77
        %p629 = pneg %p101
        %p630 = pneg %p98
        %p631 = pneg %p122
        %p632 = pneg %p119
        %p633 = pneg %p143
        %p634 = pneg %p140
        %p635 = pneg %p164
        %p636 = pneg %p161
        %p637 = pneg %p185
        %p638 = pneg %p182
        %p639 = pneg %p206
        %p640 = pneg %p203
        %p641 = pneg %p227
        %p642 = pneg %p224
        %p643 = pneg %p248
        %p644 = pneg %p245
        %p645 = pneg %p269
        %p646 = pneg %p266
        %p647 = pneg %p290
        %p648 = pneg %p287
        %p649 = pneg %p311
        %p650 = pneg %p308
        %p651 = pneg %p332
        %p652 = pneg %p329
        %p653 = pneg %p353
        %p654 = pneg %p350
        %p655 = pneg %p374
        %p656 = pneg %p371
        %p657 = pneg %p395
        %p658 = pneg %p392
        %p659 = pneg %p421
        %p660 = pneg %p418
        %s661 = sand.u32 %s408, 1
        %s662 = scalar_lea.sflag [#allocation5], %s661
        %s663 = sand.u32 %s408, 1
        %s664 = smul.addr %s663, 8
        %s665 = scalar_lea.vmem [#allocation17], %s664
        %v666 = vlaneseq
        %v667 = vand.u32 %v666, 127
        %vm668 = vcmp.lt.s32.totalorder %v667, 32
        %v669 = vlaneseq
        %v670 = vshrl.u32 %v669, 7
        %vm671 = vcmp.le.s32.totalorder %v667, %v670
        %v672 = vld [vmem:[%s587] sm:$0xff]
        %v673 = vld [vmem:[#allocation6] sm:$0x1]
        %v674 = vld [vmem:[%s2] sm:$0x1]
        %675 = vadd.xlane.f32.xlu0 %v672
        %v676 = vpop.xlane.xlu0 %675
        %v677 = vmul.f32 %v676, 0.03125
        %v678 = vsub.f32 %v672, %v677
        %v679 = vsel %vm668, %v678, 0.0
        %v680 = vmul.f32 %v679, %v679
        %681 = vadd.xlane.f32.xlu0 %v680
        %v682 = vpop.xlane.xlu0 %681
        %v683 = vmul.f32 %v682, 0.03125
        %v684 = vadd.f32 %v683, 1e-08
        %v685 = vrsqrt.pop %v684
        %v686 = vmul.f32 %v679, %v685
        %v688 = vlaneseq
        %v689 = vshrl.u32 %v688, 7
        %v690 = vsub.s32 0, %v689
        %v691 = vrot.slane %v673, %v690
        %v693 = vmul.f32 %v686, %v691
        %v695 = vlaneseq
        %v696 = vshrl.u32 %v695, 7
        %v697 = vsub.s32 0, %v696
        %v698 = vrot.slane %v674, %v697
        %v700 = vadd.f32 %v693, %v698
        %v701 = vld [vmem:[#allocation8] sm:$0xff]
        %v702 = vld [vmem:[#allocation8 + $0x8] sm:$0xff]
        %v703 = vld [vmem:[#allocation8 + $0x10] sm:$0xff]
        %v704 = vld [vmem:[#allocation8 + $0x18] sm:$0xff]
        %v705 = vld [vmem:[#allocation8 + $0x20] sm:$0xff]
        %v706 = vld [vmem:[#allocation8 + $0x28] sm:$0xff]
        %v707 = vld [vmem:[#allocation8 + $0x30] sm:$0xff]
        %v708 = vld [vmem:[#allocation8 + $0x38] sm:$0xff]
        %v709 = vld [vmem:[#allocation8 + $0x40] sm:$0xff]
        %v710 = vld [vmem:[#allocation8 + $0x48] sm:$0xff]
        %v711 = vld [vmem:[#allocation8 + $0x50] sm:$0xff]
        %v712 = vld [vmem:[#allocation8 + $0x58] sm:$0xff]
        %v713 = vld [vmem:[#allocation8 + $0x60] sm:$0xff]
        %v714 = vld [vmem:[#allocation8 + $0x68] sm:$0xff]
        %v715 = vld [vmem:[#allocation8 + $0x70] sm:$0xff]
        %v716 = vld [vmem:[#allocation8 + $0x78] sm:$0xff]
        %v717 = vld [vmem:[#allocation8 + $0x80] sm:$0xff]
        %v718 = vld [vmem:[#allocation8 + $0x88] sm:$0xff]
        %v719 = vld [vmem:[#allocation8 + $0x90] sm:$0xff]
        %v720 = vld [vmem:[#allocation8 + $0x98] sm:$0xff]
        %v721 = vld [vmem:[#allocation8 + $0xa0] sm:$0xff]
        %v722 = vld [vmem:[#allocation8 + $0xa8] sm:$0xff]
        %v723 = vld [vmem:[#allocation8 + $0xb0] sm:$0xff]
        %v724 = vld [vmem:[#allocation8 + $0xb8] sm:$0xff]
        %v725 = vld [vmem:[#allocation8 + $0xc0] sm:$0xff]
        %v726 = vld [vmem:[#allocation8 + $0xc8] sm:$0xff]
        %v727 = vld [vmem:[#allocation8 + $0xd0] sm:$0xff]
        %v728 = vld [vmem:[#allocation8 + $0xd8] sm:$0xff]
        %v729 = vld [vmem:[#allocation8 + $0xe0] sm:$0xff]
        %v730 = vld [vmem:[#allocation8 + $0xe8] sm:$0xff]
        %v731 = vld [vmem:[#allocation8 + $0xf0] sm:$0xff]
        %v732 = vld [vmem:[#allocation8 + $0xf8] sm:$0xff]
        %v733 = vld [vmem:[#allocation9] sm:$0x3]
        %v735 = vlaneseq
        %v736 = vshrl.u32 %v735, 7
        %v737 = vsub.s32 0, %v736
        %v738 = vrot.slane %v733, %v737
        %v739 = vlaneseq
        %v740 = vshrl.u32 %v739, 7
        %v741 = vsub.s32 1, %v740
        %v742 = vrot.slane %v733, %v741
        %745 = vmatprep.subr.mxu0 %v732
        %746 = vmatpush1.msra.mxu0 %v731
        %747 = vmatprep.subr.mxu0 %v730
        %748 = vmatpush1.msra.mxu0 %v729
        %749 = vmatprep.subr.mxu0 %v728
        %750 = vmatpush1.msra.mxu0 %v727
        %751 = vmatprep.subr.mxu0 %v726
        %752 = vmatpush1.msra.mxu0 %v725
        %753 = vmatprep.subr.mxu0 %v724
        %754 = vmatpush1.msra.mxu0 %v723
        %755 = vmatprep.subr.mxu0 %v722
        %756 = vmatpush1.msra.mxu0 %v721
        %757 = vmatprep.subr.mxu0 %v720
        %758 = vmatpush1.msra.mxu0 %v719
        %759 = vmatprep.subr.mxu0 %v718
        %760 = vmatpush1.msra.mxu0 %v717
        %761 = vmatprep.subr.mxu0 %v716
        %762 = vmatpush1.msra.mxu0 %v715
        %763 = vmatprep.subr.mxu0 %v714
        %764 = vmatpush1.msra.mxu0 %v713
        %765 = vmatprep.subr.mxu0 %v712
        %766 = vmatpush1.msra.mxu0 %v711
        %767 = vmatprep.subr.mxu0 %v710
        %768 = vmatpush1.msra.mxu0 %v709
        %769 = vmatprep.subr.mxu0 %v708
        %770 = vmatpush1.msra.mxu0 %v707
        %771 = vmatprep.subr.mxu0 %v706
        %772 = vmatpush1.msra.mxu0 %v705
        %773 = vmatprep.subr.mxu0 %v704
        %774 = vmatpush1.msra.mxu0 %v703
        %775 = vmatprep.subr.mxu0 %v702
        %776 = vmatpush1.msra.mxu0 %v701
        %777 = vmatprep.subr.mxu0 0.0
        %778 = vmatpush2.msra.mxu0 0.0
        %779 = vmatprep.subr.mxu0 0.0
        %780 = vmatpush2.msra.mxu0 0.0
        %781 = vmatprep.subr.mxu0 0.0
        %782 = vmatpush2.msra.mxu0 0.0
        %783 = vmatprep.subr.mxu0 0.0
        %784 = vmatpush2.msra.mxu0 0.0
        %785 = vmatprep.subr.mxu0 0.0
        %786 = vmatpush2.msra.mxu0 0.0
        %787 = vmatprep.subr.mxu0 0.0
        %788 = vmatpush2.msra.mxu0 0.0
        %789 = vmatprep.subr.mxu0 0.0
        %790 = vmatpush2.msra.mxu0 0.0
        %791 = vmatprep.subr.mxu0 0.0
        %792 = vmatpush2.msra.mxu0 0.0
        %793 = vmatprep.subr.mxu0 0.0
        %794 = vmatpush2.msra.mxu0 0.0
        %795 = vmatprep.subr.mxu0 0.0
        %796 = vmatpush2.msra.mxu0 0.0
        %797 = vmatprep.subr.mxu0 0.0
        %798 = vmatpush2.msra.mxu0 0.0
        %799 = vmatprep.subr.mxu0 0.0
        %800 = vmatpush2.msra.mxu0 0.0
        %801 = vmatprep.subr.mxu0 0.0
        %802 = vmatpush2.msra.mxu0 0.0
        %803 = vmatprep.subr.mxu0 0.0
        %804 = vmatpush2.msra.mxu0 0.0
        %805 = vmatprep.subr.mxu0 0.0
        %806 = vmatpush2.msra.mxu0 0.0
        %807 = vmatprep.subr.mxu0 0.0
        %808 = vmatpush2.msra.mxu0 0.0
        %809 = vmatprep.mubr.f32.mxu0 0.0
        %810 = vmatmul.mubr.f32.gmra.mxu0 %v700
        %v811 = vpop.f32.mrf.mxu0
        %v812 = vadd.f32 %v738, %v811
        %v813 = vpop.f32.mrf.mxu0
        %v814 = vadd.f32 %v742, %v813
        %815 = vdwg.mxu0
        %v816 = vld [vmem:[#allocation11] sm:$0xff]
        %v817 = vld [vmem:[#allocation11 + $0x8] sm:$0xff]
        %v818 = vld [vmem:[#allocation11 + $0x10] sm:$0xff]
        %v819 = vld [vmem:[#allocation11 + $0x18] sm:$0xff]
        %v820 = vld [vmem:[#allocation11 + $0x20] sm:$0xff]
        %v821 = vld [vmem:[#allocation11 + $0x28] sm:$0xff]
        %v822 = vld [vmem:[#allocation11 + $0x30] sm:$0xff]
        %v823 = vld [vmem:[#allocation11 + $0x38] sm:$0xff]
        %v824 = vld [vmem:[#allocation11 + $0x40] sm:$0xff]
        %v825 = vld [vmem:[#allocation11 + $0x48] sm:$0xff]
        %v826 = vld [vmem:[#allocation11 + $0x50] sm:$0xff]
        %v827 = vld [vmem:[#allocation11 + $0x58] sm:$0xff]
        %v828 = vld [vmem:[#allocation11 + $0x60] sm:$0xff]
        %v829 = vld [vmem:[#allocation11 + $0x68] sm:$0xff]
        %v830 = vld [vmem:[#allocation11 + $0x70] sm:$0xff]
        %v831 = vld [vmem:[#allocation11 + $0x78] sm:$0xff]
        %v832 = vld [vmem:[#allocation11 + $0x80] sm:$0xff]
        %v833 = vld [vmem:[#allocation11 + $0x88] sm:$0xff]
        %v834 = vld [vmem:[#allocation11 + $0x90] sm:$0xff]
        %v835 = vld [vmem:[#allocation11 + $0x98] sm:$0xff]
        %v836 = vld [vmem:[#allocation11 + $0xa0] sm:$0xff]
        %v837 = vld [vmem:[#allocation11 + $0xa8] sm:$0xff]
        %v838 = vld [vmem:[#allocation11 + $0xb0] sm:$0xff]
        %v839 = vld [vmem:[#allocation11 + $0xb8] sm:$0xff]
        %v840 = vld [vmem:[#allocation11 + $0xc0] sm:$0xff]
        %v841 = vld [vmem:[#allocation11 + $0xc8] sm:$0xff]
        %v842 = vld [vmem:[#allocation11 + $0xd0] sm:$0xff]
        %v843 = vld [vmem:[#allocation11 + $0xd8] sm:$0xff]
        %v844 = vld [vmem:[#allocation11 + $0xe0] sm:$0xff]
        %v845 = vld [vmem:[#allocation11 + $0xe8] sm:$0xff]
        %v846 = vld [vmem:[#allocation11 + $0xf0] sm:$0xff]
        %v847 = vld [vmem:[#allocation11 + $0xf8] sm:$0xff]
        %v848 = vld [vmem:[#allocation11 + $0x100] sm:$0xff]
        %v849 = vld [vmem:[#allocation11 + $0x108] sm:$0xff]
        %v850 = vld [vmem:[#allocation11 + $0x110] sm:$0xff]
        %v851 = vld [vmem:[#allocation11 + $0x118] sm:$0xff]
        %v852 = vld [vmem:[#allocation11 + $0x120] sm:$0xff]
        %v853 = vld [vmem:[#allocation11 + $0x128] sm:$0xff]
        %v854 = vld [vmem:[#allocation11 + $0x130] sm:$0xff]
        %v855 = vld [vmem:[#allocation11 + $0x138] sm:$0xff]
        %v856 = vld [vmem:[#allocation11 + $0x140] sm:$0xff]
        %v857 = vld [vmem:[#allocation11 + $0x148] sm:$0xff]
        %v858 = vld [vmem:[#allocation11 + $0x150] sm:$0xff]
        %v859 = vld [vmem:[#allocation11 + $0x158] sm:$0xff]
        %v860 = vld [vmem:[#allocation11 + $0x160] sm:$0xff]
        %v861 = vld [vmem:[#allocation11 + $0x168] sm:$0xff]
        %v862 = vld [vmem:[#allocation11 + $0x170] sm:$0xff]
        %v863 = vld [vmem:[#allocation11 + $0x178] sm:$0xff]
        %v864 = vld [vmem:[#allocation11 + $0x180] sm:$0xff]
        %v865 = vld [vmem:[#allocation11 + $0x188] sm:$0xff]
        %v866 = vld [vmem:[#allocation11 + $0x190] sm:$0xff]
        %v867 = vld [vmem:[#allocation11 + $0x198] sm:$0xff]
        %v868 = vld [vmem:[#allocation11 + $0x1a0] sm:$0xff]
        %v869 = vld [vmem:[#allocation11 + $0x1a8] sm:$0xff]
        %v870 = vld [vmem:[#allocation11 + $0x1b0] sm:$0xff]
        %v871 = vld [vmem:[#allocation11 + $0x1b8] sm:$0xff]
        %v872 = vld [vmem:[#allocation11 + $0x1c0] sm:$0xff]
        %v873 = vld [vmem:[#allocation11 + $0x1c8] sm:$0xff]
        %v874 = vld [vmem:[#allocation11 + $0x1d0] sm:$0xff]
        %v875 = vld [vmem:[#allocation11 + $0x1d8] sm:$0xff]
        %v876 = vld [vmem:[#allocation11 + $0x1e0] sm:$0xff]
        %v877 = vld [vmem:[#allocation11 + $0x1e8] sm:$0xff]
        %v878 = vld [vmem:[#allocation11 + $0x1f0] sm:$0xff]
        %v879 = vld [vmem:[#allocation11 + $0x1f8] sm:$0xff]
        %v880 = vld [vmem:[%s6] sm:$0xf]
        %v882 = vlaneseq
        %v883 = vshrl.u32 %v882, 7
        %v884 = vsub.s32 0, %v883
        %v885 = vrot.slane %v880, %v884
        %v886 = vlaneseq
        %v887 = vshrl.u32 %v886, 7
        %v888 = vsub.s32 1, %v887
        %v889 = vrot.slane %v880, %v888
        %v890 = vlaneseq
        %v891 = vshrl.u32 %v890, 7
        %v892 = vsub.s32 2, %v891
        %v893 = vrot.slane %v880, %v892
        %v894 = vlaneseq
        %v895 = vshrl.u32 %v894, 7
        %v896 = vsub.s32 3, %v895
        %v897 = vrot.slane %v880, %v896
        %902 = vmatprep.subr.mxu0 %v877
        %903 = vmatpush1.msra.mxu0 %v876
        %904 = vmatprep.subr.mxu0 %v873
        %905 = vmatpush1.msra.mxu0 %v872
        %906 = vmatprep.subr.mxu0 %v869
        %907 = vmatpush1.msra.mxu0 %v868
        %908 = vmatprep.subr.mxu0 %v865
        %909 = vmatpush1.msra.mxu0 %v864
        %910 = vmatprep.subr.mxu0 %v861
        %911 = vmatpush1.msra.mxu0 %v860
        %912 = vmatprep.subr.mxu0 %v857
        %913 = vmatpush1.msra.mxu0 %v856
        %914 = vmatprep.subr.mxu0 %v853
        %915 = vmatpush1.msra.mxu0 %v852
        %916 = vmatprep.subr.mxu0 %v849
        %917 = vmatpush1.msra.mxu0 %v848
        %918 = vmatprep.subr.mxu0 %v845
        %919 = vmatpush1.msra.mxu0 %v844
        %920 = vmatprep.subr.mxu0 %v841
        %921 = vmatpush1.msra.mxu0 %v840
        %922 = vmatprep.subr.mxu0 %v837
        %923 = vmatpush1.msra.mxu0 %v836
        %924 = vmatprep.subr.mxu0 %v833
        %925 = vmatpush1.msra.mxu0 %v832
        %926 = vmatprep.subr.mxu0 %v829
        %927 = vmatpush1.msra.mxu0 %v828
        %928 = vmatprep.subr.mxu0 %v825
        %929 = vmatpush1.msra.mxu0 %v824
        %930 = vmatprep.subr.mxu0 %v821
        %931 = vmatpush1.msra.mxu0 %v820
        %932 = vmatprep.subr.mxu0 %v817
        %933 = vmatpush1.msra.mxu0 %v816
        %934 = vmatprep.subr.mxu0 0.0
        %935 = vmatpush2.msra.mxu0 0.0
        %936 = vmatprep.subr.mxu0 0.0
        %937 = vmatpush2.msra.mxu0 0.0
        %938 = vmatprep.subr.mxu0 0.0
        %939 = vmatpush2.msra.mxu0 0.0
        %940 = vmatprep.subr.mxu0 0.0
        %941 = vmatpush2.msra.mxu0 0.0
        %942 = vmatprep.subr.mxu0 0.0
        %943 = vmatpush2.msra.mxu0 0.0
        %944 = vmatprep.subr.mxu0 0.0
        %945 = vmatpush2.msra.mxu0 0.0
        %946 = vmatprep.subr.mxu0 0.0
        %947 = vmatpush2.msra.mxu0 0.0
        %948 = vmatprep.subr.mxu0 0.0
        %949 = vmatpush2.msra.mxu0 0.0
        %950 = vmatprep.subr.mxu0 0.0
        %951 = vmatpush2.msra.mxu0 0.0
        %952 = vmatprep.subr.mxu0 0.0
        %953 = vmatpush2.msra.mxu0 0.0
        %954 = vmatprep.subr.mxu0 0.0
        %955 = vmatpush2.msra.mxu0 0.0
        %956 = vmatprep.subr.mxu0 0.0
        %957 = vmatpush2.msra.mxu0 0.0
        %958 = vmatprep.subr.mxu0 0.0
        %959 = vmatpush2.msra.mxu0 0.0
        %960 = vmatprep.subr.mxu0 0.0
        %961 = vmatpush2.msra.mxu0 0.0
        %962 = vmatprep.subr.mxu0 0.0
        %963 = vmatpush2.msra.mxu0 0.0
        %964 = vmatprep.subr.mxu0 0.0
        %965 = vmatpush2.msra.mxu0 0.0
        %966 = vmatprep.mubr.f32.mxu0 0.0
        %967 = vmatmul.mubr.f32.gmra.mxu0 %v672
        %v968 = vpop.f32.mrf.mxu0
        %v969 = vadd.f32 %v885, %v968
        %v970 = vpop.f32.mrf.mxu0
        %v971 = vadd.f32 %v889, %v970
        %972 = vdwg.mxu0
        %973 = vmatprep.subr.mxu0 %v879
        %974 = vmatpush1.msra.mxu0 %v878
        %975 = vmatprep.subr.mxu0 %v875
        %976 = vmatpush1.msra.mxu0 %v874
        %977 = vmatprep.subr.mxu0 %v871
        %978 = vmatpush1.msra.mxu0 %v870
        %979 = vmatprep.subr.mxu0 %v867
        %980 = vmatpush1.msra.mxu0 %v866
        %981 = vmatprep.subr.mxu0 %v863
        %982 = vmatpush1.msra.mxu0 %v862
        %983 = vmatprep.subr.mxu0 %v859
        %984 = vmatpush1.msra.mxu0 %v858
        %985 = vmatprep.subr.mxu0 %v855
        %986 = vmatpush1.msra.mxu0 %v854
        %987 = vmatprep.subr.mxu0 %v851
        %988 = vmatpush1.msra.mxu0 %v850
        %989 = vmatprep.subr.mxu0 %v847
        %990 = vmatpush1.msra.mxu0 %v846
        %991 = vmatprep.subr.mxu0 %v843
        %992 = vmatpush1.msra.mxu0 %v842
        %993 = vmatprep.subr.mxu0 %v839
        %994 = vmatpush1.msra.mxu0 %v838
        %995 = vmatprep.subr.mxu0 %v835
        %996 = vmatpush1.msra.mxu0 %v834
        %997 = vmatprep.subr.mxu0 %v831
        %998 = vmatpush1.msra.mxu0 %v830
        %999 = vmatprep.subr.mxu0 %v827
        %1000 = vmatpush1.msra.mxu0 %v826
        %1001 = vmatprep.subr.mxu0 %v823
        %1002 = vmatpush1.msra.mxu0 %v822
        %1003 = vmatprep.subr.mxu0 %v819
        %1004 = vmatpush1.msra.mxu0 %v818
        %1005 = vmatprep.subr.mxu0 0.0
        %1006 = vmatpush2.msra.mxu0 0.0
        %1007 = vmatprep.subr.mxu0 0.0
        %1008 = vmatpush2.msra.mxu0 0.0
        %1009 = vmatprep.subr.mxu0 0.0
        %1010 = vmatpush2.msra.mxu0 0.0
        %1011 = vmatprep.subr.mxu0 0.0
        %1012 = vmatpush2.msra.mxu0 0.0
        %1013 = vmatprep.subr.mxu0 0.0
        %1014 = vmatpush2.msra.mxu0 0.0
        %1015 = vmatprep.subr.mxu0 0.0
        %1016 = vmatpush2.msra.mxu0 0.0
        %1017 = vmatprep.subr.mxu0 0.0
        %1018 = vmatpush2.msra.mxu0 0.0
        %1019 = vmatprep.subr.mxu0 0.0
        %1020 = vmatpush2.msra.mxu0 0.0
        %1021 = vmatprep.subr.mxu0 0.0
        %1022 = vmatpush2.msra.mxu0 0.0
        %1023 = vmatprep.subr.mxu0 0.0
        %1024 = vmatpush2.msra.mxu0 0.0
        %1025 = vmatprep.subr.mxu0 0.0
        %1026 = vmatpush2.msra.mxu0 0.0
        %1027 = vmatprep.subr.mxu0 0.0
        %1028 = vmatpush2.msra.mxu0 0.0
        %1029 = vmatprep.subr.mxu0 0.0
        %1030 = vmatpush2.msra.mxu0 0.0
        %1031 = vmatprep.subr.mxu0 0.0
        %1032 = vmatpush2.msra.mxu0 0.0
        %1033 = vmatprep.subr.mxu0 0.0
        %1034 = vmatpush2.msra.mxu0 0.0
        %1035 = vmatprep.subr.mxu0 0.0
        %1036 = vmatpush2.msra.mxu0 0.0
        %1037 = vmatprep.mubr.f32.mxu0 0.0
        %1038 = vmatmul.mubr.f32.gmra.mxu0 %v672
        %v1039 = vpop.f32.mrf.mxu0
        %v1040 = vadd.f32 %v893, %v1039
        %v1041 = vpop.f32.mrf.mxu0
        %v1042 = vadd.f32 %v897, %v1041
        %1043 = vdwg.mxu0
        %v1044 = vmul.f32 %v812, 0.25
        %v1045 = vmul.f32 %v814, 0.25
        %1046 = vmatprep.subr.mxu0 0.0
        %1047 = vmatpush1.xpose.msra.mxu0 0.0
        %1048 = vmatprep.subr.mxu0 0.0
        %1049 = vmatpush1.xpose.msra.mxu0 0.0
        %1050 = vmatprep.subr.mxu0 0.0
        %1051 = vmatpush1.xpose.msra.mxu0 0.0
        %1052 = vmatprep.subr.mxu0 0.0
        %1053 = vmatpush1.xpose.msra.mxu0 0.0
        %1054 = vmatprep.subr.mxu0 0.0
        %1055 = vmatpush1.xpose.msra.mxu0 0.0
        %1056 = vmatprep.subr.mxu0 0.0
        %1057 = vmatpush1.xpose.msra.mxu0 0.0
        %1058 = vmatprep.subr.mxu0 0.0
        %1059 = vmatpush1.xpose.msra.mxu0 0.0
        %1060 = vmatprep.subr.mxu0 0.0
        %1061 = vmatpush1.xpose.msra.mxu0 0.0
        %1062 = vmatprep.subr.mxu0 0.0
        %1063 = vmatpush1.xpose.msra.mxu0 0.0
        %1064 = vmatprep.subr.mxu0 0.0
        %1065 = vmatpush1.xpose.msra.mxu0 0.0
        %1066 = vmatprep.subr.mxu0 0.0
        %1067 = vmatpush1.xpose.msra.mxu0 0.0
        %1068 = vmatprep.subr.mxu0 0.0
        %1069 = vmatpush1.xpose.msra.mxu0 0.0
        %1070 = vmatprep.subr.mxu0 0.0
        %1071 = vmatpush1.xpose.msra.mxu0 0.0
        %1072 = vmatprep.subr.mxu0 0.0
        %1073 = vmatpush1.xpose.msra.mxu0 0.0
        %1074 = vmatprep.subr.mxu0 0.0
        %1075 = vmatpush1.xpose.msra.mxu0 0.0
        %1076 = vmatprep.subr.mxu0 0.0
        %1077 = vmatpush1.xpose.msra.mxu0 %v969
        %1078 = vmatprep.subr.mxu0 0.0
        %1079 = vmatpush2.xpose.msra.mxu0 0.0
        %1080 = vmatprep.subr.mxu0 0.0
        %1081 = vmatpush2.xpose.msra.mxu0 0.0
        %1082 = vmatprep.subr.mxu0 0.0
        %1083 = vmatpush2.xpose.msra.mxu0 0.0
        %1084 = vmatprep.subr.mxu0 0.0
        %1085 = vmatpush2.xpose.msra.mxu0 0.0
        %1086 = vmatprep.subr.mxu0 0.0
        %1087 = vmatpush2.xpose.msra.mxu0 0.0
        %1088 = vmatprep.subr.mxu0 0.0
        %1089 = vmatpush2.xpose.msra.mxu0 0.0
        %1090 = vmatprep.subr.mxu0 0.0
        %1091 = vmatpush2.xpose.msra.mxu0 0.0
        %1092 = vmatprep.subr.mxu0 0.0
        %1093 = vmatpush2.xpose.msra.mxu0 0.0
        %1094 = vmatprep.subr.mxu0 0.0
        %1095 = vmatpush2.xpose.msra.mxu0 0.0
        %1096 = vmatprep.subr.mxu0 0.0
        %1097 = vmatpush2.xpose.msra.mxu0 0.0
        %1098 = vmatprep.subr.mxu0 0.0
        %1099 = vmatpush2.xpose.msra.mxu0 0.0
        %1100 = vmatprep.subr.mxu0 0.0
        %1101 = vmatpush2.xpose.msra.mxu0 0.0
        %1102 = vmatprep.subr.mxu0 0.0
        %1103 = vmatpush2.xpose.msra.mxu0 0.0
        %1104 = vmatprep.subr.mxu0 0.0
        %1105 = vmatpush2.xpose.msra.mxu0 0.0
        %1106 = vmatprep.subr.mxu0 0.0
        %1107 = vmatpush2.xpose.msra.mxu0 0.0
        %1108 = vmatprep.subr.mxu0 0.0
        %1109 = vmatpush2.xpose.msra.mxu0 0.0
        %1110 = vmatprep.mubr.f32.mxu0 0.0
        %1111 = vmatmul.mubr.f32.gmra.mxu0 %v1044
        %v1112 = vpop.f32.mrf.mxu0
        %v1113 = vadd.f32 0.0, %v1112
        %v1114 = vpop.f32.mrf.mxu0
        %1115 = vdwg.mxu0
        %v1116 = vsel %vm671, %v1113, -1e+30
        %vm1117 = vcmask 64512
        %v1118 = vsel %vm1117, %v1116, -inf
        %1119 = vmax.xlane.f32.xlu0 %v1118
        %v1120 = vpop.xlane.xlu0 %1119
        %v1121 = vsub.f32 %v1116, %v1120
        %v1122 = vmul.f32 %v1121, 1.442695
        %v1123 = vpow.pop %v1122
        %v1124 = vsel %vm1117, %v1123, 0.0
        %1125 = vadd.xlane.f32.xlu0 %v1124
        %v1126 = vpop.xlane.xlu0 %1125
        %v1127 = vrcp.pop %v1126
        %v1128 = vmul.f32 %v1126, %v1127
        %v1129 = vsub.f32 2.0, %v1128
        %v1130 = vmul.f32 %v1127, %v1129
        %v1131 = vmul.f32 %v1123, %v1130
        %v1133 = vsel %vm1117, %v1131, 0
        %1135 = vmatprep.subr.mxu0 0.0
        %1136 = vmatpush1.msra.mxu0 0.0
        %1137 = vmatprep.subr.mxu0 0.0
        %1138 = vmatpush1.msra.mxu0 0.0
        %1139 = vmatprep.subr.mxu0 0.0
        %1140 = vmatpush1.msra.mxu0 0.0
        %1141 = vmatprep.subr.mxu0 0.0
        %1142 = vmatpush1.msra.mxu0 0.0
        %1143 = vmatprep.subr.mxu0 0.0
        %1144 = vmatpush1.msra.mxu0 0.0
        %1145 = vmatprep.subr.mxu0 0.0
        %1146 = vmatpush1.msra.mxu0 0.0
        %1147 = vmatprep.subr.mxu0 0.0
        %1148 = vmatpush1.msra.mxu0 0.0
        %1149 = vmatprep.subr.mxu0 0.0
        %1150 = vmatpush1.msra.mxu0 0.0
        %1151 = vmatprep.subr.mxu0 0.0
        %1152 = vmatpush1.msra.mxu0 0.0
        %1153 = vmatprep.subr.mxu0 0.0
        %1154 = vmatpush1.msra.mxu0 0.0
        %1155 = vmatprep.subr.mxu0 0.0
        %1156 = vmatpush1.msra.mxu0 0.0
        %1157 = vmatprep.subr.mxu0 0.0
        %1158 = vmatpush1.msra.mxu0 0.0
        %1159 = vmatprep.subr.mxu0 0.0
        %1160 = vmatpush1.msra.mxu0 0.0
        %1161 = vmatprep.subr.mxu0 0.0
        %1162 = vmatpush1.msra.mxu0 0.0
        %1163 = vmatprep.subr.mxu0 0.0
        %1164 = vmatpush1.msra.mxu0 0.0
        %1165 = vmatprep.subr.mxu0 0.0
        %1166 = vmatpush1.msra.mxu0 %v1040
        %1167 = vmatprep.subr.mxu0 0.0
        %1168 = vmatpush2.msra.mxu0 0.0
        %1169 = vmatprep.subr.mxu0 0.0
        %1170 = vmatpush2.msra.mxu0 0.0
        %1171 = vmatprep.subr.mxu0 0.0
        %1172 = vmatpush2.msra.mxu0 0.0
        %1173 = vmatprep.subr.mxu0 0.0
        %1174 = vmatpush2.msra.mxu0 0.0
        %1175 = vmatprep.subr.mxu0 0.0
        %1176 = vmatpush2.msra.mxu0 0.0
        %1177 = vmatprep.subr.mxu0 0.0
        %1178 = vmatpush2.msra.mxu0 0.0
        %1179 = vmatprep.subr.mxu0 0.0
        %1180 = vmatpush2.msra.mxu0 0.0
        %1181 = vmatprep.subr.mxu0 0.0
        %1182 = vmatpush2.msra.mxu0 0.0
        %1183 = vmatprep.subr.mxu0 0.0
        %1184 = vmatpush2.msra.mxu0 0.0
        %1185 = vmatprep.subr.mxu0 0.0
        %1186 = vmatpush2.msra.mxu0 0.0
        %1187 = vmatprep.subr.mxu0 0.0
        %1188 = vmatpush2.msra.mxu0 0.0
        %1189 = vmatprep.subr.mxu0 0.0
        %1190 = vmatpush2.msra.mxu0 0.0
        %1191 = vmatprep.subr.mxu0 0.0
        %1192 = vmatpush2.msra.mxu0 0.0
        %1193 = vmatprep.subr.mxu0 0.0
        %1194 = vmatpush2.msra.mxu0 0.0
        %1195 = vmatprep.subr.mxu0 0.0
        %1196 = vmatpush2.msra.mxu0 0.0
        %1197 = vmatprep.subr.mxu0 0.0
        %1198 = vmatpush2.msra.mxu0 0.0
        %1199 = vmatprep.mubr.f32.mxu0 0.0
        %1200 = vmatmul.mubr.f32.gmra.mxu0 %v1133
        %v1201 = vpop.f32.mrf.mxu0
        %v1202 = vadd.f32 0.0, %v1201
        %v1203 = vpop.f32.mrf.mxu0
        %1204 = vdwg.mxu0
        %1205 = vst [vmem:[#allocation2] sm:$0xff] %v1202
        %1206 = vmatprep.subr.mxu0 0.0
        %1207 = vmatpush1.xpose.msra.mxu0 0.0
        %1208 = vmatprep.subr.mxu0 0.0
        %1209 = vmatpush1.xpose.msra.mxu0 0.0
        %1210 = vmatprep.subr.mxu0 0.0
        %1211 = vmatpush1.xpose.msra.mxu0 0.0
        %1212 = vmatprep.subr.mxu0 0.0
        %1213 = vmatpush1.xpose.msra.mxu0 0.0
        %1214 = vmatprep.subr.mxu0 0.0
        %1215 = vmatpush1.xpose.msra.mxu0 0.0
        %1216 = vmatprep.subr.mxu0 0.0
        %1217 = vmatpush1.xpose.msra.mxu0 0.0
        %1218 = vmatprep.subr.mxu0 0.0
        %1219 = vmatpush1.xpose.msra.mxu0 0.0
        %1220 = vmatprep.subr.mxu0 0.0
        %1221 = vmatpush1.xpose.msra.mxu0 0.0
        %1222 = vmatprep.subr.mxu0 0.0
        %1223 = vmatpush1.xpose.msra.mxu0 0.0
        %1224 = vmatprep.subr.mxu0 0.0
        %1225 = vmatpush1.xpose.msra.mxu0 0.0
        %1226 = vmatprep.subr.mxu0 0.0
        %1227 = vmatpush1.xpose.msra.mxu0 0.0
        %1228 = vmatprep.subr.mxu0 0.0
        %1229 = vmatpush1.xpose.msra.mxu0 0.0
        %1230 = vmatprep.subr.mxu0 0.0
        %1231 = vmatpush1.xpose.msra.mxu0 0.0
        %1232 = vmatprep.subr.mxu0 0.0
        %1233 = vmatpush1.xpose.msra.mxu0 0.0
        %1234 = vmatprep.subr.mxu0 0.0
        %1235 = vmatpush1.xpose.msra.mxu0 0.0
        %1236 = vmatprep.subr.mxu0 0.0
        %1237 = vmatpush1.xpose.msra.mxu0 %v971
        %1238 = vmatprep.subr.mxu0 0.0
        %1239 = vmatpush2.xpose.msra.mxu0 0.0
        %1240 = vmatprep.subr.mxu0 0.0
        %1241 = vmatpush2.xpose.msra.mxu0 0.0
        %1242 = vmatprep.subr.mxu0 0.0
        %1243 = vmatpush2.xpose.msra.mxu0 0.0
        %1244 = vmatprep.subr.mxu0 0.0
        %1245 = vmatpush2.xpose.msra.mxu0 0.0
        %1246 = vmatprep.subr.mxu0 0.0
        %1247 = vmatpush2.xpose.msra.mxu0 0.0
        %1248 = vmatprep.subr.mxu0 0.0
        %1249 = vmatpush2.xpose.msra.mxu0 0.0
        %1250 = vmatprep.subr.mxu0 0.0
        %1251 = vmatpush2.xpose.msra.mxu0 0.0
        %1252 = vmatprep.subr.mxu0 0.0
        %1253 = vmatpush2.xpose.msra.mxu0 0.0
        %1254 = vmatprep.subr.mxu0 0.0
        %1255 = vmatpush2.xpose.msra.mxu0 0.0
        %1256 = vmatprep.subr.mxu0 0.0
        %1257 = vmatpush2.xpose.msra.mxu0 0.0
        %1258 = vmatprep.subr.mxu0 0.0
        %1259 = vmatpush2.xpose.msra.mxu0 0.0
        %1260 = vmatprep.subr.mxu0 0.0
        %1261 = vmatpush2.xpose.msra.mxu0 0.0
        %1262 = vmatprep.subr.mxu0 0.0
        %1263 = vmatpush2.xpose.msra.mxu0 0.0
        %1264 = vmatprep.subr.mxu0 0.0
        %1265 = vmatpush2.xpose.msra.mxu0 0.0
        %1266 = vmatprep.subr.mxu0 0.0
        %1267 = vmatpush2.xpose.msra.mxu0 0.0
        %1268 = vmatprep.subr.mxu0 0.0
        %1269 = vmatpush2.xpose.msra.mxu0 0.0
        %1270 = vmatprep.mubr.f32.mxu0 0.0
        %1271 = vmatmul.mubr.f32.gmra.mxu0 %v1045
        %v1272 = vpop.f32.mrf.mxu0
        %v1273 = vadd.f32 0.0, %v1272
        %v1274 = vpop.f32.mrf.mxu0
        %1275 = vdwg.mxu0
        %v1276 = vsel %vm671, %v1273, -1e+30
        %v1277 = vsel %vm1117, %v1276, -inf
        %1278 = vmax.xlane.f32.xlu0 %v1277
        %v1279 = vpop.xlane.xlu0 %1278
        %v1280 = vsub.f32 %v1276, %v1279
        %v1281 = vmul.f32 %v1280, 1.442695
        %v1282 = vpow.pop %v1281
        %v1283 = vsel %vm1117, %v1282, 0.0
        %1284 = vadd.xlane.f32.xlu0 %v1283
        %v1285 = vpop.xlane.xlu0 %1284
        %v1286 = vrcp.pop %v1285
        %v1287 = vmul.f32 %v1285, %v1286
        %v1288 = vsub.f32 2.0, %v1287
        %v1289 = vmul.f32 %v1286, %v1288
        %v1290 = vmul.f32 %v1282, %v1289
        %v1292 = vsel %vm1117, %v1290, 0
        %1294 = vmatprep.subr.mxu0 0.0
        %1295 = vmatpush1.msra.mxu0 0.0
        %1296 = vmatprep.subr.mxu0 0.0
        %1297 = vmatpush1.msra.mxu0 0.0
        %1298 = vmatprep.subr.mxu0 0.0
        %1299 = vmatpush1.msra.mxu0 0.0
        %1300 = vmatprep.subr.mxu0 0.0
        %1301 = vmatpush1.msra.mxu0 0.0
        %1302 = vmatprep.subr.mxu0 0.0
        %1303 = vmatpush1.msra.mxu0 0.0
        %1304 = vmatprep.subr.mxu0 0.0
        %1305 = vmatpush1.msra.mxu0 0.0
        %1306 = vmatprep.subr.mxu0 0.0
        %1307 = vmatpush1.msra.mxu0 0.0
        %1308 = vmatprep.subr.mxu0 0.0
        %1309 = vmatpush1.msra.mxu0 0.0
        %1310 = vmatprep.subr.mxu0 0.0
        %1311 = vmatpush1.msra.mxu0 0.0
        %1312 = vmatprep.subr.mxu0 0.0
        %1313 = vmatpush1.msra.mxu0 0.0
        %1314 = vmatprep.subr.mxu0 0.0
        %1315 = vmatpush1.msra.mxu0 0.0
        %1316 = vmatprep.subr.mxu0 0.0
        %1317 = vmatpush1.msra.mxu0 0.0
        %1318 = vmatprep.subr.mxu0 0.0
        %1319 = vmatpush1.msra.mxu0 0.0
        %1320 = vmatprep.subr.mxu0 0.0
        %1321 = vmatpush1.msra.mxu0 0.0
        %1322 = vmatprep.subr.mxu0 0.0
        %1323 = vmatpush1.msra.mxu0 0.0
        %1324 = vmatprep.subr.mxu0 0.0
        %1325 = vmatpush1.msra.mxu0 %v1042
        %1326 = vmatprep.subr.mxu0 0.0
        %1327 = vmatpush2.msra.mxu0 0.0
        %1328 = vmatprep.subr.mxu0 0.0
        %1329 = vmatpush2.msra.mxu0 0.0
        %1330 = vmatprep.subr.mxu0 0.0
        %1331 = vmatpush2.msra.mxu0 0.0
        %1332 = vmatprep.subr.mxu0 0.0
        %1333 = vmatpush2.msra.mxu0 0.0
        %1334 = vmatprep.subr.mxu0 0.0
        %1335 = vmatpush2.msra.mxu0 0.0
        %1336 = vmatprep.subr.mxu0 0.0
        %1337 = vmatpush2.msra.mxu0 0.0
        %1338 = vmatprep.subr.mxu0 0.0
        %1339 = vmatpush2.msra.mxu0 0.0
        %1340 = vmatprep.subr.mxu0 0.0
        %1341 = vmatpush2.msra.mxu0 0.0
        %1342 = vmatprep.subr.mxu0 0.0
        %1343 = vmatpush2.msra.mxu0 0.0
        %1344 = vmatprep.subr.mxu0 0.0
        %1345 = vmatpush2.msra.mxu0 0.0
        %1346 = vmatprep.subr.mxu0 0.0
        %1347 = vmatpush2.msra.mxu0 0.0
        %1348 = vmatprep.subr.mxu0 0.0
        %1349 = vmatpush2.msra.mxu0 0.0
        %1350 = vmatprep.subr.mxu0 0.0
        %1351 = vmatpush2.msra.mxu0 0.0
        %1352 = vmatprep.subr.mxu0 0.0
        %1353 = vmatpush2.msra.mxu0 0.0
        %1354 = vmatprep.subr.mxu0 0.0
        %1355 = vmatpush2.msra.mxu0 0.0
        %1356 = vmatprep.subr.mxu0 0.0
        %1357 = vmatpush2.msra.mxu0 0.0
        %1358 = vmatprep.mubr.f32.mxu0 0.0
        %1359 = vmatmul.mubr.f32.gmra.mxu0 %v1292
        %v1360 = vpop.f32.mrf.mxu0
        %v1361 = vadd.f32 0.0, %v1360
        %v1362 = vpop.f32.mrf.mxu0
        %1363 = vdwg.mxu0
        %1364 = vst [vmem:[#allocation2 + $0x8] sm:$0xff] %v1361
        %v1365 = vld [vmem:[#allocation2] sm:$0xff]
        %v1366 = vld [vmem:[#allocation2 + $0x8] sm:$0xff]
        %v1367 = vld [vmem:[#allocation12] sm:$0xff]
        %v1368 = vld [vmem:[#allocation12 + $0x8] sm:$0xff]
        %v1369 = vld [vmem:[#allocation12 + $0x10] sm:$0xff]
        %v1370 = vld [vmem:[#allocation12 + $0x18] sm:$0xff]
        %v1371 = vld [vmem:[#allocation12 + $0x20] sm:$0xff]
        %v1372 = vld [vmem:[#allocation12 + $0x28] sm:$0xff]
        %v1373 = vld [vmem:[#allocation12 + $0x30] sm:$0xff]
        %v1374 = vld [vmem:[#allocation12 + $0x38] sm:$0xff]
        %v1375 = vld [vmem:[#allocation12 + $0x40] sm:$0xff]
        %v1376 = vld [vmem:[#allocation12 + $0x48] sm:$0xff]
        %v1377 = vld [vmem:[#allocation12 + $0x50] sm:$0xff]
        %v1378 = vld [vmem:[#allocation12 + $0x58] sm:$0xff]
        %v1379 = vld [vmem:[#allocation12 + $0x60] sm:$0xff]
        %v1380 = vld [vmem:[#allocation12 + $0x68] sm:$0xff]
        %v1381 = vld [vmem:[#allocation12 + $0x70] sm:$0xff]
        %v1382 = vld [vmem:[#allocation12 + $0x78] sm:$0xff]
        %v1383 = vld [vmem:[#allocation12 + $0x80] sm:$0xff]
        %v1384 = vld [vmem:[#allocation12 + $0x88] sm:$0xff]
        %v1385 = vld [vmem:[#allocation12 + $0x90] sm:$0xff]
        %v1386 = vld [vmem:[#allocation12 + $0x98] sm:$0xff]
        %v1387 = vld [vmem:[#allocation12 + $0xa0] sm:$0xff]
        %v1388 = vld [vmem:[#allocation12 + $0xa8] sm:$0xff]
        %v1389 = vld [vmem:[#allocation12 + $0xb0] sm:$0xff]
        %v1390 = vld [vmem:[#allocation12 + $0xb8] sm:$0xff]
        %v1391 = vld [vmem:[#allocation12 + $0xc0] sm:$0xff]
        %v1392 = vld [vmem:[#allocation12 + $0xc8] sm:$0xff]
        %v1393 = vld [vmem:[#allocation12 + $0xd0] sm:$0xff]
        %v1394 = vld [vmem:[#allocation12 + $0xd8] sm:$0xff]
        %v1395 = vld [vmem:[#allocation12 + $0xe0] sm:$0xff]
        %v1396 = vld [vmem:[#allocation12 + $0xe8] sm:$0xff]
        %v1397 = vld [vmem:[#allocation12 + $0xf0] sm:$0xff]
        %v1398 = vld [vmem:[#allocation12 + $0xf8] sm:$0xff]
        %v1399 = vld [vmem:[%s8] sm:$0x1]
        %v1401 = vlaneseq
        %v1402 = vshrl.u32 %v1401, 7
        %v1403 = vsub.s32 0, %v1402
        %v1404 = vrot.slane %v1399, %v1403
        %1406 = vmatprep.subr.mxu0 0.0
        %1407 = vmatpush1.msra.mxu0 %v1382
        %1408 = vmatprep.subr.mxu0 0.0
        %1409 = vmatpush1.msra.mxu0 %v1381
        %1410 = vmatprep.subr.mxu0 0.0
        %1411 = vmatpush1.msra.mxu0 %v1380
        %1412 = vmatprep.subr.mxu0 0.0
        %1413 = vmatpush1.msra.mxu0 %v1379
        %1414 = vmatprep.subr.mxu0 0.0
        %1415 = vmatpush1.msra.mxu0 %v1378
        %1416 = vmatprep.subr.mxu0 0.0
        %1417 = vmatpush1.msra.mxu0 %v1377
        %1418 = vmatprep.subr.mxu0 0.0
        %1419 = vmatpush1.msra.mxu0 %v1376
        %1420 = vmatprep.subr.mxu0 0.0
        %1421 = vmatpush1.msra.mxu0 %v1375
        %1422 = vmatprep.subr.mxu0 0.0
        %1423 = vmatpush1.msra.mxu0 %v1374
        %1424 = vmatprep.subr.mxu0 0.0
        %1425 = vmatpush1.msra.mxu0 %v1373
        %1426 = vmatprep.subr.mxu0 0.0
        %1427 = vmatpush1.msra.mxu0 %v1372
        %1428 = vmatprep.subr.mxu0 0.0
        %1429 = vmatpush1.msra.mxu0 %v1371
        %1430 = vmatprep.subr.mxu0 0.0
        %1431 = vmatpush1.msra.mxu0 %v1370
        %1432 = vmatprep.subr.mxu0 0.0
        %1433 = vmatpush1.msra.mxu0 %v1369
        %1434 = vmatprep.subr.mxu0 0.0
        %1435 = vmatpush1.msra.mxu0 %v1368
        %1436 = vmatprep.subr.mxu0 0.0
        %1437 = vmatpush1.msra.mxu0 %v1367
        %1438 = vmatprep.subr.mxu0 0.0
        %1439 = vmatpush2.msra.mxu0 %v1398
        %1440 = vmatprep.subr.mxu0 0.0
        %1441 = vmatpush2.msra.mxu0 %v1397
        %1442 = vmatprep.subr.mxu0 0.0
        %1443 = vmatpush2.msra.mxu0 %v1396
        %1444 = vmatprep.subr.mxu0 0.0
        %1445 = vmatpush2.msra.mxu0 %v1395
        %1446 = vmatprep.subr.mxu0 0.0
        %1447 = vmatpush2.msra.mxu0 %v1394
        %1448 = vmatprep.subr.mxu0 0.0
        %1449 = vmatpush2.msra.mxu0 %v1393
        %1450 = vmatprep.subr.mxu0 0.0
        %1451 = vmatpush2.msra.mxu0 %v1392
        %1452 = vmatprep.subr.mxu0 0.0
        %1453 = vmatpush2.msra.mxu0 %v1391
        %1454 = vmatprep.subr.mxu0 0.0
        %1455 = vmatpush2.msra.mxu0 %v1390
        %1456 = vmatprep.subr.mxu0 0.0
        %1457 = vmatpush2.msra.mxu0 %v1389
        %1458 = vmatprep.subr.mxu0 0.0
        %1459 = vmatpush2.msra.mxu0 %v1388
        %1460 = vmatprep.subr.mxu0 0.0
        %1461 = vmatpush2.msra.mxu0 %v1387
        %1462 = vmatprep.subr.mxu0 0.0
        %1463 = vmatpush2.msra.mxu0 %v1386
        %1464 = vmatprep.subr.mxu0 0.0
        %1465 = vmatpush2.msra.mxu0 %v1385
        %1466 = vmatprep.subr.mxu0 0.0
        %1467 = vmatpush2.msra.mxu0 %v1384
        %1468 = vmatprep.subr.mxu0 0.0
        %1469 = vmatpush2.msra.mxu0 %v1383
        %1470 = vmatprep.mubr.f32.mxu0 %v1366
        %1471 = vmatmul.mubr.f32.gmra.mxu0 %v1365
        %v1472 = vpop.f32.mrf.mxu0
        %v1473 = vadd.f32 %v1404, %v1472
        %v1474 = vpop.f32.mrf.mxu0
        %1475 = vdwg.mxu0
        %v1476 = vadd.f32 %v700, %v1473
        %v1477 = vld [vmem:[%s9] sm:$0x1]
        %v1478 = vld [vmem:[%s10] sm:$0x1]
        %1479 = vadd.xlane.f32.xlu0 %v1476
        %v1480 = vpop.xlane.xlu0 %1479
        %v1481 = vmul.f32 %v1480, 0.03125
        %v1482 = vsub.f32 %v1476, %v1481
        %v1483 = vsel %vm668, %v1482, 0.0
        %v1484 = vmul.f32 %v1483, %v1483
        %1485 = vadd.xlane.f32.xlu0 %v1484
        %v1486 = vpop.xlane.xlu0 %1485
        %v1487 = vmul.f32 %v1486, 0.03125
        %v1488 = vadd.f32 %v1487, 1e-08
        %v1489 = vrsqrt.pop %v1488
        %v1490 = vmul.f32 %v1483, %v1489
        %v1492 = vlaneseq
        %v1493 = vshrl.u32 %v1492, 7
        %v1494 = vsub.s32 0, %v1493
        %v1495 = vrot.slane %v1477, %v1494
        %v1497 = vmul.f32 %v1490, %v1495
        %v1499 = vlaneseq
        %v1500 = vshrl.u32 %v1499, 7
        %v1501 = vsub.s32 0, %v1500
        %v1502 = vrot.slane %v1478, %v1501
        %v1504 = vadd.f32 %v1497, %v1502
        %v1505 = vld [vmem:[#allocation14] sm:$0xff]
        %v1506 = vld [vmem:[#allocation14 + $0x8] sm:$0xff]
        %v1507 = vld [vmem:[#allocation14 + $0x10] sm:$0xff]
        %v1508 = vld [vmem:[#allocation14 + $0x18] sm:$0xff]
        %v1509 = vld [vmem:[#allocation14 + $0x20] sm:$0xff]
        %v1510 = vld [vmem:[#allocation14 + $0x28] sm:$0xff]
        %v1511 = vld [vmem:[#allocation14 + $0x30] sm:$0xff]
        %v1512 = vld [vmem:[#allocation14 + $0x38] sm:$0xff]
        %v1513 = vld [vmem:[#allocation14 + $0x40] sm:$0xff]
        %v1514 = vld [vmem:[#allocation14 + $0x48] sm:$0xff]
        %v1515 = vld [vmem:[#allocation14 + $0x50] sm:$0xff]
        %v1516 = vld [vmem:[#allocation14 + $0x58] sm:$0xff]
        %v1517 = vld [vmem:[#allocation14 + $0x60] sm:$0xff]
        %v1518 = vld [vmem:[#allocation14 + $0x68] sm:$0xff]
        %v1519 = vld [vmem:[#allocation14 + $0x70] sm:$0xff]
        %v1520 = vld [vmem:[#allocation14 + $0x78] sm:$0xff]
        %v1521 = vld [vmem:[%s12] sm:$0x1]
        %v1523 = vlaneseq
        %v1524 = vshrl.u32 %v1523, 7
        %v1525 = vsub.s32 0, %v1524
        %v1526 = vrot.slane %v1521, %v1525
        %1528 = vmatprep.subr.mxu0 0.0
        %1529 = vmatpush1.msra.mxu0 %v1520
        %1530 = vmatprep.subr.mxu0 0.0
        %1531 = vmatpush1.msra.mxu0 %v1519
        %1532 = vmatprep.subr.mxu0 0.0
        %1533 = vmatpush1.msra.mxu0 %v1518
        %1534 = vmatprep.subr.mxu0 0.0
        %1535 = vmatpush1.msra.mxu0 %v1517
        %1536 = vmatprep.subr.mxu0 0.0
        %1537 = vmatpush1.msra.mxu0 %v1516
        %1538 = vmatprep.subr.mxu0 0.0
        %1539 = vmatpush1.msra.mxu0 %v1515
        %1540 = vmatprep.subr.mxu0 0.0
        %1541 = vmatpush1.msra.mxu0 %v1514
        %1542 = vmatprep.subr.mxu0 0.0
        %1543 = vmatpush1.msra.mxu0 %v1513
        %1544 = vmatprep.subr.mxu0 0.0
        %1545 = vmatpush1.msra.mxu0 %v1512
        %1546 = vmatprep.subr.mxu0 0.0
        %1547 = vmatpush1.msra.mxu0 %v1511
        %1548 = vmatprep.subr.mxu0 0.0
        %1549 = vmatpush1.msra.mxu0 %v1510
        %1550 = vmatprep.subr.mxu0 0.0
        %1551 = vmatpush1.msra.mxu0 %v1509
        %1552 = vmatprep.subr.mxu0 0.0
        %1553 = vmatpush1.msra.mxu0 %v1508
        %1554 = vmatprep.subr.mxu0 0.0
        %1555 = vmatpush1.msra.mxu0 %v1507
        %1556 = vmatprep.subr.mxu0 0.0
        %1557 = vmatpush1.msra.mxu0 %v1506
        %1558 = vmatprep.subr.mxu0 0.0
        %1559 = vmatpush1.msra.mxu0 %v1505
        %1560 = vmatprep.subr.mxu0 0.0
        %1561 = vmatpush2.msra.mxu0 0.0
        %1562 = vmatprep.subr.mxu0 0.0
        %1563 = vmatpush2.msra.mxu0 0.0
        %1564 = vmatprep.subr.mxu0 0.0
        %1565 = vmatpush2.msra.mxu0 0.0
        %1566 = vmatprep.subr.mxu0 0.0
        %1567 = vmatpush2.msra.mxu0 0.0
        %1568 = vmatprep.subr.mxu0 0.0
        %1569 = vmatpush2.msra.mxu0 0.0
        %1570 = vmatprep.subr.mxu0 0.0
        %1571 = vmatpush2.msra.mxu0 0.0
        %1572 = vmatprep.subr.mxu0 0.0
        %1573 = vmatpush2.msra.mxu0 0.0
        %1574 = vmatprep.subr.mxu0 0.0
        %1575 = vmatpush2.msra.mxu0 0.0
        %1576 = vmatprep.subr.mxu0 0.0
        %1577 = vmatpush2.msra.mxu0 0.0
        %1578 = vmatprep.subr.mxu0 0.0
        %1579 = vmatpush2.msra.mxu0 0.0
        %1580 = vmatprep.subr.mxu0 0.0
        %1581 = vmatpush2.msra.mxu0 0.0
        %1582 = vmatprep.subr.mxu0 0.0
        %1583 = vmatpush2.msra.mxu0 0.0
        %1584 = vmatprep.subr.mxu0 0.0
        %1585 = vmatpush2.msra.mxu0 0.0
        %1586 = vmatprep.subr.mxu0 0.0
        %1587 = vmatpush2.msra.mxu0 0.0
        %1588 = vmatprep.subr.mxu0 0.0
        %1589 = vmatpush2.msra.mxu0 0.0
        %1590 = vmatprep.subr.mxu0 0.0
        %1591 = vmatpush2.msra.mxu0 0.0
        %1592 = vmatprep.mubr.f32.mxu0 0.0
        %1593 = vmatmul.mubr.f32.gmra.mxu0 %v1504
        %v1594 = vpop.f32.mrf.mxu0
        %v1595 = vadd.f32 %v1526, %v1594
        %v1596 = vpop.f32.mrf.mxu0
        %1597 = vdwg.mxu0
        %v1598 = vmax.f32 %v1595, 0.0
        %v1599 = vld [vmem:[#allocation15] sm:$0xff]
        %v1600 = vld [vmem:[#allocation15 + $0x8] sm:$0xff]
        %v1601 = vld [vmem:[#allocation15 + $0x10] sm:$0xff]
        %v1602 = vld [vmem:[#allocation15 + $0x18] sm:$0xff]
        %v1603 = vld [vmem:[#allocation15 + $0x20] sm:$0xff]
        %v1604 = vld [vmem:[#allocation15 + $0x28] sm:$0xff]
        %v1605 = vld [vmem:[#allocation15 + $0x30] sm:$0xff]
        %v1606 = vld [vmem:[#allocation15 + $0x38] sm:$0xff]
        %v1607 = vld [vmem:[#allocation15 + $0x40] sm:$0xff]
        %v1608 = vld [vmem:[#allocation15 + $0x48] sm:$0xff]
        %v1609 = vld [vmem:[#allocation15 + $0x50] sm:$0xff]
        %v1610 = vld [vmem:[#allocation15 + $0x58] sm:$0xff]
        %v1611 = vld [vmem:[#allocation15 + $0x60] sm:$0xff]
        %v1612 = vld [vmem:[#allocation15 + $0x68] sm:$0xff]
        %v1613 = vld [vmem:[#allocation15 + $0x70] sm:$0xff]
        %v1614 = vld [vmem:[#allocation15 + $0x78] sm:$0xff]
        %v1615 = vld [vmem:[%s14] sm:$0x1]
        %v1617 = vlaneseq
        %v1618 = vshrl.u32 %v1617, 7
        %v1619 = vsub.s32 0, %v1618
        %v1620 = vrot.slane %v1615, %v1619
        %1622 = vmatprep.subr.mxu0 0.0
        %1623 = vmatpush1.msra.mxu0 %v1614
        %1624 = vmatprep.subr.mxu0 0.0
        %1625 = vmatpush1.msra.mxu0 %v1613
        %1626 = vmatprep.subr.mxu0 0.0
        %1627 = vmatpush1.msra.mxu0 %v1612
        %1628 = vmatprep.subr.mxu0 0.0
        %1629 = vmatpush1.msra.mxu0 %v1611
        %1630 = vmatprep.subr.mxu0 0.0
        %1631 = vmatpush1.msra.mxu0 %v1610
        %1632 = vmatprep.subr.mxu0 0.0
        %1633 = vmatpush1.msra.mxu0 %v1609
        %1634 = vmatprep.subr.mxu0 0.0
        %1635 = vmatpush1.msra.mxu0 %v1608
        %1636 = vmatprep.subr.mxu0 0.0
        %1637 = vmatpush1.msra.mxu0 %v1607
        %1638 = vmatprep.subr.mxu0 0.0
        %1639 = vmatpush1.msra.mxu0 %v1606
        %1640 = vmatprep.subr.mxu0 0.0
        %1641 = vmatpush1.msra.mxu0 %v1605
        %1642 = vmatprep.subr.mxu0 0.0
        %1643 = vmatpush1.msra.mxu0 %v1604
        %1644 = vmatprep.subr.mxu0 0.0
        %1645 = vmatpush1.msra.mxu0 %v1603
        %1646 = vmatprep.subr.mxu0 0.0
        %1647 = vmatpush1.msra.mxu0 %v1602
        %1648 = vmatprep.subr.mxu0 0.0
        %1649 = vmatpush1.msra.mxu0 %v1601
        %1650 = vmatprep.subr.mxu0 0.0
        %1651 = vmatpush1.msra.mxu0 %v1600
        %1652 = vmatprep.subr.mxu0 0.0
        %1653 = vmatpush1.msra.mxu0 %v1599
        %1654 = vmatprep.subr.mxu0 0.0
        %1655 = vmatpush2.msra.mxu0 0.0
        %1656 = vmatprep.subr.mxu0 0.0
        %1657 = vmatpush2.msra.mxu0 0.0
        %1658 = vmatprep.subr.mxu0 0.0
        %1659 = vmatpush2.msra.mxu0 0.0
        %1660 = vmatprep.subr.mxu0 0.0
        %1661 = vmatpush2.msra.mxu0 0.0
        %1662 = vmatprep.subr.mxu0 0.0
        %1663 = vmatpush2.msra.mxu0 0.0
        %1664 = vmatprep.subr.mxu0 0.0
        %1665 = vmatpush2.msra.mxu0 0.0
        %1666 = vmatprep.subr.mxu0 0.0
        %1667 = vmatpush2.msra.mxu0 0.0
        %1668 = vmatprep.subr.mxu0 0.0
        %1669 = vmatpush2.msra.mxu0 0.0
        %1670 = vmatprep.subr.mxu0 0.0
        %1671 = vmatpush2.msra.mxu0 0.0
        %1672 = vmatprep.subr.mxu0 0.0
        %1673 = vmatpush2.msra.mxu0 0.0
        %1674 = vmatprep.subr.mxu0 0.0
        %1675 = vmatpush2.msra.mxu0 0.0
        %1676 = vmatprep.subr.mxu0 0.0
        %1677 = vmatpush2.msra.mxu0 0.0
        %1678 = vmatprep.subr.mxu0 0.0
        %1679 = vmatpush2.msra.mxu0 0.0
        %1680 = vmatprep.subr.mxu0 0.0
        %1681 = vmatpush2.msra.mxu0 0.0
        %1682 = vmatprep.subr.mxu0 0.0
        %1683 = vmatpush2.msra.mxu0 0.0
        %1684 = vmatprep.subr.mxu0 0.0
        %1685 = vmatpush2.msra.mxu0 0.0
        %1686 = vmatprep.mubr.f32.mxu0 0.0
        %1687 = vmatmul.mubr.f32.gmra.mxu0 %v1598
        %v1688 = vpop.f32.mrf.mxu0
        %v1689 = vadd.f32 %v1620, %v1688
        %v1690 = vpop.f32.mrf.mxu0
        %1691 = vdwg.mxu0
        %v1692 = vadd.f32 %v1504, %v1689
        %s1693 = scalar_lea.vmem [#allocation6], 1
        %v1694 = vld [vmem:[%s1693] sm:$0x1]
        %s1695 = scalar_lea.vmem %s2, 1
        %v1696 = vld [vmem:[%s1695] sm:$0x1]
        %1697 = vadd.xlane.f32.xlu0 %v1692
        %v1698 = vpop.xlane.xlu0 %1697
        %v1699 = vmul.f32 %v1698, 0.03125
        %v1700 = vsub.f32 %v1692, %v1699
        %v1701 = vsel %vm668, %v1700, 0.0
        %v1702 = vmul.f32 %v1701, %v1701
        %1703 = vadd.xlane.f32.xlu0 %v1702
        %v1704 = vpop.xlane.xlu0 %1703
        %v1705 = vmul.f32 %v1704, 0.03125
        %v1706 = vadd.f32 %v1705, 1e-08
        %v1707 = vrsqrt.pop %v1706
        %v1708 = vmul.f32 %v1701, %v1707
        %v1710 = vlaneseq
        %v1711 = vshrl.u32 %v1710, 7
        %v1712 = vsub.s32 0, %v1711
        %v1713 = vrot.slane %v1694, %v1712
        %v1715 = vmul.f32 %v1708, %v1713
        %v1717 = vlaneseq
        %v1718 = vshrl.u32 %v1717, 7
        %v1719 = vsub.s32 0, %v1718
        %v1720 = vrot.slane %v1696, %v1719
        %v1722 = vadd.f32 %v1715, %v1720
        %s1723 = scalar_lea.vmem [#allocation8], 256
        %v1724 = vld [vmem:[%s1723] sm:$0xff]
        %v1725 = vld [vmem:[%s1723 + $0x8] sm:$0xff]
        %v1726 = vld [vmem:[%s1723 + $0x10] sm:$0xff]
        %v1727 = vld [vmem:[%s1723 + $0x18] sm:$0xff]
        %v1728 = vld [vmem:[%s1723 + $0x20] sm:$0xff]
        %v1729 = vld [vmem:[%s1723 + $0x28] sm:$0xff]
        %v1730 = vld [vmem:[%s1723 + $0x30] sm:$0xff]
        %v1731 = vld [vmem:[%s1723 + $0x38] sm:$0xff]
        %v1732 = vld [vmem:[%s1723 + $0x40] sm:$0xff]
        %v1733 = vld [vmem:[%s1723 + $0x48] sm:$0xff]
        %v1734 = vld [vmem:[%s1723 + $0x50] sm:$0xff]
        %v1735 = vld [vmem:[%s1723 + $0x58] sm:$0xff]
        %v1736 = vld [vmem:[%s1723 + $0x60] sm:$0xff]
        %v1737 = vld [vmem:[%s1723 + $0x68] sm:$0xff]
        %v1738 = vld [vmem:[%s1723 + $0x70] sm:$0xff]
        %v1739 = vld [vmem:[%s1723 + $0x78] sm:$0xff]
        %v1740 = vld [vmem:[%s1723 + $0x80] sm:$0xff]
        %v1741 = vld [vmem:[%s1723 + $0x88] sm:$0xff]
        %v1742 = vld [vmem:[%s1723 + $0x90] sm:$0xff]
        %v1743 = vld [vmem:[%s1723 + $0x98] sm:$0xff]
        %v1744 = vld [vmem:[%s1723 + $0xa0] sm:$0xff]
        %v1745 = vld [vmem:[%s1723 + $0xa8] sm:$0xff]
        %v1746 = vld [vmem:[%s1723 + $0xb0] sm:$0xff]
        %v1747 = vld [vmem:[%s1723 + $0xb8] sm:$0xff]
        %v1748 = vld [vmem:[%s1723 + $0xc0] sm:$0xff]
        %v1749 = vld [vmem:[%s1723 + $0xc8] sm:$0xff]
        %v1750 = vld [vmem:[%s1723 + $0xd0] sm:$0xff]
        %v1751 = vld [vmem:[%s1723 + $0xd8] sm:$0xff]
        %v1752 = vld [vmem:[%s1723 + $0xe0] sm:$0xff]
        %v1753 = vld [vmem:[%s1723 + $0xe8] sm:$0xff]
        %v1754 = vld [vmem:[%s1723 + $0xf0] sm:$0xff]
        %v1755 = vld [vmem:[%s1723 + $0xf8] sm:$0xff]
        %s1756 = scalar_lea.vmem [#allocation9], 2
        %v1757 = vld [vmem:[%s1756] sm:$0x3]
        %v1759 = vlaneseq
        %v1760 = vshrl.u32 %v1759, 7
        %v1761 = vsub.s32 0, %v1760
        %v1762 = vrot.slane %v1757, %v1761
        %v1763 = vlaneseq
        %v1764 = vshrl.u32 %v1763, 7
        %v1765 = vsub.s32 1, %v1764
        %v1766 = vrot.slane %v1757, %v1765
        %1769 = vmatprep.subr.mxu0 %v1755
        %1770 = vmatpush1.msra.mxu0 %v1754
        %1771 = vmatprep.subr.mxu0 %v1753
        %1772 = vmatpush1.msra.mxu0 %v1752
        %1773 = vmatprep.subr.mxu0 %v1751
        %1774 = vmatpush1.msra.mxu0 %v1750
        %1775 = vmatprep.subr.mxu0 %v1749
        %1776 = vmatpush1.msra.mxu0 %v1748
        %1777 = vmatprep.subr.mxu0 %v1747
        %1778 = vmatpush1.msra.mxu0 %v1746
        %1779 = vmatprep.subr.mxu0 %v1745
        %1780 = vmatpush1.msra.mxu0 %v1744
        %1781 = vmatprep.subr.mxu0 %v1743
        %1782 = vmatpush1.msra.mxu0 %v1742
        %1783 = vmatprep.subr.mxu0 %v1741
        %1784 = vmatpush1.msra.mxu0 %v1740
        %1785 = vmatprep.subr.mxu0 %v1739
        %1786 = vmatpush1.msra.mxu0 %v1738
        %1787 = vmatprep.subr.mxu0 %v1737
        %1788 = vmatpush1.msra.mxu0 %v1736
        %1789 = vmatprep.subr.mxu0 %v1735
        %1790 = vmatpush1.msra.mxu0 %v1734
        %1791 = vmatprep.subr.mxu0 %v1733
        %1792 = vmatpush1.msra.mxu0 %v1732
        %1793 = vmatprep.subr.mxu0 %v1731
        %1794 = vmatpush1.msra.mxu0 %v1730
        %1795 = vmatprep.subr.mxu0 %v1729
        %1796 = vmatpush1.msra.mxu0 %v1728
        %1797 = vmatprep.subr.mxu0 %v1727
        %1798 = vmatpush1.msra.mxu0 %v1726
        %1799 = vmatprep.subr.mxu0 %v1725
        %1800 = vmatpush1.msra.mxu0 %v1724
        %1801 = vmatprep.subr.mxu0 0.0
        %1802 = vmatpush2.msra.mxu0 0.0
        %1803 = vmatprep.subr.mxu0 0.0
        %1804 = vmatpush2.msra.mxu0 0.0
        %1805 = vmatprep.subr.mxu0 0.0
        %1806 = vmatpush2.msra.mxu0 0.0
        %1807 = vmatprep.subr.mxu0 0.0
        %1808 = vmatpush2.msra.mxu0 0.0
        %1809 = vmatprep.subr.mxu0 0.0
        %1810 = vmatpush2.msra.mxu0 0.0
        %1811 = vmatprep.subr.mxu0 0.0
        %1812 = vmatpush2.msra.mxu0 0.0
        %1813 = vmatprep.subr.mxu0 0.0
        %1814 = vmatpush2.msra.mxu0 0.0
        %1815 = vmatprep.subr.mxu0 0.0
        %1816 = vmatpush2.msra.mxu0 0.0
        %1817 = vmatprep.subr.mxu0 0.0
        %1818 = vmatpush2.msra.mxu0 0.0
        %1819 = vmatprep.subr.mxu0 0.0
        %1820 = vmatpush2.msra.mxu0 0.0
        %1821 = vmatprep.subr.mxu0 0.0
        %1822 = vmatpush2.msra.mxu0 0.0
        %1823 = vmatprep.subr.mxu0 0.0
        %1824 = vmatpush2.msra.mxu0 0.0
        %1825 = vmatprep.subr.mxu0 0.0
        %1826 = vmatpush2.msra.mxu0 0.0
        %1827 = vmatprep.subr.mxu0 0.0
        %1828 = vmatpush2.msra.mxu0 0.0
        %1829 = vmatprep.subr.mxu0 0.0
        %1830 = vmatpush2.msra.mxu0 0.0
        %1831 = vmatprep.subr.mxu0 0.0
        %1832 = vmatpush2.msra.mxu0 0.0
        %1833 = vmatprep.mubr.f32.mxu0 0.0
        %1834 = vmatmul.mubr.f32.gmra.mxu0 %v1722
        %v1835 = vpop.f32.mrf.mxu0
        %v1836 = vadd.f32 %v1762, %v1835
        %v1837 = vpop.f32.mrf.mxu0
        %v1838 = vadd.f32 %v1766, %v1837
        %1839 = vdwg.mxu0
        %s1840 = scalar_lea.vmem [#allocation11], 512
        %v1841 = vld [vmem:[%s1840] sm:$0xff]
        %v1842 = vld [vmem:[%s1840 + $0x8] sm:$0xff]
        %v1843 = vld [vmem:[%s1840 + $0x10] sm:$0xff]
        %v1844 = vld [vmem:[%s1840 + $0x18] sm:$0xff]
        %v1845 = vld [vmem:[%s1840 + $0x20] sm:$0xff]
        %v1846 = vld [vmem:[%s1840 + $0x28] sm:$0xff]
        %v1847 = vld [vmem:[%s1840 + $0x30] sm:$0xff]
        %v1848 = vld [vmem:[%s1840 + $0x38] sm:$0xff]
        %v1849 = vld [vmem:[%s1840 + $0x40] sm:$0xff]
        %v1850 = vld [vmem:[%s1840 + $0x48] sm:$0xff]
        %v1851 = vld [vmem:[%s1840 + $0x50] sm:$0xff]
        %v1852 = vld [vmem:[%s1840 + $0x58] sm:$0xff]
        %v1853 = vld [vmem:[%s1840 + $0x60] sm:$0xff]
        %v1854 = vld [vmem:[%s1840 + $0x68] sm:$0xff]
        %v1855 = vld [vmem:[%s1840 + $0x70] sm:$0xff]
        %v1856 = vld [vmem:[%s1840 + $0x78] sm:$0xff]
        %v1857 = vld [vmem:[%s1840 + $0x80] sm:$0xff]
        %v1858 = vld [vmem:[%s1840 + $0x88] sm:$0xff]
        %v1859 = vld [vmem:[%s1840 + $0x90] sm:$0xff]
        %v1860 = vld [vmem:[%s1840 + $0x98] sm:$0xff]
        %v1861 = vld [vmem:[%s1840 + $0xa0] sm:$0xff]
        %v1862 = vld [vmem:[%s1840 + $0xa8] sm:$0xff]
        %v1863 = vld [vmem:[%s1840 + $0xb0] sm:$0xff]
        %v1864 = vld [vmem:[%s1840 + $0xb8] sm:$0xff]
        %v1865 = vld [vmem:[%s1840 + $0xc0] sm:$0xff]
        %v1866 = vld [vmem:[%s1840 + $0xc8] sm:$0xff]
        %v1867 = vld [vmem:[%s1840 + $0xd0] sm:$0xff]
        %v1868 = vld [vmem:[%s1840 + $0xd8] sm:$0xff]
        %v1869 = vld [vmem:[%s1840 + $0xe0] sm:$0xff]
        %v1870 = vld [vmem:[%s1840 + $0xe8] sm:$0xff]
        %v1871 = vld [vmem:[%s1840 + $0xf0] sm:$0xff]
        %v1872 = vld [vmem:[%s1840 + $0xf8] sm:$0xff]
        %v1873 = vld [vmem:[%s1840 + $0x100] sm:$0xff]
        %v1874 = vld [vmem:[%s1840 + $0x108] sm:$0xff]
        %v1875 = vld [vmem:[%s1840 + $0x110] sm:$0xff]
        %v1876 = vld [vmem:[%s1840 + $0x118] sm:$0xff]
        %v1877 = vld [vmem:[%s1840 + $0x120] sm:$0xff]
        %v1878 = vld [vmem:[%s1840 + $0x128] sm:$0xff]
        %v1879 = vld [vmem:[%s1840 + $0x130] sm:$0xff]
        %v1880 = vld [vmem:[%s1840 + $0x138] sm:$0xff]
        %v1881 = vld [vmem:[%s1840 + $0x140] sm:$0xff]
        %v1882 = vld [vmem:[%s1840 + $0x148] sm:$0xff]
        %v1883 = vld [vmem:[%s1840 + $0x150] sm:$0xff]
        %v1884 = vld [vmem:[%s1840 + $0x158] sm:$0xff]
        %v1885 = vld [vmem:[%s1840 + $0x160] sm:$0xff]
        %v1886 = vld [vmem:[%s1840 + $0x168] sm:$0xff]
        %v1887 = vld [vmem:[%s1840 + $0x170] sm:$0xff]
        %v1888 = vld [vmem:[%s1840 + $0x178] sm:$0xff]
        %v1889 = vld [vmem:[%s1840 + $0x180] sm:$0xff]
        %v1890 = vld [vmem:[%s1840 + $0x188] sm:$0xff]
        %v1891 = vld [vmem:[%s1840 + $0x190] sm:$0xff]
        %v1892 = vld [vmem:[%s1840 + $0x198] sm:$0xff]
        %v1893 = vld [vmem:[%s1840 + $0x1a0] sm:$0xff]
        %v1894 = vld [vmem:[%s1840 + $0x1a8] sm:$0xff]
        %v1895 = vld [vmem:[%s1840 + $0x1b0] sm:$0xff]
        %v1896 = vld [vmem:[%s1840 + $0x1b8] sm:$0xff]
        %v1897 = vld [vmem:[%s1840 + $0x1c0] sm:$0xff]
        %v1898 = vld [vmem:[%s1840 + $0x1c8] sm:$0xff]
        %v1899 = vld [vmem:[%s1840 + $0x1d0] sm:$0xff]
        %v1900 = vld [vmem:[%s1840 + $0x1d8] sm:$0xff]
        %v1901 = vld [vmem:[%s1840 + $0x1e0] sm:$0xff]
        %v1902 = vld [vmem:[%s1840 + $0x1e8] sm:$0xff]
        %v1903 = vld [vmem:[%s1840 + $0x1f0] sm:$0xff]
        %v1904 = vld [vmem:[%s1840 + $0x1f8] sm:$0xff]
        %s1905 = scalar_lea.vmem %s6, 4
        %v1906 = vld [vmem:[%s1905] sm:$0xf]
        %v1908 = vlaneseq
        %v1909 = vshrl.u32 %v1908, 7
        %v1910 = vsub.s32 0, %v1909
        %v1911 = vrot.slane %v1906, %v1910
        %v1912 = vlaneseq
        %v1913 = vshrl.u32 %v1912, 7
        %v1914 = vsub.s32 1, %v1913
        %v1915 = vrot.slane %v1906, %v1914
        %v1916 = vlaneseq
        %v1917 = vshrl.u32 %v1916, 7
        %v1918 = vsub.s32 2, %v1917
        %v1919 = vrot.slane %v1906, %v1918
        %v1920 = vlaneseq
        %v1921 = vshrl.u32 %v1920, 7
        %v1922 = vsub.s32 3, %v1921
        %v1923 = vrot.slane %v1906, %v1922
        %1928 = vmatprep.subr.mxu0 %v1902
        %1929 = vmatpush1.msra.mxu0 %v1901
        %1930 = vmatprep.subr.mxu0 %v1898
        %1931 = vmatpush1.msra.mxu0 %v1897
        %1932 = vmatprep.subr.mxu0 %v1894
        %1933 = vmatpush1.msra.mxu0 %v1893
        %1934 = vmatprep.subr.mxu0 %v1890
        %1935 = vmatpush1.msra.mxu0 %v1889
        %1936 = vmatprep.subr.mxu0 %v1886
        %1937 = vmatpush1.msra.mxu0 %v1885
        %1938 = vmatprep.subr.mxu0 %v1882
        %1939 = vmatpush1.msra.mxu0 %v1881
        %1940 = vmatprep.subr.mxu0 %v1878
        %1941 = vmatpush1.msra.mxu0 %v1877
        %1942 = vmatprep.subr.mxu0 %v1874
        %1943 = vmatpush1.msra.mxu0 %v1873
        %1944 = vmatprep.subr.mxu0 %v1870
        %1945 = vmatpush1.msra.mxu0 %v1869
        %1946 = vmatprep.subr.mxu0 %v1866
        %1947 = vmatpush1.msra.mxu0 %v1865
        %1948 = vmatprep.subr.mxu0 %v1862
        %1949 = vmatpush1.msra.mxu0 %v1861
        %1950 = vmatprep.subr.mxu0 %v1858
        %1951 = vmatpush1.msra.mxu0 %v1857
        %1952 = vmatprep.subr.mxu0 %v1854
        %1953 = vmatpush1.msra.mxu0 %v1853
        %1954 = vmatprep.subr.mxu0 %v1850
        %1955 = vmatpush1.msra.mxu0 %v1849
        %1956 = vmatprep.subr.mxu0 %v1846
        %1957 = vmatpush1.msra.mxu0 %v1845
        %1958 = vmatprep.subr.mxu0 %v1842
        %1959 = vmatpush1.msra.mxu0 %v1841
        %1960 = vmatprep.subr.mxu0 0.0
        %1961 = vmatpush2.msra.mxu0 0.0
        %1962 = vmatprep.subr.mxu0 0.0
        %1963 = vmatpush2.msra.mxu0 0.0
        %1964 = vmatprep.subr.mxu0 0.0
        %1965 = vmatpush2.msra.mxu0 0.0
        %1966 = vmatprep.subr.mxu0 0.0
        %1967 = vmatpush2.msra.mxu0 0.0
        %1968 = vmatprep.subr.mxu0 0.0
        %1969 = vmatpush2.msra.mxu0 0.0
        %1970 = vmatprep.subr.mxu0 0.0
        %1971 = vmatpush2.msra.mxu0 0.0
        %1972 = vmatprep.subr.mxu0 0.0
        %1973 = vmatpush2.msra.mxu0 0.0
        %1974 = vmatprep.subr.mxu0 0.0
        %1975 = vmatpush2.msra.mxu0 0.0
        %1976 = vmatprep.subr.mxu0 0.0
        %1977 = vmatpush2.msra.mxu0 0.0
        %1978 = vmatprep.subr.mxu0 0.0
        %1979 = vmatpush2.msra.mxu0 0.0
        %1980 = vmatprep.subr.mxu0 0.0
        %1981 = vmatpush2.msra.mxu0 0.0
        %1982 = vmatprep.subr.mxu0 0.0
        %1983 = vmatpush2.msra.mxu0 0.0
        %1984 = vmatprep.subr.mxu0 0.0
        %1985 = vmatpush2.msra.mxu0 0.0
        %1986 = vmatprep.subr.mxu0 0.0
        %1987 = vmatpush2.msra.mxu0 0.0
        %1988 = vmatprep.subr.mxu0 0.0
        %1989 = vmatpush2.msra.mxu0 0.0
        %1990 = vmatprep.subr.mxu0 0.0
        %1991 = vmatpush2.msra.mxu0 0.0
        %1992 = vmatprep.mubr.f32.mxu0 0.0
        %1993 = vmatmul.mubr.f32.gmra.mxu0 %v1692
        %v1994 = vpop.f32.mrf.mxu0
        %v1995 = vadd.f32 %v1911, %v1994
        %v1996 = vpop.f32.mrf.mxu0
        %v1997 = vadd.f32 %v1915, %v1996
        %1998 = vdwg.mxu0
        %1999 = vmatprep.subr.mxu0 %v1904
        %2000 = vmatpush1.msra.mxu0 %v1903
        %2001 = vmatprep.subr.mxu0 %v1900
        %2002 = vmatpush1.msra.mxu0 %v1899
        %2003 = vmatprep.subr.mxu0 %v1896
        %2004 = vmatpush1.msra.mxu0 %v1895
        %2005 = vmatprep.subr.mxu0 %v1892
        %2006 = vmatpush1.msra.mxu0 %v1891
        %2007 = vmatprep.subr.mxu0 %v1888
        %2008 = vmatpush1.msra.mxu0 %v1887
        %2009 = vmatprep.subr.mxu0 %v1884
        %2010 = vmatpush1.msra.mxu0 %v1883
        %2011 = vmatprep.subr.mxu0 %v1880
        %2012 = vmatpush1.msra.mxu0 %v1879
        %2013 = vmatprep.subr.mxu0 %v1876
        %2014 = vmatpush1.msra.mxu0 %v1875
        %2015 = vmatprep.subr.mxu0 %v1872
        %2016 = vmatpush1.msra.mxu0 %v1871
        %2017 = vmatprep.subr.mxu0 %v1868
        %2018 = vmatpush1.msra.mxu0 %v1867
        %2019 = vmatprep.subr.mxu0 %v1864
        %2020 = vmatpush1.msra.mxu0 %v1863
        %2021 = vmatprep.subr.mxu0 %v1860
        %2022 = vmatpush1.msra.mxu0 %v1859
        %2023 = vmatprep.subr.mxu0 %v1856
        %2024 = vmatpush1.msra.mxu0 %v1855
        %2025 = vmatprep.subr.mxu0 %v1852
        %2026 = vmatpush1.msra.mxu0 %v1851
        %2027 = vmatprep.subr.mxu0 %v1848
        %2028 = vmatpush1.msra.mxu0 %v1847
        %2029 = vmatprep.subr.mxu0 %v1844
        %2030 = vmatpush1.msra.mxu0 %v1843
        %2031 = vmatprep.subr.mxu0 0.0
        %2032 = vmatpush2.msra.mxu0 0.0
        %2033 = vmatprep.subr.mxu0 0.0
        %2034 = vmatpush2.msra.mxu0 0.0
        %2035 = vmatprep.subr.mxu0 0.0
        %2036 = vmatpush2.msra.mxu0 0.0
        %2037 = vmatprep.subr.mxu0 0.0
        %2038 = vmatpush2.msra.mxu0 0.0
        %2039 = vmatprep.subr.mxu0 0.0
        %2040 = vmatpush2.msra.mxu0 0.0
        %2041 = vmatprep.subr.mxu0 0.0
        %2042 = vmatpush2.msra.mxu0 0.0
        %2043 = vmatprep.subr.mxu0 0.0
        %2044 = vmatpush2.msra.mxu0 0.0
        %2045 = vmatprep.subr.mxu0 0.0
        %2046 = vmatpush2.msra.mxu0 0.0
        %2047 = vmatprep.subr.mxu0 0.0
        %2048 = vmatpush2.msra.mxu0 0.0
        %2049 = vmatprep.subr.mxu0 0.0
        %2050 = vmatpush2.msra.mxu0 0.0
        %2051 = vmatprep.subr.mxu0 0.0
        %2052 = vmatpush2.msra.mxu0 0.0
        %2053 = vmatprep.subr.mxu0 0.0
        %2054 = vmatpush2.msra.mxu0 0.0
        %2055 = vmatprep.subr.mxu0 0.0
        %2056 = vmatpush2.msra.mxu0 0.0
        %2057 = vmatprep.subr.mxu0 0.0
        %2058 = vmatpush2.msra.mxu0 0.0
        %2059 = vmatprep.subr.mxu0 0.0
        %2060 = vmatpush2.msra.mxu0 0.0
        %2061 = vmatprep.subr.mxu0 0.0
        %2062 = vmatpush2.msra.mxu0 0.0
        %2063 = vmatprep.mubr.f32.mxu0 0.0
        %2064 = vmatmul.mubr.f32.gmra.mxu0 %v1692
        %v2065 = vpop.f32.mrf.mxu0
        %v2066 = vadd.f32 %v1919, %v2065
        %v2067 = vpop.f32.mrf.mxu0
        %v2068 = vadd.f32 %v1923, %v2067
        %2069 = vdwg.mxu0
        %v2070 = vmul.f32 %v1836, 0.25
        %v2071 = vmul.f32 %v1838, 0.25
        %2072 = vmatprep.subr.mxu0 0.0
        %2073 = vmatpush1.xpose.msra.mxu0 0.0
        %2074 = vmatprep.subr.mxu0 0.0
        %2075 = vmatpush1.xpose.msra.mxu0 0.0
        %2076 = vmatprep.subr.mxu0 0.0
        %2077 = vmatpush1.xpose.msra.mxu0 0.0
        %2078 = vmatprep.subr.mxu0 0.0
        %2079 = vmatpush1.xpose.msra.mxu0 0.0
        %2080 = vmatprep.subr.mxu0 0.0
        %2081 = vmatpush1.xpose.msra.mxu0 0.0
        %2082 = vmatprep.subr.mxu0 0.0
        %2083 = vmatpush1.xpose.msra.mxu0 0.0
        %2084 = vmatprep.subr.mxu0 0.0
        %2085 = vmatpush1.xpose.msra.mxu0 0.0
        %2086 = vmatprep.subr.mxu0 0.0
        %2087 = vmatpush1.xpose.msra.mxu0 0.0
        %2088 = vmatprep.subr.mxu0 0.0
        %2089 = vmatpush1.xpose.msra.mxu0 0.0
        %2090 = vmatprep.subr.mxu0 0.0
        %2091 = vmatpush1.xpose.msra.mxu0 0.0
        %2092 = vmatprep.subr.mxu0 0.0
        %2093 = vmatpush1.xpose.msra.mxu0 0.0
        %2094 = vmatprep.subr.mxu0 0.0
        %2095 = vmatpush1.xpose.msra.mxu0 0.0
        %2096 = vmatprep.subr.mxu0 0.0
        %2097 = vmatpush1.xpose.msra.mxu0 0.0
        %2098 = vmatprep.subr.mxu0 0.0
        %2099 = vmatpush1.xpose.msra.mxu0 0.0
        %2100 = vmatprep.subr.mxu0 0.0
        %2101 = vmatpush1.xpose.msra.mxu0 0.0
        %2102 = vmatprep.subr.mxu0 0.0
        %2103 = vmatpush1.xpose.msra.mxu0 %v1995
        %2104 = vmatprep.subr.mxu0 0.0
        %2105 = vmatpush2.xpose.msra.mxu0 0.0
        %2106 = vmatprep.subr.mxu0 0.0
        %2107 = vmatpush2.xpose.msra.mxu0 0.0
        %2108 = vmatprep.subr.mxu0 0.0
        %2109 = vmatpush2.xpose.msra.mxu0 0.0
        %2110 = vmatprep.subr.mxu0 0.0
        %2111 = vmatpush2.xpose.msra.mxu0 0.0
        %2112 = vmatprep.subr.mxu0 0.0
        %2113 = vmatpush2.xpose.msra.mxu0 0.0
        %2114 = vmatprep.subr.mxu0 0.0
        %2115 = vmatpush2.xpose.msra.mxu0 0.0
        %2116 = vmatprep.subr.mxu0 0.0
        %2117 = vmatpush2.xpose.msra.mxu0 0.0
        %2118 = vmatprep.subr.mxu0 0.0
        %2119 = vmatpush2.xpose.msra.mxu0 0.0
        %2120 = vmatprep.subr.mxu0 0.0
        %2121 = vmatpush2.xpose.msra.mxu0 0.0
        %2122 = vmatprep.subr.mxu0 0.0
        %2123 = vmatpush2.xpose.msra.mxu0 0.0
        %2124 = vmatprep.subr.mxu0 0.0
        %2125 = vmatpush2.xpose.msra.mxu0 0.0
        %2126 = vmatprep.subr.mxu0 0.0
        %2127 = vmatpush2.xpose.msra.mxu0 0.0
        %2128 = vmatprep.subr.mxu0 0.0
        %2129 = vmatpush2.xpose.msra.mxu0 0.0
        %2130 = vmatprep.subr.mxu0 0.0
        %2131 = vmatpush2.xpose.msra.mxu0 0.0
        %2132 = vmatprep.subr.mxu0 0.0
        %2133 = vmatpush2.xpose.msra.mxu0 0.0
        %2134 = vmatprep.subr.mxu0 0.0
        %2135 = vmatpush2.xpose.msra.mxu0 0.0
        %2136 = vmatprep.mubr.f32.mxu0 0.0
        %2137 = vmatmul.mubr.f32.gmra.mxu0 %v2070
        %v2138 = vpop.f32.mrf.mxu0
        %v2139 = vadd.f32 0.0, %v2138
        %v2140 = vpop.f32.mrf.mxu0
        %2141 = vdwg.mxu0
        %v2142 = vsel %vm671, %v2139, -1e+30
        %v2143 = vsel %vm1117, %v2142, -inf
        %2144 = vmax.xlane.f32.xlu0 %v2143
        %v2145 = vpop.xlane.xlu0 %2144
        %v2146 = vsub.f32 %v2142, %v2145
        %v2147 = vmul.f32 %v2146, 1.442695
        %v2148 = vpow.pop %v2147
        %v2149 = vsel %vm1117, %v2148, 0.0
        %2150 = vadd.xlane.f32.xlu0 %v2149
        %v2151 = vpop.xlane.xlu0 %2150
        %v2152 = vrcp.pop %v2151
        %v2153 = vmul.f32 %v2151, %v2152
        %v2154 = vsub.f32 2.0, %v2153
        %v2155 = vmul.f32 %v2152, %v2154
        %v2156 = vmul.f32 %v2148, %v2155
        %v2158 = vsel %vm1117, %v2156, 0
        %2160 = vmatprep.subr.mxu0 0.0
        %2161 = vmatpush1.msra.mxu0 0.0
        %2162 = vmatprep.subr.mxu0 0.0
        %2163 = vmatpush1.msra.mxu0 0.0
        %2164 = vmatprep.subr.mxu0 0.0
        %2165 = vmatpush1.msra.mxu0 0.0
        %2166 = vmatprep.subr.mxu0 0.0
        %2167 = vmatpush1.msra.mxu0 0.0
        %2168 = vmatprep.subr.mxu0 0.0
        %2169 = vmatpush1.msra.mxu0 0.0
        %2170 = vmatprep.subr.mxu0 0.0
        %2171 = vmatpush1.msra.mxu0 0.0
        %2172 = vmatprep.subr.mxu0 0.0
        %2173 = vmatpush1.msra.mxu0 0.0
        %2174 = vmatprep.subr.mxu0 0.0
        %2175 = vmatpush1.msra.mxu0 0.0
        %2176 = vmatprep.subr.mxu0 0.0
        %2177 = vmatpush1.msra.mxu0 0.0
        %2178 = vmatprep.subr.mxu0 0.0
        %2179 = vmatpush1.msra.mxu0 0.0
        %2180 = vmatprep.subr.mxu0 0.0
        %2181 = vmatpush1.msra.mxu0 0.0
        %2182 = vmatprep.subr.mxu0 0.0
        %2183 = vmatpush1.msra.mxu0 0.0
        %2184 = vmatprep.subr.mxu0 0.0
        %2185 = vmatpush1.msra.mxu0 0.0
        %2186 = vmatprep.subr.mxu0 0.0
        %2187 = vmatpush1.msra.mxu0 0.0
        %2188 = vmatprep.subr.mxu0 0.0
        %2189 = vmatpush1.msra.mxu0 0.0
        %2190 = vmatprep.subr.mxu0 0.0
        %2191 = vmatpush1.msra.mxu0 %v2066
        %2192 = vmatprep.subr.mxu0 0.0
        %2193 = vmatpush2.msra.mxu0 0.0
        %2194 = vmatprep.subr.mxu0 0.0
        %2195 = vmatpush2.msra.mxu0 0.0
        %2196 = vmatprep.subr.mxu0 0.0
        %2197 = vmatpush2.msra.mxu0 0.0
        %2198 = vmatprep.subr.mxu0 0.0
        %2199 = vmatpush2.msra.mxu0 0.0
        %2200 = vmatprep.subr.mxu0 0.0
        %2201 = vmatpush2.msra.mxu0 0.0
        %2202 = vmatprep.subr.mxu0 0.0
        %2203 = vmatpush2.msra.mxu0 0.0
        %2204 = vmatprep.subr.mxu0 0.0
        %2205 = vmatpush2.msra.mxu0 0.0
        %2206 = vmatprep.subr.mxu0 0.0
        %2207 = vmatpush2.msra.mxu0 0.0
        %2208 = vmatprep.subr.mxu0 0.0
        %2209 = vmatpush2.msra.mxu0 0.0
        %2210 = vmatprep.subr.mxu0 0.0
        %2211 = vmatpush2.msra.mxu0 0.0
        %2212 = vmatprep.subr.mxu0 0.0
        %2213 = vmatpush2.msra.mxu0 0.0
        %2214 = vmatprep.subr.mxu0 0.0
        %2215 = vmatpush2.msra.mxu0 0.0
        %2216 = vmatprep.subr.mxu0 0.0
        %2217 = vmatpush2.msra.mxu0 0.0
        %2218 = vmatprep.subr.mxu0 0.0
        %2219 = vmatpush2.msra.mxu0 0.0
        %2220 = vmatprep.subr.mxu0 0.0
        %2221 = vmatpush2.msra.mxu0 0.0
        %2222 = vmatprep.subr.mxu0 0.0
        %2223 = vmatpush2.msra.mxu0 0.0
        %2224 = vmatprep.mubr.f32.mxu0 0.0
        %2225 = vmatmul.mubr.f32.gmra.mxu0 %v2158
        %v2226 = vpop.f32.mrf.mxu0
        %v2227 = vadd.f32 0.0, %v2226
        %v2228 = vpop.f32.mrf.mxu0
        %2229 = vdwg.mxu0
        %2230 = vst [vmem:[#allocation2] sm:$0xff] %v2227
        %2231 = vmatprep.subr.mxu0 0.0
        %2232 = vmatpush1.xpose.msra.mxu0 0.0
        %2233 = vmatprep.subr.mxu0 0.0
        %2234 = vmatpush1.xpose.msra.mxu0 0.0
        %2235 = vmatprep.subr.mxu0 0.0
        %2236 = vmatpush1.xpose.msra.mxu0 0.0
        %2237 = vmatprep.subr.mxu0 0.0
        %2238 = vmatpush1.xpose.msra.mxu0 0.0
        %2239 = vmatprep.subr.mxu0 0.0
        %2240 = vmatpush1.xpose.msra.mxu0 0.0
        %2241 = vmatprep.subr.mxu0 0.0
        %2242 = vmatpush1.xpose.msra.mxu0 0.0
        %2243 = vmatprep.subr.mxu0 0.0
        %2244 = vmatpush1.xpose.msra.mxu0 0.0
        %2245 = vmatprep.subr.mxu0 0.0
        %2246 = vmatpush1.xpose.msra.mxu0 0.0
        %2247 = vmatprep.subr.mxu0 0.0
        %2248 = vmatpush1.xpose.msra.mxu0 0.0
        %2249 = vmatprep.subr.mxu0 0.0
        %2250 = vmatpush1.xpose.msra.mxu0 0.0
        %2251 = vmatprep.subr.mxu0 0.0
        %2252 = vmatpush1.xpose.msra.mxu0 0.0
        %2253 = vmatprep.subr.mxu0 0.0
        %2254 = vmatpush1.xpose.msra.mxu0 0.0
        %2255 = vmatprep.subr.mxu0 0.0
        %2256 = vmatpush1.xpose.msra.mxu0 0.0
        %2257 = vmatprep.subr.mxu0 0.0
        %2258 = vmatpush1.xpose.msra.mxu0 0.0
        %2259 = vmatprep.subr.mxu0 0.0
        %2260 = vmatpush1.xpose.msra.mxu0 0.0
        %2261 = vmatprep.subr.mxu0 0.0
        %2262 = vmatpush1.xpose.msra.mxu0 %v1997
        %2263 = vmatprep.subr.mxu0 0.0
        %2264 = vmatpush2.xpose.msra.mxu0 0.0
        %2265 = vmatprep.subr.mxu0 0.0
        %2266 = vmatpush2.xpose.msra.mxu0 0.0
        %2267 = vmatprep.subr.mxu0 0.0
        %2268 = vmatpush2.xpose.msra.mxu0 0.0
        %2269 = vmatprep.subr.mxu0 0.0
        %2270 = vmatpush2.xpose.msra.mxu0 0.0
        %2271 = vmatprep.subr.mxu0 0.0
        %2272 = vmatpush2.xpose.msra.mxu0 0.0
        %2273 = vmatprep.subr.mxu0 0.0
        %2274 = vmatpush2.xpose.msra.mxu0 0.0
        %2275 = vmatprep.subr.mxu0 0.0
        %2276 = vmatpush2.xpose.msra.mxu0 0.0
        %2277 = vmatprep.subr.mxu0 0.0
        %2278 = vmatpush2.xpose.msra.mxu0 0.0
        %2279 = vmatprep.subr.mxu0 0.0
        %2280 = vmatpush2.xpose.msra.mxu0 0.0
        %2281 = vmatprep.subr.mxu0 0.0
        %2282 = vmatpush2.xpose.msra.mxu0 0.0
        %2283 = vmatprep.subr.mxu0 0.0
        %2284 = vmatpush2.xpose.msra.mxu0 0.0
        %2285 = vmatprep.subr.mxu0 0.0
        %2286 = vmatpush2.xpose.msra.mxu0 0.0
        %2287 = vmatprep.subr.mxu0 0.0
        %2288 = vmatpush2.xpose.msra.mxu0 0.0
        %2289 = vmatprep.subr.mxu0 0.0
        %2290 = vmatpush2.xpose.msra.mxu0 0.0
        %2291 = vmatprep.subr.mxu0 0.0
        %2292 = vmatpush2.xpose.msra.mxu0 0.0
        %2293 = vmatprep.subr.mxu0 0.0
        %2294 = vmatpush2.xpose.msra.mxu0 0.0
        %2295 = vmatprep.mubr.f32.mxu0 0.0
        %2296 = vmatmul.mubr.f32.gmra.mxu0 %v2071
        %v2297 = vpop.f32.mrf.mxu0
        %v2298 = vadd.f32 0.0, %v2297
        %v2299 = vpop.f32.mrf.mxu0
        %2300 = vdwg.mxu0
        %v2301 = vsel %vm671, %v2298, -1e+30
        %v2302 = vsel %vm1117, %v2301, -inf
        %2303 = vmax.xlane.f32.xlu0 %v2302
        %v2304 = vpop.xlane.xlu0 %2303
        %v2305 = vsub.f32 %v2301, %v2304
        %v2306 = vmul.f32 %v2305, 1.442695
        %v2307 = vpow.pop %v2306
        %v2308 = vsel %vm1117, %v2307, 0.0
        %2309 = vadd.xlane.f32.xlu0 %v2308
        %v2310 = vpop.xlane.xlu0 %2309
        %v2311 = vrcp.pop %v2310
        %v2312 = vmul.f32 %v2310, %v2311
        %v2313 = vsub.f32 2.0, %v2312
        %v2314 = vmul.f32 %v2311, %v2313
        %v2315 = vmul.f32 %v2307, %v2314
        %v2317 = vsel %vm1117, %v2315, 0
        %2319 = vmatprep.subr.mxu0 0.0
        %2320 = vmatpush1.msra.mxu0 0.0
        %2321 = vmatprep.subr.mxu0 0.0
        %2322 = vmatpush1.msra.mxu0 0.0
        %2323 = vmatprep.subr.mxu0 0.0
        %2324 = vmatpush1.msra.mxu0 0.0
        %2325 = vmatprep.subr.mxu0 0.0
        %2326 = vmatpush1.msra.mxu0 0.0
        %2327 = vmatprep.subr.mxu0 0.0
        %2328 = vmatpush1.msra.mxu0 0.0
        %2329 = vmatprep.subr.mxu0 0.0
        %2330 = vmatpush1.msra.mxu0 0.0
        %2331 = vmatprep.subr.mxu0 0.0
        %2332 = vmatpush1.msra.mxu0 0.0
        %2333 = vmatprep.subr.mxu0 0.0
        %2334 = vmatpush1.msra.mxu0 0.0
        %2335 = vmatprep.subr.mxu0 0.0
        %2336 = vmatpush1.msra.mxu0 0.0
        %2337 = vmatprep.subr.mxu0 0.0
        %2338 = vmatpush1.msra.mxu0 0.0
        %2339 = vmatprep.subr.mxu0 0.0
        %2340 = vmatpush1.msra.mxu0 0.0
        %2341 = vmatprep.subr.mxu0 0.0
        %2342 = vmatpush1.msra.mxu0 0.0
        %2343 = vmatprep.subr.mxu0 0.0
        %2344 = vmatpush1.msra.mxu0 0.0
        %2345 = vmatprep.subr.mxu0 0.0
        %2346 = vmatpush1.msra.mxu0 0.0
        %2347 = vmatprep.subr.mxu0 0.0
        %2348 = vmatpush1.msra.mxu0 0.0
        %2349 = vmatprep.subr.mxu0 0.0
        %2350 = vmatpush1.msra.mxu0 %v2068
        %2351 = vmatprep.subr.mxu0 0.0
        %2352 = vmatpush2.msra.mxu0 0.0
        %2353 = vmatprep.subr.mxu0 0.0
        %2354 = vmatpush2.msra.mxu0 0.0
        %2355 = vmatprep.subr.mxu0 0.0
        %2356 = vmatpush2.msra.mxu0 0.0
        %2357 = vmatprep.subr.mxu0 0.0
        %2358 = vmatpush2.msra.mxu0 0.0
        %2359 = vmatprep.subr.mxu0 0.0
        %2360 = vmatpush2.msra.mxu0 0.0
        %2361 = vmatprep.subr.mxu0 0.0
        %2362 = vmatpush2.msra.mxu0 0.0
        %2363 = vmatprep.subr.mxu0 0.0
        %2364 = vmatpush2.msra.mxu0 0.0
        %2365 = vmatprep.subr.mxu0 0.0
        %2366 = vmatpush2.msra.mxu0 0.0
        %2367 = vmatprep.subr.mxu0 0.0
        %2368 = vmatpush2.msra.mxu0 0.0
        %2369 = vmatprep.subr.mxu0 0.0
        %2370 = vmatpush2.msra.mxu0 0.0
        %2371 = vmatprep.subr.mxu0 0.0
        %2372 = vmatpush2.msra.mxu0 0.0
        %2373 = vmatprep.subr.mxu0 0.0
        %2374 = vmatpush2.msra.mxu0 0.0
        %2375 = vmatprep.subr.mxu0 0.0
        %2376 = vmatpush2.msra.mxu0 0.0
        %2377 = vmatprep.subr.mxu0 0.0
        %2378 = vmatpush2.msra.mxu0 0.0
        %2379 = vmatprep.subr.mxu0 0.0
        %2380 = vmatpush2.msra.mxu0 0.0
        %2381 = vmatprep.subr.mxu0 0.0
        %2382 = vmatpush2.msra.mxu0 0.0
        %2383 = vmatprep.mubr.f32.mxu0 0.0
        %2384 = vmatmul.mubr.f32.gmra.mxu0 %v2317
        %v2385 = vpop.f32.mrf.mxu0
        %v2386 = vadd.f32 0.0, %v2385
        %v2387 = vpop.f32.mrf.mxu0
        %2388 = vdwg.mxu0
        %2389 = vst [vmem:[#allocation2 + $0x8] sm:$0xff] %v2386
        %v2390 = vld [vmem:[#allocation2] sm:$0xff]
        %v2391 = vld [vmem:[#allocation2 + $0x8] sm:$0xff]
        %s2392 = scalar_lea.vmem [#allocation12], 256
        %v2393 = vld [vmem:[%s2392] sm:$0xff]
        %v2394 = vld [vmem:[%s2392 + $0x8] sm:$0xff]
        %v2395 = vld [vmem:[%s2392 + $0x10] sm:$0xff]
        %v2396 = vld [vmem:[%s2392 + $0x18] sm:$0xff]
        %v2397 = vld [vmem:[%s2392 + $0x20] sm:$0xff]
        %v2398 = vld [vmem:[%s2392 + $0x28] sm:$0xff]
        %v2399 = vld [vmem:[%s2392 + $0x30] sm:$0xff]
        %v2400 = vld [vmem:[%s2392 + $0x38] sm:$0xff]
        %v2401 = vld [vmem:[%s2392 + $0x40] sm:$0xff]
        %v2402 = vld [vmem:[%s2392 + $0x48] sm:$0xff]
        %v2403 = vld [vmem:[%s2392 + $0x50] sm:$0xff]
        %v2404 = vld [vmem:[%s2392 + $0x58] sm:$0xff]
        %v2405 = vld [vmem:[%s2392 + $0x60] sm:$0xff]
        %v2406 = vld [vmem:[%s2392 + $0x68] sm:$0xff]
        %v2407 = vld [vmem:[%s2392 + $0x70] sm:$0xff]
        %v2408 = vld [vmem:[%s2392 + $0x78] sm:$0xff]
        %v2409 = vld [vmem:[%s2392 + $0x80] sm:$0xff]
        %v2410 = vld [vmem:[%s2392 + $0x88] sm:$0xff]
        %v2411 = vld [vmem:[%s2392 + $0x90] sm:$0xff]
        %v2412 = vld [vmem:[%s2392 + $0x98] sm:$0xff]
        %v2413 = vld [vmem:[%s2392 + $0xa0] sm:$0xff]
        %v2414 = vld [vmem:[%s2392 + $0xa8] sm:$0xff]
        %v2415 = vld [vmem:[%s2392 + $0xb0] sm:$0xff]
        %v2416 = vld [vmem:[%s2392 + $0xb8] sm:$0xff]
        %v2417 = vld [vmem:[%s2392 + $0xc0] sm:$0xff]
        %v2418 = vld [vmem:[%s2392 + $0xc8] sm:$0xff]
        %v2419 = vld [vmem:[%s2392 + $0xd0] sm:$0xff]
        %v2420 = vld [vmem:[%s2392 + $0xd8] sm:$0xff]
        %v2421 = vld [vmem:[%s2392 + $0xe0] sm:$0xff]
        %v2422 = vld [vmem:[%s2392 + $0xe8] sm:$0xff]
        %v2423 = vld [vmem:[%s2392 + $0xf0] sm:$0xff]
        %v2424 = vld [vmem:[%s2392 + $0xf8] sm:$0xff]
        %s2425 = scalar_lea.vmem %s8, 1
        %v2426 = vld [vmem:[%s2425] sm:$0x1]
        %v2428 = vlaneseq
        %v2429 = vshrl.u32 %v2428, 7
        %v2430 = vsub.s32 0, %v2429
        %v2431 = vrot.slane %v2426, %v2430
        %2433 = vmatprep.subr.mxu0 0.0
        %2434 = vmatpush1.msra.mxu0 %v2408
        %2435 = vmatprep.subr.mxu0 0.0
        %2436 = vmatpush1.msra.mxu0 %v2407
        %2437 = vmatprep.subr.mxu0 0.0
        %2438 = vmatpush1.msra.mxu0 %v2406
        %2439 = vmatprep.subr.mxu0 0.0
        %2440 = vmatpush1.msra.mxu0 %v2405
        %2441 = vmatprep.subr.mxu0 0.0
        %2442 = vmatpush1.msra.mxu0 %v2404
        %2443 = vmatprep.subr.mxu0 0.0
        %2444 = vmatpush1.msra.mxu0 %v2403
        %2445 = vmatprep.subr.mxu0 0.0
        %2446 = vmatpush1.msra.mxu0 %v2402
        %2447 = vmatprep.subr.mxu0 0.0
        %2448 = vmatpush1.msra.mxu0 %v2401
        %2449 = vmatprep.subr.mxu0 0.0
        %2450 = vmatpush1.msra.mxu0 %v2400
        %2451 = vmatprep.subr.mxu0 0.0
        %2452 = vmatpush1.msra.mxu0 %v2399
        %2453 = vmatprep.subr.mxu0 0.0
        %2454 = vmatpush1.msra.mxu0 %v2398
        %2455 = vmatprep.subr.mxu0 0.0
        %2456 = vmatpush1.msra.mxu0 %v2397
        %2457 = vmatprep.subr.mxu0 0.0
        %2458 = vmatpush1.msra.mxu0 %v2396
        %2459 = vmatprep.subr.mxu0 0.0
        %2460 = vmatpush1.msra.mxu0 %v2395
        %2461 = vmatprep.subr.mxu0 0.0
        %2462 = vmatpush1.msra.mxu0 %v2394
        %2463 = vmatprep.subr.mxu0 0.0
        %2464 = vmatpush1.msra.mxu0 %v2393
        %2465 = vmatprep.subr.mxu0 0.0
        %2466 = vmatpush2.msra.mxu0 %v2424
        %2467 = vmatprep.subr.mxu0 0.0
        %2468 = vmatpush2.msra.mxu0 %v2423
        %2469 = vmatprep.subr.mxu0 0.0
        %2470 = vmatpush2.msra.mxu0 %v2422
        %2471 = vmatprep.subr.mxu0 0.0
        %2472 = vmatpush2.msra.mxu0 %v2421
        %2473 = vmatprep.subr.mxu0 0.0
        %2474 = vmatpush2.msra.mxu0 %v2420
        %2475 = vmatprep.subr.mxu0 0.0
        %2476 = vmatpush2.msra.mxu0 %v2419
        %2477 = vmatprep.subr.mxu0 0.0
        %2478 = vmatpush2.msra.mxu0 %v2418
        %2479 = vmatprep.subr.mxu0 0.0
        %2480 = vmatpush2.msra.mxu0 %v2417
        %2481 = vmatprep.subr.mxu0 0.0
        %2482 = vmatpush2.msra.mxu0 %v2416
        %2483 = vmatprep.subr.mxu0 0.0
        %2484 = vmatpush2.msra.mxu0 %v2415
        %2485 = vmatprep.subr.mxu0 0.0
        %2486 = vmatpush2.msra.mxu0 %v2414
        %2487 = vmatprep.subr.mxu0 0.0
        %2488 = vmatpush2.msra.mxu0 %v2413
        %2489 = vmatprep.subr.mxu0 0.0
        %2490 = vmatpush2.msra.mxu0 %v2412
        %2491 = vmatprep.subr.mxu0 0.0
        %2492 = vmatpush2.msra.mxu0 %v2411
        %2493 = vmatprep.subr.mxu0 0.0
        %2494 = vmatpush2.msra.mxu0 %v2410
        %2495 = vmatprep.subr.mxu0 0.0
        %2496 = vmatpush2.msra.mxu0 %v2409
        %2497 = vmatprep.mubr.f32.mxu0 %v2391
        %2498 = vmatmul.mubr.f32.gmra.mxu0 %v2390
        %v2499 = vpop.f32.mrf.mxu0
        %v2500 = vadd.f32 %v2431, %v2499
        %v2501 = vpop.f32.mrf.mxu0
        %2502 = vdwg.mxu0
        %v2503 = vadd.f32 %v1722, %v2500
        %s2504 = scalar_lea.vmem %s9, 1
        %v2505 = vld [vmem:[%s2504] sm:$0x1]
        %s2506 = scalar_lea.vmem %s10, 1
        %v2507 = vld [vmem:[%s2506] sm:$0x1]
        %2508 = vadd.xlane.f32.xlu0 %v2503
        %v2509 = vpop.xlane.xlu0 %2508
        %v2510 = vmul.f32 %v2509, 0.03125
        %v2511 = vsub.f32 %v2503, %v2510
        %v2512 = vsel %vm668, %v2511, 0.0
        %v2513 = vmul.f32 %v2512, %v2512
        %2514 = vadd.xlane.f32.xlu0 %v2513
        %v2515 = vpop.xlane.xlu0 %2514
        %v2516 = vmul.f32 %v2515, 0.03125
        %v2517 = vadd.f32 %v2516, 1e-08
        %v2518 = vrsqrt.pop %v2517
        %v2519 = vmul.f32 %v2512, %v2518
        %v2521 = vlaneseq
        %v2522 = vshrl.u32 %v2521, 7
        %v2523 = vsub.s32 0, %v2522
        %v2524 = vrot.slane %v2505, %v2523
        %v2526 = vmul.f32 %v2519, %v2524
        %v2528 = vlaneseq
        %v2529 = vshrl.u32 %v2528, 7
        %v2530 = vsub.s32 0, %v2529
        %v2531 = vrot.slane %v2507, %v2530
        %v2533 = vadd.f32 %v2526, %v2531
        %s2534 = scalar_lea.vmem [#allocation14], 128
        %v2535 = vld [vmem:[%s2534] sm:$0xff]
        %v2536 = vld [vmem:[%s2534 + $0x8] sm:$0xff]
        %v2537 = vld [vmem:[%s2534 + $0x10] sm:$0xff]
        %v2538 = vld [vmem:[%s2534 + $0x18] sm:$0xff]
        %v2539 = vld [vmem:[%s2534 + $0x20] sm:$0xff]
        %v2540 = vld [vmem:[%s2534 + $0x28] sm:$0xff]
        %v2541 = vld [vmem:[%s2534 + $0x30] sm:$0xff]
        %v2542 = vld [vmem:[%s2534 + $0x38] sm:$0xff]
        %v2543 = vld [vmem:[%s2534 + $0x40] sm:$0xff]
        %v2544 = vld [vmem:[%s2534 + $0x48] sm:$0xff]
        %v2545 = vld [vmem:[%s2534 + $0x50] sm:$0xff]
        %v2546 = vld [vmem:[%s2534 + $0x58] sm:$0xff]
        %v2547 = vld [vmem:[%s2534 + $0x60] sm:$0xff]
        %v2548 = vld [vmem:[%s2534 + $0x68] sm:$0xff]
        %v2549 = vld [vmem:[%s2534 + $0x70] sm:$0xff]
        %v2550 = vld [vmem:[%s2534 + $0x78] sm:$0xff]
        %s2551 = scalar_lea.vmem %s12, 1
        %v2552 = vld [vmem:[%s2551] sm:$0x1]
        %v2554 = vlaneseq
        %v2555 = vshrl.u32 %v2554, 7
        %v2556 = vsub.s32 0, %v2555
        %v2557 = vrot.slane %v2552, %v2556
        %2559 = vmatprep.subr.mxu0 0.0
        %2560 = vmatpush1.msra.mxu0 %v2550
        %2561 = vmatprep.subr.mxu0 0.0
        %2562 = vmatpush1.msra.mxu0 %v2549
        %2563 = vmatprep.subr.mxu0 0.0
        %2564 = vmatpush1.msra.mxu0 %v2548
        %2565 = vmatprep.subr.mxu0 0.0
        %2566 = vmatpush1.msra.mxu0 %v2547
        %2567 = vmatprep.subr.mxu0 0.0
        %2568 = vmatpush1.msra.mxu0 %v2546
        %2569 = vmatprep.subr.mxu0 0.0
        %2570 = vmatpush1.msra.mxu0 %v2545
        %2571 = vmatprep.subr.mxu0 0.0
        %2572 = vmatpush1.msra.mxu0 %v2544
        %2573 = vmatprep.subr.mxu0 0.0
        %2574 = vmatpush1.msra.mxu0 %v2543
        %2575 = vmatprep.subr.mxu0 0.0
        %2576 = vmatpush1.msra.mxu0 %v2542
        %2577 = vmatprep.subr.mxu0 0.0
        %2578 = vmatpush1.msra.mxu0 %v2541
        %2579 = vmatprep.subr.mxu0 0.0
        %2580 = vmatpush1.msra.mxu0 %v2540
        %2581 = vmatprep.subr.mxu0 0.0
        %2582 = vmatpush1.msra.mxu0 %v2539
        %2583 = vmatprep.subr.mxu0 0.0
        %2584 = vmatpush1.msra.mxu0 %v2538
        %2585 = vmatprep.subr.mxu0 0.0
        %2586 = vmatpush1.msra.mxu0 %v2537
        %2587 = vmatprep.subr.mxu0 0.0
        %2588 = vmatpush1.msra.mxu0 %v2536
        %2589 = vmatprep.subr.mxu0 0.0
        %2590 = vmatpush1.msra.mxu0 %v2535
        %2591 = vmatprep.subr.mxu0 0.0
        %2592 = vmatpush2.msra.mxu0 0.0
        %2593 = vmatprep.subr.mxu0 0.0
        %2594 = vmatpush2.msra.mxu0 0.0
        %2595 = vmatprep.subr.mxu0 0.0
        %2596 = vmatpush2.msra.mxu0 0.0
        %2597 = vmatprep.subr.mxu0 0.0
        %2598 = vmatpush2.msra.mxu0 0.0
        %2599 = vmatprep.subr.mxu0 0.0
        %2600 = vmatpush2.msra.mxu0 0.0
        %2601 = vmatprep.subr.mxu0 0.0
        %2602 = vmatpush2.msra.mxu0 0.0
        %2603 = vmatprep.subr.mxu0 0.0
        %2604 = vmatpush2.msra.mxu0 0.0
        %2605 = vmatprep.subr.mxu0 0.0
        %2606 = vmatpush2.msra.mxu0 0.0
        %2607 = vmatprep.subr.mxu0 0.0
        %2608 = vmatpush2.msra.mxu0 0.0
        %2609 = vmatprep.subr.mxu0 0.0
        %2610 = vmatpush2.msra.mxu0 0.0
        %2611 = vmatprep.subr.mxu0 0.0
        %2612 = vmatpush2.msra.mxu0 0.0
        %2613 = vmatprep.subr.mxu0 0.0
        %2614 = vmatpush2.msra.mxu0 0.0
        %2615 = vmatprep.subr.mxu0 0.0
        %2616 = vmatpush2.msra.mxu0 0.0
        %2617 = vmatprep.subr.mxu0 0.0
        %2618 = vmatpush2.msra.mxu0 0.0
        %2619 = vmatprep.subr.mxu0 0.0
        %2620 = vmatpush2.msra.mxu0 0.0
        %2621 = vmatprep.subr.mxu0 0.0
        %2622 = vmatpush2.msra.mxu0 0.0
        %2623 = vmatprep.mubr.f32.mxu0 0.0
        %2624 = vmatmul.mubr.f32.gmra.mxu0 %v2533
        %v2625 = vpop.f32.mrf.mxu0
        %v2626 = vadd.f32 %v2557, %v2625
        %v2627 = vpop.f32.mrf.mxu0
        %2628 = vdwg.mxu0
        %v2629 = vmax.f32 %v2626, 0.0
        %s2630 = scalar_lea.vmem [#allocation15], 128
        %v2631 = vld [vmem:[%s2630] sm:$0xff]
        %v2632 = vld [vmem:[%s2630 + $0x8] sm:$0xff]
        %v2633 = vld [vmem:[%s2630 + $0x10] sm:$0xff]
        %v2634 = vld [vmem:[%s2630 + $0x18] sm:$0xff]
        %v2635 = vld [vmem:[%s2630 + $0x20] sm:$0xff]
        %v2636 = vld [vmem:[%s2630 + $0x28] sm:$0xff]
        %v2637 = vld [vmem:[%s2630 + $0x30] sm:$0xff]
        %v2638 = vld [vmem:[%s2630 + $0x38] sm:$0xff]
        %v2639 = vld [vmem:[%s2630 + $0x40] sm:$0xff]
        %v2640 = vld [vmem:[%s2630 + $0x48] sm:$0xff]
        %v2641 = vld [vmem:[%s2630 + $0x50] sm:$0xff]
        %v2642 = vld [vmem:[%s2630 + $0x58] sm:$0xff]
        %v2643 = vld [vmem:[%s2630 + $0x60] sm:$0xff]
        %v2644 = vld [vmem:[%s2630 + $0x68] sm:$0xff]
        %v2645 = vld [vmem:[%s2630 + $0x70] sm:$0xff]
        %v2646 = vld [vmem:[%s2630 + $0x78] sm:$0xff]
        %s2647 = scalar_lea.vmem %s14, 1
        %v2648 = vld [vmem:[%s2647] sm:$0x1]
        %v2650 = vlaneseq
        %v2651 = vshrl.u32 %v2650, 7
        %v2652 = vsub.s32 0, %v2651
        %v2653 = vrot.slane %v2648, %v2652
        %2655 = vmatprep.subr.mxu0 0.0
        %2656 = vmatpush1.msra.mxu0 %v2646
        %2657 = vmatprep.subr.mxu0 0.0
        %2658 = vmatpush1.msra.mxu0 %v2645
        %2659 = vmatprep.subr.mxu0 0.0
        %2660 = vmatpush1.msra.mxu0 %v2644
        %2661 = vmatprep.subr.mxu0 0.0
        %2662 = vmatpush1.msra.mxu0 %v2643
        %2663 = vmatprep.subr.mxu0 0.0
        %2664 = vmatpush1.msra.mxu0 %v2642
        %2665 = vmatprep.subr.mxu0 0.0
        %2666 = vmatpush1.msra.mxu0 %v2641
        %2667 = vmatprep.subr.mxu0 0.0
        %2668 = vmatpush1.msra.mxu0 %v2640
        %2669 = vmatprep.subr.mxu0 0.0
        %2670 = vmatpush1.msra.mxu0 %v2639
        %2671 = vmatprep.subr.mxu0 0.0
        %2672 = vmatpush1.msra.mxu0 %v2638
        %2673 = vmatprep.subr.mxu0 0.0
        %2674 = vmatpush1.msra.mxu0 %v2637
        %2675 = vmatprep.subr.mxu0 0.0
        %2676 = vmatpush1.msra.mxu0 %v2636
        %2677 = vmatprep.subr.mxu0 0.0
        %2678 = vmatpush1.msra.mxu0 %v2635
        %2679 = vmatprep.subr.mxu0 0.0
        %2680 = vmatpush1.msra.mxu0 %v2634
        %2681 = vmatprep.subr.mxu0 0.0
        %2682 = vmatpush1.msra.mxu0 %v2633
        %2683 = vmatprep.subr.mxu0 0.0
        %2684 = vmatpush1.msra.mxu0 %v2632
        %2685 = vmatprep.subr.mxu0 0.0
        %2686 = vmatpush1.msra.mxu0 %v2631
        %2687 = vmatprep.subr.mxu0 0.0
        %2688 = vmatpush2.msra.mxu0 0.0
        %2689 = vmatprep.subr.mxu0 0.0
        %2690 = vmatpush2.msra.mxu0 0.0
        %2691 = vmatprep.subr.mxu0 0.0
        %2692 = vmatpush2.msra.mxu0 0.0
        %2693 = vmatprep.subr.mxu0 0.0
        %2694 = vmatpush2.msra.mxu0 0.0
        %2695 = vmatprep.subr.mxu0 0.0
        %2696 = vmatpush2.msra.mxu0 0.0
        %2697 = vmatprep.subr.mxu0 0.0
        %2698 = vmatpush2.msra.mxu0 0.0
        %2699 = vmatprep.subr.mxu0 0.0
        %2700 = vmatpush2.msra.mxu0 0.0
        %2701 = vmatprep.subr.mxu0 0.0
        %2702 = vmatpush2.msra.mxu0 0.0
        %2703 = vmatprep.subr.mxu0 0.0
        %2704 = vmatpush2.msra.mxu0 0.0
        %2705 = vmatprep.subr.mxu0 0.0
        %2706 = vmatpush2.msra.mxu0 0.0
        %2707 = vmatprep.subr.mxu0 0.0
        %2708 = vmatpush2.msra.mxu0 0.0
        %2709 = vmatprep.subr.mxu0 0.0
        %2710 = vmatpush2.msra.mxu0 0.0
        %2711 = vmatprep.subr.mxu0 0.0
        %2712 = vmatpush2.msra.mxu0 0.0
        %2713 = vmatprep.subr.mxu0 0.0
        %2714 = vmatpush2.msra.mxu0 0.0
        %2715 = vmatprep.subr.mxu0 0.0
        %2716 = vmatpush2.msra.mxu0 0.0
        %2717 = vmatprep.subr.mxu0 0.0
        %2718 = vmatpush2.msra.mxu0 0.0
        %2719 = vmatprep.mubr.f32.mxu0 0.0
        %2720 = vmatmul.mubr.f32.gmra.mxu0 %v2629
        %v2721 = vpop.f32.mrf.mxu0
        %v2722 = vadd.f32 %v2653, %v2721
        %v2723 = vpop.f32.mrf.mxu0
        %2724 = vdwg.mxu0
        %v2725 = vadd.f32 %v2533, %v2722
        %v2726 = vld [vmem:[%s15] sm:$0x1]
        %v2727 = vld [vmem:[%s16] sm:$0x1]
        %2728 = vadd.xlane.f32.xlu0 %v2725
        %v2729 = vpop.xlane.xlu0 %2728
        %v2730 = vmul.f32 %v2729, 0.03125
        %v2731 = vsub.f32 %v2725, %v2730
        %v2732 = vsel %vm668, %v2731, 0.0
        %v2733 = vmul.f32 %v2732, %v2732
        %2734 = vadd.xlane.f32.xlu0 %v2733
        %v2735 = vpop.xlane.xlu0 %2734
        %v2736 = vmul.f32 %v2735, 0.03125
        %v2737 = vadd.f32 %v2736, 1e-08
        %v2738 = vrsqrt.pop %v2737
        %v2739 = vmul.f32 %v2732, %v2738
        %v2741 = vlaneseq
        %v2742 = vshrl.u32 %v2741, 7
        %v2743 = vsub.s32 0, %v2742
        %v2744 = vrot.slane %v2726, %v2743
        %v2746 = vmul.f32 %v2739, %v2744
        %v2748 = vlaneseq
        %v2749 = vshrl.u32 %v2748, 7
        %v2750 = vsub.s32 0, %v2749
        %v2751 = vrot.slane %v2727, %v2750
        %v2753 = vadd.f32 %v2746, %v2751
        %2754 = vst [vmem:[%s665] sm:$0xff] %v2753
        %s2755 = sand.u32 %s408, 1
        %s2756 = scalar_lea.sflag [#allocation5], %s2755
        %s2757 = sand.u32 %s408, 1
        %s2758 = smul.addr %s2757, 8
        %s2759 = scalar_lea.vmem [#allocation17], %s2758
        // Predicated region
        $region121: #{tpu_custom_call.1} parent=87 // pred_check
          %p2760 = pneg %p418
        $region122: #{tpu_custom_call.1} parent=87 // pred_check_branch
          %2762 = sbr.rel (%p2760) target = $region124
        $region123: #{tpu_custom_call.1} parent=87 // pred_region
          %s2764 = ssub.s32 128, 128
          %2765 = vsyncadd %s2756, %s2764
          %s2766 = smul.addr %s38, 128
          %s2767 = scalar_lea.hbm %s17, %s2766
          %s2769 = sshll.u32 %s2759, 4
          %s2770 = int_to_ptr.vmem [resolvable:$true] %s2769
          %2772 = dma.vmem_to_hbm [thread:$0]  %s2770, 128, %s2767, %s2756
        $region124: #{tpu_custom_call.1} parent=87 // pred_fallthru
          _
      $region88: #{tpu_custom_call.1} parent=5 // pred_fallthru
        _
      %p2773 = scmp.le.s32.totalorder 2, %s33
      // Predicated region
      $region125: #{tpu_custom_call.1} parent=5 // pred_check
        %p2774 = pneg %p2773
      $region126: #{tpu_custom_call.1} parent=5 // pred_check_branch
        %2776 = sbr.rel (%p2774) target = $region128
      $region127: #{tpu_custom_call.1} parent=5 // pred_region
        %s2777 = ssub.s32 %s33, 2
        // Predicated region
        $region129: #{tpu_custom_call.1} parent=127 // pred_check
          %p2778 = pneg %p424
        $region130: #{tpu_custom_call.1} parent=127 // pred_check_branch
          %2780 = sbr.rel (%p2778) target = $region132
        $region131: #{tpu_custom_call.1} parent=127 // pred_region
          %s2781 = sand.u32 %s409, 1
          %s2782 = scalar_lea.sflag [#allocation5], %s2781
          %s2783 = sand.u32 %s409, 1
          %s2784 = smul.addr %s2783, 8
          %s2785 = scalar_lea.vmem [#allocation17], %s2784
          %2786 = dma.done %s2782, 128
        $region132: #{tpu_custom_call.1} parent=127 // pred_fallthru
          _
      $region128: #{tpu_custom_call.1} parent=5 // pred_fallthru
        _
    $region6: #{tpu_custom_call.1} parent=1 // loop_footer
      %s37 = sadd.s32 1, %s33
    $region7: #{tpu_custom_call.1} parent=1 // loop_footer_branch
      %32 = sbr.rel target = $region3
    $region8: #{tpu_custom_call.1} parent=1 // loop_exit
      _
    %2787 = vsyncpa [#allocation4], 1
    %s2788 = scalar_lea.sflag [#allocation4], 1
    %2789 = vsyncpa %s2788, 1
    %2790 = vsyncpa [#allocation7], 1
    %2791 = vsyncpa [#allocation10], 1
    %2792 = vsyncpa [#allocation13], 1
    %2793 = vsyncpa [#allocation16], 1
    %2794 = vsyncpa [#allocation5], 1
    %s2795 = scalar_lea.sflag [#allocation5], 1
    %2796 = vsyncpa %s2795, 1

// kernel: tpu_custom_call.1
$region0: #{tpu_custom_call.1}
  #allocation0 [shape = 'u32[]', space=smem, size = 0x4, offset = 0x4, fixed_abs, tag = 'smem constant byte address 0x4 - core index']
  #allocation1 [shape = 'u32[144,128]{1,0:T(1,128)}', space=vmem, size = 0x12000, scoped, tag = 'internal scratch']
  #allocation2 [shape = 'f32[8,256]{1,0:T(8,128)}', space=vmem, size = 0x2000, scoped, tag = 'scratch operand']
  %s0 = inlined_call_operand.hbm [shape: f32[16,128], index: 0, kind: input, shape index: {}]
  %s1 = inlined_call_operand.hbm [shape: f32[2,1,128], index: 1, kind: input, shape index: {}]
  %s2 = inlined_call_operand.vmem [shape: f32[2,1,128], index: 2, kind: input, shape index: {}]
  %s3 = inlined_call_operand.hbm [shape: f32[2,128,256], index: 3, kind: input, shape index: {}]
  %s4 = inlined_call_operand.hbm [shape: f32[2,1,256], index: 4, kind: input, shape index: {}]
  %s5 = inlined_call_operand.hbm [shape: f32[2,128,512], index: 5, kind: input, shape index: {}]
  %s6 = inlined_call_operand.vmem [shape: f32[2,1,512], index: 6, kind: input, shape index: {}]
  %s7 = inlined_call_operand.hbm [shape: f32[2,256,128], index: 7, kind: input, shape index: {}]
  %s8 = inlined_call_operand.vmem [shape: f32[2,1,128], index: 8, kind: input, shape index: {}]
  %s9 = inlined_call_operand.vmem [shape: f32[2,1,128], index: 9, kind: input, shape index: {}]
  %s10 = inlined_call_operand.vmem [shape: f32[2,1,128], index: 10, kind: input, shape index: {}]
  %s11 = inlined_call_operand.hbm [shape: f32[2,128,128], index: 11, kind: input, shape index: {}]
  %s12 = inlined_call_operand.vmem [shape: f32[2,1,128], index: 12, kind: input, shape index: {}]
  %s13 = inlined_call_operand.hbm [shape: f32[2,128,128], index: 13, kind: input, shape index: {}]
  %s14 = inlined_call_operand.vmem [shape: f32[2,1,128], index: 14, kind: input, shape index: {}]
  %s15 = inlined_call_operand.vmem [shape: f32[1,1,128], index: 15, kind: input, shape index: {}]
  %s16 = inlined_call_operand.vmem [shape: f32[1,1,128], index: 16, kind: input, shape index: {}]
  %s17 = inlined_call_operand.hbm [shape: f32[16,128], index: 17, kind: output, shape index: {}]
  %s18 = sld [smem:[#allocation0]]
  $region133: #{tpu_custom_call.1} parent=0
    _
  %s20 = ssub.s32 1, %s18
  %s21 = scalar_select 0, %s20, %s18
  $region1: #{tpu_custom_call.1} parent=0
    #allocation3 [shape = 'u8[8192]{0}', space=vmem, size = 0x2000, scoped, tag = 'input window, operand 0']
    #allocation4 [shape = 's32[2]{0}', space=sflag, size = 0x8, scoped, tag = 'scoped memory for tpu_custom_call.1']
    #allocation5 [shape = 's32[2]{0}', space=sflag, size = 0x8, scoped, tag = 'scoped memory for tpu_custom_call.1']
    #allocation6 [shape = 'u8[1024]{0}', space=vmem, size = 0x400, scoped, tag = 'input window, operand 1, single buffered']
    #allocation7 [shape = 's32[1]{0}', space=sflag, size = 0x4, scoped, tag = 'scoped memory for tpu_custom_call.1']
    #allocation8 [shape = 'u8[262144]{0}', space=vmem, size = 0x40000, scoped, tag = 'input window, operand 3, single buffered']
    #allocation9 [shape = 'u8[2048]{0}', space=vmem, size = 0x800, scoped, tag = 'input window, operand 4, single buffered']
    #allocation10 [shape = 's32[1]{0}', space=sflag, size = 0x4, scoped, tag = 'scoped memory for tpu_custom_call.1']
    #allocation11 [shape = 'u8[524288]{0}', space=vmem, size = 0x80000, scoped, tag = 'input window, operand 5, single buffered']
    #allocation12 [shape = 'u8[262144]{0}', space=vmem, size = 0x40000, scoped, tag = 'input window, operand 7, single buffered']
    #allocation13 [shape = 's32[1]{0}', space=sflag, size = 0x4, scoped, tag = 'scoped memory for tpu_custom_call.1']
    #allocation14 [shape = 'u8[131072]{0}', space=vmem, size = 0x20000, scoped, tag = 'input window, operand 11, single buffered']
    #allocation15 [shape = 'u8[131072]{0}', space=vmem, size = 0x20000, scoped, tag = 'input window, operand 13, single buffered']
    #allocation16 [shape = 's32[1]{0}', space=sflag, size = 0x4, scoped, tag = 'scoped memory for tpu_custom_call.1']
    #allocation17 [shape = 'u8[8192]{0}', space=vmem, size = 0x2000, scoped, tag = 'output window, operand 0']
    %22 = vsyncpa [#allocation4], 0
    %s23 = scalar_lea.sflag [#allocation4], 1
    %24 = vsyncpa %s23, 0
    %25 = vsyncpa [#allocation7], 0
    %26 = vsyncpa [#allocation10], 0
    %27 = vsyncpa [#allocation13], 0
    %28 = vsyncpa [#allocation16], 0
    %29 = vsyncpa [#allocation5], 0
    %s30 = scalar_lea.sflag [#allocation5], 1
    %31 = vsyncpa %s30, 0
    loop: start=0, step=1, limit=4
    $region2: #{tpu_custom_call.1} parent=1 // loop_pre_header
      _
    $region3: #{tpu_custom_call.1} parent=1 // loop_header
      %s33 = sphi 0, %s37
      %p34 = scmp.ge.s32.totalorder %s33, 4
      %s43 = sphi 0, %s45
      %s46 = sphi 0, %s43
      %s47 = sphi 0, %s46
      %s63 = sphi 0, %s47
      %s67 = sphi 0, %s67
      %s69 = sphi 0, %s67
      %s70 = sphi 0, %s69
      %s84 = sphi 0, %s70
      %s88 = sphi 0, %s88
      %s90 = sphi 0, %s88
      %s91 = sphi 0, %s90
      %s105 = sphi 0, %s91
      %s109 = sphi 0, %s109
      %s111 = sphi 0, %s109
      %s112 = sphi 0, %s111
      %s126 = sphi 0, %s112
      %s130 = sphi 0, %s130
      %s132 = sphi 0, %s130
      %s133 = sphi 0, %s132
      %s147 = sphi 0, %s133
      %s151 = sphi 0, %s151
      %s153 = sphi 0, %s151
      %s154 = sphi 0, %s153
      %s168 = sphi 0, %s154
      %s172 = sphi 0, %s172
      %s174 = sphi 0, %s172
      %s175 = sphi 0, %s174
      %s189 = sphi 0, %s175
      %s193 = sphi 0, %s193
      %s195 = sphi 0, %s193
      %s196 = sphi 0, %s195
      %s210 = sphi 0, %s196
      %s214 = sphi 0, %s214
      %s216 = sphi 0, %s214
      %s217 = sphi 0, %s216
      %s231 = sphi 0, %s217
      %s235 = sphi 0, %s235
      %s237 = sphi 0, %s235
      %s238 = sphi 0, %s237
      %s252 = sphi 0, %s238
      %s256 = sphi 0, %s256
      %s258 = sphi 0, %s256
      %s259 = sphi 0, %s258
      %s273 = sphi 0, %s259
      %s277 = sphi 0, %s277
      %s279 = sphi 0, %s277
      %s280 = sphi 0, %s279
      %s294 = sphi 0, %s280
      %s298 = sphi 0, %s298
      %s300 = sphi 0, %s298
      %s301 = sphi 0, %s300
      %s315 = sphi 0, %s301
      %s319 = sphi 0, %s319
      %s321 = sphi 0, %s319
      %s322 = sphi 0, %s321
      %s336 = sphi 0, %s322
      %s340 = sphi 0, %s340
      %s342 = sphi 0, %s340
      %s343 = sphi 0, %s342
      %s357 = sphi 0, %s343
      %s361 = sphi 0, %s361
      %s363 = sphi 0, %s361
      %s364 = sphi 0, %s363
      %s378 = sphi 0, %s364
      %s382 = sphi 0, %s382
      %s384 = sphi 0, %s382
      %s385 = sphi 0, %s384
      %s399 = sphi 0, %s385
      %s405 = sphi 0, %s407
      %s408 = sphi 0, %s405
      %s409 = sphi 0, %s408
      %s425 = sphi 0, %s409
    $region4: #{tpu_custom_call.1} parent=1 // loop_header_branch
      %36 = sbr.rel (%p34) target = $region8
    $region5: #{tpu_custom_call.1} parent=1 // loop_body
      %s38 = ssub.s32 %s33, 1
      %s39 = ssub.s32 %s33, 2
      %s40 = sadd.s32 %s33, 1
      %s41 = ssub.s32 %s33, %s40
      %p42 = scmp.eq.s32.totalorder %s41, 0
      %s44 = sadd.s32 %s43, 1
      %s45 = scalar_select %p42, %s43, %s44
      %p48 = pneg %p42
      %p49 = scmp.eq.s32.totalorder %s33, 1
      %p50 = por %p48, %p49
      %p51 = scmp.ne.s32.totalorder %s43, %s46
      %p52 = scmp.eq.s32.totalorder %s33, 0
      %p53 = por %p51, %p52
      %p54 = scmp.ne.s32.totalorder %s43, %s46
      %p55 = scmp.eq.s32.totalorder %s38, 1
      %p56 = por %p54, %p55
      %p57 = scmp.ne.s32.totalorder %s46, %s47
      %p58 = scmp.eq.s32.totalorder %s38, 0
      %p59 = por %p57, %p58
      %p60 = scmp.ne.s32.totalorder %s46, %s47
      %p61 = scmp.eq.s32.totalorder %s39, 1
      %p62 = por %p60, %p61
      %p64 = scmp.ne.s32.totalorder %s47, %s63
      %p65 = scmp.eq.s32.totalorder %s39, 0
      %p66 = por %p64, %p65
      %s68 = sadd.s32 %s67, 1
      %p71 = scmp.eq.s32.totalorder %s33, 1
      %p72 = scmp.ne.s32.totalorder %s67, %s69
      %p73 = scmp.eq.s32.totalorder %s33, 0
      %p74 = por %p72, %p73
      %p75 = scmp.ne.s32.totalorder %s67, %s69
      %p76 = scmp.eq.s32.totalorder %s38, 1
      %p77 = por %p75, %p76
      %p78 = scmp.ne.s32.totalorder %s69, %s70
      %p79 = scmp.eq.s32.totalorder %s38, 0
      %p80 = por %p78, %p79
      %p81 = scmp.ne.s32.totalorder %s69, %s70
      %p82 = scmp.eq.s32.totalorder %s39, 1
      %p83 = por %p81, %p82
      %p85 = scmp.ne.s32.totalorder %s70, %s84
      %p86 = scmp.eq.s32.totalorder %s39, 0
      %p87 = por %p85, %p86
      %s89 = sadd.s32 %s88, 1
      %p92 = scmp.eq.s32.totalorder %s33, 1
      %p93 = scmp.ne.s32.totalorder %s88, %s90
      %p94 = scmp.eq.s32.totalorder %s33, 0
      %p95 = por %p93, %p94
      %p96 = scmp.ne.s32.totalorder %s88, %s90
      %p97 = scmp.eq.s32.totalorder %s38, 1
      %p98 = por %p96, %p97
      %p99 = scmp.ne.s32.totalorder %s90, %s91
      %p100 = scmp.eq.s32.totalorder %s38, 0
      %p101 = por %p99, %p100
      %p102 = scmp.ne.s32.totalorder %s90, %s91
      %p103 = scmp.eq.s32.totalorder %s39, 1
      %p104 = por %p102, %p103
      %p106 = scmp.ne.s32.totalorder %s91, %s105
      %p107 = scmp.eq.s32.totalorder %s39, 0
      %p108 = por %p106, %p107
      %s110 = sadd.s32 %s109, 1
      %p113 = scmp.eq.s32.totalorder %s33, 1
      %p114 = scmp.ne.s32.totalorder %s109, %s111
      %p115 = scmp.eq.s32.totalorder %s33, 0
      %p116 = por %p114, %p115
      %p117 = scmp.ne.s32.totalorder %s109, %s111
      %p118 = scmp.eq.s32.totalorder %s38, 1
      %p119 = por %p117, %p118
      %p120 = scmp.ne.s32.totalorder %s111, %s112
      %p121 = scmp.eq.s32.totalorder %s38, 0
      %p122 = por %p120, %p121
      %p123 = scmp.ne.s32.totalorder %s111, %s112
      %p124 = scmp.eq.s32.totalorder %s39, 1
      %p125 = por %p123, %p124
      %p127 = scmp.ne.s32.totalorder %s112, %s126
      %p128 = scmp.eq.s32.totalorder %s39, 0
      %p129 = por %p127, %p128
      %s131 = sadd.s32 %s130, 1
      %p134 = scmp.eq.s32.totalorder %s33, 1
      %p135 = scmp.ne.s32.totalorder %s130, %s132
      %p136 = scmp.eq.s32.totalorder %s33, 0
      %p137 = por %p135, %p136
      %p138 = scmp.ne.s32.totalorder %s130, %s132
      %p139 = scmp.eq.s32.totalorder %s38, 1
      %p140 = por %p138, %p139
      %p141 = scmp.ne.s32.totalorder %s132, %s133
      %p142 = scmp.eq.s32.totalorder %s38, 0
      %p143 = por %p141, %p142
      %p144 = scmp.ne.s32.totalorder %s132, %s133
      %p145 = scmp.eq.s32.totalorder %s39, 1
      %p146 = por %p144, %p145
      %p148 = scmp.ne.s32.totalorder %s133, %s147
      %p149 = scmp.eq.s32.totalorder %s39, 0
      %p150 = por %p148, %p149
      %s152 = sadd.s32 %s151, 1
      %p155 = scmp.eq.s32.totalorder %s33, 1
      %p156 = scmp.ne.s32.totalorder %s151, %s153
      %p157 = scmp.eq.s32.totalorder %s33, 0
      %p158 = por %p156, %p157
      %p159 = scmp.ne.s32.totalorder %s151, %s153
      %p160 = scmp.eq.s32.totalorder %s38, 1
      %p161 = por %p159, %p160
      %p162 = scmp.ne.s32.totalorder %s153, %s154
      %p163 = scmp.eq.s32.totalorder %s38, 0
      %p164 = por %p162, %p163
      %p165 = scmp.ne.s32.totalorder %s153, %s154
      %p166 = scmp.eq.s32.totalorder %s39, 1
      %p167 = por %p165, %p166
      %p169 = scmp.ne.s32.totalorder %s154, %s168
      %p170 = scmp.eq.s32.totalorder %s39, 0
      %p171 = por %p169, %p170
      %s173 = sadd.s32 %s172, 1
      %p176 = scmp.eq.s32.totalorder %s33, 1
      %p177 = scmp.ne.s32.totalorder %s172, %s174
      %p178 = scmp.eq.s32.totalorder %s33, 0
      %p179 = por %p177, %p178
      %p180 = scmp.ne.s32.totalorder %s172, %s174
      %p181 = scmp.eq.s32.totalorder %s38, 1
      %p182 = por %p180, %p181
      %p183 = scmp.ne.s32.totalorder %s174, %s175
      %p184 = scmp.eq.s32.totalorder %s38, 0
      %p185 = por %p183, %p184
      %p186 = scmp.ne.s32.totalorder %s174, %s175
      %p187 = scmp.eq.s32.totalorder %s39, 1
      %p188 = por %p186, %p187
      %p190 = scmp.ne.s32.totalorder %s175, %s189
      %p191 = scmp.eq.s32.totalorder %s39, 0
      %p192 = por %p190, %p191
      %s194 = sadd.s32 %s193, 1
      %p197 = scmp.eq.s32.totalorder %s33, 1
      %p198 = scmp.ne.s32.totalorder %s193, %s195
      %p199 = scmp.eq.s32.totalorder %s33, 0
      %p200 = por %p198, %p199
      %p201 = scmp.ne.s32.totalorder %s193, %s195
      %p202 = scmp.eq.s32.totalorder %s38, 1
      %p203 = por %p201, %p202
      %p204 = scmp.ne.s32.totalorder %s195, %s196
      %p205 = scmp.eq.s32.totalorder %s38, 0
      %p206 = por %p204, %p205
      %p207 = scmp.ne.s32.totalorder %s195, %s196
      %p208 = scmp.eq.s32.totalorder %s39, 1
      %p209 = por %p207, %p208
      %p211 = scmp.ne.s32.totalorder %s196, %s210
      %p212 = scmp.eq.s32.totalorder %s39, 0
      %p213 = por %p211, %p212
      %s215 = sadd.s32 %s214, 1
      %p218 = scmp.eq.s32.totalorder %s33, 1
      %p219 = scmp.ne.s32.totalorder %s214, %s216
      %p220 = scmp.eq.s32.totalorder %s33, 0
      %p221 = por %p219, %p220
      %p222 = scmp.ne.s32.totalorder %s214, %s216
      %p223 = scmp.eq.s32.totalorder %s38, 1
      %p224 = por %p222, %p223
      %p225 = scmp.ne.s32.totalorder %s216, %s217
      %p226 = scmp.eq.s32.totalorder %s38, 0
      %p227 = por %p225, %p226
      %p228 = scmp.ne.s32.totalorder %s216, %s217
      %p229 = scmp.eq.s32.totalorder %s39, 1
      %p230 = por %p228, %p229
      %p232 = scmp.ne.s32.totalorder %s217, %s231
      %p233 = scmp.eq.s32.totalorder %s39, 0
      %p234 = por %p232, %p233
      %s236 = sadd.s32 %s235, 1
      %p239 = scmp.eq.s32.totalorder %s33, 1
      %p240 = scmp.ne.s32.totalorder %s235, %s237
      %p241 = scmp.eq.s32.totalorder %s33, 0
      %p242 = por %p240, %p241
      %p243 = scmp.ne.s32.totalorder %s235, %s237
      %p244 = scmp.eq.s32.totalorder %s38, 1
      %p245 = por %p243, %p244
      %p246 = scmp.ne.s32.totalorder %s237, %s238
      %p247 = scmp.eq.s32.totalorder %s38, 0
      %p248 = por %p246, %p247
      %p249 = scmp.ne.s32.totalorder %s237, %s238
      %p250 = scmp.eq.s32.totalorder %s39, 1
      %p251 = por %p249, %p250
      %p253 = scmp.ne.s32.totalorder %s238, %s252
      %p254 = scmp.eq.s32.totalorder %s39, 0
      %p255 = por %p253, %p254
      %s257 = sadd.s32 %s256, 1
      %p260 = scmp.eq.s32.totalorder %s33, 1
      %p261 = scmp.ne.s32.totalorder %s256, %s258
      %p262 = scmp.eq.s32.totalorder %s33, 0
      %p263 = por %p261, %p262
      %p264 = scmp.ne.s32.totalorder %s256, %s258
      %p265 = scmp.eq.s32.totalorder %s38, 1
      %p266 = por %p264, %p265
      %p267 = scmp.ne.s32.totalorder %s258, %s259
      %p268 = scmp.eq.s32.totalorder %s38, 0
      %p269 = por %p267, %p268
      %p270 = scmp.ne.s32.totalorder %s258, %s259
      %p271 = scmp.eq.s32.totalorder %s39, 1
      %p272 = por %p270, %p271
      %p274 = scmp.ne.s32.totalorder %s259, %s273
      %p275 = scmp.eq.s32.totalorder %s39, 0
      %p276 = por %p274, %p275
      %s278 = sadd.s32 %s277, 1
      %p281 = scmp.eq.s32.totalorder %s33, 1
      %p282 = scmp.ne.s32.totalorder %s277, %s279
      %p283 = scmp.eq.s32.totalorder %s33, 0
      %p284 = por %p282, %p283
      %p285 = scmp.ne.s32.totalorder %s277, %s279
      %p286 = scmp.eq.s32.totalorder %s38, 1
      %p287 = por %p285, %p286
      %p288 = scmp.ne.s32.totalorder %s279, %s280
      %p289 = scmp.eq.s32.totalorder %s38, 0
      %p290 = por %p288, %p289
      %p291 = scmp.ne.s32.totalorder %s279, %s280
      %p292 = scmp.eq.s32.totalorder %s39, 1
      %p293 = por %p291, %p292
      %p295 = scmp.ne.s32.totalorder %s280, %s294
      %p296 = scmp.eq.s32.totalorder %s39, 0
      %p297 = por %p295, %p296
      %s299 = sadd.s32 %s298, 1
      %p302 = scmp.eq.s32.totalorder %s33, 1
      %p303 = scmp.ne.s32.totalorder %s298, %s300
      %p304 = scmp.eq.s32.totalorder %s33, 0
      %p305 = por %p303, %p304
      %p306 = scmp.ne.s32.totalorder %s298, %s300
      %p307 = scmp.eq.s32.totalorder %s38, 1
      %p308 = por %p306, %p307
      %p309 = scmp.ne.s32.totalorder %s300, %s301
      %p310 = scmp.eq.s32.totalorder %s38, 0
      %p311 = por %p309, %p310
      %p312 = scmp.ne.s32.totalorder %s300, %s301
      %p313 = scmp.eq.s32.totalorder %s39, 1
      %p314 = por %p312, %p313
      %p316 = scmp.ne.s32.totalorder %s301, %s315
      %p317 = scmp.eq.s32.totalorder %s39, 0
      %p318 = por %p316, %p317
      %s320 = sadd.s32 %s319, 1
      %p323 = scmp.eq.s32.totalorder %s33, 1
      %p324 = scmp.ne.s32.totalorder %s319, %s321
      %p325 = scmp.eq.s32.totalorder %s33, 0
      %p326 = por %p324, %p325
      %p327 = scmp.ne.s32.totalorder %s319, %s321
      %p328 = scmp.eq.s32.totalorder %s38, 1
      %p329 = por %p327, %p328
      %p330 = scmp.ne.s32.totalorder %s321, %s322
      %p331 = scmp.eq.s32.totalorder %s38, 0
      %p332 = por %p330, %p331
      %p333 = scmp.ne.s32.totalorder %s321, %s322
      %p334 = scmp.eq.s32.totalorder %s39, 1
      %p335 = por %p333, %p334
      %p337 = scmp.ne.s32.totalorder %s322, %s336
      %p338 = scmp.eq.s32.totalorder %s39, 0
      %p339 = por %p337, %p338
      %s341 = sadd.s32 %s340, 1
      %p344 = scmp.eq.s32.totalorder %s33, 1
      %p345 = scmp.ne.s32.totalorder %s340, %s342
      %p346 = scmp.eq.s32.totalorder %s33, 0
      %p347 = por %p345, %p346
      %p348 = scmp.ne.s32.totalorder %s340, %s342
      %p349 = scmp.eq.s32.totalorder %s38, 1
      %p350 = por %p348, %p349
      %p351 = scmp.ne.s32.totalorder %s342, %s343
      %p352 = scmp.eq.s32.totalorder %s38, 0
      %p353 = por %p351, %p352
      %p354 = scmp.ne.s32.totalorder %s342, %s343
      %p355 = scmp.eq.s32.totalorder %s39, 1
      %p356 = por %p354, %p355
      %p358 = scmp.ne.s32.totalorder %s343, %s357
      %p359 = scmp.eq.s32.totalorder %s39, 0
      %p360 = por %p358, %p359
      %s362 = sadd.s32 %s361, 1
      %p365 = scmp.eq.s32.totalorder %s33, 1
      %p366 = scmp.ne.s32.totalorder %s361, %s363
      %p367 = scmp.eq.s32.totalorder %s33, 0
      %p368 = por %p366, %p367
      %p369 = scmp.ne.s32.totalorder %s361, %s363
      %p370 = scmp.eq.s32.totalorder %s38, 1
      %p371 = por %p369, %p370
      %p372 = scmp.ne.s32.totalorder %s363, %s364
      %p373 = scmp.eq.s32.totalorder %s38, 0
      %p374 = por %p372, %p373
      %p375 = scmp.ne.s32.totalorder %s363, %s364
      %p376 = scmp.eq.s32.totalorder %s39, 1
      %p377 = por %p375, %p376
      %p379 = scmp.ne.s32.totalorder %s364, %s378
      %p380 = scmp.eq.s32.totalorder %s39, 0
      %p381 = por %p379, %p380
      %s383 = sadd.s32 %s382, 1
      %p386 = scmp.eq.s32.totalorder %s33, 1
      %p387 = scmp.ne.s32.totalorder %s382, %s384
      %p388 = scmp.eq.s32.totalorder %s33, 0
      %p389 = por %p387, %p388
      %p390 = scmp.ne.s32.totalorder %s382, %s384
      %p391 = scmp.eq.s32.totalorder %s38, 1
      %p392 = por %p390, %p391
      %p393 = scmp.ne.s32.totalorder %s384, %s385
      %p394 = scmp.eq.s32.totalorder %s38, 0
      %p395 = por %p393, %p394
      %p396 = scmp.ne.s32.totalorder %s384, %s385
      %p397 = scmp.eq.s32.totalorder %s39, 1
      %p398 = por %p396, %p397
      %p400 = scmp.ne.s32.totalorder %s385, %s399
      %p401 = scmp.eq.s32.totalorder %s39, 0
      %p402 = por %p400, %p401
      %s403 = ssub.s32 %s33, %s40
      %p404 = scmp.eq.s32.totalorder %s403, 0
      %s406 = sadd.s32 %s405, 1
      %s407 = scalar_select %p404, %s405, %s406
      %p410 = pneg %p404
      %p411 = scmp.eq.s32.totalorder %s33, 1
      %p412 = por %p410, %p411
      %p413 = scmp.ne.s32.totalorder %s405, %s408
      %p414 = scmp.eq.s32.totalorder %s33, 0
      %p415 = por %p413, %p414
      %p416 = scmp.ne.s32.totalorder %s405, %s408
      %p417 = scmp.eq.s32.totalorder %s38, 1
      %p418 = por %p416, %p417
      %p419 = scmp.ne.s32.totalorder %s408, %s409
      %p420 = scmp.eq.s32.totalorder %s38, 0
      %p421 = por %p419, %p420
      %p422 = scmp.ne.s32.totalorder %s408, %s409
      %p423 = scmp.eq.s32.totalorder %s39, 1
      %p424 = por %p422, %p423
      %p426 = scmp.ne.s32.totalorder %s409, %s425
      %p427 = scmp.eq.s32.totalorder %s39, 0
      %p428 = por %p426, %p427
      %p429 = scmp.le.s32.totalorder 1, %s33
      %p430 = scmp.lt.s32.totalorder %s33, 3
      %p431 = pnand %p429, %p430
      %p432 = pneg %p431
      // Predicated region
      $region9: #{tpu_custom_call.1} parent=5 // pred_check
        _
      $region10: #{tpu_custom_call.1} parent=5 // pred_check_branch
        %434 = sbr.rel (%p431) target = $region12
      $region11: #{tpu_custom_call.1} parent=5 // pred_region
        %s435 = ssub.s32 %s33, 1
        // Predicated region
        $region13: #{tpu_custom_call.1} parent=11 // pred_check
          %p436 = pneg %p80
        $region14: #{tpu_custom_call.1} parent=11 // pred_check_branch
          %438 = sbr.rel (%p436) target = $region16
        $region15: #{tpu_custom_call.1} parent=11 // pred_region
          %s440 = ssub.s32 32, 32
          %441 = vsyncadd [#allocation7], %s440
          %s442 = sshll.u32 [#allocation6], 4
          %s443 = int_to_ptr.vmem [resolvable:$true] %s442
          %448 = dma.hbm_to_vmem [thread:$0]  %s1, 32, %s443, [#allocation7], 16, 16, 1
        $region16: #{tpu_custom_call.1} parent=11 // pred_fallthru
          _
        // Predicated region
        $region17: #{tpu_custom_call.1} parent=11 // pred_check
          %p449 = pneg %p101
        $region18: #{tpu_custom_call.1} parent=11 // pred_check_branch
          %451 = sbr.rel (%p449) target = $region20
        $region19: #{tpu_custom_call.1} parent=11 // pred_region
          _
        $region20: #{tpu_custom_call.1} parent=11 // pred_fallthru
          _
        // Predicated region
        $region21: #{tpu_custom_call.1} parent=11 // pred_check
          %p452 = pneg %p122
        $region22: #{tpu_custom_call.1} parent=11 // pred_check_branch
          %454 = sbr.rel (%p452) target = $region24
        $region23: #{tpu_custom_call.1} parent=11 // pred_region
          %s456 = ssub.s32 8192, 8192
          %457 = vsyncadd [#allocation7], %s456
          %s458 = sshll.u32 [#allocation8], 4
          %s459 = int_to_ptr.vmem [resolvable:$true] %s458
          %464 = dma.hbm_to_vmem [thread:$0]  %s3, 8192, %s459, [#allocation7], 256, 256, 16
        $region24: #{tpu_custom_call.1} parent=11 // pred_fallthru
          _
        // Predicated region
        $region25: #{tpu_custom_call.1} parent=11 // pred_check
          %p465 = pneg %p143
        $region26: #{tpu_custom_call.1} parent=11 // pred_check_branch
          %467 = sbr.rel (%p465) target = $region28
        $region27: #{tpu_custom_call.1} parent=11 // pred_region
          %s469 = ssub.s32 64, 64
          %470 = vsyncadd [#allocation10], %s469
          %s471 = sshll.u32 [#allocation9], 4
          %s472 = int_to_ptr.vmem [resolvable:$true] %s471
          %477 = dma.hbm_to_vmem [thread:$0]  %s4, 64, %s472, [#allocation10], 32, 32, 2
        $region28: #{tpu_custom_call.1} parent=11 // pred_fallthru
          _
        // Predicated region
        $region29: #{tpu_custom_call.1} parent=11 // pred_check
          %p478 = pneg %p164
        $region30: #{tpu_custom_call.1} parent=11 // pred_check_branch
          %480 = sbr.rel (%p478) target = $region32
        $region31: #{tpu_custom_call.1} parent=11 // pred_region
          %s482 = ssub.s32 16384, 16384
          %483 = vsyncadd [#allocation10], %s482
          %s484 = sshll.u32 [#allocation11], 4
          %s485 = int_to_ptr.vmem [resolvable:$true] %s484
          %490 = dma.hbm_to_vmem [thread:$0]  %s5, 16384, %s485, [#allocation10], 512, 512, 32
        $region32: #{tpu_custom_call.1} parent=11 // pred_fallthru
          _
        // Predicated region
        $region33: #{tpu_custom_call.1} parent=11 // pred_check
          %p491 = pneg %p185
        $region34: #{tpu_custom_call.1} parent=11 // pred_check_branch
          %493 = sbr.rel (%p491) target = $region36
        $region35: #{tpu_custom_call.1} parent=11 // pred_region
          _
        $region36: #{tpu_custom_call.1} parent=11 // pred_fallthru
          _
        // Predicated region
        $region37: #{tpu_custom_call.1} parent=11 // pred_check
          %p494 = pneg %p206
        $region38: #{tpu_custom_call.1} parent=11 // pred_check_branch
          %496 = sbr.rel (%p494) target = $region40
        $region39: #{tpu_custom_call.1} parent=11 // pred_region
          %s498 = ssub.s32 8192, 8192
          %499 = vsyncadd [#allocation13], %s498
          %s500 = sshll.u32 [#allocation12], 4
          %s501 = int_to_ptr.vmem [resolvable:$true] %s500
          %506 = dma.hbm_to_vmem [thread:$0]  %s7, 8192, %s501, [#allocation13], 128, 128, 8
        $region40: #{tpu_custom_call.1} parent=11 // pred_fallthru
          _
        // Predicated region
        $region41: #{tpu_custom_call.1} parent=11 // pred_check
          %p507 = pneg %p227
        $region42: #{tpu_custom_call.1} parent=11 // pred_check_branch
          %509 = sbr.rel (%p507) target = $region44
        $region43: #{tpu_custom_call.1} parent=11 // pred_region
          _
        $region44: #{tpu_custom_call.1} parent=11 // pred_fallthru
          _
        // Predicated region
        $region45: #{tpu_custom_call.1} parent=11 // pred_check
          %p510 = pneg %p248
        $region46: #{tpu_custom_call.1} parent=11 // pred_check_branch
          %512 = sbr.rel (%p510) target = $region48
        $region47: #{tpu_custom_call.1} parent=11 // pred_region
          _
        $region48: #{tpu_custom_call.1} parent=11 // pred_fallthru
          _
        // Predicated region
        $region49: #{tpu_custom_call.1} parent=11 // pred_check
          %p513 = pneg %p269
        $region50: #{tpu_custom_call.1} parent=11 // pred_check_branch
          %515 = sbr.rel (%p513) target = $region52
        $region51: #{tpu_custom_call.1} parent=11 // pred_region
          _
        $region52: #{tpu_custom_call.1} parent=11 // pred_fallthru
          _
        // Predicated region
        $region53: #{tpu_custom_call.1} parent=11 // pred_check
          %p516 = pneg %p290
        $region54: #{tpu_custom_call.1} parent=11 // pred_check_branch
          %518 = sbr.rel (%p516) target = $region56
        $region55: #{tpu_custom_call.1} parent=11 // pred_region
          %s520 = ssub.s32 4096, 4096
          %521 = vsyncadd [#allocation13], %s520
          %s522 = sshll.u32 [#allocation14], 4
          %s523 = int_to_ptr.vmem [resolvable:$true] %s522
          %528 = dma.hbm_to_vmem [thread:$0]  %s11, 4096, %s523, [#allocation13], 128, 128, 8
        $region56: #{tpu_custom_call.1} parent=11 // pred_fallthru
          _
        // Predicated region
        $region57: #{tpu_custom_call.1} parent=11 // pred_check
          %p529 = pneg %p311
        $region58: #{tpu_custom_call.1} parent=11 // pred_check_branch
          %531 = sbr.rel (%p529) target = $region60
        $region59: #{tpu_custom_call.1} parent=11 // pred_region
          _
        $region60: #{tpu_custom_call.1} parent=11 // pred_fallthru
          _
        // Predicated region
        $region61: #{tpu_custom_call.1} parent=11 // pred_check
          %p532 = pneg %p332
        $region62: #{tpu_custom_call.1} parent=11 // pred_check_branch
          %534 = sbr.rel (%p532) target = $region64
        $region63: #{tpu_custom_call.1} parent=11 // pred_region
          %s536 = ssub.s32 4096, 4096
          %537 = vsyncadd [#allocation16], %s536
          %s538 = sshll.u32 [#allocation15], 4
          %s539 = int_to_ptr.vmem [resolvable:$true] %s538
          %544 = dma.hbm_to_vmem [thread:$0]  %s13, 4096, %s539, [#allocation16], 128, 128, 8
        $region64: #{tpu_custom_call.1} parent=11 // pred_fallthru
          _
        // Predicated region
        $region65: #{tpu_custom_call.1} parent=11 // pred_check
          %p545 = pneg %p353
        $region66: #{tpu_custom_call.1} parent=11 // pred_check_branch
          %547 = sbr.rel (%p545) target = $region68
        $region67: #{tpu_custom_call.1} parent=11 // pred_region
          _
        $region68: #{tpu_custom_call.1} parent=11 // pred_fallthru
          _
        // Predicated region
        $region69: #{tpu_custom_call.1} parent=11 // pred_check
          %p548 = pneg %p374
        $region70: #{tpu_custom_call.1} parent=11 // pred_check_branch
          %550 = sbr.rel (%p548) target = $region72
        $region71: #{tpu_custom_call.1} parent=11 // pred_region
          _
        $region72: #{tpu_custom_call.1} parent=11 // pred_fallthru
          _
        // Predicated region
        $region73: #{tpu_custom_call.1} parent=11 // pred_check
          %p551 = pneg %p395
        $region74: #{tpu_custom_call.1} parent=11 // pred_check_branch
          %553 = sbr.rel (%p551) target = $region76
        $region75: #{tpu_custom_call.1} parent=11 // pred_region
          _
        $region76: #{tpu_custom_call.1} parent=11 // pred_fallthru
          _
      $region12: #{tpu_custom_call.1} parent=5 // pred_fallthru
        _
      %p554 = scmp.lt.s32.totalorder %s33, 2
      // Predicated region
      $region77: #{tpu_custom_call.1} parent=5 // pred_check
        %p555 = pneg %p554
      $region78: #{tpu_custom_call.1} parent=5 // pred_check_branch
        %557 = sbr.rel (%p555) target = $region80
      $region79: #{tpu_custom_call.1} parent=5 // pred_region
        // Predicated region
        $region81: #{tpu_custom_call.1} parent=79 // pred_check
          %p558 = pneg %p53
        $region82: #{tpu_custom_call.1} parent=79 // pred_check_branch
          %560 = sbr.rel (%p558) target = $region84
        $region83: #{tpu_custom_call.1} parent=79 // pred_region
          %s561 = sand.u32 %s43, 1
          %s562 = scalar_lea.sflag [#allocation4], %s561
          %s563 = sand.u32 %s43, 1
          %s564 = smul.addr %s563, 8
          %s565 = scalar_lea.vmem [#allocation3], %s564
          %s567 = ssub.s32 128, 128
          %568 = vsyncadd %s562, %s567
          %s569 = smul.addr %s33, 128
          %s570 = scalar_lea.hbm %s0, %s569
          %s572 = sshll.u32 %s565, 4
          %s573 = int_to_ptr.vmem [resolvable:$true] %s572
          %575 = dma.hbm_to_vmem [thread:$0]  %s570, 128, %s573, %s562
        $region84: #{tpu_custom_call.1} parent=79 // pred_fallthru
          _
      $region80: #{tpu_custom_call.1} parent=5 // pred_fallthru
        _
      %p576 = scmp.le.s32.totalorder 1, %s33
      %p577 = scmp.lt.s32.totalorder %s33, 3
      %p578 = pnand %p576, %p577
      %p579 = pneg %p578
      // Predicated region
      $region85: #{tpu_custom_call.1} parent=5 // pred_check
        _
      $region86: #{tpu_custom_call.1} parent=5 // pred_check_branch
        %581 = sbr.rel (%p578) target = $region88
      $region87: #{tpu_custom_call.1} parent=5 // pred_region
        %s582 = ssub.s32 %s33, 1
        %s583 = sand.u32 %s46, 1
        %s584 = scalar_lea.sflag [#allocation4], %s583
        %s585 = sand.u32 %s46, 1
        %s586 = smul.addr %s585, 8
        %s587 = scalar_lea.vmem [#allocation3], %s586
        // Predicated region
        $region89: #{tpu_custom_call.1} parent=87 // pred_check
          %p588 = pneg %p59
        $region90: #{tpu_custom_call.1} parent=87 // pred_check_branch
          %590 = sbr.rel (%p588) target = $region92
        $region91: #{tpu_custom_call.1} parent=87 // pred_region
          %591 = dma.done %s584, 128
        $region92: #{tpu_custom_call.1} parent=87 // pred_fallthru
          _
        // Predicated region
        $region93: #{tpu_custom_call.1} parent=87 // pred_check
          %p592 = pneg %p80
        $region94: #{tpu_custom_call.1} parent=87 // pred_check_branch
          %594 = sbr.rel (%p592) target = $region96
        $region95: #{tpu_custom_call.1} parent=87 // pred_region
          %595 = dma.done [#allocation7], 32
        $region96: #{tpu_custom_call.1} parent=87 // pred_fallthru
          _
        // Predicated region
        $region97: #{tpu_custom_call.1} parent=87 // pred_check
          %p596 = pneg %p122
        $region98: #{tpu_custom_call.1} parent=87 // pred_check_branch
          %598 = sbr.rel (%p596) target = $region100
        $region99: #{tpu_custom_call.1} parent=87 // pred_region
          %599 = dma.done [#allocation7], 8192
        $region100: #{tpu_custom_call.1} parent=87 // pred_fallthru
          _
        // Predicated region
        $region101: #{tpu_custom_call.1} parent=87 // pred_check
          %p600 = pneg %p143
        $region102: #{tpu_custom_call.1} parent=87 // pred_check_branch
          %602 = sbr.rel (%p600) target = $region104
        $region103: #{tpu_custom_call.1} parent=87 // pred_region
          %603 = dma.done [#allocation10], 64
        $region104: #{tpu_custom_call.1} parent=87 // pred_fallthru
          _
        // Predicated region
        $region105: #{tpu_custom_call.1} parent=87 // pred_check
          %p604 = pneg %p164
        $region106: #{tpu_custom_call.1} parent=87 // pred_check_branch
          %606 = sbr.rel (%p604) target = $region108
        $region107: #{tpu_custom_call.1} parent=87 // pred_region
          %607 = dma.done [#allocation10], 16384
        $region108: #{tpu_custom_call.1} parent=87 // pred_fallthru
          _
        // Predicated region
        $region109: #{tpu_custom_call.1} parent=87 // pred_check
          %p608 = pneg %p206
        $region110: #{tpu_custom_call.1} parent=87 // pred_check_branch
          %610 = sbr.rel (%p608) target = $region112
        $region111: #{tpu_custom_call.1} parent=87 // pred_region
          %611 = dma.done [#allocation13], 8192
        $region112: #{tpu_custom_call.1} parent=87 // pred_fallthru
          _
        // Predicated region
        $region113: #{tpu_custom_call.1} parent=87 // pred_check
          %p612 = pneg %p290
        $region114: #{tpu_custom_call.1} parent=87 // pred_check_branch
          %614 = sbr.rel (%p612) target = $region116
        $region115: #{tpu_custom_call.1} parent=87 // pred_region
          %615 = dma.done [#allocation13], 4096
        $region116: #{tpu_custom_call.1} parent=87 // pred_fallthru
          _
        // Predicated region
        $region117: #{tpu_custom_call.1} parent=87 // pred_check
          %p616 = pneg %p332
        $region118: #{tpu_custom_call.1} parent=87 // pred_check_branch
          %618 = sbr.rel (%p616) target = $region120
        $region119: #{tpu_custom_call.1} parent=87 // pred_region
          %619 = dma.done [#allocation16], 4096
        $region120: #{tpu_custom_call.1} parent=87 // pred_fallthru
          _
        %s620 = sand.u32 %s46, 1
        %s621 = scalar_lea.sflag [#allocation4], %s620
        %s622 = sand.u32 %s46, 1
        %s623 = smul.addr %s622, 8
        %s624 = scalar_lea.vmem [#allocation3], %s623
        %p625 = pneg %p59
        %p626 = pneg %p56
        %p627 = pneg %p80
        %p628 = pneg %p77
        %p629 = pneg %p101
        %p630 = pneg %p98
        %p631 = pneg %p122
        %p632 = pneg %p119
        %p633 = pneg %p143
        %p634 = pneg %p140
        %p635 = pneg %p164
        %p636 = pneg %p161
        %p637 = pneg %p185
        %p638 = pneg %p182
        %p639 = pneg %p206
        %p640 = pneg %p203
        %p641 = pneg %p227
        %p642 = pneg %p224
        %p643 = pneg %p248
        %p644 = pneg %p245
        %p645 = pneg %p269
        %p646 = pneg %p266
        %p647 = pneg %p290
        %p648 = pneg %p287
        %p649 = pneg %p311
        %p650 = pneg %p308
        %p651 = pneg %p332
        %p652 = pneg %p329
        %p653 = pneg %p353
        %p654 = pneg %p350
        %p655 = pneg %p374
        %p656 = pneg %p371
        %p657 = pneg %p395
        %p658 = pneg %p392
        %p659 = pneg %p421
        %p660 = pneg %p418
        %s661 = sand.u32 %s408, 1
        %s662 = scalar_lea.sflag [#allocation5], %s661
        %s663 = sand.u32 %s408, 1
        %s664 = smul.addr %s663, 8
        %s665 = scalar_lea.vmem [#allocation17], %s664
        %v666 = vlaneseq
        %v667 = vand.u32 %v666, 127
        %vm668 = vcmp.lt.s32.totalorder %v667, 32
        %v669 = vlaneseq
        %v670 = vshrl.u32 %v669, 7
        %vm671 = vcmp.le.s32.totalorder %v667, %v670
        %v672 = vld [vmem:[%s587] sm:$0xff]
        %v673 = vld [vmem:[#allocation6] sm:$0x1]
        %v674 = vld [vmem:[%s2] sm:$0x1]
        %675 = vadd.xlane.f32.xlu0 %v672
        %v676 = vpop.xlane.xlu0 %675
        %v677 = vmul.f32 %v676, 0.03125
        %v678 = vsub.f32 %v672, %v677
        %v679 = vsel %vm668, %v678, 0.0
        %v680 = vmul.f32 %v679, %v679
        %681 = vadd.xlane.f32.xlu0 %v680
        %v682 = vpop.xlane.xlu0 %681
        %v683 = vmul.f32 %v682, 0.03125
        %v684 = vadd.f32 %v683, 1e-08
        %v685 = vrsqrt.pop %v684
        %v686 = vmul.f32 %v679, %v685
        %v688 = vlaneseq
        %v689 = vshrl.u32 %v688, 7
        %v690 = vsub.s32 0, %v689
        %v691 = vrot.slane %v673, %v690
        %v693 = vmul.f32 %v686, %v691
        %v695 = vlaneseq
        %v696 = vshrl.u32 %v695, 7
        %v697 = vsub.s32 0, %v696
        %v698 = vrot.slane %v674, %v697
        %v700 = vadd.f32 %v693, %v698
        %v701 = vld [vmem:[#allocation8] sm:$0xff]
        %v702 = vld [vmem:[#allocation8 + $0x8] sm:$0xff]
        %v703 = vld [vmem:[#allocation8 + $0x10] sm:$0xff]
        %v704 = vld [vmem:[#allocation8 + $0x18] sm:$0xff]
        %v705 = vld [vmem:[#allocation8 + $0x20] sm:$0xff]
        %v706 = vld [vmem:[#allocation8 + $0x28] sm:$0xff]
        %v707 = vld [vmem:[#allocation8 + $0x30] sm:$0xff]
        %v708 = vld [vmem:[#allocation8 + $0x38] sm:$0xff]
        %v709 = vld [vmem:[#allocation8 + $0x40] sm:$0xff]
        %v710 = vld [vmem:[#allocation8 + $0x48] sm:$0xff]
        %v711 = vld [vmem:[#allocation8 + $0x50] sm:$0xff]
        %v712 = vld [vmem:[#allocation8 + $0x58] sm:$0xff]
        %v713 = vld [vmem:[#allocation8 + $0x60] sm:$0xff]
        %v714 = vld [vmem:[#allocation8 + $0x68] sm:$0xff]
        %v715 = vld [vmem:[#allocation8 + $0x70] sm:$0xff]
        %v716 = vld [vmem:[#allocation8 + $0x78] sm:$0xff]
        %v717 = vld [vmem:[#allocation8 + $0x80] sm:$0xff]
        %v718 = vld [vmem:[#allocation8 + $0x88] sm:$0xff]
        %v719 = vld [vmem:[#allocation8 + $0x90] sm:$0xff]
        %v720 = vld [vmem:[#allocation8 + $0x98] sm:$0xff]
        %v721 = vld [vmem:[#allocation8 + $0xa0] sm:$0xff]
        %v722 = vld [vmem:[#allocation8 + $0xa8] sm:$0xff]
        %v723 = vld [vmem:[#allocation8 + $0xb0] sm:$0xff]
        %v724 = vld [vmem:[#allocation8 + $0xb8] sm:$0xff]
        %v725 = vld [vmem:[#allocation8 + $0xc0] sm:$0xff]
        %v726 = vld [vmem:[#allocation8 + $0xc8] sm:$0xff]
        %v727 = vld [vmem:[#allocation8 + $0xd0] sm:$0xff]
        %v728 = vld [vmem:[#allocation8 + $0xd8] sm:$0xff]
        %v729 = vld [vmem:[#allocation8 + $0xe0] sm:$0xff]
        %v730 = vld [vmem:[#allocation8 + $0xe8] sm:$0xff]
        %v731 = vld [vmem:[#allocation8 + $0xf0] sm:$0xff]
        %v732 = vld [vmem:[#allocation8 + $0xf8] sm:$0xff]
        %v733 = vld [vmem:[#allocation9] sm:$0x3]
        %v735 = vlaneseq
        %v736 = vshrl.u32 %v735, 7
        %v737 = vsub.s32 0, %v736
        %v738 = vrot.slane %v733, %v737
        %v739 = vlaneseq
        %v740 = vshrl.u32 %v739, 7
        %v741 = vsub.s32 1, %v740
        %v742 = vrot.slane %v733, %v741
        %745 = vmatprep.subr.mxu0 %v732
        %746 = vmatpush1.msra.mxu0 %v731
        %747 = vmatprep.subr.mxu0 %v730
        %748 = vmatpush1.msra.mxu0 %v729
        %749 = vmatprep.subr.mxu0 %v728
        %750 = vmatpush1.msra.mxu0 %v727
        %751 = vmatprep.subr.mxu0 %v726
        %752 = vmatpush1.msra.mxu0 %v725
        %753 = vmatprep.subr.mxu0 %v724
        %754 = vmatpush1.msra.mxu0 %v723
        %755 = vmatprep.subr.mxu0 %v722
        %756 = vmatpush1.msra.mxu0 %v721
        %757 = vmatprep.subr.mxu0 %v720
        %758 = vmatpush1.msra.mxu0 %v719
        %759 = vmatprep.subr.mxu0 %v718
        %760 = vmatpush1.msra.mxu0 %v717
        %761 = vmatprep.subr.mxu0 %v716
        %762 = vmatpush1.msra.mxu0 %v715
        %763 = vmatprep.subr.mxu0 %v714
        %764 = vmatpush1.msra.mxu0 %v713
        %765 = vmatprep.subr.mxu0 %v712
        %766 = vmatpush1.msra.mxu0 %v711
        %767 = vmatprep.subr.mxu0 %v710
        %768 = vmatpush1.msra.mxu0 %v709
        %769 = vmatprep.subr.mxu0 %v708
        %770 = vmatpush1.msra.mxu0 %v707
        %771 = vmatprep.subr.mxu0 %v706
        %772 = vmatpush1.msra.mxu0 %v705
        %773 = vmatprep.subr.mxu0 %v704
        %774 = vmatpush1.msra.mxu0 %v703
        %775 = vmatprep.subr.mxu0 %v702
        %776 = vmatpush1.msra.mxu0 %v701
        %777 = vmatprep.subr.mxu0 0.0
        %778 = vmatpush2.msra.mxu0 0.0
        %779 = vmatprep.subr.mxu0 0.0
        %780 = vmatpush2.msra.mxu0 0.0
        %781 = vmatprep.subr.mxu0 0.0
        %782 = vmatpush2.msra.mxu0 0.0
        %783 = vmatprep.subr.mxu0 0.0
        %784 = vmatpush2.msra.mxu0 0.0
        %785 = vmatprep.subr.mxu0 0.0
        %786 = vmatpush2.msra.mxu0 0.0
        %787 = vmatprep.subr.mxu0 0.0
        %788 = vmatpush2.msra.mxu0 0.0
        %789 = vmatprep.subr.mxu0 0.0
        %790 = vmatpush2.msra.mxu0 0.0
        %791 = vmatprep.subr.mxu0 0.0
        %792 = vmatpush2.msra.mxu0 0.0
        %793 = vmatprep.subr.mxu0 0.0
        %794 = vmatpush2.msra.mxu0 0.0
        %795 = vmatprep.subr.mxu0 0.0
        %796 = vmatpush2.msra.mxu0 0.0
        %797 = vmatprep.subr.mxu0 0.0
        %798 = vmatpush2.msra.mxu0 0.0
        %799 = vmatprep.subr.mxu0 0.0
        %800 = vmatpush2.msra.mxu0 0.0
        %801 = vmatprep.subr.mxu0 0.0
        %802 = vmatpush2.msra.mxu0 0.0
        %803 = vmatprep.subr.mxu0 0.0
        %804 = vmatpush2.msra.mxu0 0.0
        %805 = vmatprep.subr.mxu0 0.0
        %806 = vmatpush2.msra.mxu0 0.0
        %807 = vmatprep.subr.mxu0 0.0
        %808 = vmatpush2.msra.mxu0 0.0
        %809 = vmatprep.mubr.f32.mxu0 0.0
        %810 = vmatmul.mubr.f32.gmra.mxu0 %v700
        %v811 = vpop.f32.mrf.mxu0
        %v812 = vadd.f32 %v738, %v811
        %v813 = vpop.f32.mrf.mxu0
        %v814 = vadd.f32 %v742, %v813
        %815 = vdwg.mxu0
        %v816 = vld [vmem:[#allocation11] sm:$0xff]
        %v817 = vld [vmem:[#allocation11 + $0x8] sm:$0xff]
        %v818 = vld [vmem:[#allocation11 + $0x10] sm:$0xff]
        %v819 = vld [vmem:[#allocation11 + $0x18] sm:$0xff]
        %v820 = vld [vmem:[#allocation11 + $0x20] sm:$0xff]
        %v821 = vld [vmem:[#allocation11 + $0x28] sm:$0xff]
        %v822 = vld [vmem:[#allocation11 + $0x30] sm:$0xff]
        %v823 = vld [vmem:[#allocation11 + $0x38] sm:$0xff]
        %v824 = vld [vmem:[#allocation11 + $0x40] sm:$0xff]
        %v825 = vld [vmem:[#allocation11 + $0x48] sm:$0xff]
        %v826 = vld [vmem:[#allocation11 + $0x50] sm:$0xff]
        %v827 = vld [vmem:[#allocation11 + $0x58] sm:$0xff]
        %v828 = vld [vmem:[#allocation11 + $0x60] sm:$0xff]
        %v829 = vld [vmem:[#allocation11 + $0x68] sm:$0xff]
        %v830 = vld [vmem:[#allocation11 + $0x70] sm:$0xff]
        %v831 = vld [vmem:[#allocation11 + $0x78] sm:$0xff]
        %v832 = vld [vmem:[#allocation11 + $0x80] sm:$0xff]
        %v833 = vld [vmem:[#allocation11 + $0x88] sm:$0xff]
        %v834 = vld [vmem:[#allocation11 + $0x90] sm:$0xff]
        %v835 = vld [vmem:[#allocation11 + $0x98] sm:$0xff]
        %v836 = vld [vmem:[#allocation11 + $0xa0] sm:$0xff]
        %v837 = vld [vmem:[#allocation11 + $0xa8] sm:$0xff]
        %v838 = vld [vmem:[#allocation11 + $0xb0] sm:$0xff]
        %v839 = vld [vmem:[#allocation11 + $0xb8] sm:$0xff]
        %v840 = vld [vmem:[#allocation11 + $0xc0] sm:$0xff]
        %v841 = vld [vmem:[#allocation11 + $0xc8] sm:$0xff]
        %v842 = vld [vmem:[#allocation11 + $0xd0] sm:$0xff]
        %v843 = vld [vmem:[#allocation11 + $0xd8] sm:$0xff]
        %v844 = vld [vmem:[#allocation11 + $0xe0] sm:$0xff]
        %v845 = vld [vmem:[#allocation11 + $0xe8] sm:$0xff]
        %v846 = vld [vmem:[#allocation11 + $0xf0] sm:$0xff]
        %v847 = vld [vmem:[#allocation11 + $0xf8] sm:$0xff]
        %v848 = vld [vmem:[#allocation11 + $0x100] sm:$0xff]
        %v849 = vld [vmem:[#allocation11 + $0x108] sm:$0xff]
        %v850 = vld [vmem:[#allocation11 + $0x110] sm:$0xff]
        %v851 = vld [vmem:[#allocation11 + $0x118] sm:$0xff]
        %v852 = vld [vmem:[#allocation11 + $0x120] sm:$0xff]
        %v853 = vld [vmem:[#allocation11 + $0x128] sm:$0xff]
        %v854 = vld [vmem:[#allocation11 + $0x130] sm:$0xff]
        %v855 = vld [vmem:[#allocation11 + $0x138] sm:$0xff]
        %v856 = vld [vmem:[#allocation11 + $0x140] sm:$0xff]
        %v857 = vld [vmem:[#allocation11 + $0x148] sm:$0xff]
        %v858 = vld [vmem:[#allocation11 + $0x150] sm:$0xff]
        %v859 = vld [vmem:[#allocation11 + $0x158] sm:$0xff]
        %v860 = vld [vmem:[#allocation11 + $0x160] sm:$0xff]
        %v861 = vld [vmem:[#allocation11 + $0x168] sm:$0xff]
        %v862 = vld [vmem:[#allocation11 + $0x170] sm:$0xff]
        %v863 = vld [vmem:[#allocation11 + $0x178] sm:$0xff]
        %v864 = vld [vmem:[#allocation11 + $0x180] sm:$0xff]
        %v865 = vld [vmem:[#allocation11 + $0x188] sm:$0xff]
        %v866 = vld [vmem:[#allocation11 + $0x190] sm:$0xff]
        %v867 = vld [vmem:[#allocation11 + $0x198] sm:$0xff]
        %v868 = vld [vmem:[#allocation11 + $0x1a0] sm:$0xff]
        %v869 = vld [vmem:[#allocation11 + $0x1a8] sm:$0xff]
        %v870 = vld [vmem:[#allocation11 + $0x1b0] sm:$0xff]
        %v871 = vld [vmem:[#allocation11 + $0x1b8] sm:$0xff]
        %v872 = vld [vmem:[#allocation11 + $0x1c0] sm:$0xff]
        %v873 = vld [vmem:[#allocation11 + $0x1c8] sm:$0xff]
        %v874 = vld [vmem:[#allocation11 + $0x1d0] sm:$0xff]
        %v875 = vld [vmem:[#allocation11 + $0x1d8] sm:$0xff]
        %v876 = vld [vmem:[#allocation11 + $0x1e0] sm:$0xff]
        %v877 = vld [vmem:[#allocation11 + $0x1e8] sm:$0xff]
        %v878 = vld [vmem:[#allocation11 + $0x1f0] sm:$0xff]
        %v879 = vld [vmem:[#allocation11 + $0x1f8] sm:$0xff]
        %v880 = vld [vmem:[%s6] sm:$0xf]
        %v882 = vlaneseq
        %v883 = vshrl.u32 %v882, 7
        %v884 = vsub.s32 0, %v883
        %v885 = vrot.slane %v880, %v884
        %v886 = vlaneseq
        %v887 = vshrl.u32 %v886, 7
        %v888 = vsub.s32 1, %v887
        %v889 = vrot.slane %v880, %v888
        %v890 = vlaneseq
        %v891 = vshrl.u32 %v890, 7
        %v892 = vsub.s32 2, %v891
        %v893 = vrot.slane %v880, %v892
        %v894 = vlaneseq
        %v895 = vshrl.u32 %v894, 7
        %v896 = vsub.s32 3, %v895
        %v897 = vrot.slane %v880, %v896
        %902 = vmatprep.subr.mxu0 %v877
        %903 = vmatpush1.msra.mxu0 %v876
        %904 = vmatprep.subr.mxu0 %v873
        %905 = vmatpush1.msra.mxu0 %v872
        %906 = vmatprep.subr.mxu0 %v869
        %907 = vmatpush1.msra.mxu0 %v868
        %908 = vmatprep.subr.mxu0 %v865
        %909 = vmatpush1.msra.mxu0 %v864
        %910 = vmatprep.subr.mxu0 %v861
        %911 = vmatpush1.msra.mxu0 %v860
        %912 = vmatprep.subr.mxu0 %v857
        %913 = vmatpush1.msra.mxu0 %v856
        %914 = vmatprep.subr.mxu0 %v853
        %915 = vmatpush1.msra.mxu0 %v852
        %916 = vmatprep.subr.mxu0 %v849
        %917 = vmatpush1.msra.mxu0 %v848
        %918 = vmatprep.subr.mxu0 %v845
        %919 = vmatpush1.msra.mxu0 %v844
        %920 = vmatprep.subr.mxu0 %v841
        %921 = vmatpush1.msra.mxu0 %v840
        %922 = vmatprep.subr.mxu0 %v837
        %923 = vmatpush1.msra.mxu0 %v836
        %924 = vmatprep.subr.mxu0 %v833
        %925 = vmatpush1.msra.mxu0 %v832
        %926 = vmatprep.subr.mxu0 %v829
        %927 = vmatpush1.msra.mxu0 %v828
        %928 = vmatprep.subr.mxu0 %v825
        %929 = vmatpush1.msra.mxu0 %v824
        %930 = vmatprep.subr.mxu0 %v821
        %931 = vmatpush1.msra.mxu0 %v820
        %932 = vmatprep.subr.mxu0 %v817
        %933 = vmatpush1.msra.mxu0 %v816
        %934 = vmatprep.subr.mxu0 0.0
        %935 = vmatpush2.msra.mxu0 0.0
        %936 = vmatprep.subr.mxu0 0.0
        %937 = vmatpush2.msra.mxu0 0.0
        %938 = vmatprep.subr.mxu0 0.0
        %939 = vmatpush2.msra.mxu0 0.0
        %940 = vmatprep.subr.mxu0 0.0
        %941 = vmatpush2.msra.mxu0 0.0
        %942 = vmatprep.subr.mxu0 0.0
        %943 = vmatpush2.msra.mxu0 0.0
        %944 = vmatprep.subr.mxu0 0.0
        %945 = vmatpush2.msra.mxu0 0.0
        %946 = vmatprep.subr.mxu0 0.0
        %947 = vmatpush2.msra.mxu0 0.0
        %948 = vmatprep.subr.mxu0 0.0
        %949 = vmatpush2.msra.mxu0 0.0
        %950 = vmatprep.subr.mxu0 0.0
        %951 = vmatpush2.msra.mxu0 0.0
        %952 = vmatprep.subr.mxu0 0.0
        %953 = vmatpush2.msra.mxu0 0.0
        %954 = vmatprep.subr.mxu0 0.0
        %955 = vmatpush2.msra.mxu0 0.0
        %956 = vmatprep.subr.mxu0 0.0
        %957 = vmatpush2.msra.mxu0 0.0
        %958 = vmatprep.subr.mxu0 0.0
        %959 = vmatpush2.msra.mxu0 0.0
        %960 = vmatprep.subr.mxu0 0.0
        %961 = vmatpush2.msra.mxu0 0.0
        %962 = vmatprep.subr.mxu0 0.0
        %963 = vmatpush2.msra.mxu0 0.0
        %964 = vmatprep.subr.mxu0 0.0
        %965 = vmatpush2.msra.mxu0 0.0
        %966 = vmatprep.mubr.f32.mxu0 0.0
        %967 = vmatmul.mubr.f32.gmra.mxu0 %v672
        %v968 = vpop.f32.mrf.mxu0
        %v969 = vadd.f32 %v885, %v968
        %v970 = vpop.f32.mrf.mxu0
        %v971 = vadd.f32 %v889, %v970
        %972 = vdwg.mxu0
        %973 = vmatprep.subr.mxu0 %v879
        %974 = vmatpush1.msra.mxu0 %v878
        %975 = vmatprep.subr.mxu0 %v875
        %976 = vmatpush1.msra.mxu0 %v874
        %977 = vmatprep.subr.mxu0 %v871
        %978 = vmatpush1.msra.mxu0 %v870
        %979 = vmatprep.subr.mxu0 %v867
        %980 = vmatpush1.msra.mxu0 %v866
        %981 = vmatprep.subr.mxu0 %v863
        %982 = vmatpush1.msra.mxu0 %v862
        %983 = vmatprep.subr.mxu0 %v859
        %984 = vmatpush1.msra.mxu0 %v858
        %985 = vmatprep.subr.mxu0 %v855
        %986 = vmatpush1.msra.mxu0 %v854
        %987 = vmatprep.subr.mxu0 %v851
        %988 = vmatpush1.msra.mxu0 %v850
        %989 = vmatprep.subr.mxu0 %v847
        %990 = vmatpush1.msra.mxu0 %v846
        %991 = vmatprep.subr.mxu0 %v843
        %992 = vmatpush1.msra.mxu0 %v842
        %993 = vmatprep.subr.mxu0 %v839
        %994 = vmatpush1.msra.mxu0 %v838
        %995 = vmatprep.subr.mxu0 %v835
        %996 = vmatpush1.msra.mxu0 %v834
        %997 = vmatprep.subr.mxu0 %v831
        %998 = vmatpush1.msra.mxu0 %v830
        %999 = vmatprep.subr.mxu0 %v827
        %1000 = vmatpush1.msra.mxu0 %v826
        %1001 = vmatprep.subr.mxu0 %v823
        %1002 = vmatpush1.msra.mxu0 %v822
        %1003 = vmatprep.subr.mxu0 %v819
        %1004 = vmatpush1.msra.mxu0 %v818
        %1005 = vmatprep.subr.mxu0 0.0
        %1006 = vmatpush2.msra.mxu0 0.0
        %1007 = vmatprep.subr.mxu0 0.0
        %1008 = vmatpush2.msra.mxu0 0.0
        %1009 = vmatprep.subr.mxu0 0.0
        %1010 = vmatpush2.msra.mxu0 0.0
        %1011 = vmatprep.subr.mxu0 0.0
        %1012 = vmatpush2.msra.mxu0 0.0
        %1013 = vmatprep.subr.mxu0 0.0
        %1014 = vmatpush2.msra.mxu0 0.0
        %1015 = vmatprep.subr.mxu0 0.0
        %1016 = vmatpush2.msra.mxu0 0.0
        %1017 = vmatprep.subr.mxu0 0.0
        %1018 = vmatpush2.msra.mxu0 0.0
        %1019 = vmatprep.subr.mxu0 0.0
        %1020 = vmatpush2.msra.mxu0 0.0
        %1021 = vmatprep.subr.mxu0 0.0
        %1022 = vmatpush2.msra.mxu0 0.0
        %1023 = vmatprep.subr.mxu0 0.0
        %1024 = vmatpush2.msra.mxu0 0.0
        %1025 = vmatprep.subr.mxu0 0.0
        %1026 = vmatpush2.msra.mxu0 0.0
        %1027 = vmatprep.subr.mxu0 0.0
        %1028 = vmatpush2.msra.mxu0 0.0
        %1029 = vmatprep.subr.mxu0 0.0
        %1030 = vmatpush2.msra.mxu0 0.0
        %1031 = vmatprep.subr.mxu0 0.0
        %1032 = vmatpush2.msra.mxu0 0.0
        %1033 = vmatprep.subr.mxu0 0.0
        %1034 = vmatpush2.msra.mxu0 0.0
        %1035 = vmatprep.subr.mxu0 0.0
        %1036 = vmatpush2.msra.mxu0 0.0
        %1037 = vmatprep.mubr.f32.mxu0 0.0
        %1038 = vmatmul.mubr.f32.gmra.mxu0 %v672
        %v1039 = vpop.f32.mrf.mxu0
        %v1040 = vadd.f32 %v893, %v1039
        %v1041 = vpop.f32.mrf.mxu0
        %v1042 = vadd.f32 %v897, %v1041
        %1043 = vdwg.mxu0
        %v1044 = vmul.f32 %v812, 0.25
        %v1045 = vmul.f32 %v814, 0.25
        %1046 = vmatprep.subr.mxu0 0.0
        %1047 = vmatpush1.xpose.msra.mxu0 0.0
        %1048 = vmatprep.subr.mxu0 0.0
        %1049 = vmatpush1.xpose.msra.mxu0 0.0
        %1050 = vmatprep.subr.mxu0 0.0
        %1051 = vmatpush1.xpose.msra.mxu0 0.0
        %1052 = vmatprep.subr.mxu0 0.0
        %1053 = vmatpush1.xpose.msra.mxu0 0.0
        %1054 = vmatprep.subr.mxu0 0.0
        %1055 = vmatpush1.xpose.msra.mxu0 0.0
        %1056 = vmatprep.subr.mxu0 0.0
        %1057 = vmatpush1.xpose.msra.mxu0 0.0
        %1058 = vmatprep.subr.mxu0 0.0
        %1059 = vmatpush1.xpose.msra.mxu0 0.0
        %1060 = vmatprep.subr.mxu0 0.0
        %1061 = vmatpush1.xpose.msra.mxu0 0.0
        %1062 = vmatprep.subr.mxu0 0.0
        %1063 = vmatpush1.xpose.msra.mxu0 0.0
        %1064 = vmatprep.subr.mxu0 0.0
        %1065 = vmatpush1.xpose.msra.mxu0 0.0
        %1066 = vmatprep.subr.mxu0 0.0
        %1067 = vmatpush1.xpose.msra.mxu0 0.0
        %1068 = vmatprep.subr.mxu0 0.0
        %1069 = vmatpush1.xpose.msra.mxu0 0.0
        %1070 = vmatprep.subr.mxu0 0.0
        %1071 = vmatpush1.xpose.msra.mxu0 0.0
        %1072 = vmatprep.subr.mxu0 0.0
        %1073 = vmatpush1.xpose.msra.mxu0 0.0
        %1074 = vmatprep.subr.mxu0 0.0
        %1075 = vmatpush1.xpose.msra.mxu0 0.0
        %1076 = vmatprep.subr.mxu0 0.0
        %1077 = vmatpush1.xpose.msra.mxu0 %v969
        %1078 = vmatprep.subr.mxu0 0.0
        %1079 = vmatpush2.xpose.msra.mxu0 0.0
        %1080 = vmatprep.subr.mxu0 0.0
        %1081 = vmatpush2.xpose.msra.mxu0 0.0
        %1082 = vmatprep.subr.mxu0 0.0
        %1083 = vmatpush2.xpose.msra.mxu0 0.0
        %1084 = vmatprep.subr.mxu0 0.0
        %1085 = vmatpush2.xpose.msra.mxu0 0.0
        %1086 = vmatprep.subr.mxu0 0.0
        %1087 = vmatpush2.xpose.msra.mxu0 0.0
        %1088 = vmatprep.subr.mxu0 0.0
        %1089 = vmatpush2.xpose.msra.mxu0 0.0
        %1090 = vmatprep.subr.mxu0 0.0
        %1091 = vmatpush2.xpose.msra.mxu0 0.0
        %1092 = vmatprep.subr.mxu0 0.0
        %1093 = vmatpush2.xpose.msra.mxu0 0.0
        %1094 = vmatprep.subr.mxu0 0.0
        %1095 = vmatpush2.xpose.msra.mxu0 0.0
        %1096 = vmatprep.subr.mxu0 0.0
        %1097 = vmatpush2.xpose.msra.mxu0 0.0
        %1098 = vmatprep.subr.mxu0 0.0
        %1099 = vmatpush2.xpose.msra.mxu0 0.0
        %1100 = vmatprep.subr.mxu0 0.0
        %1101 = vmatpush2.xpose.msra.mxu0 0.0
        %1102 = vmatprep.subr.mxu0 0.0
        %1103 = vmatpush2.xpose.msra.mxu0 0.0
        %1104 = vmatprep.subr.mxu0 0.0
        %1105 = vmatpush2.xpose.msra.mxu0 0.0
        %1106 = vmatprep.subr.mxu0 0.0
        %1107 = vmatpush2.xpose.msra.mxu0 0.0
        %1108 = vmatprep.subr.mxu0 0.0
        %1109 = vmatpush2.xpose.msra.mxu0 0.0
        %1110 = vmatprep.mubr.f32.mxu0 0.0
        %1111 = vmatmul.mubr.f32.gmra.mxu0 %v1044
        %v1112 = vpop.f32.mrf.mxu0
        %v1113 = vadd.f32 0.0, %v1112
        %v1114 = vpop.f32.mrf.mxu0
        %1115 = vdwg.mxu0
        %v1116 = vsel %vm671, %v1113, -1e+30
        %vm1117 = vcmask 64512
        %v1118 = vsel %vm1117, %v1116, -inf
        %1119 = vmax.xlane.f32.xlu0 %v1118
        %v1120 = vpop.xlane.xlu0 %1119
        %v1121 = vsub.f32 %v1116, %v1120
        %v1122 = vmul.f32 %v1121, 1.442695
        %v1123 = vpow.pop %v1122
        %v1124 = vsel %vm1117, %v1123, 0.0
        %1125 = vadd.xlane.f32.xlu0 %v1124
        %v1126 = vpop.xlane.xlu0 %1125
        %v1127 = vrcp.pop %v1126
        %v1128 = vmul.f32 %v1126, %v1127
        %v1129 = vsub.f32 2.0, %v1128
        %v1130 = vmul.f32 %v1127, %v1129
        %v1131 = vmul.f32 %v1123, %v1130
        %v1133 = vsel %vm1117, %v1131, 0
        %1135 = vmatprep.subr.mxu0 0.0
        %1136 = vmatpush1.msra.mxu0 0.0
        %1137 = vmatprep.subr.mxu0 0.0
        %1138 = vmatpush1.msra.mxu0 0.0
        %1139 = vmatprep.subr.mxu0 0.0
        %1140 = vmatpush1.msra.mxu0 0.0
        %1141 = vmatprep.subr.mxu0 0.0
        %1142 = vmatpush1.msra.mxu0 0.0
        %1143 = vmatprep.subr.mxu0 0.0
        %1144 = vmatpush1.msra.mxu0 0.0
        %1145 = vmatprep.subr.mxu0 0.0
        %1146 = vmatpush1.msra.mxu0 0.0
        %1147 = vmatprep.subr.mxu0 0.0
        %1148 = vmatpush1.msra.mxu0 0.0
        %1149 = vmatprep.subr.mxu0 0.0
        %1150 = vmatpush1.msra.mxu0 0.0
        %1151 = vmatprep.subr.mxu0 0.0
        %1152 = vmatpush1.msra.mxu0 0.0
        %1153 = vmatprep.subr.mxu0 0.0
        %1154 = vmatpush1.msra.mxu0 0.0
        %1155 = vmatprep.subr.mxu0 0.0
        %1156 = vmatpush1.msra.mxu0 0.0
        %1157 = vmatprep.subr.mxu0 0.0
        %1158 = vmatpush1.msra.mxu0 0.0
        %1159 = vmatprep.subr.mxu0 0.0
        %1160 = vmatpush1.msra.mxu0 0.0
        %1161 = vmatprep.subr.mxu0 0.0
        %1162 = vmatpush1.msra.mxu0 0.0
        %1163 = vmatprep.subr.mxu0 0.0
        %1164 = vmatpush1.msra.mxu0 0.0
        %1165 = vmatprep.subr.mxu0 0.0
        %1166 = vmatpush1.msra.mxu0 %v1040
        %1167 = vmatprep.subr.mxu0 0.0
        %1168 = vmatpush2.msra.mxu0 0.0
        %1169 = vmatprep.subr.mxu0 0.0
        %1170 = vmatpush2.msra.mxu0 0.0
        %1171 = vmatprep.subr.mxu0 0.0
        %1172 = vmatpush2.msra.mxu0 0.0
        %1173 = vmatprep.subr.mxu0 0.0
        %1174 = vmatpush2.msra.mxu0 0.0
        %1175 = vmatprep.subr.mxu0 0.0
        %1176 = vmatpush2.msra.mxu0 0.0
        %1177 = vmatprep.subr.mxu0 0.0
        %1178 = vmatpush2.msra.mxu0 0.0
        %1179 = vmatprep.subr.mxu0 0.0
        %1180 = vmatpush2.msra.mxu0 0.0
        %1181 = vmatprep.subr.mxu0 0.0
        %1182 = vmatpush2.msra.mxu0 0.0
        %1183 = vmatprep.subr.mxu0 0.0
        %1184 = vmatpush2.msra.mxu0 0.0
        %1185 = vmatprep.subr.mxu0 0.0
        %1186 = vmatpush2.msra.mxu0 0.0
        %1187 = vmatprep.subr.mxu0 0.0
        %1188 = vmatpush2.msra.mxu0 0.0
        %1189 = vmatprep.subr.mxu0 0.0
        %1190 = vmatpush2.msra.mxu0 0.0
        %1191 = vmatprep.subr.mxu0 0.0
        %1192 = vmatpush2.msra.mxu0 0.0
        %1193 = vmatprep.subr.mxu0 0.0
        %1194 = vmatpush2.msra.mxu0 0.0
        %1195 = vmatprep.subr.mxu0 0.0
        %1196 = vmatpush2.msra.mxu0 0.0
        %1197 = vmatprep.subr.mxu0 0.0
        %1198 = vmatpush2.msra.mxu0 0.0
        %1199 = vmatprep.mubr.f32.mxu0 0.0
        %1200 = vmatmul.mubr.f32.gmra.mxu0 %v1133
        %v1201 = vpop.f32.mrf.mxu0
        %v1202 = vadd.f32 0.0, %v1201
        %v1203 = vpop.f32.mrf.mxu0
        %1204 = vdwg.mxu0
        %1205 = vst [vmem:[#allocation2] sm:$0xff] %v1202
        %1206 = vmatprep.subr.mxu0 0.0
        %1207 = vmatpush1.xpose.msra.mxu0 0.0
        %1208 = vmatprep.subr.mxu0 0.0
        %1209 = vmatpush1.xpose.msra.mxu0 0.0
        %1210 = vmatprep.subr.mxu0 0.0
        %1211 = vmatpush1.xpose.msra.mxu0 0.0
        %1212 = vmatprep.subr.mxu0 0.0
        %1213 = vmatpush1.xpose.msra.mxu0 0.0
        %1214 = vmatprep.subr.mxu0 0.0
        %1215 = vmatpush1.xpose.msra.mxu0 0.0
        %1216 = vmatprep.subr.mxu0 0.0
        %1217 = vmatpush1.xpose.msra.mxu0 0.0
        %1218 = vmatprep.subr.mxu0 0.0
        %1219 = vmatpush1.xpose.msra.mxu0 0.0
        %1220 = vmatprep.subr.mxu0 0.0
        %1221 = vmatpush1.xpose.msra.mxu0 0.0
        %1222 = vmatprep.subr.mxu0 0.0
        %1223 = vmatpush1.xpose.msra.mxu0 0.0
        %1224 = vmatprep.subr.mxu0 0.0
        %1225 = vmatpush1.xpose.msra.mxu0 0.0
        %1226 = vmatprep.subr.mxu0 0.0
        %1227 = vmatpush1.xpose.msra.mxu0 0.0
        %1228 = vmatprep.subr.mxu0 0.0
        %1229 = vmatpush1.xpose.msra.mxu0 0.0
        %1230 = vmatprep.subr.mxu0 0.0
        %1231 = vmatpush1.xpose.msra.mxu0 0.0
        %1232 = vmatprep.subr.mxu0 0.0
        %1233 = vmatpush1.xpose.msra.mxu0 0.0
        %1234 = vmatprep.subr.mxu0 0.0
        %1235 = vmatpush1.xpose.msra.mxu0 0.0
        %1236 = vmatprep.subr.mxu0 0.0
        %1237 = vmatpush1.xpose.msra.mxu0 %v971
        %1238 = vmatprep.subr.mxu0 0.0
        %1239 = vmatpush2.xpose.msra.mxu0 0.0
        %1240 = vmatprep.subr.mxu0 0.0
        %1241 = vmatpush2.xpose.msra.mxu0 0.0
        %1242 = vmatprep.subr.mxu0 0.0
        %1243 = vmatpush2.xpose.msra.mxu0 0.0
        %1244 = vmatprep.subr.mxu0 0.0
        %1245 = vmatpush2.xpose.msra.mxu0 0.0
        %1246 = vmatprep.subr.mxu0 0.0
        %1247 = vmatpush2.xpose.msra.mxu0 0.0
        %1248 = vmatprep.subr.mxu0 0.0
        %1249 = vmatpush2.xpose.msra.mxu0 0.0
        %1250 = vmatprep.subr.mxu0 0.0
        %1251 = vmatpush2.xpose.msra.mxu0 0.0
        %1252 = vmatprep.subr.mxu0 0.0
        %1253 = vmatpush2.xpose.msra.mxu0 0.0
        %1254 = vmatprep.subr.mxu0 0.0
        %1255 = vmatpush2.xpose.msra.mxu0 0.0
        %1256 = vmatprep.subr.mxu0 0.0
        %1257 = vmatpush2.xpose.msra.mxu0 0.0
        %1258 = vmatprep.subr.mxu0 0.0
        %1259 = vmatpush2.xpose.msra.mxu0 0.0
        %1260 = vmatprep.subr.mxu0 0.0
        %1261 = vmatpush2.xpose.msra.mxu0 0.0
        %1262 = vmatprep.subr.mxu0 0.0
        %1263 = vmatpush2.xpose.msra.mxu0 0.0
        %1264 = vmatprep.subr.mxu0 0.0
        %1265 = vmatpush2.xpose.msra.mxu0 0.0
        %1266 = vmatprep.subr.mxu0 0.0
        %1267 = vmatpush2.xpose.msra.mxu0 0.0
        %1268 = vmatprep.subr.mxu0 0.0
        %1269 = vmatpush2.xpose.msra.mxu0 0.0
        %1270 = vmatprep.mubr.f32.mxu0 0.0
        %1271 = vmatmul.mubr.f32.gmra.mxu0 %v1045
        %v1272 = vpop.f32.mrf.mxu0
        %v1273 = vadd.f32 0.0, %v1272
        %v1274 = vpop.f32.mrf.mxu0
        %1275 = vdwg.mxu0
        %v1276 = vsel %vm671, %v1273, -1e+30
        %v1277 = vsel %vm1117, %v1276, -inf
        %1278 = vmax.xlane.f32.xlu0 %v1277
        %v1279 = vpop.xlane.xlu0 %1278
        %v1280 = vsub.f32 %v1276, %v1279
        %v1281 = vmul.f32 %v1280, 1.442695
        %v1282 = vpow.pop %v1281
        %v1283 = vsel %vm1117, %v1282, 0.0
        %1284 = vadd.xlane.f32.xlu0 %v1283
        %v1285 = vpop.xlane.xlu0 %1284
        %v1286 = vrcp.pop %v1285
        %v1287 = vmul.f32 %v1285, %v1286
        %v1288 = vsub.f32 2.0, %v1287
        %v1289 = vmul.f32 %v1286, %v1288
        %v1290 = vmul.f32 %v1282, %v1289
        %v1292 = vsel %vm1117, %v1290, 0
        %1294 = vmatprep.subr.mxu0 0.0
        %1295 = vmatpush1.msra.mxu0 0.0
        %1296 = vmatprep.subr.mxu0 0.0
        %1297 = vmatpush1.msra.mxu0 0.0
        %1298 = vmatprep.subr.mxu0 0.0
        %1299 = vmatpush1.msra.mxu0 0.0
        %1300 = vmatprep.subr.mxu0 0.0
        %1301 = vmatpush1.msra.mxu0 0.0
        %1302 = vmatprep.subr.mxu0 0.0
        %1303 = vmatpush1.msra.mxu0 0.0
        %1304 = vmatprep.subr.mxu0 0.0
        %1305 = vmatpush1.msra.mxu0 0.0
        %1306 = vmatprep.subr.mxu0 0.0
        %1307 = vmatpush1.msra.mxu0 0.0
        %1308 = vmatprep.subr.mxu0 0.0
        %1309 = vmatpush1.msra.mxu0 0.0
        %1310 = vmatprep.subr.mxu0 0.0
        %1311 = vmatpush1.msra.mxu0 0.0
        %1312 = vmatprep.subr.mxu0 0.0
        %1313 = vmatpush1.msra.mxu0 0.0
        %1314 = vmatprep.subr.mxu0 0.0
        %1315 = vmatpush1.msra.mxu0 0.0
        %1316 = vmatprep.subr.mxu0 0.0
        %1317 = vmatpush1.msra.mxu0 0.0
        %1318 = vmatprep.subr.mxu0 0.0
        %1319 = vmatpush1.msra.mxu0 0.0
        %1320 = vmatprep.subr.mxu0 0.0
        %1321 = vmatpush1.msra.mxu0 0.0
        %1322 = vmatprep.subr.mxu0 0.0
        %1323 = vmatpush1.msra.mxu0 0.0
        %1324 = vmatprep.subr.mxu0 0.0
        %1325 = vmatpush1.msra.mxu0 %v1042
        %1326 = vmatprep.subr.mxu0 0.0
        %1327 = vmatpush2.msra.mxu0 0.0
        %1328 = vmatprep.subr.mxu0 0.0
        %1329 = vmatpush2.msra.mxu0 0.0
        %1330 = vmatprep.subr.mxu0 0.0
        %1331 = vmatpush2.msra.mxu0 0.0
        %1332 = vmatprep.subr.mxu0 0.0
        %1333 = vmatpush2.msra.mxu0 0.0
        %1334 = vmatprep.subr.mxu0 0.0
        %1335 = vmatpush2.msra.mxu0 0.0
        %1336 = vmatprep.subr.mxu0 0.0
        %1337 = vmatpush2.msra.mxu0 0.0
        %1338 = vmatprep.subr.mxu0 0.0
        %1339 = vmatpush2.msra.mxu0 0.0
        %1340 = vmatprep.subr.mxu0 0.0
        %1341 = vmatpush2.msra.mxu0 0.0
        %1342 = vmatprep.subr.mxu0 0.0
        %1343 = vmatpush2.msra.mxu0 0.0
        %1344 = vmatprep.subr.mxu0 0.0
        %1345 = vmatpush2.msra.mxu0 0.0
        %1346 = vmatprep.subr.mxu0 0.0
        %1347 = vmatpush2.msra.mxu0 0.0
        %1348 = vmatprep.subr.mxu0 0.0
        %1349 = vmatpush2.msra.mxu0 0.0
        %1350 = vmatprep.subr.mxu0 0.0
        %1351 = vmatpush2.msra.mxu0 0.0
        %1352 = vmatprep.subr.mxu0 0.0
        %1353 = vmatpush2.msra.mxu0 0.0
        %1354 = vmatprep.subr.mxu0 0.0
        %1355 = vmatpush2.msra.mxu0 0.0
        %1356 = vmatprep.subr.mxu0 0.0
        %1357 = vmatpush2.msra.mxu0 0.0
        %1358 = vmatprep.mubr.f32.mxu0 0.0
        %1359 = vmatmul.mubr.f32.gmra.mxu0 %v1292
        %v1360 = vpop.f32.mrf.mxu0
        %v1361 = vadd.f32 0.0, %v1360
        %v1362 = vpop.f32.mrf.mxu0
        %1363 = vdwg.mxu0
        %1364 = vst [vmem:[#allocation2 + $0x8] sm:$0xff] %v1361
        %v1365 = vld [vmem:[#allocation2] sm:$0xff]
        %v1366 = vld [vmem:[#allocation2 + $0x8] sm:$0xff]
        %v1367 = vld [vmem:[#allocation12] sm:$0xff]
        %v1368 = vld [vmem:[#allocation12 + $0x8] sm:$0xff]
        %v1369 = vld [vmem:[#allocation12 + $0x10] sm:$0xff]
        %v1370 = vld [vmem:[#allocation12 + $0x18] sm:$0xff]
        %v1371 = vld [vmem:[#allocation12 + $0x20] sm:$0xff]
        %v1372 = vld [vmem:[#allocation12 + $0x28] sm:$0xff]
        %v1373 = vld [vmem:[#allocation12 + $0x30] sm:$0xff]
        %v1374 = vld [vmem:[#allocation12 + $0x38] sm:$0xff]
        %v1375 = vld [vmem:[#allocation12 + $0x40] sm:$0xff]
        %v1376 = vld [vmem:[#allocation12 + $0x48] sm:$0xff]
        %v1377 = vld [vmem:[#allocation12 + $0x50] sm:$0xff]
        %v1378 = vld [vmem:[#allocation12 + $0x58] sm:$0xff]
        %v1379 = vld [vmem:[#allocation12 + $0x60] sm:$0xff]
        %v1380 = vld [vmem:[#allocation12 + $0x68] sm:$0xff]
        %v1381 = vld [vmem:[#allocation12 + $0x70] sm:$0xff]
        %v1382 = vld [vmem:[#allocation12 + $0x78] sm:$0xff]
        %v1383 = vld [vmem:[#allocation12 + $0x80] sm:$0xff]
        %v1384 = vld [vmem:[#allocation12 + $0x88] sm:$0xff]
        %v1385 = vld [vmem:[#allocation12 + $0x90] sm:$0xff]
        %v1386 = vld [vmem:[#allocation12 + $0x98] sm:$0xff]
        %v1387 = vld [vmem:[#allocation12 + $0xa0] sm:$0xff]
        %v1388 = vld [vmem:[#allocation12 + $0xa8] sm:$0xff]
        %v1389 = vld [vmem:[#allocation12 + $0xb0] sm:$0xff]
        %v1390 = vld [vmem:[#allocation12 + $0xb8] sm:$0xff]
        %v1391 = vld [vmem:[#allocation12 + $0xc0] sm:$0xff]
        %v1392 = vld [vmem:[#allocation12 + $0xc8] sm:$0xff]
        %v1393 = vld [vmem:[#allocation12 + $0xd0] sm:$0xff]
        %v1394 = vld [vmem:[#allocation12 + $0xd8] sm:$0xff]
        %v1395 = vld [vmem:[#allocation12 + $0xe0] sm:$0xff]
        %v1396 = vld [vmem:[#allocation12 + $0xe8] sm:$0xff]
        %v1397 = vld [vmem:[#allocation12 + $0xf0] sm:$0xff]
        %v1398 = vld [vmem:[#allocation12 + $0xf8] sm:$0xff]
        %v1399 = vld [vmem:[%s8] sm:$0x1]
        %v1401 = vlaneseq
        %v1402 = vshrl.u32 %v1401, 7
        %v1403 = vsub.s32 0, %v1402
        %v1404 = vrot.slane %v1399, %v1403
        %1406 = vmatprep.subr.mxu0 0.0
        %1407 = vmatpush1.msra.mxu0 %v1382
        %1408 = vmatprep.subr.mxu0 0.0
        %1409 = vmatpush1.msra.mxu0 %v1381
        %1410 = vmatprep.subr.mxu0 0.0
        %1411 = vmatpush1.msra.mxu0 %v1380
        %1412 = vmatprep.subr.mxu0 0.0
        %1413 = vmatpush1.msra.mxu0 %v1379
        %1414 = vmatprep.subr.mxu0 0.0
        %1415 = vmatpush1.msra.mxu0 %v1378
        %1416 = vmatprep.subr.mxu0 0.0
        %1417 = vmatpush1.msra.mxu0 %v1377
        %1418 = vmatprep.subr.mxu0 0.0
        %1419 = vmatpush1.msra.mxu0 %v1376
        %1420 = vmatprep.subr.mxu0 0.0
        %1421 = vmatpush1.msra.mxu0 %v1375
        %1422 = vmatprep.subr.mxu0 0.0
        %1423 = vmatpush1.msra.mxu0 %v1374
        %1424 = vmatprep.subr.mxu0 0.0
        %1425 = vmatpush1.msra.mxu0 %v1373
        %1426 = vmatprep.subr.mxu0 0.0
        %1427 = vmatpush1.msra.mxu0 %v1372
        %1428 = vmatprep.subr.mxu0 0.0
        %1429 = vmatpush1.msra.mxu0 %v1371
        %1430 = vmatprep.subr.mxu0 0.0
        %1431 = vmatpush1.msra.mxu0 %v1370
        %1432 = vmatprep.subr.mxu0 0.0
        %1433 = vmatpush1.msra.mxu0 %v1369
        %1434 = vmatprep.subr.mxu0 0.0
        %1435 = vmatpush1.msra.mxu0 %v1368
        %1436 = vmatprep.subr.mxu0 0.0
        %1437 = vmatpush1.msra.mxu0 %v1367
        %1438 = vmatprep.subr.mxu0 0.0
        %1439 = vmatpush2.msra.mxu0 %v1398
        %1440 = vmatprep.subr.mxu0 0.0
        %1441 = vmatpush2.msra.mxu0 %v1397
        %1442 = vmatprep.subr.mxu0 0.0
        %1443 = vmatpush2.msra.mxu0 %v1396
        %1444 = vmatprep.subr.mxu0 0.0
        %1445 = vmatpush2.msra.mxu0 %v1395
        %1446 = vmatprep.subr.mxu0 0.0
        %1447 = vmatpush2.msra.mxu0 %v1394
        %1448 = vmatprep.subr.mxu0 0.0
        %1449 = vmatpush2.msra.mxu0 %v1393
        %1450 = vmatprep.subr.mxu0 0.0
        %1451 = vmatpush2.msra.mxu0 %v1392
        %1452 = vmatprep.subr.mxu0 0.0
        %1453 = vmatpush2.msra.mxu0 %v1391
        %1454 = vmatprep.subr.mxu0 0.0
        %1455 = vmatpush2.msra.mxu0 %v1390
        %1456 = vmatprep.subr.mxu0 0.0
        %1457 = vmatpush2.msra.mxu0 %v1389
        %1458 = vmatprep.subr.mxu0 0.0
        %1459 = vmatpush2.msra.mxu0 %v1388
        %1460 = vmatprep.subr.mxu0 0.0
        %1461 = vmatpush2.msra.mxu0 %v1387
        %1462 = vmatprep.subr.mxu0 0.0
        %1463 = vmatpush2.msra.mxu0 %v1386
        %1464 = vmatprep.subr.mxu0 0.0
        %1465 = vmatpush2.msra.mxu0 %v1385
        %1466 = vmatprep.subr.mxu0 0.0
        %1467 = vmatpush2.msra.mxu0 %v1384
        %1468 = vmatprep.subr.mxu0 0.0
        %1469 = vmatpush2.msra.mxu0 %v1383
        %1470 = vmatprep.mubr.f32.mxu0 %v1366
        %1471 = vmatmul.mubr.f32.gmra.mxu0 %v1365
        %v1472 = vpop.f32.mrf.mxu0
        %v1473 = vadd.f32 %v1404, %v1472
        %v1474 = vpop.f32.mrf.mxu0
        %1475 = vdwg.mxu0
        %v1476 = vadd.f32 %v700, %v1473
        %v1477 = vld [vmem:[%s9] sm:$0x1]
        %v1478 = vld [vmem:[%s10] sm:$0x1]
        %1479 = vadd.xlane.f32.xlu0 %v1476
        %v1480 = vpop.xlane.xlu0 %1479
        %v1481 = vmul.f32 %v1480, 0.03125
        %v1482 = vsub.f32 %v1476, %v1481
        %v1483 = vsel %vm668, %v1482, 0.0
        %v1484 = vmul.f32 %v1483, %v1483
        %1485 = vadd.xlane.f32.xlu0 %v1484
        %v1486 = vpop.xlane.xlu0 %1485
        %v1487 = vmul.f32 %v1486, 0.03125
        %v1488 = vadd.f32 %v1487, 1e-08
        %v1489 = vrsqrt.pop %v1488
        %v1490 = vmul.f32 %v1483, %v1489
        %v1492 = vlaneseq
        %v1493 = vshrl.u32 %v1492, 7
        %v1494 = vsub.s32 0, %v1493
        %v1495 = vrot.slane %v1477, %v1494
        %v1497 = vmul.f32 %v1490, %v1495
        %v1499 = vlaneseq
        %v1500 = vshrl.u32 %v1499, 7
        %v1501 = vsub.s32 0, %v1500
        %v1502 = vrot.slane %v1478, %v1501
        %v1504 = vadd.f32 %v1497, %v1502
        %v1505 = vld [vmem:[#allocation14] sm:$0xff]
        %v1506 = vld [vmem:[#allocation14 + $0x8] sm:$0xff]
        %v1507 = vld [vmem:[#allocation14 + $0x10] sm:$0xff]
        %v1508 = vld [vmem:[#allocation14 + $0x18] sm:$0xff]
        %v1509 = vld [vmem:[#allocation14 + $0x20] sm:$0xff]
        %v1510 = vld [vmem:[#allocation14 + $0x28] sm:$0xff]
        %v1511 = vld [vmem:[#allocation14 + $0x30] sm:$0xff]
        %v1512 = vld [vmem:[#allocation14 + $0x38] sm:$0xff]
        %v1513 = vld [vmem:[#allocation14 + $0x40] sm:$0xff]
        %v1514 = vld [vmem:[#allocation14 + $0x48] sm:$0xff]
        %v1515 = vld [vmem:[#allocation14 + $0x50] sm:$0xff]
        %v1516 = vld [vmem:[#allocation14 + $0x58] sm:$0xff]
        %v1517 = vld [vmem:[#allocation14 + $0x60] sm:$0xff]
        %v1518 = vld [vmem:[#allocation14 + $0x68] sm:$0xff]
        %v1519 = vld [vmem:[#allocation14 + $0x70] sm:$0xff]
        %v1520 = vld [vmem:[#allocation14 + $0x78] sm:$0xff]
        %v1521 = vld [vmem:[%s12] sm:$0x1]
        %v1523 = vlaneseq
        %v1524 = vshrl.u32 %v1523, 7
        %v1525 = vsub.s32 0, %v1524
        %v1526 = vrot.slane %v1521, %v1525
        %1528 = vmatprep.subr.mxu0 0.0
        %1529 = vmatpush1.msra.mxu0 %v1520
        %1530 = vmatprep.subr.mxu0 0.0
        %1531 = vmatpush1.msra.mxu0 %v1519
        %1532 = vmatprep.subr.mxu0 0.0
        %1533 = vmatpush1.msra.mxu0 %v1518
        %1534 = vmatprep.subr.mxu0 0.0
        %1535 = vmatpush1.msra.mxu0 %v1517
        %1536 = vmatprep.subr.mxu0 0.0
        %1537 = vmatpush1.msra.mxu0 %v1516
        %1538 = vmatprep.subr.mxu0 0.0
        %1539 = vmatpush1.msra.mxu0 %v1515
        %1540 = vmatprep.subr.mxu0 0.0
        %1541 = vmatpush1.msra.mxu0 %v1514
        %1542 = vmatprep.subr.mxu0 0.0
        %1543 = vmatpush1.msra.mxu0 %v1513
        %1544 = vmatprep.subr.mxu0 0.0
        %1545 = vmatpush1.msra.mxu0 %v1512
        %1546 = vmatprep.subr.mxu0 0.0
        %1547 = vmatpush1.msra.mxu0 %v1511
        %1548 = vmatprep.subr.mxu0 0.0
        %1549 = vmatpush1.msra.mxu0 %v1510
        %1550 = vmatprep.subr.mxu0 0.0
        %1551 = vmatpush1.msra.mxu0 %v1509
        %1552 = vmatprep.subr.mxu0 0.0
        %1553 = vmatpush1.msra.mxu0 %v1508
        %1554 = vmatprep.subr.mxu0 0.0
        %1555 = vmatpush1.msra.mxu0 %v1507
        %1556 = vmatprep.subr.mxu0 0.0
        %1557 = vmatpush1.msra.mxu0 %v1506
        %1558 = vmatprep.subr.mxu0 0.0
        %1559 = vmatpush1.msra.mxu0 %v1505
        %1560 = vmatprep.subr.mxu0 0.0
        %1561 = vmatpush2.msra.mxu0 0.0
        %1562 = vmatprep.subr.mxu0 0.0
        %1563 = vmatpush2.msra.mxu0 0.0
        %1564 = vmatprep.subr.mxu0 0.0
        %1565 = vmatpush2.msra.mxu0 0.0
        %1566 = vmatprep.subr.mxu0 0.0
        %1567 = vmatpush2.msra.mxu0 0.0
        %1568 = vmatprep.subr.mxu0 0.0
        %1569 = vmatpush2.msra.mxu0 0.0
        %1570 = vmatprep.subr.mxu0 0.0
        %1571 = vmatpush2.msra.mxu0 0.0
        %1572 = vmatprep.subr.mxu0 0.0
        %1573 = vmatpush2.msra.mxu0 0.0
        %1574 = vmatprep.subr.mxu0 0.0
        %1575 = vmatpush2.msra.mxu0 0.0
        %1576 = vmatprep.subr.mxu0 0.0
        %1577 = vmatpush2.msra.mxu0 0.0
        %1578 = vmatprep.subr.mxu0 0.0
        %1579 = vmatpush2.msra.mxu0 0.0
        %1580 = vmatprep.subr.mxu0 0.0
        %1581 = vmatpush2.msra.mxu0 0.0
        %1582 = vmatprep.subr.mxu0 0.0
        %1583 = vmatpush2.msra.mxu0 0.0
        %1584 = vmatprep.subr.mxu0 0.0
        %1585 = vmatpush2.msra.mxu0 0.0
        %1586 = vmatprep.subr.mxu0 0.0
        %1587 = vmatpush2.msra.mxu0 0.0
        %1588 = vmatprep.subr.mxu0 0.0
        %1589 = vmatpush2.msra.mxu0 0.0
        %1590 = vmatprep.subr.mxu0 0.0
        %1591 = vmatpush2.msra.mxu0 0.0
        %1592 = vmatprep.mubr.f32.mxu0 0.0
        %1593 = vmatmul.mubr.f32.gmra.mxu0 %v1504
        %v1594 = vpop.f32.mrf.mxu0
        %v1595 = vadd.f32 %v1526, %v1594
        %v1596 = vpop.f32.mrf.mxu0
        %1597 = vdwg.mxu0
        %v1598 = vmax.f32 %v1595, 0.0
        %v1599 = vld [vmem:[#allocation15] sm:$0xff]
        %v1600 = vld [vmem:[#allocation15 + $0x8] sm:$0xff]
        %v1601 = vld [vmem:[#allocation15 + $0x10] sm:$0xff]
        %v1602 = vld [vmem:[#allocation15 + $0x18] sm:$0xff]
        %v1603 = vld [vmem:[#allocation15 + $0x20] sm:$0xff]
        %v1604 = vld [vmem:[#allocation15 + $0x28] sm:$0xff]
        %v1605 = vld [vmem:[#allocation15 + $0x30] sm:$0xff]
        %v1606 = vld [vmem:[#allocation15 + $0x38] sm:$0xff]
        %v1607 = vld [vmem:[#allocation15 + $0x40] sm:$0xff]
        %v1608 = vld [vmem:[#allocation15 + $0x48] sm:$0xff]
        %v1609 = vld [vmem:[#allocation15 + $0x50] sm:$0xff]
        %v1610 = vld [vmem:[#allocation15 + $0x58] sm:$0xff]
        %v1611 = vld [vmem:[#allocation15 + $0x60] sm:$0xff]
        %v1612 = vld [vmem:[#allocation15 + $0x68] sm:$0xff]
        %v1613 = vld [vmem:[#allocation15 + $0x70] sm:$0xff]
        %v1614 = vld [vmem:[#allocation15 + $0x78] sm:$0xff]
        %v1615 = vld [vmem:[%s14] sm:$0x1]
        %v1617 = vlaneseq
        %v1618 = vshrl.u32 %v1617, 7
        %v1619 = vsub.s32 0, %v1618
        %v1620 = vrot.slane %v1615, %v1619
        %1622 = vmatprep.subr.mxu0 0.0
        %1623 = vmatpush1.msra.mxu0 %v1614
        %1624 = vmatprep.subr.mxu0 0.0
        %1625 = vmatpush1.msra.mxu0 %v1613
        %1626 = vmatprep.subr.mxu0 0.0
        %1627 = vmatpush1.msra.mxu0 %v1612
        %1628 = vmatprep.subr.mxu0 0.0
        %1629 = vmatpush1.msra.mxu0 %v1611
        %1630 = vmatprep.subr.mxu0 0.0
        %1631 = vmatpush1.msra.mxu0 %v1610
        %1632 = vmatprep.subr.mxu0 0.0
        %1633 = vmatpush1.msra.mxu0 %v1609
        %1634 = vmatprep.subr.mxu0 0.0
        %1635 = vmatpush1.msra.mxu0 %v1608
        %1636 = vmatprep.subr.mxu0 0.0
        %1637 = vmatpush1.msra.mxu0 %v1607
        %1638 = vmatprep.subr.mxu0 0.0
        %1639 = vmatpush1.msra.mxu0 %v1606
        %1640 = vmatprep.subr.mxu0 0.0
        %1641 = vmatpush1.msra.mxu0 %v1605
        %1642 = vmatprep.subr.mxu0 0.0
        %1643 = vmatpush1.msra.mxu0 %v1604
        %1644 = vmatprep.subr.mxu0 0.0
        %1645 = vmatpush1.msra.mxu0 %v1603
        %1646 = vmatprep.subr.mxu0 0.0
        %1647 = vmatpush1.msra.mxu0 %v1602
        %1648 = vmatprep.subr.mxu0 0.0
        %1649 = vmatpush1.msra.mxu0 %v1601
        %1650 = vmatprep.subr.mxu0 0.0
        %1651 = vmatpush1.msra.mxu0 %v1600
        %1652 = vmatprep.subr.mxu0 0.0
        %1653 = vmatpush1.msra.mxu0 %v1599
        %1654 = vmatprep.subr.mxu0 0.0
        %1655 = vmatpush2.msra.mxu0 0.0
        %1656 = vmatprep.subr.mxu0 0.0
        %1657 = vmatpush2.msra.mxu0 0.0
        %1658 = vmatprep.subr.mxu0 0.0
        %1659 = vmatpush2.msra.mxu0 0.0
        %1660 = vmatprep.subr.mxu0 0.0
        %1661 = vmatpush2.msra.mxu0 0.0
        %1662 = vmatprep.subr.mxu0 0.0
        %1663 = vmatpush2.msra.mxu0 0.0
        %1664 = vmatprep.subr.mxu0 0.0
        %1665 = vmatpush2.msra.mxu0 0.0
        %1666 = vmatprep.subr.mxu0 0.0
        %1667 = vmatpush2.msra.mxu0 0.0
        %1668 = vmatprep.subr.mxu0 0.0
        %1669 = vmatpush2.msra.mxu0 0.0
        %1670 = vmatprep.subr.mxu0 0.0
        %1671 = vmatpush2.msra.mxu0 0.0
        %1672 = vmatprep.subr.mxu0 0.0
        %1673 = vmatpush2.msra.mxu0 0.0
        %1674 = vmatprep.subr.mxu0 0.0
        %1675 = vmatpush2.msra.mxu0 0.0
        %1676 = vmatprep.subr.mxu0 0.0
        %1677 = vmatpush2.msra.mxu0 0.0
        %1678 = vmatprep.subr.mxu0 0.0
        %1679 = vmatpush2.msra.mxu0 0.0
        %1680 = vmatprep.subr.mxu0 0.0
        %1681 = vmatpush2.msra.mxu0 0.0
        %1682 = vmatprep.subr.mxu0 0.0
        %1683 = vmatpush2.msra.mxu0 0.0
        %1684 = vmatprep.subr.mxu0 0.0
        %1685 = vmatpush2.msra.mxu0 0.0
        %1686 = vmatprep.mubr.f32.mxu0 0.0
        %1687 = vmatmul.mubr.f32.gmra.mxu0 %v1598
        %v1688 = vpop.f32.mrf.mxu0
        %v1689 = vadd.f32 %v1620, %v1688
        %v1690 = vpop.f32.mrf.mxu0
        %1691 = vdwg.mxu0
        %v1692 = vadd.f32 %v1504, %v1689
        %s1693 = scalar_lea.vmem [#allocation6], 1
        %v1694 = vld [vmem:[%s1693] sm:$0x1]
        %s1695 = scalar_lea.vmem %s2, 1
        %v1696 = vld [vmem:[%s1695] sm:$0x1]
        %1697 = vadd.xlane.f32.xlu0 %v1692
        %v1698 = vpop.xlane.xlu0 %1697
        %v1699 = vmul.f32 %v1698, 0.03125
        %v1700 = vsub.f32 %v1692, %v1699
        %v1701 = vsel %vm668, %v1700, 0.0
        %v1702 = vmul.f32 %v1701, %v1701
        %1703 = vadd.xlane.f32.xlu0 %v1702
        %v1704 = vpop.xlane.xlu0 %1703
        %v1705 = vmul.f32 %v1704, 0.03125
        %v1706 = vadd.f32 %v1705, 1e-08
        %v1707 = vrsqrt.pop %v1706
        %v1708 = vmul.f32 %v1701, %v1707
        %v1710 = vlaneseq
        %v1711 = vshrl.u32 %v1710, 7
        %v1712 = vsub.s32 0, %v1711
        %v1713 = vrot.slane %v1694, %v1712
        %v1715 = vmul.f32 %v1708, %v1713
        %v1717 = vlaneseq
        %v1718 = vshrl.u32 %v1717, 7
        %v1719 = vsub.s32 0, %v1718
        %v1720 = vrot.slane %v1696, %v1719
        %v1722 = vadd.f32 %v1715, %v1720
        %s1723 = scalar_lea.vmem [#allocation8], 256
        %v1724 = vld [vmem:[%s1723] sm:$0xff]
        %v1725 = vld [vmem:[%s1723 + $0x8] sm:$0xff]
        %v1726 = vld [vmem:[%s1723 + $0x10] sm:$0xff]
        %v1727 = vld [vmem:[%s1723 + $0x18] sm:$0xff]
        %v1728 = vld [vmem:[%s1723 + $0x20] sm:$0xff]
        %v1729 = vld [vmem:[%s1723 + $0x28] sm:$0xff]
        %v1730 = vld [vmem:[%s1723 + $0x30] sm:$0xff]
        %v1731 = vld [vmem:[%s1723 + $0x38] sm:$0xff]
        %v1732 = vld [vmem:[%s1723 + $0x40] sm:$0xff]
        %v1733 = vld [vmem:[%s1723 + $0x48] sm:$0xff]
        %v1734 = vld [vmem:[%s1723 + $0x50] sm:$0xff]
        %v1735 = vld [vmem:[%s1723 + $0x58] sm:$0xff]
        %v1736 = vld [vmem:[%s1723 + $0x60] sm:$0xff]
        %v1737 = vld [vmem:[%s1723 + $0x68] sm:$0xff]
        %v1738 = vld [vmem:[%s1723 + $0x70] sm:$0xff]
        %v1739 = vld [vmem:[%s1723 + $0x78] sm:$0xff]
        %v1740 = vld [vmem:[%s1723 + $0x80] sm:$0xff]
        %v1741 = vld [vmem:[%s1723 + $0x88] sm:$0xff]
        %v1742 = vld [vmem:[%s1723 + $0x90] sm:$0xff]
        %v1743 = vld [vmem:[%s1723 + $0x98] sm:$0xff]
        %v1744 = vld [vmem:[%s1723 + $0xa0] sm:$0xff]
        %v1745 = vld [vmem:[%s1723 + $0xa8] sm:$0xff]
        %v1746 = vld [vmem:[%s1723 + $0xb0] sm:$0xff]
        %v1747 = vld [vmem:[%s1723 + $0xb8] sm:$0xff]
        %v1748 = vld [vmem:[%s1723 + $0xc0] sm:$0xff]
        %v1749 = vld [vmem:[%s1723 + $0xc8] sm:$0xff]
        %v1750 = vld [vmem:[%s1723 + $0xd0] sm:$0xff]
        %v1751 = vld [vmem:[%s1723 + $0xd8] sm:$0xff]
        %v1752 = vld [vmem:[%s1723 + $0xe0] sm:$0xff]
        %v1753 = vld [vmem:[%s1723 + $0xe8] sm:$0xff]
        %v1754 = vld [vmem:[%s1723 + $0xf0] sm:$0xff]
        %v1755 = vld [vmem:[%s1723 + $0xf8] sm:$0xff]
        %s1756 = scalar_lea.vmem [#allocation9], 2
        %v1757 = vld [vmem:[%s1756] sm:$0x3]
        %v1759 = vlaneseq
        %v1760 = vshrl.u32 %v1759, 7
        %v1761 = vsub.s32 0, %v1760
        %v1762 = vrot.slane %v1757, %v1761
        %v1763 = vlaneseq
        %v1764 = vshrl.u32 %v1763, 7
        %v1765 = vsub.s32 1, %v1764
        %v1766 = vrot.slane %v1757, %v1765
        %1769 = vmatprep.subr.mxu0 %v1755
        %1770 = vmatpush1.msra.mxu0 %v1754
        %1771 = vmatprep.subr.mxu0 %v1753
        %1772 = vmatpush1.msra.mxu0 %v1752
        %1773 = vmatprep.subr.mxu0 %v1751
        %1774 = vmatpush1.msra.mxu0 %v1750
        %1775 = vmatprep.subr.mxu0 %v1749
        %1776 = vmatpush1.msra.mxu0 %v1748
        %1777 = vmatprep.subr.mxu0 %v1747
        %1778 = vmatpush1.msra.mxu0 %v1746
        %1779 = vmatprep.subr.mxu0 %v1745
        %1780 = vmatpush1.msra.mxu0 %v1744
        %1781 = vmatprep.subr.mxu0 %v1743
        %1782 = vmatpush1.msra.mxu0 %v1742
        %1783 = vmatprep.subr.mxu0 %v1741
        %1784 = vmatpush1.msra.mxu0 %v1740
        %1785 = vmatprep.subr.mxu0 %v1739
        %1786 = vmatpush1.msra.mxu0 %v1738
        %1787 = vmatprep.subr.mxu0 %v1737
        %1788 = vmatpush1.msra.mxu0 %v1736
        %1789 = vmatprep.subr.mxu0 %v1735
        %1790 = vmatpush1.msra.mxu0 %v1734
        %1791 = vmatprep.subr.mxu0 %v1733
        %1792 = vmatpush1.msra.mxu0 %v1732
        %1793 = vmatprep.subr.mxu0 %v1731
        %1794 = vmatpush1.msra.mxu0 %v1730
        %1795 = vmatprep.subr.mxu0 %v1729
        %1796 = vmatpush1.msra.mxu0 %v1728
        %1797 = vmatprep.subr.mxu0 %v1727
        %1798 = vmatpush1.msra.mxu0 %v1726
        %1799 = vmatprep.subr.mxu0 %v1725
        %1800 = vmatpush1.msra.mxu0 %v1724
        %1801 = vmatprep.subr.mxu0 0.0
        %1802 = vmatpush2.msra.mxu0 0.0
        %1803 = vmatprep.subr.mxu0 0.0
        %1804 = vmatpush2.msra.mxu0 0.0
        %1805 = vmatprep.subr.mxu0 0.0
        %1806 = vmatpush2.msra.mxu0 0.0
        %1807 = vmatprep.subr.mxu0 0.0
        %1808 = vmatpush2.msra.mxu0 0.0
        %1809 = vmatprep.subr.mxu0 0.0
        %1810 = vmatpush2.msra.mxu0 0.0
        %1811 = vmatprep.subr.mxu0 0.0
        %1812 = vmatpush2.msra.mxu0 0.0
        %1813 = vmatprep.subr.mxu0 0.0
        %1814 = vmatpush2.msra.mxu0 0.0
        %1815 = vmatprep.subr.mxu0 0.0
        %1816 = vmatpush2.msra.mxu0 0.0
        %1817 = vmatprep.subr.mxu0 0.0
        %1818 = vmatpush2.msra.mxu0 0.0
        %1819 = vmatprep.subr.mxu0 0.0
        %1820 = vmatpush2.msra.mxu0 0.0
        %1821 = vmatprep.subr.mxu0 0.0
        %1822 = vmatpush2.msra.mxu0 0.0
        %1823 = vmatprep.subr.mxu0 0.0
        %1824 = vmatpush2.msra.mxu0 0.0
        %1825 = vmatprep.subr.mxu0 0.0
        %1826 = vmatpush2.msra.mxu0 0.0
        %1827 = vmatprep.subr.mxu0 0.0
        %1828 = vmatpush2.msra.mxu0 0.0
        %1829 = vmatprep.subr.mxu0 0.0
        %1830 = vmatpush2.msra.mxu0 0.0
        %1831 = vmatprep.subr.mxu0 0.0
        %1832 = vmatpush2.msra.mxu0 0.0
        %1833 = vmatprep.mubr.f32.mxu0 0.0
        %1834 = vmatmul.mubr.f32.gmra.mxu0 %v1722
        %v1835 = vpop.f32.mrf.mxu0
        %v1836 = vadd.f32 %v1762, %v1835
        %v1837 = vpop.f32.mrf.mxu0
        %v1838 = vadd.f32 %v1766, %v1837
        %1839 = vdwg.mxu0
        %s1840 = scalar_lea.vmem [#allocation11], 512
        %v1841 = vld [vmem:[%s1840] sm:$0xff]
        %v1842 = vld [vmem:[%s1840 + $0x8] sm:$0xff]
        %v1843 = vld [vmem:[%s1840 + $0x10] sm:$0xff]
        %v1844 = vld [vmem:[%s1840 + $0x18] sm:$0xff]
        %v1845 = vld [vmem:[%s1840 + $0x20] sm:$0xff]
        %v1846 = vld [vmem:[%s1840 + $0x28] sm:$0xff]
        %v1847 = vld [vmem:[%s1840 + $0x30] sm:$0xff]
        %v1848 = vld [vmem:[%s1840 + $0x38] sm:$0xff]
        %v1849 = vld [vmem:[%s1840 + $0x40] sm:$0xff]
        %v1850 = vld [vmem:[%s1840 + $0x48] sm:$0xff]
        %v1851 = vld [vmem:[%s1840 + $0x50] sm:$0xff]
        %v1852 = vld [vmem:[%s1840 + $0x58] sm:$0xff]
        %v1853 = vld [vmem:[%s1840 + $0x60] sm:$0xff]
        %v1854 = vld [vmem:[%s1840 + $0x68] sm:$0xff]
        %v1855 = vld [vmem:[%s1840 + $0x70] sm:$0xff]
        %v1856 = vld [vmem:[%s1840 + $0x78] sm:$0xff]
        %v1857 = vld [vmem:[%s1840 + $0x80] sm:$0xff]
        %v1858 = vld [vmem:[%s1840 + $0x88] sm:$0xff]
        %v1859 = vld [vmem:[%s1840 + $0x90] sm:$0xff]
        %v1860 = vld [vmem:[%s1840 + $0x98] sm:$0xff]
        %v1861 = vld [vmem:[%s1840 + $0xa0] sm:$0xff]
        %v1862 = vld [vmem:[%s1840 + $0xa8] sm:$0xff]
        %v1863 = vld [vmem:[%s1840 + $0xb0] sm:$0xff]
        %v1864 = vld [vmem:[%s1840 + $0xb8] sm:$0xff]
        %v1865 = vld [vmem:[%s1840 + $0xc0] sm:$0xff]
        %v1866 = vld [vmem:[%s1840 + $0xc8] sm:$0xff]
        %v1867 = vld [vmem:[%s1840 + $0xd0] sm:$0xff]
        %v1868 = vld [vmem:[%s1840 + $0xd8] sm:$0xff]
        %v1869 = vld [vmem:[%s1840 + $0xe0] sm:$0xff]
        %v1870 = vld [vmem:[%s1840 + $0xe8] sm:$0xff]
        %v1871 = vld [vmem:[%s1840 + $0xf0] sm:$0xff]
        %v1872 = vld [vmem:[%s1840 + $0xf8] sm:$0xff]
        %v1873 = vld [vmem:[%s1840 + $0x100] sm:$0xff]
        %v1874 = vld [vmem:[%s1840 + $0x108] sm:$0xff]
        %v1875 = vld [vmem:[%s1840 + $0x110] sm:$0xff]
        %v1876 = vld [vmem:[%s1840 + $0x118] sm:$0xff]
        %v1877 = vld [vmem:[%s1840 + $0x120] sm:$0xff]
        %v1878 = vld [vmem:[%s1840 + $0x128] sm:$0xff]
        %v1879 = vld [vmem:[%s1840 + $0x130] sm:$0xff]
        %v1880 = vld [vmem:[%s1840 + $0x138] sm:$0xff]
        %v1881 = vld [vmem:[%s1840 + $0x140] sm:$0xff]
        %v1882 = vld [vmem:[%s1840 + $0x148] sm:$0xff]
        %v1883 = vld [vmem:[%s1840 + $0x150] sm:$0xff]
        %v1884 = vld [vmem:[%s1840 + $0x158] sm:$0xff]
        %v1885 = vld [vmem:[%s1840 + $0x160] sm:$0xff]
        %v1886 = vld [vmem:[%s1840 + $0x168] sm:$0xff]
        %v1887 = vld [vmem:[%s1840 + $0x170] sm:$0xff]
        %v1888 = vld [vmem:[%s1840 + $0x178] sm:$0xff]
        %v1889 = vld [vmem:[%s1840 + $0x180] sm:$0xff]
        %v1890 = vld [vmem:[%s1840 + $0x188] sm:$0xff]
        %v1891 = vld [vmem:[%s1840 + $0x190] sm:$0xff]
        %v1892 = vld [vmem:[%s1840 + $0x198] sm:$0xff]
        %v1893 = vld [vmem:[%s1840 + $0x1a0] sm:$0xff]
        %v1894 = vld [vmem:[%s1840 + $0x1a8] sm:$0xff]
        %v1895 = vld [vmem:[%s1840 + $0x1b0] sm:$0xff]
        %v1896 = vld [vmem:[%s1840 + $0x1b8] sm:$0xff]
        %v1897 = vld [vmem:[%s1840 + $0x1c0] sm:$0xff]
        %v1898 = vld [vmem:[%s1840 + $0x1c8] sm:$0xff]
        %v1899 = vld [vmem:[%s1840 + $0x1d0] sm:$0xff]
        %v1900 = vld [vmem:[%s1840 + $0x1d8] sm:$0xff]
        %v1901 = vld [vmem:[%s1840 + $0x1e0] sm:$0xff]
        %v1902 = vld [vmem:[%s1840 + $0x1e8] sm:$0xff]
        %v1903 = vld [vmem:[%s1840 + $0x1f0] sm:$0xff]
        %v1904 = vld [vmem:[%s1840 + $0x1f8] sm:$0xff]
        %s1905 = scalar_lea.vmem %s6, 4
        %v1906 = vld [vmem:[%s1905] sm:$0xf]
        %v1908 = vlaneseq
        %v1909 = vshrl.u32 %v1908, 7
        %v1910 = vsub.s32 0, %v1909
        %v1911 = vrot.slane %v1906, %v1910
        %v1912 = vlaneseq
        %v1913 = vshrl.u32 %v1912, 7
        %v1914 = vsub.s32 1, %v1913
        %v1915 = vrot.slane %v1906, %v1914
        %v1916 = vlaneseq
        %v1917 = vshrl.u32 %v1916, 7
        %v1918 = vsub.s32 2, %v1917
        %v1919 = vrot.slane %v1906, %v1918
        %v1920 = vlaneseq
        %v1921 = vshrl.u32 %v1920, 7
        %v1922 = vsub.s32 3, %v1921
        %v1923 = vrot.slane %v1906, %v1922
        %1928 = vmatprep.subr.mxu0 %v1902
        %1929 = vmatpush1.msra.mxu0 %v1901
        %1930 = vmatprep.subr.mxu0 %v1898
        %1931 = vmatpush1.msra.mxu0 %v1897
        %1932 = vmatprep.subr.mxu0 %v1894
        %1933 = vmatpush1.msra.mxu0 %v1893
        %1934 = vmatprep.subr.mxu0 %v1890
        %1935 = vmatpush1.msra.mxu0 %v1889
        %1936 = vmatprep.subr.mxu0 %v1886
        %1937 = vmatpush1.msra.mxu0 %v1885
        %1938 = vmatprep.subr.mxu0 %v1882
        %1939 = vmatpush1.msra.mxu0 %v1881
        %1940 = vmatprep.subr.mxu0 %v1878
        %1941 = vmatpush1.msra.mxu0 %v1877
        %1942 = vmatprep.subr.mxu0 %v1874
        %1943 = vmatpush1.msra.mxu0 %v1873
        %1944 = vmatprep.subr.mxu0 %v1870
        %1945 = vmatpush1.msra.mxu0 %v1869
        %1946 = vmatprep.subr.mxu0 %v1866
        %1947 = vmatpush1.msra.mxu0 %v1865
        %1948 = vmatprep.subr.mxu0 %v1862
        %1949 = vmatpush1.msra.mxu0 %v1861
        %1950 = vmatprep.subr.mxu0 %v1858
        %1951 = vmatpush1.msra.mxu0 %v1857
        %1952 = vmatprep.subr.mxu0 %v1854
        %1953 = vmatpush1.msra.mxu0 %v1853
        %1954 = vmatprep.subr.mxu0 %v1850
        %1955 = vmatpush1.msra.mxu0 %v1849
        %1956 = vmatprep.subr.mxu0 %v1846
        %1957 = vmatpush1.msra.mxu0 %v1845
        %1958 = vmatprep.subr.mxu0 %v1842
        %1959 = vmatpush1.msra.mxu0 %v1841
        %1960 = vmatprep.subr.mxu0 0.0
        %1961 = vmatpush2.msra.mxu0 0.0
        %1962 = vmatprep.subr.mxu0 0.0
        %1963 = vmatpush2.msra.mxu0 0.0
        %1964 = vmatprep.subr.mxu0 0.0
        %1965 = vmatpush2.msra.mxu0 0.0
        %1966 = vmatprep.subr.mxu0 0.0
        %1967 = vmatpush2.msra.mxu0 0.0
        %1968 = vmatprep.subr.mxu0 0.0
        %1969 = vmatpush2.msra.mxu0 0.0
        %1970 = vmatprep.subr.mxu0 0.0
        %1971 = vmatpush2.msra.mxu0 0.0
        %1972 = vmatprep.subr.mxu0 0.0
        %1973 = vmatpush2.msra.mxu0 0.0
        %1974 = vmatprep.subr.mxu0 0.0
        %1975 = vmatpush2.msra.mxu0 0.0
        %1976 = vmatprep.subr.mxu0 0.0
        %1977 = vmatpush2.msra.mxu0 0.0
        %1978 = vmatprep.subr.mxu0 0.0
        %1979 = vmatpush2.msra.mxu0 0.0
        %1980 = vmatprep.subr.mxu0 0.0
        %1981 = vmatpush2.msra.mxu0 0.0
        %1982 = vmatprep.subr.mxu0 0.0
        %1983 = vmatpush2.msra.mxu0 0.0
        %1984 = vmatprep.subr.mxu0 0.0
        %1985 = vmatpush2.msra.mxu0 0.0
        %1986 = vmatprep.subr.mxu0 0.0
        %1987 = vmatpush2.msra.mxu0 0.0
        %1988 = vmatprep.subr.mxu0 0.0
        %1989 = vmatpush2.msra.mxu0 0.0
        %1990 = vmatprep.subr.mxu0 0.0
        %1991 = vmatpush2.msra.mxu0 0.0
        %1992 = vmatprep.mubr.f32.mxu0 0.0
        %1993 = vmatmul.mubr.f32.gmra.mxu0 %v1692
        %v1994 = vpop.f32.mrf.mxu0
        %v1995 = vadd.f32 %v1911, %v1994
        %v1996 = vpop.f32.mrf.mxu0
        %v1997 = vadd.f32 %v1915, %v1996
        %1998 = vdwg.mxu0
        %1999 = vmatprep.subr.mxu0 %v1904
        %2000 = vmatpush1.msra.mxu0 %v1903
        %2001 = vmatprep.subr.mxu0 %v1900
        %2002 = vmatpush1.msra.mxu0 %v1899
        %2003 = vmatprep.subr.mxu0 %v1896
        %2004 = vmatpush1.msra.mxu0 %v1895
        %2005 = vmatprep.subr.mxu0 %v1892
        %2006 = vmatpush1.msra.mxu0 %v1891
        %2007 = vmatprep.subr.mxu0 %v1888
        %2008 = vmatpush1.msra.mxu0 %v1887
        %2009 = vmatprep.subr.mxu0 %v1884
        %2010 = vmatpush1.msra.mxu0 %v1883
        %2011 = vmatprep.subr.mxu0 %v1880
        %2012 = vmatpush1.msra.mxu0 %v1879
        %2013 = vmatprep.subr.mxu0 %v1876
        %2014 = vmatpush1.msra.mxu0 %v1875
        %2015 = vmatprep.subr.mxu0 %v1872
        %2016 = vmatpush1.msra.mxu0 %v1871
        %2017 = vmatprep.subr.mxu0 %v1868
        %2018 = vmatpush1.msra.mxu0 %v1867
        %2019 = vmatprep.subr.mxu0 %v1864
        %2020 = vmatpush1.msra.mxu0 %v1863
        %2021 = vmatprep.subr.mxu0 %v1860
        %2022 = vmatpush1.msra.mxu0 %v1859
        %2023 = vmatprep.subr.mxu0 %v1856
        %2024 = vmatpush1.msra.mxu0 %v1855
        %2025 = vmatprep.subr.mxu0 %v1852
        %2026 = vmatpush1.msra.mxu0 %v1851
        %2027 = vmatprep.subr.mxu0 %v1848
        %2028 = vmatpush1.msra.mxu0 %v1847
        %2029 = vmatprep.subr.mxu0 %v1844
        %2030 = vmatpush1.msra.mxu0 %v1843
        %2031 = vmatprep.subr.mxu0 0.0
        %2032 = vmatpush2.msra.mxu0 0.0
        %2033 = vmatprep.subr.mxu0 0.0
        %2034 = vmatpush2.msra.mxu0 0.0
        %2035 = vmatprep.subr.mxu0 0.0
        %2036 = vmatpush2.msra.mxu0 0.0
        %2037 = vmatprep.subr.mxu0 0.0
        %2038 = vmatpush2.msra.mxu0 0.0
        %2039 = vmatprep.subr.mxu0 0.0
        %2040 = vmatpush2.msra.mxu0 0.0
        %2041 = vmatprep.subr.mxu0 0.0
        %2042 = vmatpush2.msra.mxu0 0.0
        %2043 = vmatprep.subr.mxu0 0.0
        %2044 = vmatpush2.msra.mxu0 0.0
        %2045 = vmatprep.subr.mxu0 0.0
        %2046 = vmatpush2.msra.mxu0 0.0
        %2047 = vmatprep.subr.mxu0 0.0
        %2048 = vmatpush2.msra.mxu0 0.0
        %2049 = vmatprep.subr.mxu0 0.0
        %2050 = vmatpush2.msra.mxu0 0.0
        %2051 = vmatprep.subr.mxu0 0.0
        %2052 = vmatpush2.msra.mxu0 0.0
        %2053 = vmatprep.subr.mxu0 0.0
        %2054 = vmatpush2.msra.mxu0 0.0
        %2055 = vmatprep.subr.mxu0 0.0
        %2056 = vmatpush2.msra.mxu0 0.0
        %2057 = vmatprep.subr.mxu0 0.0
        %2058 = vmatpush2.msra.mxu0 0.0
        %2059 = vmatprep.subr.mxu0 0.0
        %2060 = vmatpush2.msra.mxu0 0.0
        %2061 = vmatprep.subr.mxu0 0.0
        %2062 = vmatpush2.msra.mxu0 0.0
        %2063 = vmatprep.mubr.f32.mxu0 0.0
        %2064 = vmatmul.mubr.f32.gmra.mxu0 %v1692
        %v2065 = vpop.f32.mrf.mxu0
        %v2066 = vadd.f32 %v1919, %v2065
        %v2067 = vpop.f32.mrf.mxu0
        %v2068 = vadd.f32 %v1923, %v2067
        %2069 = vdwg.mxu0
        %v2070 = vmul.f32 %v1836, 0.25
        %v2071 = vmul.f32 %v1838, 0.25
        %2072 = vmatprep.subr.mxu0 0.0
        %2073 = vmatpush1.xpose.msra.mxu0 0.0
        %2074 = vmatprep.subr.mxu0 0.0
        %2075 = vmatpush1.xpose.msra.mxu0 0.0
        %2076 = vmatprep.subr.mxu0 0.0
        %2077 = vmatpush1.xpose.msra.mxu0 0.0
        %2078 = vmatprep.subr.mxu0 0.0
        %2079 = vmatpush1.xpose.msra.mxu0 0.0
        %2080 = vmatprep.subr.mxu0 0.0
        %2081 = vmatpush1.xpose.msra.mxu0 0.0
        %2082 = vmatprep.subr.mxu0 0.0
        %2083 = vmatpush1.xpose.msra.mxu0 0.0
        %2084 = vmatprep.subr.mxu0 0.0
        %2085 = vmatpush1.xpose.msra.mxu0 0.0
        %2086 = vmatprep.subr.mxu0 0.0
        %2087 = vmatpush1.xpose.msra.mxu0 0.0
        %2088 = vmatprep.subr.mxu0 0.0
        %2089 = vmatpush1.xpose.msra.mxu0 0.0
        %2090 = vmatprep.subr.mxu0 0.0
        %2091 = vmatpush1.xpose.msra.mxu0 0.0
        %2092 = vmatprep.subr.mxu0 0.0
        %2093 = vmatpush1.xpose.msra.mxu0 0.0
        %2094 = vmatprep.subr.mxu0 0.0
        %2095 = vmatpush1.xpose.msra.mxu0 0.0
        %2096 = vmatprep.subr.mxu0 0.0
        %2097 = vmatpush1.xpose.msra.mxu0 0.0
        %2098 = vmatprep.subr.mxu0 0.0
        %2099 = vmatpush1.xpose.msra.mxu0 0.0
        %2100 = vmatprep.subr.mxu0 0.0
        %2101 = vmatpush1.xpose.msra.mxu0 0.0
        %2102 = vmatprep.subr.mxu0 0.0
        %2103 = vmatpush1.xpose.msra.mxu0 %v1995
        %2104 = vmatprep.subr.mxu0 0.0
        %2105 = vmatpush2.xpose.msra.mxu0 0.0
        %2106 = vmatprep.subr.mxu0 0.0
        %2107 = vmatpush2.xpose.msra.mxu0 0.0
        %2108 = vmatprep.subr.mxu0 0.0
        %2109 = vmatpush2.xpose.msra.mxu0 0.0
        %2110 = vmatprep.subr.mxu0 0.0
        %2111 = vmatpush2.xpose.msra.mxu0 0.0
        %2112 = vmatprep.subr.mxu0 0.0
        %2113 = vmatpush2.xpose.msra.mxu0 0.0
        %2114 = vmatprep.subr.mxu0 0.0
        %2115 = vmatpush2.xpose.msra.mxu0 0.0
        %2116 = vmatprep.subr.mxu0 0.0
        %2117 = vmatpush2.xpose.msra.mxu0 0.0
        %2118 = vmatprep.subr.mxu0 0.0
        %2119 = vmatpush2.xpose.msra.mxu0 0.0
        %2120 = vmatprep.subr.mxu0 0.0
        %2121 = vmatpush2.xpose.msra.mxu0 0.0
        %2122 = vmatprep.subr.mxu0 0.0
        %2123 = vmatpush2.xpose.msra.mxu0 0.0
        %2124 = vmatprep.subr.mxu0 0.0
        %2125 = vmatpush2.xpose.msra.mxu0 0.0
        %2126 = vmatprep.subr.mxu0 0.0
        %2127 = vmatpush2.xpose.msra.mxu0 0.0
        %2128 = vmatprep.subr.mxu0 0.0
        %2129 = vmatpush2.xpose.msra.mxu0 0.0
        %2130 = vmatprep.subr.mxu0 0.0
        %2131 = vmatpush2.xpose.msra.mxu0 0.0
        %2132 = vmatprep.subr.mxu0 0.0
        %2133 = vmatpush2.xpose.msra.mxu0 0.0
        %2134 = vmatprep.subr.mxu0 0.0
        %2135 = vmatpush2.xpose.msra.mxu0 0.0
        %2136 = vmatprep.mubr.f32.mxu0 0.0
        %2137 = vmatmul.mubr.f32.gmra.mxu0 %v2070
        %v2138 = vpop.f32.mrf.mxu0
        %v2139 = vadd.f32 0.0, %v2138
        %v2140 = vpop.f32.mrf.mxu0
        %2141 = vdwg.mxu0
        %v2142 = vsel %vm671, %v2139, -1e+30
        %v2143 = vsel %vm1117, %v2142, -inf
        %2144 = vmax.xlane.f32.xlu0 %v2143
        %v2145 = vpop.xlane.xlu0 %2144
        %v2146 = vsub.f32 %v2142, %v2145
        %v2147 = vmul.f32 %v2146, 1.442695
        %v2148 = vpow.pop %v2147
        %v2149 = vsel %vm1117, %v2148, 0.0
        %2150 = vadd.xlane.f32.xlu0 %v2149
        %v2151 = vpop.xlane.xlu0 %2150
        %v2152 = vrcp.pop %v2151
        %v2153 = vmul.f32 %v2151, %v2152
        %v2154 = vsub.f32 2.0, %v2153
        %v2155 = vmul.f32 %v2152, %v2154
        %v2156 = vmul.f32 %v2148, %v2155
        %v2158 = vsel %vm1117, %v2156, 0
        %2160 = vmatprep.subr.mxu0 0.0
        %2161 = vmatpush1.msra.mxu0 0.0
        %2162 = vmatprep.subr.mxu0 0.0
        %2163 = vmatpush1.msra.mxu0 0.0
        %2164 = vmatprep.subr.mxu0 0.0
        %2165 = vmatpush1.msra.mxu0 0.0
        %2166 = vmatprep.subr.mxu0 0.0
        %2167 = vmatpush1.msra.mxu0 0.0
        %2168 = vmatprep.subr.mxu0 0.0
        %2169 = vmatpush1.msra.mxu0 0.0
        %2170 = vmatprep.subr.mxu0 0.0
        %2171 = vmatpush1.msra.mxu0 0.0
        %2172 = vmatprep.subr.mxu0 0.0
        %2173 = vmatpush1.msra.mxu0 0.0
        %2174 = vmatprep.subr.mxu0 0.0
        %2175 = vmatpush1.msra.mxu0 0.0
        %2176 = vmatprep.subr.mxu0 0.0
        %2177 = vmatpush1.msra.mxu0 0.0
        %2178 = vmatprep.subr.mxu0 0.0
        %2179 = vmatpush1.msra.mxu0 0.0
        %2180 = vmatprep.subr.mxu0 0.0
        %2181 = vmatpush1.msra.mxu0 0.0
        %2182 = vmatprep.subr.mxu0 0.0
        %2183 = vmatpush1.msra.mxu0 0.0
        %2184 = vmatprep.subr.mxu0 0.0
        %2185 = vmatpush1.msra.mxu0 0.0
        %2186 = vmatprep.subr.mxu0 0.0
        %2187 = vmatpush1.msra.mxu0 0.0
        %2188 = vmatprep.subr.mxu0 0.0
        %2189 = vmatpush1.msra.mxu0 0.0
        %2190 = vmatprep.subr.mxu0 0.0
        %2191 = vmatpush1.msra.mxu0 %v2066
        %2192 = vmatprep.subr.mxu0 0.0
        %2193 = vmatpush2.msra.mxu0 0.0
        %2194 = vmatprep.subr.mxu0 0.0
        %2195 = vmatpush2.msra.mxu0 0.0
        %2196 = vmatprep.subr.mxu0 0.0
        %2197 = vmatpush2.msra.mxu0 0.0
        %2198 = vmatprep.subr.mxu0 0.0
        %2199 = vmatpush2.msra.mxu0 0.0
        %2200 = vmatprep.subr.mxu0 0.0
        %2201 = vmatpush2.msra.mxu0 0.0
        %2202 = vmatprep.subr.mxu0 0.0
        %2203 = vmatpush2.msra.mxu0 0.0
        %2204 = vmatprep.subr.mxu0 0.0
        %2205 = vmatpush2.msra.mxu0 0.0
        %2206 = vmatprep.subr.mxu0 0.0
        %2207 = vmatpush2.msra.mxu0 0.0
        %2208 = vmatprep.subr.mxu0 0.0
        %2209 = vmatpush2.msra.mxu0 0.0
        %2210 = vmatprep.subr.mxu0 0.0
        %2211 = vmatpush2.msra.mxu0 0.0
        %2212 = vmatprep.subr.mxu0 0.0
        %2213 = vmatpush2.msra.mxu0 0.0
        %2214 = vmatprep.subr.mxu0 0.0
        %2215 = vmatpush2.msra.mxu0 0.0
        %2216 = vmatprep.subr.mxu0 0.0
        %2217 = vmatpush2.msra.mxu0 0.0
        %2218 = vmatprep.subr.mxu0 0.0
        %2219 = vmatpush2.msra.mxu0 0.0
        %2220 = vmatprep.subr.mxu0 0.0
        %2221 = vmatpush2.msra.mxu0 0.0
        %2222 = vmatprep.subr.mxu0 0.0
        %2223 = vmatpush2.msra.mxu0 0.0
        %2224 = vmatprep.mubr.f32.mxu0 0.0
        %2225 = vmatmul.mubr.f32.gmra.mxu0 %v2158
        %v2226 = vpop.f32.mrf.mxu0
        %v2227 = vadd.f32 0.0, %v2226
        %v2228 = vpop.f32.mrf.mxu0
        %2229 = vdwg.mxu0
        %2230 = vst [vmem:[#allocation2] sm:$0xff] %v2227
        %2231 = vmatprep.subr.mxu0 0.0
        %2232 = vmatpush1.xpose.msra.mxu0 0.0
        %2233 = vmatprep.subr.mxu0 0.0
        %2234 = vmatpush1.xpose.msra.mxu0 0.0
        %2235 = vmatprep.subr.mxu0 0.0
        %2236 = vmatpush1.xpose.msra.mxu0 0.0
        %2237 = vmatprep.subr.mxu0 0.0
        %2238 = vmatpush1.xpose.msra.mxu0 0.0
        %2239 = vmatprep.subr.mxu0 0.0
        %2240 = vmatpush1.xpose.msra.mxu0 0.0
        %2241 = vmatprep.subr.mxu0 0.0
        %2242 = vmatpush1.xpose.msra.mxu0 0.0
        %2243 = vmatprep.subr.mxu0 0.0
        %2244 = vmatpush1.xpose.msra.mxu0 0.0
        %2245 = vmatprep.subr.mxu0 0.0
        %2246 = vmatpush1.xpose.msra.mxu0 0.0
        %2247 = vmatprep.subr.mxu0 0.0
        %2248 = vmatpush1.xpose.msra.mxu0 0.0
        %2249 = vmatprep.subr.mxu0 0.0
        %2250 = vmatpush1.xpose.msra.mxu0 0.0
        %2251 = vmatprep.subr.mxu0 0.0
        %2252 = vmatpush1.xpose.msra.mxu0 0.0
        %2253 = vmatprep.subr.mxu0 0.0
        %2254 = vmatpush1.xpose.msra.mxu0 0.0
        %2255 = vmatprep.subr.mxu0 0.0
        %2256 = vmatpush1.xpose.msra.mxu0 0.0
        %2257 = vmatprep.subr.mxu0 0.0
        %2258 = vmatpush1.xpose.msra.mxu0 0.0
        %2259 = vmatprep.subr.mxu0 0.0
        %2260 = vmatpush1.xpose.msra.mxu0 0.0
        %2261 = vmatprep.subr.mxu0 0.0
        %2262 = vmatpush1.xpose.msra.mxu0 %v1997
        %2263 = vmatprep.subr.mxu0 0.0
        %2264 = vmatpush2.xpose.msra.mxu0 0.0
        %2265 = vmatprep.subr.mxu0 0.0
        %2266 = vmatpush2.xpose.msra.mxu0 0.0
        %2267 = vmatprep.subr.mxu0 0.0
        %2268 = vmatpush2.xpose.msra.mxu0 0.0
        %2269 = vmatprep.subr.mxu0 0.0
        %2270 = vmatpush2.xpose.msra.mxu0 0.0
        %2271 = vmatprep.subr.mxu0 0.0
        %2272 = vmatpush2.xpose.msra.mxu0 0.0
        %2273 = vmatprep.subr.mxu0 0.0
        %2274 = vmatpush2.xpose.msra.mxu0 0.0
        %2275 = vmatprep.subr.mxu0 0.0
        %2276 = vmatpush2.xpose.msra.mxu0 0.0
        %2277 = vmatprep.subr.mxu0 0.0
        %2278 = vmatpush2.xpose.msra.mxu0 0.0
        %2279 = vmatprep.subr.mxu0 0.0
        %2280 = vmatpush2.xpose.msra.mxu0 0.0
        %2281 = vmatprep.subr.mxu0 0.0
        %2282 = vmatpush2.xpose.msra.mxu0 0.0
        %2283 = vmatprep.subr.mxu0 0.0
        %2284 = vmatpush2.xpose.msra.mxu0 0.0
        %2285 = vmatprep.subr.mxu0 0.0
        %2286 = vmatpush2.xpose.msra.mxu0 0.0
        %2287 = vmatprep.subr.mxu0 0.0
        %2288 = vmatpush2.xpose.msra.mxu0 0.0
        %2289 = vmatprep.subr.mxu0 0.0
        %2290 = vmatpush2.xpose.msra.mxu0 0.0
        %2291 = vmatprep.subr.mxu0 0.0
        %2292 = vmatpush2.xpose.msra.mxu0 0.0
        %2293 = vmatprep.subr.mxu0 0.0
        %2294 = vmatpush2.xpose.msra.mxu0 0.0
        %2295 = vmatprep.mubr.f32.mxu0 0.0
        %2296 = vmatmul.mubr.f32.gmra.mxu0 %v2071
        %v2297 = vpop.f32.mrf.mxu0
        %v2298 = vadd.f32 0.0, %v2297
        %v2299 = vpop.f32.mrf.mxu0
        %2300 = vdwg.mxu0
        %v2301 = vsel %vm671, %v2298, -1e+30
        %v2302 = vsel %vm1117, %v2301, -inf
        %2303 = vmax.xlane.f32.xlu0 %v2302
        %v2304 = vpop.xlane.xlu0 %2303
        %v2305 = vsub.f32 %v2301, %v2304
        %v2306 = vmul.f32 %v2305, 1.442695
        %v2307 = vpow.pop %v2306
        %v2308 = vsel %vm1117, %v2307, 0.0
        %2309 = vadd.xlane.f32.xlu0 %v2308
        %v2310 = vpop.xlane.xlu0 %2309
        %v2311 = vrcp.pop %v2310
        %v2312 = vmul.f32 %v2310, %v2311
        %v2313 = vsub.f32 2.0, %v2312
        %v2314 = vmul.f32 %v2311, %v2313
        %v2315 = vmul.f32 %v2307, %v2314
        %v2317 = vsel %vm1117, %v2315, 0
        %2319 = vmatprep.subr.mxu0 0.0
        %2320 = vmatpush1.msra.mxu0 0.0
        %2321 = vmatprep.subr.mxu0 0.0
        %2322 = vmatpush1.msra.mxu0 0.0
        %2323 = vmatprep.subr.mxu0 0.0
        %2324 = vmatpush1.msra.mxu0 0.0
        %2325 = vmatprep.subr.mxu0 0.0
        %2326 = vmatpush1.msra.mxu0 0.0
        %2327 = vmatprep.subr.mxu0 0.0
        %2328 = vmatpush1.msra.mxu0 0.0
        %2329 = vmatprep.subr.mxu0 0.0
        %2330 = vmatpush1.msra.mxu0 0.0
        %2331 = vmatprep.subr.mxu0 0.0
        %2332 = vmatpush1.msra.mxu0 0.0
        %2333 = vmatprep.subr.mxu0 0.0
        %2334 = vmatpush1.msra.mxu0 0.0
        %2335 = vmatprep.subr.mxu0 0.0
        %2336 = vmatpush1.msra.mxu0 0.0
        %2337 = vmatprep.subr.mxu0 0.0
        %2338 = vmatpush1.msra.mxu0 0.0
        %2339 = vmatprep.subr.mxu0 0.0
        %2340 = vmatpush1.msra.mxu0 0.0
        %2341 = vmatprep.subr.mxu0 0.0
        %2342 = vmatpush1.msra.mxu0 0.0
        %2343 = vmatprep.subr.mxu0 0.0
        %2344 = vmatpush1.msra.mxu0 0.0
        %2345 = vmatprep.subr.mxu0 0.0
        %2346 = vmatpush1.msra.mxu0 0.0
        %2347 = vmatprep.subr.mxu0 0.0
        %2348 = vmatpush1.msra.mxu0 0.0
        %2349 = vmatprep.subr.mxu0 0.0
        %2350 = vmatpush1.msra.mxu0 %v2068
        %2351 = vmatprep.subr.mxu0 0.0
        %2352 = vmatpush2.msra.mxu0 0.0
        %2353 = vmatprep.subr.mxu0 0.0
        %2354 = vmatpush2.msra.mxu0 0.0
        %2355 = vmatprep.subr.mxu0 0.0
        %2356 = vmatpush2.msra.mxu0 0.0
        %2357 = vmatprep.subr.mxu0 0.0
        %2358 = vmatpush2.msra.mxu0 0.0
        %2359 = vmatprep.subr.mxu0 0.0
        %2360 = vmatpush2.msra.mxu0 0.0
        %2361 = vmatprep.subr.mxu0 0.0
        %2362 = vmatpush2.msra.mxu0 0.0
        %2363 = vmatprep.subr.mxu0 0.0
        %2364 = vmatpush2.msra.mxu0 0.0
        %2365 = vmatprep.subr.mxu0 0.0
        %2366 = vmatpush2.msra.mxu0 0.0
        %2367 = vmatprep.subr.mxu0 0.0
        %2368 = vmatpush2.msra.mxu0 0.0
        %2369 = vmatprep.subr.mxu0 0.0
        %2370 = vmatpush2.msra.mxu0 0.0
        %2371 = vmatprep.subr.mxu0 0.0
        %2372 = vmatpush2.msra.mxu0 0.0
        %2373 = vmatprep.subr.mxu0 0.0
        %2374 = vmatpush2.msra.mxu0 0.0
        %2375 = vmatprep.subr.mxu0 0.0
        %2376 = vmatpush2.msra.mxu0 0.0
        %2377 = vmatprep.subr.mxu0 0.0
        %2378 = vmatpush2.msra.mxu0 0.0
        %2379 = vmatprep.subr.mxu0 0.0
        %2380 = vmatpush2.msra.mxu0 0.0
        %2381 = vmatprep.subr.mxu0 0.0
        %2382 = vmatpush2.msra.mxu0 0.0
        %2383 = vmatprep.mubr.f32.mxu0 0.0
        %2384 = vmatmul.mubr.f32.gmra.mxu0 %v2317
        %v2385 = vpop.f32.mrf.mxu0
        %v2386 = vadd.f32 0.0, %v2385
        %v2387 = vpop.f32.mrf.mxu0
        %2388 = vdwg.mxu0
        %2389 = vst [vmem:[#allocation2 + $0x8] sm:$0xff] %v2386
        %v2390 = vld [vmem:[#allocation2] sm:$0xff]
        %v2391 = vld [vmem:[#allocation2 + $0x8] sm:$0xff]
        %s2392 = scalar_lea.vmem [#allocation12], 256
        %v2393 = vld [vmem:[%s2392] sm:$0xff]
        %v2394 = vld [vmem:[%s2392 + $0x8] sm:$0xff]
        %v2395 = vld [vmem:[%s2392 + $0x10] sm:$0xff]
        %v2396 = vld [vmem:[%s2392 + $0x18] sm:$0xff]
        %v2397 = vld [vmem:[%s2392 + $0x20] sm:$0xff]
        %v2398 = vld [vmem:[%s2392 + $0x28] sm:$0xff]
        %v2399 = vld [vmem:[%s2392 + $0x30] sm:$0xff]
        %v2400 = vld [vmem:[%s2392 + $0x38] sm:$0xff]
        %v2401 = vld [vmem:[%s2392 + $0x40] sm:$0xff]
        %v2402 = vld [vmem:[%s2392 + $0x48] sm:$0xff]
        %v2403 = vld [vmem:[%s2392 + $0x50] sm:$0xff]
        %v2404 = vld [vmem:[%s2392 + $0x58] sm:$0xff]
        %v2405 = vld [vmem:[%s2392 + $0x60] sm:$0xff]
        %v2406 = vld [vmem:[%s2392 + $0x68] sm:$0xff]
        %v2407 = vld [vmem:[%s2392 + $0x70] sm:$0xff]
        %v2408 = vld [vmem:[%s2392 + $0x78] sm:$0xff]
        %v2409 = vld [vmem:[%s2392 + $0x80] sm:$0xff]
        %v2410 = vld [vmem:[%s2392 + $0x88] sm:$0xff]
        %v2411 = vld [vmem:[%s2392 + $0x90] sm:$0xff]
        %v2412 = vld [vmem:[%s2392 + $0x98] sm:$0xff]
        %v2413 = vld [vmem:[%s2392 + $0xa0] sm:$0xff]
        %v2414 = vld [vmem:[%s2392 + $0xa8] sm:$0xff]
        %v2415 = vld [vmem:[%s2392 + $0xb0] sm:$0xff]
        %v2416 = vld [vmem:[%s2392 + $0xb8] sm:$0xff]
        %v2417 = vld [vmem:[%s2392 + $0xc0] sm:$0xff]
        %v2418 = vld [vmem:[%s2392 + $0xc8] sm:$0xff]
        %v2419 = vld [vmem:[%s2392 + $0xd0] sm:$0xff]
        %v2420 = vld [vmem:[%s2392 + $0xd8] sm:$0xff]
        %v2421 = vld [vmem:[%s2392 + $0xe0] sm:$0xff]
        %v2422 = vld [vmem:[%s2392 + $0xe8] sm:$0xff]
        %v2423 = vld [vmem:[%s2392 + $0xf0] sm:$0xff]
        %v2424 = vld [vmem:[%s2392 + $0xf8] sm:$0xff]
        %s2425 = scalar_lea.vmem %s8, 1
        %v2426 = vld [vmem:[%s2425] sm:$0x1]
        %v2428 = vlaneseq
        %v2429 = vshrl.u32 %v2428, 7
        %v2430 = vsub.s32 0, %v2429
        %v2431 = vrot.slane %v2426, %v2430
        %2433 = vmatprep.subr.mxu0 0.0
        %2434 = vmatpush1.msra.mxu0 %v2408
        %2435 = vmatprep.subr.mxu0 0.0
        %2436 = vmatpush1.msra.mxu0 %v2407
        %2437 = vmatprep.subr.mxu0 0.0
        %2438 = vmatpush1.msra.mxu0 %v2406
        %2439 = vmatprep.subr.mxu0 0.0
        %2440 = vmatpush1.msra.mxu0 %v2405
        %2441 = vmatprep.subr.mxu0 0.0
        %2442 = vmatpush1.msra.mxu0 %v2404
        %2443 = vmatprep.subr.mxu0 0.0
        %2444 = vmatpush1.msra.mxu0 %v2403
        %2445 = vmatprep.subr.mxu0 0.0
        %2446 = vmatpush1.msra.mxu0 %v2402
        %2447 = vmatprep.subr.mxu0 0.0
        %2448 = vmatpush1.msra.mxu0 %v2401
        %2449 = vmatprep.subr.mxu0 0.0
        %2450 = vmatpush1.msra.mxu0 %v2400
        %2451 = vmatprep.subr.mxu0 0.0
        %2452 = vmatpush1.msra.mxu0 %v2399
        %2453 = vmatprep.subr.mxu0 0.0
        %2454 = vmatpush1.msra.mxu0 %v2398
        %2455 = vmatprep.subr.mxu0 0.0
        %2456 = vmatpush1.msra.mxu0 %v2397
        %2457 = vmatprep.subr.mxu0 0.0
        %2458 = vmatpush1.msra.mxu0 %v2396
        %2459 = vmatprep.subr.mxu0 0.0
        %2460 = vmatpush1.msra.mxu0 %v2395
        %2461 = vmatprep.subr.mxu0 0.0
        %2462 = vmatpush1.msra.mxu0 %v2394
        %2463 = vmatprep.subr.mxu0 0.0
        %2464 = vmatpush1.msra.mxu0 %v2393
        %2465 = vmatprep.subr.mxu0 0.0
        %2466 = vmatpush2.msra.mxu0 %v2424
        %2467 = vmatprep.subr.mxu0 0.0
        %2468 = vmatpush2.msra.mxu0 %v2423
        %2469 = vmatprep.subr.mxu0 0.0
        %2470 = vmatpush2.msra.mxu0 %v2422
        %2471 = vmatprep.subr.mxu0 0.0
        %2472 = vmatpush2.msra.mxu0 %v2421
        %2473 = vmatprep.subr.mxu0 0.0
        %2474 = vmatpush2.msra.mxu0 %v2420
        %2475 = vmatprep.subr.mxu0 0.0
        %2476 = vmatpush2.msra.mxu0 %v2419
        %2477 = vmatprep.subr.mxu0 0.0
        %2478 = vmatpush2.msra.mxu0 %v2418
        %2479 = vmatprep.subr.mxu0 0.0
        %2480 = vmatpush2.msra.mxu0 %v2417
        %2481 = vmatprep.subr.mxu0 0.0
        %2482 = vmatpush2.msra.mxu0 %v2416
        %2483 = vmatprep.subr.mxu0 0.0
        %2484 = vmatpush2.msra.mxu0 %v2415
        %2485 = vmatprep.subr.mxu0 0.0
        %2486 = vmatpush2.msra.mxu0 %v2414
        %2487 = vmatprep.subr.mxu0 0.0
        %2488 = vmatpush2.msra.mxu0 %v2413
        %2489 = vmatprep.subr.mxu0 0.0
        %2490 = vmatpush2.msra.mxu0 %v2412
        %2491 = vmatprep.subr.mxu0 0.0
        %2492 = vmatpush2.msra.mxu0 %v2411
        %2493 = vmatprep.subr.mxu0 0.0
        %2494 = vmatpush2.msra.mxu0 %v2410
        %2495 = vmatprep.subr.mxu0 0.0
        %2496 = vmatpush2.msra.mxu0 %v2409
        %2497 = vmatprep.mubr.f32.mxu0 %v2391
        %2498 = vmatmul.mubr.f32.gmra.mxu0 %v2390
        %v2499 = vpop.f32.mrf.mxu0
        %v2500 = vadd.f32 %v2431, %v2499
        %v2501 = vpop.f32.mrf.mxu0
        %2502 = vdwg.mxu0
        %v2503 = vadd.f32 %v1722, %v2500
        %s2504 = scalar_lea.vmem %s9, 1
        %v2505 = vld [vmem:[%s2504] sm:$0x1]
        %s2506 = scalar_lea.vmem %s10, 1
        %v2507 = vld [vmem:[%s2506] sm:$0x1]
        %2508 = vadd.xlane.f32.xlu0 %v2503
        %v2509 = vpop.xlane.xlu0 %2508
        %v2510 = vmul.f32 %v2509, 0.03125
        %v2511 = vsub.f32 %v2503, %v2510
        %v2512 = vsel %vm668, %v2511, 0.0
        %v2513 = vmul.f32 %v2512, %v2512
        %2514 = vadd.xlane.f32.xlu0 %v2513
        %v2515 = vpop.xlane.xlu0 %2514
        %v2516 = vmul.f32 %v2515, 0.03125
        %v2517 = vadd.f32 %v2516, 1e-08
        %v2518 = vrsqrt.pop %v2517
        %v2519 = vmul.f32 %v2512, %v2518
        %v2521 = vlaneseq
        %v2522 = vshrl.u32 %v2521, 7
        %v2523 = vsub.s32 0, %v2522
        %v2524 = vrot.slane %v2505, %v2523
        %v2526 = vmul.f32 %v2519, %v2524
        %v2528 = vlaneseq
        %v2529 = vshrl.u32 %v2528, 7
        %v2530 = vsub.s32 0, %v2529
        %v2531 = vrot.slane %v2507, %v2530
        %v2533 = vadd.f32 %v2526, %v2531
        %s2534 = scalar_lea.vmem [#allocation14], 128
        %v2535 = vld [vmem:[%s2534] sm:$0xff]
        %v2536 = vld [vmem:[%s2534 + $0x8] sm:$0xff]
        %v2537 = vld [vmem:[%s2534 + $0x10] sm:$0xff]
        %v2538 = vld [vmem:[%s2534 + $0x18] sm:$0xff]
        %v2539 = vld [vmem:[%s2534 + $0x20] sm:$0xff]
        %v2540 = vld [vmem:[%s2534 + $0x28] sm:$0xff]
        %v2541 = vld [vmem:[%s2534 + $0x30] sm:$0xff]
        %v2542 = vld [vmem:[%s2534 + $0x38] sm:$0xff]
        %v2543 = vld [vmem:[%s2534 + $0x40] sm:$0xff]
        %v2544 = vld [vmem:[%s2534 + $0x48] sm:$0xff]
        %v2545 = vld [vmem:[%s2534 + $0x50] sm:$0xff]
        %v2546 = vld [vmem:[%s2534 + $0x58] sm:$0xff]
        %v2547 = vld [vmem:[%s2534 + $0x60] sm:$0xff]
        %v2548 = vld [vmem:[%s2534 + $0x68] sm:$0xff]
        %v2549 = vld [vmem:[%s2534 + $0x70] sm:$0xff]
        %v2550 = vld [vmem:[%s2534 + $0x78] sm:$0xff]
        %s2551 = scalar_lea.vmem %s12, 1
        %v2552 = vld [vmem:[%s2551] sm:$0x1]
        %v2554 = vlaneseq
        %v2555 = vshrl.u32 %v2554, 7
        %v2556 = vsub.s32 0, %v2555
        %v2557 = vrot.slane %v2552, %v2556
        %2559 = vmatprep.subr.mxu0 0.0
        %2560 = vmatpush1.msra.mxu0 %v2550
        %2561 = vmatprep.subr.mxu0 0.0
        %2562 = vmatpush1.msra.mxu0 %v2549
        %2563 = vmatprep.subr.mxu0 0.0
        %2564 = vmatpush1.msra.mxu0 %v2548
        %2565 = vmatprep.subr.mxu0 0.0
        %2566 = vmatpush1.msra.mxu0 %v2547
        %2567 = vmatprep.subr.mxu0 0.0
        %2568 = vmatpush1.msra.mxu0 %v2546
        %2569 = vmatprep.subr.mxu0 0.0
        %2570 = vmatpush1.msra.mxu0 %v2545
        %2571 = vmatprep.subr.mxu0 0.0
        %2572 = vmatpush1.msra.mxu0 %v2544
        %2573 = vmatprep.subr.mxu0 0.0
        %2574 = vmatpush1.msra.mxu0 %v2543
        %2575 = vmatprep.subr.mxu0 0.0
        %2576 = vmatpush1.msra.mxu0 %v2542
        %2577 = vmatprep.subr.mxu0 0.0
        %2578 = vmatpush1.msra.mxu0 %v2541
        %2579 = vmatprep.subr.mxu0 0.0
        %2580 = vmatpush1.msra.mxu0 %v2540
        %2581 = vmatprep.subr.mxu0 0.0
        %2582 = vmatpush1.msra.mxu0 %v2539
        %2583 = vmatprep.subr.mxu0 0.0
        %2584 = vmatpush1.msra.mxu0 %v2538
        %2585 = vmatprep.subr.mxu0 0.0
        %2586 = vmatpush1.msra.mxu0 %v2537
        %2587 = vmatprep.subr.mxu0 0.0
        %2588 = vmatpush1.msra.mxu0 %v2536
        %2589 = vmatprep.subr.mxu0 0.0
        %2590 = vmatpush1.msra.mxu0 %v2535
        %2591 = vmatprep.subr.mxu0 0.0
        %2592 = vmatpush2.msra.mxu0 0.0
        %2593 = vmatprep.subr.mxu0 0.0
        %2594 = vmatpush2.msra.mxu0 0.0
        %2595 = vmatprep.subr.mxu0 0.0
        %2596 = vmatpush2.msra.mxu0 0.0
        %2597 = vmatprep.subr.mxu0 0.0
        %2598 = vmatpush2.msra.mxu0 0.0
        %2599 = vmatprep.subr.mxu0 0.0
        %2600 = vmatpush2.msra.mxu0 0.0
        %2601 = vmatprep.subr.mxu0 0.0
        %2602 = vmatpush2.msra.mxu0 0.0
        %2603 = vmatprep.subr.mxu0 0.0
        %2604 = vmatpush2.msra.mxu0 0.0
        %2605 = vmatprep.subr.mxu0 0.0
        %2606 = vmatpush2.msra.mxu0 0.0
        %2607 = vmatprep.subr.mxu0 0.0
        %2608 = vmatpush2.msra.mxu0 0.0
        %2609 = vmatprep.subr.mxu0 0.0
        %2610 = vmatpush2.msra.mxu0 0.0
        %2611 = vmatprep.subr.mxu0 0.0
        %2612 = vmatpush2.msra.mxu0 0.0
        %2613 = vmatprep.subr.mxu0 0.0
        %2614 = vmatpush2.msra.mxu0 0.0
        %2615 = vmatprep.subr.mxu0 0.0
        %2616 = vmatpush2.msra.mxu0 0.0
        %2617 = vmatprep.subr.mxu0 0.0
        %2618 = vmatpush2.msra.mxu0 0.0
        %2619 = vmatprep.subr.mxu0 0.0
        %2620 = vmatpush2.msra.mxu0 0.0
        %2621 = vmatprep.subr.mxu0 0.0
        %2622 = vmatpush2.msra.mxu0 0.0
        %2623 = vmatprep.mubr.f32.mxu0 0.0
        %2624 = vmatmul.mubr.f32.gmra.mxu0 %v2533
        %v2625 = vpop.f32.mrf.mxu0
        %v2626 = vadd.f32 %v2557, %v2625
        %v2627 = vpop.f32.mrf.mxu0
        %2628 = vdwg.mxu0
        %v2629 = vmax.f32 %v2626, 0.0
        %s2630 = scalar_lea.vmem [#allocation15], 128
        %v2631 = vld [vmem:[%s2630] sm:$0xff]
        %v2632 = vld [vmem:[%s2630 + $0x8] sm:$0xff]
        %v2633 = vld [vmem:[%s2630 + $0x10] sm:$0xff]
        %v2634 = vld [vmem:[%s2630 + $0x18] sm:$0xff]
        %v2635 = vld [vmem:[%s2630 + $0x20] sm:$0xff]
        %v2636 = vld [vmem:[%s2630 + $0x28] sm:$0xff]
        %v2637 = vld [vmem:[%s2630 + $0x30] sm:$0xff]
        %v2638 = vld [vmem:[%s2630 + $0x38] sm:$0xff]
        %v2639 = vld [vmem:[%s2630 + $0x40] sm:$0xff]
        %v2640 = vld [vmem:[%s2630 + $0x48] sm:$0xff]
        %v2641 = vld [vmem:[%s2630 + $0x50] sm:$0xff]
        %v2642 = vld [vmem:[%s2630 + $0x58] sm:$0xff]
        %v2643 = vld [vmem:[%s2630 + $0x60] sm:$0xff]
        %v2644 = vld [vmem:[%s2630 + $0x68] sm:$0xff]
        %v2645 = vld [vmem:[%s2630 + $0x70] sm:$0xff]
        %v2646 = vld [vmem:[%s2630 + $0x78] sm:$0xff]
        %s2647 = scalar_lea.vmem %s14, 1
        %v2648 = vld [vmem:[%s2647] sm:$0x1]
        %v2650 = vlaneseq
        %v2651 = vshrl.u32 %v2650, 7
        %v2652 = vsub.s32 0, %v2651
        %v2653 = vrot.slane %v2648, %v2652
        %2655 = vmatprep.subr.mxu0 0.0
        %2656 = vmatpush1.msra.mxu0 %v2646
        %2657 = vmatprep.subr.mxu0 0.0
        %2658 = vmatpush1.msra.mxu0 %v2645
        %2659 = vmatprep.subr.mxu0 0.0
        %2660 = vmatpush1.msra.mxu0 %v2644
        %2661 = vmatprep.subr.mxu0 0.0
        %2662 = vmatpush1.msra.mxu0 %v2643
        %2663 = vmatprep.subr.mxu0 0.0
        %2664 = vmatpush1.msra.mxu0 %v2642
        %2665 = vmatprep.subr.mxu0 0.0
        %2666 = vmatpush1.msra.mxu0 %v2641
        %2667 = vmatprep.subr.mxu0 0.0
        %2668 = vmatpush1.msra.mxu0 %v2640
        %2669 = vmatprep.subr.mxu0 0.0
        %2670 = vmatpush1.msra.mxu0 %v2639
        %2671 = vmatprep.subr.mxu0 0.0
        %2672 = vmatpush1.msra.mxu0 %v2638
        %2673 = vmatprep.subr.mxu0 0.0
        %2674 = vmatpush1.msra.mxu0 %v2637
        %2675 = vmatprep.subr.mxu0 0.0
        %2676 = vmatpush1.msra.mxu0 %v2636
        %2677 = vmatprep.subr.mxu0 0.0
        %2678 = vmatpush1.msra.mxu0 %v2635
        %2679 = vmatprep.subr.mxu0 0.0
        %2680 = vmatpush1.msra.mxu0 %v2634
        %2681 = vmatprep.subr.mxu0 0.0
        %2682 = vmatpush1.msra.mxu0 %v2633
        %2683 = vmatprep.subr.mxu0 0.0
        %2684 = vmatpush1.msra.mxu0 %v2632
        %2685 = vmatprep.subr.mxu0 0.0
        %2686 = vmatpush1.msra.mxu0 %v2631
        %2687 = vmatprep.subr.mxu0 0.0
        %2688 = vmatpush2.msra.mxu0 0.0
        %2689 = vmatprep.subr.mxu0 0.0
        %2690 = vmatpush2.msra.mxu0 0.0
        %2691 = vmatprep.subr.mxu0 0.0
        %2692 = vmatpush2.msra.mxu0 0.0
        %2693 = vmatprep.subr.mxu0 0.0
        %2694 = vmatpush2.msra.mxu0 0.0
        %2695 = vmatprep.subr.mxu0 0.0
        %2696 = vmatpush2.msra.mxu0 0.0
        %2697 = vmatprep.subr.mxu0 0.0
        %2698 = vmatpush2.msra.mxu0 0.0
        %2699 = vmatprep.subr.mxu0 0.0
        %2700 = vmatpush2.msra.mxu0 0.0
        %2701 = vmatprep.subr.mxu0 0.0
        %2702 = vmatpush2.msra.mxu0 0.0
        %2703 = vmatprep.subr.mxu0 0.0
        %2704 = vmatpush2.msra.mxu0 0.0
        %2705 = vmatprep.subr.mxu0 0.0
        %2706 = vmatpush2.msra.mxu0 0.0
        %2707 = vmatprep.subr.mxu0 0.0
        %2708 = vmatpush2.msra.mxu0 0.0
        %2709 = vmatprep.subr.mxu0 0.0
        %2710 = vmatpush2.msra.mxu0 0.0
        %2711 = vmatprep.subr.mxu0 0.0
        %2712 = vmatpush2.msra.mxu0 0.0
        %2713 = vmatprep.subr.mxu0 0.0
        %2714 = vmatpush2.msra.mxu0 0.0
        %2715 = vmatprep.subr.mxu0 0.0
        %2716 = vmatpush2.msra.mxu0 0.0
        %2717 = vmatprep.subr.mxu0 0.0
        %2718 = vmatpush2.msra.mxu0 0.0
        %2719 = vmatprep.mubr.f32.mxu0 0.0
        %2720 = vmatmul.mubr.f32.gmra.mxu0 %v2629
        %v2721 = vpop.f32.mrf.mxu0
        %v2722 = vadd.f32 %v2653, %v2721
        %v2723 = vpop.f32.mrf.mxu0
        %2724 = vdwg.mxu0
        %v2725 = vadd.f32 %v2533, %v2722
        %v2726 = vld [vmem:[%s15] sm:$0x1]
        %v2727 = vld [vmem:[%s16] sm:$0x1]
        %2728 = vadd.xlane.f32.xlu0 %v2725
        %v2729 = vpop.xlane.xlu0 %2728
        %v2730 = vmul.f32 %v2729, 0.03125
        %v2731 = vsub.f32 %v2725, %v2730
        %v2732 = vsel %vm668, %v2731, 0.0
        %v2733 = vmul.f32 %v2732, %v2732
        %2734 = vadd.xlane.f32.xlu0 %v2733
        %v2735 = vpop.xlane.xlu0 %2734
        %v2736 = vmul.f32 %v2735, 0.03125
        %v2737 = vadd.f32 %v2736, 1e-08
        %v2738 = vrsqrt.pop %v2737
        %v2739 = vmul.f32 %v2732, %v2738
        %v2741 = vlaneseq
        %v2742 = vshrl.u32 %v2741, 7
        %v2743 = vsub.s32 0, %v2742
        %v2744 = vrot.slane %v2726, %v2743
        %v2746 = vmul.f32 %v2739, %v2744
        %v2748 = vlaneseq
        %v2749 = vshrl.u32 %v2748, 7
        %v2750 = vsub.s32 0, %v2749
        %v2751 = vrot.slane %v2727, %v2750
        %v2753 = vadd.f32 %v2746, %v2751
        %2754 = vst [vmem:[%s665] sm:$0xff] %v2753
        %s2755 = sand.u32 %s408, 1
        %s2756 = scalar_lea.sflag [#allocation5], %s2755
        %s2757 = sand.u32 %s408, 1
        %s2758 = smul.addr %s2757, 8
        %s2759 = scalar_lea.vmem [#allocation17], %s2758
        // Predicated region
        $region121: #{tpu_custom_call.1} parent=87 // pred_check
          %p2760 = pneg %p418
        $region122: #{tpu_custom_call.1} parent=87 // pred_check_branch
          %2762 = sbr.rel (%p2760) target = $region124
        $region123: #{tpu_custom_call.1} parent=87 // pred_region
          %s2764 = ssub.s32 128, 128
          %2765 = vsyncadd %s2756, %s2764
          %s2766 = smul.addr %s38, 128
          %s2767 = scalar_lea.hbm %s17, %s2766
          %s2769 = sshll.u32 %s2759, 4
          %s2770 = int_to_ptr.vmem [resolvable:$true] %s2769
          %2772 = dma.vmem_to_hbm [thread:$0]  %s2770, 128, %s2767, %s2756
        $region124: #{tpu_custom_call.1} parent=87 // pred_fallthru
          _
      $region88: #{tpu_custom_call.1} parent=5 // pred_fallthru
        _
      %p2773 = scmp.le.s32.totalorder 2, %s33
      // Predicated region
      $region125: #{tpu_custom_call.1} parent=5 // pred_check
        %p2774 = pneg %p2773
      $region126: #{tpu_custom_call.1} parent=5 // pred_check_branch
        %2776 = sbr.rel (%p2774) target = $region128
      $region127: #{tpu_custom_call.1} parent=5 // pred_region
        %s2777 = ssub.s32 %s33, 2
        // Predicated region
        $region129: #{tpu_custom_call.1} parent=127 // pred_check
          %p2778 = pneg %p424
        $region130: #{tpu_custom_call.1} parent=127 // pred_check_branch
          %2780 = sbr.rel (%p2778) target = $region132
        $region131: #{tpu_custom_call.1} parent=127 // pred_region
          %s2781 = sand.u32 %s409, 1
          %s2782 = scalar_lea.sflag [#allocation5], %s2781
          %s2783 = sand.u32 %s409, 1
          %s2784 = smul.addr %s2783, 8
          %s2785 = scalar_lea.vmem [#allocation17], %s2784
          %2786 = dma.done %s2782, 128
        $region132: #{tpu_custom_call.1} parent=127 // pred_fallthru
          _
      $region128: #{tpu_custom_call.1} parent=5 // pred_fallthru
        _
    $region6: #{tpu_custom_call.1} parent=1 // loop_footer
      %s37 = sadd.s32 1, %s33
    $region7: #{tpu_custom_call.1} parent=1 // loop_footer_branch
      %32 = sbr.rel target = $region3
    $region8: #{tpu_custom_call.1} parent=1 // loop_exit
      _
    %2787 = vsyncpa [#allocation4], 1
    %s2788 = scalar_lea.sflag [#allocation4], 1
    %2789 = vsyncpa %s2788, 1
    %2790 = vsyncpa [#allocation7], 1
    %2791 = vsyncpa [#allocation10], 1
    %2792 = vsyncpa [#allocation13], 1
    %2793 = vsyncpa [#allocation16], 1
    %2794 = vsyncpa [#allocation5], 1
    %s2795 = scalar_lea.sflag [#allocation5], 1
    %2796 = vsyncpa %s2795, 1

</llo_original>
